<compile_context>
chip_gen: v7x
topology: tpu7x:2x2x1
jax: 0.10.0
libtpu: 0.0.40
codegen_flags: <defaults>
</compile_context>

<pallas_src>
import jax
import jax.numpy as jnp
from jax.experimental import pallas as pl
from jax.experimental.pallas import tpu as pltpu


# (in_features, out_features) per layer; fc5 output padded to 128 lanes.
LAYER_DIMS = [(3072, 1024), (1024, 512), (512, 256), (256, 128), (128, 10)]
OUT_PAD = 128  # lane-dense final output width (real logits are the first 10)


def _round_up(v, m):
    return ((v + m - 1) // m) * m


def deep_fc_kernel(x_ref,
                   w1_ref, b1_ref,
                   w2_ref, b2_ref,
                   w3_ref, b3_ref,
                   w4_ref, b4_ref,
                   w5_ref, b5_ref,
                   out_ref):
    # x tile: (TB, 3072) bf16 in VMEM (already cast in the wrapper).

    def linear(h_bf16, w_ref, b_ref):
        # bf16 x bf16 -> f32 accumulate on the MXU; bias-add in f32 (v5e-safe).
        acc = jnp.dot(h_bf16, w_ref[...], preferred_element_type=jnp.float32)
        return acc + b_ref[...]

    # fc1..fc4 + ReLU (dropout == identity in eval mode)
    h = jnp.maximum(linear(x_ref[...], w1_ref, b1_ref), 0.0)              # 3072 -> 1024
    h = jnp.maximum(linear(h.astype(jnp.bfloat16), w2_ref, b2_ref), 0.0)  # 1024 -> 512
    h = jnp.maximum(linear(h.astype(jnp.bfloat16), w3_ref, b3_ref), 0.0)  # 512  -> 256
    h = jnp.maximum(linear(h.astype(jnp.bfloat16), w4_ref, b4_ref), 0.0)  # 256  -> 128

    # fc5 (no activation), padded to 128 lanes for a dense, unmasked store.
    out_ref[...] = linear(h.astype(jnp.bfloat16), w5_ref, b5_ref)         # 128 -> 128


def init_params(key):
    """Deterministic init matching the PyTorch nn.Linear shapes ((out, in) weights)."""
    params = []
    for (in_d, out_d) in LAYER_DIMS:
        kw, kb, key = jax.random.split(key, 3)
        bound = 1.0 / jnp.sqrt(in_d)  # same scale as torch's default init
        w = jax.random.uniform(kw, (out_d, in_d), jnp.float32, -bound, bound)
        b = jax.random.uniform(kb, (out_d,), jnp.float32, -bound, bound)
        params.append((w, b))
    return params


def prepare_params(params):
    """One-time param prep (hoisted out of the forward path).

    Converts each (out,in) f32 weight to a (in,out) bf16 matrix and each bias
    to a (1,out) f32 row; fc5 is zero-padded to 128 output lanes.
    Returns the flat list [w1, b1, w2, b2, ..., w5, b5].
    """
    flat = []
    n = len(params)
    for li, (w, b) in enumerate(params):
        wt = jnp.asarray(w, jnp.float32).T            # (in, out)
        bb = jnp.asarray(b, jnp.float32)[None, :]     # (1, out)
        if li == n - 1:
            pad = OUT_PAD - wt.shape[1]
            wt = jnp.pad(wt, ((0, 0), (0, pad)))
            bb = jnp.pad(bb, ((0, 0), (0, pad)))
        flat.append(wt.astype(jnp.bfloat16))
        flat.append(bb)
    return flat


def deep_fc_net(x_nchw, flat_params, *, max_tb=512):
    """x_nchw: (B, 3, 32, 32) float32 -> logits (B, 10) float32."""
    B = x_nchw.shape[0]
    # Stream x in bf16: halves the dominant per-tile HBM traffic; numerically
    # identical since the MXU would cast to bf16 anyway.
    x = x_nchw.reshape(B, -1).astype(jnp.bfloat16)      # (B, 3072), C*H*W order
    d_in = x.shape[1]

    # Batch tile:
    #  * floor 16 rows (bf16 MXU operand min sublane tile; avoids relayout),
    #  * at least 2 grid steps when B is big enough so v7x's 2 TCs both work,
    #  * capped at max_tb=512 (v7x 64 MiB VMEM safe; v6e could go to 1024).
    tb = min(max_tb, max(16, _round_up(pl.cdiv(B, 2), 16)))
    b_pad = pl.cdiv(B, tb) * tb
    if b_pad != B:
        x = jnp.pad(x, ((0, b_pad - B), (0, 0)))
    grid = (b_pad // tb,)

    # x / out tiles advance with the grid; weights & biases stay VMEM-resident
    # and are explicitly single-buffered (their block index never changes).
    in_specs = [pl.BlockSpec((tb, d_in), lambda i: (i, 0))]
    for t in flat_params:
        in_specs.append(
            pl.BlockSpec(t.shape, lambda i: (0, 0),
                         pipeline_mode=pl.Buffered(1)))
    out_specs = pl.BlockSpec((tb, OUT_PAD), lambda i: (i, 0))

    # VMEM budget from the actual footprint:
    #   weights/biases (counted 2x to stay safe even if the single-buffer hint
    #   is ignored), double-buffered bf16 x tiles, double-buffered f32 out
    #   tiles, and f32 + bf16 activation temporaries for every hidden layer.
    weight_bytes = sum(int(t.size) * t.dtype.itemsize for t in flat_params)
    x_tile_bytes = tb * d_in * 2                         # bf16
    out_tile_bytes = tb * OUT_PAD * 4                    # f32
    hidden_cols = sum(o for (_, o) in LAYER_DIMS[:-1]) + OUT_PAD  # 1024+512+256+128+128
    act_bytes = tb * hidden_cols * (4 + 2)               # f32 acc + bf16 copy per layer
    vmem_bytes = (2 * weight_bytes
                  + 2 * x_tile_bytes
                  + 2 * out_tile_bytes
                  + act_bytes)
    # 16 MiB headroom for Mosaic internal scratch; cap keeps >=16 MiB slack
    # below v7x's 64 MiB while overriding v5e's 16 MiB scoped default.
    vmem_limit = min(vmem_bytes + (16 << 20), 48 << 20)

    # Cost hint for XLA scheduling around the custom call.
    padded_dims = [(i, (OUT_PAD if li == len(LAYER_DIMS) - 1 else o))
                   for li, (i, o) in enumerate(LAYER_DIMS)]
    flops = 2 * b_pad * sum(i * o for (i, o) in padded_dims)
    bytes_accessed = int(x.size) * 2 + b_pad * OUT_PAD * 4 + weight_bytes
    cost = pl.CostEstimate(flops=int(flops), transcendentals=0,
                           bytes_accessed=int(bytes_accessed))

    out = pl.pallas_call(
        deep_fc_kernel,
        out_shape=jax.ShapeDtypeStruct((b_pad, OUT_PAD), jnp.float32),
        grid_spec=pltpu.PrefetchScalarGridSpec(
            num_scalar_prefetch=0,
            grid=grid,
            in_specs=in_specs,
            out_specs=out_specs),
        compiler_params=pltpu.CompilerParams(
            dimension_semantics=("parallel",),
            vmem_limit_bytes=int(vmem_limit)),
        cost_estimate=cost,
    )(x, *flat_params)

    return out[:B, :10]


if __name__ == "__main__":
    key = jax.random.PRNGKey(0)
    k_x, k_p = jax.random.split(key)

    # CIFAR-like input implied by fc1 (32*32*3 = 3072): (B, 3, 32, 32)
    B = 2
    x = jax.random.normal(k_x, (B, 3, 32, 32), jnp.float32)

    params = init_params(k_p)
    flat_params = prepare_params(params)   # one-time: transpose + bf16 + pad

    y = deep_fc_net(x, flat_params)
    y = jax.block_until_ready(y)

    assert y.shape == (B, 10), y.shape
    assert y.dtype == jnp.float32, y.dtype
    print("KERNEL_OK")
</pallas_src>

<mosaic_0001>
module attributes {stable_mosaic.version = 11 : i64} {
  func.func @deep_fc_kernel(%arg0: i32, %arg1: memref<16x3072xbf16, #tpu.memory_space<vmem>>, %arg2: memref<3072x1024xbf16, #tpu.memory_space<vmem>>, %arg3: memref<1x1024xf32, #tpu.memory_space<vmem>>, %arg4: memref<1024x512xbf16, #tpu.memory_space<vmem>>, %arg5: memref<1x512xf32, #tpu.memory_space<vmem>>, %arg6: memref<512x256xbf16, #tpu.memory_space<vmem>>, %arg7: memref<1x256xf32, #tpu.memory_space<vmem>>, %arg8: memref<256x128xbf16, #tpu.memory_space<vmem>>, %arg9: memref<1x128xf32, #tpu.memory_space<vmem>>, %arg10: memref<128x128xbf16, #tpu.memory_space<vmem>>, %arg11: memref<1x128xf32, #tpu.memory_space<vmem>>, %arg12: memref<16x128xf32, #tpu.memory_space<vmem>>) attributes {dimension_semantics = [#tpu.dimension_semantics<parallel>], iteration_bounds = array<i64: 1>, scalar_prefetch = 0 : i64, scratch_operands = 0 : i64, tpu.core_type = #tpu.core_type<tc>, window_params = [{transform_indices = @transform_0, window_bounds = array<i64: 16, 3072>}, {pipeline_mode = #tpu.pipeline_mode<synchronous>, transform_indices = @transform_1, window_bounds = array<i64: 3072, 1024>}, {pipeline_mode = #tpu.pipeline_mode<synchronous>, transform_indices = @transform_2, window_bounds = array<i64: 1, 1024>}, {pipeline_mode = #tpu.pipeline_mode<synchronous>, transform_indices = @transform_3, window_bounds = array<i64: 1024, 512>}, {pipeline_mode = #tpu.pipeline_mode<synchronous>, transform_indices = @transform_4, window_bounds = array<i64: 1, 512>}, {pipeline_mode = #tpu.pipeline_mode<synchronous>, transform_indices = @transform_5, window_bounds = array<i64: 512, 256>}, {pipeline_mode = #tpu.pipeline_mode<synchronous>, transform_indices = @transform_6, window_bounds = array<i64: 1, 256>}, {pipeline_mode = #tpu.pipeline_mode<synchronous>, transform_indices = @transform_7, window_bounds = array<i64: 256, 128>}, {pipeline_mode = #tpu.pipeline_mode<synchronous>, transform_indices = @transform_8, window_bounds = array<i64: 1, 128>}, {pipeline_mode = #tpu.pipeline_mode<synchronous>, transform_indices = @transform_9, window_bounds = array<i64: 128, 128>}, {pipeline_mode = #tpu.pipeline_mode<synchronous>, transform_indices = @transform_10, window_bounds = array<i64: 1, 128>}, {transform_indices = @transform_11, window_bounds = array<i64: 16, 128>}]} {
    %c0 = arith.constant 0 : index
    %c0_0 = arith.constant 0 : index
    %0 = vector.load %arg1[%c0, %c0_0] : memref<16x3072xbf16, #tpu.memory_space<vmem>>, vector<16x3072xbf16>
    %c0_1 = arith.constant 0 : index
    %c0_2 = arith.constant 0 : index
    %1 = vector.load %arg2[%c0_1, %c0_2] : memref<3072x1024xbf16, #tpu.memory_space<vmem>>, vector<3072x1024xbf16>
    %cst = arith.constant dense<0.000000e+00> : vector<16x1024xf32>
    %2 = tpu.matmul %0, %1, %cst {dimension_numbers = #tpu.dot_dimension_numbers<[1], [0], [0], [1], [0, 0, 1, 1], [], []>} : vector<16x3072xbf16>, vector<3072x1024xbf16>, vector<16x1024xf32> -> vector<16x1024xf32>
    %c0_3 = arith.constant 0 : index
    %c0_4 = arith.constant 0 : index
    %3 = vector.load %arg3[%c0_3, %c0_4] : memref<1x1024xf32, #tpu.memory_space<vmem>>, vector<1x1024xf32>
    %4 = vector.broadcast %3 : vector<1x1024xf32> to vector<16x1024xf32>
    %5 = arith.addf %2, %4 : vector<16x1024xf32>
    %cst_5 = arith.constant 0.000000e+00 : f32
    %6 = vector.broadcast %cst_5 : f32 to vector<16x1024xf32>
    %7 = arith.maximumf %5, %6 : vector<16x1024xf32>
    %8 = arith.truncf %7 : vector<16x1024xf32> to vector<16x1024xbf16>
    %c0_6 = arith.constant 0 : index
    %c0_7 = arith.constant 0 : index
    %9 = vector.load %arg4[%c0_6, %c0_7] : memref<1024x512xbf16, #tpu.memory_space<vmem>>, vector<1024x512xbf16>
    %cst_8 = arith.constant dense<0.000000e+00> : vector<16x512xf32>
    %10 = tpu.matmul %8, %9, %cst_8 {dimension_numbers = #tpu.dot_dimension_numbers<[1], [0], [0], [1], [0, 0, 1, 1], [], []>} : vector<16x1024xbf16>, vector<1024x512xbf16>, vector<16x512xf32> -> vector<16x512xf32>
    %c0_9 = arith.constant 0 : index
    %c0_10 = arith.constant 0 : index
    %11 = vector.load %arg5[%c0_9, %c0_10] : memref<1x512xf32, #tpu.memory_space<vmem>>, vector<1x512xf32>
    %12 = vector.broadcast %11 : vector<1x512xf32> to vector<16x512xf32>
    %13 = arith.addf %10, %12 : vector<16x512xf32>
    %cst_11 = arith.constant 0.000000e+00 : f32
    %14 = vector.broadcast %cst_11 : f32 to vector<16x512xf32>
    %15 = arith.maximumf %13, %14 : vector<16x512xf32>
    %16 = arith.truncf %15 : vector<16x512xf32> to vector<16x512xbf16>
    %c0_12 = arith.constant 0 : index
    %c0_13 = arith.constant 0 : index
    %17 = vector.load %arg6[%c0_12, %c0_13] : memref<512x256xbf16, #tpu.memory_space<vmem>>, vector<512x256xbf16>
    %cst_14 = arith.constant dense<0.000000e+00> : vector<16x256xf32>
    %18 = tpu.matmul %16, %17, %cst_14 {dimension_numbers = #tpu.dot_dimension_numbers<[1], [0], [0], [1], [0, 0, 1, 1], [], []>} : vector<16x512xbf16>, vector<512x256xbf16>, vector<16x256xf32> -> vector<16x256xf32>
    %c0_15 = arith.constant 0 : index
    %c0_16 = arith.constant 0 : index
    %19 = vector.load %arg7[%c0_15, %c0_16] : memref<1x256xf32, #tpu.memory_space<vmem>>, vector<1x256xf32>
    %20 = vector.broadcast %19 : vector<1x256xf32> to vector<16x256xf32>
    %21 = arith.addf %18, %20 : vector<16x256xf32>
    %cst_17 = arith.constant 0.000000e+00 : f32
    %22 = vector.broadcast %cst_17 : f32 to vector<16x256xf32>
    %23 = arith.maximumf %21, %22 : vector<16x256xf32>
    %24 = arith.truncf %23 : vector<16x256xf32> to vector<16x256xbf16>
    %c0_18 = arith.constant 0 : index
    %c0_19 = arith.constant 0 : index
    %25 = vector.load %arg8[%c0_18, %c0_19] : memref<256x128xbf16, #tpu.memory_space<vmem>>, vector<256x128xbf16>
    %cst_20 = arith.constant dense<0.000000e+00> : vector<16x128xf32>
    %26 = tpu.matmul %24, %25, %cst_20 {dimension_numbers = #tpu.dot_dimension_numbers<[1], [0], [0], [1], [0, 0, 1, 1], [], []>} : vector<16x256xbf16>, vector<256x128xbf16>, vector<16x128xf32> -> vector<16x128xf32>
    %c0_21 = arith.constant 0 : index
    %c0_22 = arith.constant 0 : index
    %27 = vector.load %arg9[%c0_21, %c0_22] : memref<1x128xf32, #tpu.memory_space<vmem>>, vector<1x128xf32>
    %28 = vector.broadcast %27 : vector<1x128xf32> to vector<16x128xf32>
    %29 = arith.addf %26, %28 : vector<16x128xf32>
    %cst_23 = arith.constant 0.000000e+00 : f32
    %30 = vector.broadcast %cst_23 : f32 to vector<16x128xf32>
    %31 = arith.maximumf %29, %30 : vector<16x128xf32>
    %32 = arith.truncf %31 : vector<16x128xf32> to vector<16x128xbf16>
    %c0_24 = arith.constant 0 : index
    %c0_25 = arith.constant 0 : index
    %33 = vector.load %arg10[%c0_24, %c0_25] : memref<128x128xbf16, #tpu.memory_space<vmem>>, vector<128x128xbf16>
    %cst_26 = arith.constant dense<0.000000e+00> : vector<16x128xf32>
    %34 = tpu.matmul %32, %33, %cst_26 {dimension_numbers = #tpu.dot_dimension_numbers<[1], [0], [0], [1], [0, 0, 1, 1], [], []>} : vector<16x128xbf16>, vector<128x128xbf16>, vector<16x128xf32> -> vector<16x128xf32>
    %c0_27 = arith.constant 0 : index
    %c0_28 = arith.constant 0 : index
    %35 = vector.load %arg11[%c0_27, %c0_28] : memref<1x128xf32, #tpu.memory_space<vmem>>, vector<1x128xf32>
    %36 = vector.broadcast %35 : vector<1x128xf32> to vector<16x128xf32>
    %37 = arith.addf %34, %36 : vector<16x128xf32>
    %c0_29 = arith.constant 0 : index
    %c0_30 = arith.constant 0 : index
    %38 = vector.load %arg12[%c0_29, %c0_30] : memref<16x128xf32, #tpu.memory_space<vmem>>, vector<16x128xf32>
    tpu.vector_store %arg12[%c0_29, %c0_30], %37 {strides = array<i32>} : memref<16x128xf32, #tpu.memory_space<vmem>>, vector<16x128xf32>,
    return
  }
  func.func @transform_0(%arg0: i32) -> (i32, i32) {
    %c0_i32 = arith.constant 0 : i32
    %c0_i32_0 = arith.constant 0 : i32
    return %arg0, %c0_i32 : i32, i32
  }
  func.func @transform_1(%arg0: i32) -> (i32, i32) {
    %c0_i32 = arith.constant 0 : i32
    %c0_i32_0 = arith.constant 0 : i32
    %c0_i32_1 = arith.constant 0 : i32
    return %c0_i32, %c0_i32_0 : i32, i32
  }
  func.func @transform_2(%arg0: i32) -> (i32, i32) {
    %c0_i32 = arith.constant 0 : i32
    %c0_i32_0 = arith.constant 0 : i32
    %c0_i32_1 = arith.constant 0 : i32
    return %c0_i32, %c0_i32_0 : i32, i32
  }
  func.func @transform_3(%arg0: i32) -> (i32, i32) {
    %c0_i32 = arith.constant 0 : i32
    %c0_i32_0 = arith.constant 0 : i32
    %c0_i32_1 = arith.constant 0 : i32
    return %c0_i32, %c0_i32_0 : i32, i32
  }
  func.func @transform_4(%arg0: i32) -> (i32, i32) {
    %c0_i32 = arith.constant 0 : i32
    %c0_i32_0 = arith.constant 0 : i32
    %c0_i32_1 = arith.constant 0 : i32
    return %c0_i32, %c0_i32_0 : i32, i32
  }
  func.func @transform_5(%arg0: i32) -> (i32, i32) {
    %c0_i32 = arith.constant 0 : i32
    %c0_i32_0 = arith.constant 0 : i32
    %c0_i32_1 = arith.constant 0 : i32
    return %c0_i32, %c0_i32_0 : i32, i32
  }
  func.func @transform_6(%arg0: i32) -> (i32, i32) {
    %c0_i32 = arith.constant 0 : i32
    %c0_i32_0 = arith.constant 0 : i32
    %c0_i32_1 = arith.constant 0 : i32
    return %c0_i32, %c0_i32_0 : i32, i32
  }
  func.func @transform_7(%arg0: i32) -> (i32, i32) {
    %c0_i32 = arith.constant 0 : i32
    %c0_i32_0 = arith.constant 0 : i32
    %c0_i32_1 = arith.constant 0 : i32
    return %c0_i32, %c0_i32_0 : i32, i32
  }
  func.func @transform_8(%arg0: i32) -> (i32, i32) {
    %c0_i32 = arith.constant 0 : i32
    %c0_i32_0 = arith.constant 0 : i32
    %c0_i32_1 = arith.constant 0 : i32
    return %c0_i32, %c0_i32_0 : i32, i32
  }
  func.func @transform_9(%arg0: i32) -> (i32, i32) {
    %c0_i32 = arith.constant 0 : i32
    %c0_i32_0 = arith.constant 0 : i32
    %c0_i32_1 = arith.constant 0 : i32
    return %c0_i32, %c0_i32_0 : i32, i32
  }
  func.func @transform_10(%arg0: i32) -> (i32, i32) {
    %c0_i32 = arith.constant 0 : i32
    %c0_i32_0 = arith.constant 0 : i32
    %c0_i32_1 = arith.constant 0 : i32
    return %c0_i32, %c0_i32_0 : i32, i32
  }
  func.func @transform_11(%arg0: i32) -> (i32, i32) {
    %c0_i32 = arith.constant 0 : i32
    %c0_i32_0 = arith.constant 0 : i32
    return %arg0, %c0_i32 : i32, i32
  }
}

</mosaic_0001>

<llo_original>
// kernel: tpu_custom_call.1
$region0: #{tpu_custom_call.1}
  #allocation0 [shape = 'u32[]', space=smem, size = 0x4, offset = 0x4, fixed_abs, tag = 'smem constant byte address 0x4 - core index']
  #allocation1 [shape = 'u32[144,128]{1,0:T(1,128)}', space=vmem, size = 0x12000, scoped, tag = 'internal scratch']
  %s0 = inlined_call_operand.hbm [shape: bf16[16,3072], index: 0, kind: input, shape index: {}]
  %s1 = inlined_call_operand.hbm [shape: bf16[3072,1024], index: 1, kind: input, shape index: {}]
  %s2 = inlined_call_operand.hbm [shape: f32[1,1024], index: 2, kind: input, shape index: {}]
  %s3 = inlined_call_operand.hbm [shape: bf16[1024,512], index: 3, kind: input, shape index: {}]
  %s4 = inlined_call_operand.hbm [shape: f32[1,512], index: 4, kind: input, shape index: {}]
  %s5 = inlined_call_operand.hbm [shape: bf16[512,256], index: 5, kind: input, shape index: {}]
  %s6 = inlined_call_operand.hbm [shape: f32[1,256], index: 6, kind: input, shape index: {}]
  %s7 = inlined_call_operand.hbm [shape: bf16[256,128], index: 7, kind: input, shape index: {}]
  %s8 = inlined_call_operand.hbm [shape: f32[1,128], index: 8, kind: input, shape index: {}]
  %s9 = inlined_call_operand.hbm [shape: bf16[128,128], index: 9, kind: input, shape index: {}]
  %s10 = inlined_call_operand.hbm [shape: f32[1,128], index: 10, kind: input, shape index: {}]
  %s11 = inlined_call_operand.hbm [shape: f32[16,128], index: 11, kind: output, shape index: {}]
  %s12 = sld [smem:[#allocation0]]
  $region98: #{tpu_custom_call.1} parent=0
    _
  %s14 = ssub.s32 1, %s12
  %s15 = scalar_select 0, %s14, %s12
  $region1: #{tpu_custom_call.1} parent=0
    #allocation2 [shape = 'u8[98304]{0}', space=vmem, size = 0x18000, scoped, tag = 'input window, operand 0, single buffered']
    #allocation3 [shape = 's32[1]{0}', space=sflag, size = 0x4, scoped, tag = 'scoped memory for tpu_custom_call.1']
    #allocation4 [shape = 's32[1]{0}', space=sflag, size = 0x4, scoped, tag = 'scoped memory for tpu_custom_call.1']
    #allocation5 [shape = 'u8[6291456]{0}', space=vmem, size = 0x600000, scoped, tag = 'input window, operand 1, single buffered']
    #allocation6 [shape = 's32[1]{0}', space=sflag, size = 0x4, scoped, tag = 'scoped memory for tpu_custom_call.1']
    #allocation7 [shape = 'u8[4096]{0}', space=vmem, size = 0x1000, scoped, tag = 'input window, operand 2, single buffered']
    #allocation8 [shape = 'u8[1048576]{0}', space=vmem, size = 0x100000, scoped, tag = 'input window, operand 3, single buffered']
    #allocation9 [shape = 's32[1]{0}', space=sflag, size = 0x4, scoped, tag = 'scoped memory for tpu_custom_call.1']
    #allocation10 [shape = 'u8[2048]{0}', space=vmem, size = 0x800, scoped, tag = 'input window, operand 4, single buffered']
    #allocation11 [shape = 'u8[262144]{0}', space=vmem, size = 0x40000, scoped, tag = 'input window, operand 5, single buffered']
    #allocation12 [shape = 's32[1]{0}', space=sflag, size = 0x4, scoped, tag = 'scoped memory for tpu_custom_call.1']
    #allocation13 [shape = 'u8[1024]{0}', space=vmem, size = 0x400, scoped, tag = 'input window, operand 6, single buffered']
    #allocation14 [shape = 'u8[65536]{0}', space=vmem, size = 0x10000, scoped, tag = 'input window, operand 7, single buffered']
    #allocation15 [shape = 's32[1]{0}', space=sflag, size = 0x4, scoped, tag = 'scoped memory for tpu_custom_call.1']
    #allocation16 [shape = 'u8[512]{0}', space=vmem, size = 0x400, scoped, tag = 'input window, operand 8, single buffered']
    #allocation17 [shape = 'u8[32768]{0}', space=vmem, size = 0x8000, scoped, tag = 'input window, operand 9, single buffered']
    #allocation18 [shape = 's32[1]{0}', space=sflag, size = 0x4, scoped, tag = 'scoped memory for tpu_custom_call.1']
    #allocation19 [shape = 'u8[512]{0}', space=vmem, size = 0x400, scoped, tag = 'input window, operand 10, single buffered']
    #allocation20 [shape = 'u8[8192]{0}', space=vmem, size = 0x2000, scoped, tag = 'output window, operand 0, single buffered']
    %16 = vsyncpa [#allocation3], 0
    %17 = vsyncpa [#allocation6], 0
    %18 = vsyncpa [#allocation9], 0
    %19 = vsyncpa [#allocation12], 0
    %20 = vsyncpa [#allocation15], 0
    %21 = vsyncpa [#allocation18], 0
    %22 = vsyncpa [#allocation4], 0
    // Predicated region
    $region2: #{tpu_custom_call.1} parent=1 // pred_check
      _
    $region3: #{tpu_custom_call.1} parent=1 // pred_check_branch
      %24 = sbr.rel (0) target = $region5
    $region4: #{tpu_custom_call.1} parent=1 // pred_region
      %s26 = ssub.s32 3072, 3072
      %27 = vsyncadd [#allocation3], %s26
      %s28 = sshll.u32 [#allocation2], 4
      %s29 = int_to_ptr.vmem [resolvable:$true] %s28
      %34 = dma.hbm_to_vmem [thread:$0]  %s0, 3072, %s29, [#allocation3], 1536, 1536, 96
    $region5: #{tpu_custom_call.1} parent=1 // pred_fallthru
      _
    // Predicated region
    $region6: #{tpu_custom_call.1} parent=1 // pred_check
      _
    $region7: #{tpu_custom_call.1} parent=1 // pred_check_branch
      %36 = sbr.rel (0) target = $region9
    $region8: #{tpu_custom_call.1} parent=1 // pred_region
      %s38 = ssub.s32 196608, 196608
      %39 = vsyncadd [#allocation6], %s38
      %s40 = sshll.u32 [#allocation5], 4
      %s41 = int_to_ptr.vmem [resolvable:$true] %s40
      %46 = dma.hbm_to_vmem [thread:$0]  %s1, 196608, %s41, [#allocation6], 512, 512, 32
    $region9: #{tpu_custom_call.1} parent=1 // pred_fallthru
      _
    // Predicated region
    $region10: #{tpu_custom_call.1} parent=1 // pred_check
      _
    $region11: #{tpu_custom_call.1} parent=1 // pred_check_branch
      %48 = sbr.rel (0) target = $region13
    $region12: #{tpu_custom_call.1} parent=1 // pred_region
      %s50 = ssub.s32 128, 128
      %51 = vsyncadd [#allocation6], %s50
      %s53 = sshll.u32 [#allocation7], 4
      %s54 = int_to_ptr.vmem [resolvable:$true] %s53
      %56 = dma.hbm_to_vmem [thread:$0]  %s2, 128, %s54, [#allocation6]
    $region13: #{tpu_custom_call.1} parent=1 // pred_fallthru
      _
    // Predicated region
    $region14: #{tpu_custom_call.1} parent=1 // pred_check
      _
    $region15: #{tpu_custom_call.1} parent=1 // pred_check_branch
      %58 = sbr.rel (0) target = $region17
    $region16: #{tpu_custom_call.1} parent=1 // pred_region
      %s60 = ssub.s32 32768, 32768
      %61 = vsyncadd [#allocation9], %s60
      %s62 = sshll.u32 [#allocation8], 4
      %s63 = int_to_ptr.vmem [resolvable:$true] %s62
      %68 = dma.hbm_to_vmem [thread:$0]  %s3, 32768, %s63, [#allocation9], 256, 256, 16
    $region17: #{tpu_custom_call.1} parent=1 // pred_fallthru
      _
    // Predicated region
    $region18: #{tpu_custom_call.1} parent=1 // pred_check
      _
    $region19: #{tpu_custom_call.1} parent=1 // pred_check_branch
      %70 = sbr.rel (0) target = $region21
    $region20: #{tpu_custom_call.1} parent=1 // pred_region
      %s72 = ssub.s32 64, 64
      %73 = vsyncadd [#allocation9], %s72
      %s75 = sshll.u32 [#allocation10], 4
      %s76 = int_to_ptr.vmem [resolvable:$true] %s75
      %78 = dma.hbm_to_vmem [thread:$0]  %s4, 64, %s76, [#allocation9]
    $region21: #{tpu_custom_call.1} parent=1 // pred_fallthru
      _
    // Predicated region
    $region22: #{tpu_custom_call.1} parent=1 // pred_check
      _
    $region23: #{tpu_custom_call.1} parent=1 // pred_check_branch
      %80 = sbr.rel (0) target = $region25
    $region24: #{tpu_custom_call.1} parent=1 // pred_region
      %s82 = ssub.s32 8192, 8192
      %83 = vsyncadd [#allocation12], %s82
      %s84 = sshll.u32 [#allocation11], 4
      %s85 = int_to_ptr.vmem [resolvable:$true] %s84
      %90 = dma.hbm_to_vmem [thread:$0]  %s5, 8192, %s85, [#allocation12], 128, 128, 8
    $region25: #{tpu_custom_call.1} parent=1 // pred_fallthru
      _
    // Predicated region
    $region26: #{tpu_custom_call.1} parent=1 // pred_check
      _
    $region27: #{tpu_custom_call.1} parent=1 // pred_check_branch
      %92 = sbr.rel (0) target = $region29
    $region28: #{tpu_custom_call.1} parent=1 // pred_region
      %s94 = ssub.s32 32, 32
      %95 = vsyncadd [#allocation12], %s94
      %s97 = sshll.u32 [#allocation13], 4
      %s98 = int_to_ptr.vmem [resolvable:$true] %s97
      %100 = dma.hbm_to_vmem [thread:$0]  %s6, 32, %s98, [#allocation12]
    $region29: #{tpu_custom_call.1} parent=1 // pred_fallthru
      _
    // Predicated region
    $region30: #{tpu_custom_call.1} parent=1 // pred_check
      _
    $region31: #{tpu_custom_call.1} parent=1 // pred_check_branch
      %102 = sbr.rel (0) target = $region33
    $region32: #{tpu_custom_call.1} parent=1 // pred_region
      %s104 = ssub.s32 2048, 2048
      %105 = vsyncadd [#allocation15], %s104
      %s106 = sshll.u32 [#allocation14], 4
      %s107 = int_to_ptr.vmem [resolvable:$true] %s106
      %112 = dma.hbm_to_vmem [thread:$0]  %s7, 2048, %s107, [#allocation15], 64, 64, 4
    $region33: #{tpu_custom_call.1} parent=1 // pred_fallthru
      _
    // Predicated region
    $region34: #{tpu_custom_call.1} parent=1 // pred_check
      _
    $region35: #{tpu_custom_call.1} parent=1 // pred_check_branch
      %114 = sbr.rel (0) target = $region37
    $region36: #{tpu_custom_call.1} parent=1 // pred_region
      %s116 = ssub.s32 16, 16
      %117 = vsyncadd [#allocation15], %s116
      %s119 = sshll.u32 [#allocation16], 4
      %s120 = int_to_ptr.vmem [resolvable:$true] %s119
      %122 = dma.hbm_to_vmem [thread:$0]  %s8, 16, %s120, [#allocation15]
    $region37: #{tpu_custom_call.1} parent=1 // pred_fallthru
      _
    // Predicated region
    $region38: #{tpu_custom_call.1} parent=1 // pred_check
      _
    $region39: #{tpu_custom_call.1} parent=1 // pred_check_branch
      %124 = sbr.rel (0) target = $region41
    $region40: #{tpu_custom_call.1} parent=1 // pred_region
      %s126 = ssub.s32 1024, 1024
      %127 = vsyncadd [#allocation18], %s126
      %s128 = sshll.u32 [#allocation17], 4
      %s129 = int_to_ptr.vmem [resolvable:$true] %s128
      %134 = dma.hbm_to_vmem [thread:$0]  %s9, 1024, %s129, [#allocation18], 64, 64, 4
    $region41: #{tpu_custom_call.1} parent=1 // pred_fallthru
      _
    // Predicated region
    $region42: #{tpu_custom_call.1} parent=1 // pred_check
      _
    $region43: #{tpu_custom_call.1} parent=1 // pred_check_branch
      %136 = sbr.rel (0) target = $region45
    $region44: #{tpu_custom_call.1} parent=1 // pred_region
      %s138 = ssub.s32 16, 16
      %139 = vsyncadd [#allocation18], %s138
      %s141 = sshll.u32 [#allocation19], 4
      %s142 = int_to_ptr.vmem [resolvable:$true] %s141
      %144 = dma.hbm_to_vmem [thread:$0]  %s10, 16, %s142, [#allocation18]
    $region45: #{tpu_custom_call.1} parent=1 // pred_fallthru
      _
    // Predicated region
    $region46: #{tpu_custom_call.1} parent=1 // pred_check
      _
    $region47: #{tpu_custom_call.1} parent=1 // pred_check_branch
      %146 = sbr.rel (0) target = $region49
    $region48: #{tpu_custom_call.1} parent=1 // pred_region
      %147 = dma.done [#allocation3], 3072
    $region49: #{tpu_custom_call.1} parent=1 // pred_fallthru
      _
    // Predicated region
    $region50: #{tpu_custom_call.1} parent=1 // pred_check
      _
    $region51: #{tpu_custom_call.1} parent=1 // pred_check_branch
      %149 = sbr.rel (0) target = $region53
    $region52: #{tpu_custom_call.1} parent=1 // pred_region
      %150 = dma.done [#allocation6], 196608
    $region53: #{tpu_custom_call.1} parent=1 // pred_fallthru
      _
    // Predicated region
    $region54: #{tpu_custom_call.1} parent=1 // pred_check
      _
    $region55: #{tpu_custom_call.1} parent=1 // pred_check_branch
      %152 = sbr.rel (0) target = $region57
    $region56: #{tpu_custom_call.1} parent=1 // pred_region
      %153 = dma.done [#allocation6], 128
    $region57: #{tpu_custom_call.1} parent=1 // pred_fallthru
      _
    // Predicated region
    $region58: #{tpu_custom_call.1} parent=1 // pred_check
      _
    $region59: #{tpu_custom_call.1} parent=1 // pred_check_branch
      %155 = sbr.rel (0) target = $region61
    $region60: #{tpu_custom_call.1} parent=1 // pred_region
      %156 = dma.done [#allocation9], 32768
    $region61: #{tpu_custom_call.1} parent=1 // pred_fallthru
      _
    // Predicated region
    $region62: #{tpu_custom_call.1} parent=1 // pred_check
      _
    $region63: #{tpu_custom_call.1} parent=1 // pred_check_branch
      %158 = sbr.rel (0) target = $region65
    $region64: #{tpu_custom_call.1} parent=1 // pred_region
      %159 = dma.done [#allocation9], 64
    $region65: #{tpu_custom_call.1} parent=1 // pred_fallthru
      _
    // Predicated region
    $region66: #{tpu_custom_call.1} parent=1 // pred_check
      _
    $region67: #{tpu_custom_call.1} parent=1 // pred_check_branch
      %161 = sbr.rel (0) target = $region69
    $region68: #{tpu_custom_call.1} parent=1 // pred_region
      %162 = dma.done [#allocation12], 8192
    $region69: #{tpu_custom_call.1} parent=1 // pred_fallthru
      _
    // Predicated region
    $region70: #{tpu_custom_call.1} parent=1 // pred_check
      _
    $region71: #{tpu_custom_call.1} parent=1 // pred_check_branch
      %164 = sbr.rel (0) target = $region73
    $region72: #{tpu_custom_call.1} parent=1 // pred_region
      %165 = dma.done [#allocation12], 32
    $region73: #{tpu_custom_call.1} parent=1 // pred_fallthru
      _
    // Predicated region
    $region74: #{tpu_custom_call.1} parent=1 // pred_check
      _
    $region75: #{tpu_custom_call.1} parent=1 // pred_check_branch
      %167 = sbr.rel (0) target = $region77
    $region76: #{tpu_custom_call.1} parent=1 // pred_region
      %168 = dma.done [#allocation15], 2048
    $region77: #{tpu_custom_call.1} parent=1 // pred_fallthru
      _
    // Predicated region
    $region78: #{tpu_custom_call.1} parent=1 // pred_check
      _
    $region79: #{tpu_custom_call.1} parent=1 // pred_check_branch
      %170 = sbr.rel (0) target = $region81
    $region80: #{tpu_custom_call.1} parent=1 // pred_region
      %171 = dma.done [#allocation15], 16
    $region81: #{tpu_custom_call.1} parent=1 // pred_fallthru
      _
    // Predicated region
    $region82: #{tpu_custom_call.1} parent=1 // pred_check
      _
    $region83: #{tpu_custom_call.1} parent=1 // pred_check_branch
      %173 = sbr.rel (0) target = $region85
    $region84: #{tpu_custom_call.1} parent=1 // pred_region
      %174 = dma.done [#allocation18], 1024
    $region85: #{tpu_custom_call.1} parent=1 // pred_fallthru
      _
    // Predicated region
    $region86: #{tpu_custom_call.1} parent=1 // pred_check
      _
    $region87: #{tpu_custom_call.1} parent=1 // pred_check_branch
      %176 = sbr.rel (0) target = $region89
    $region88: #{tpu_custom_call.1} parent=1 // pred_region
      %177 = dma.done [#allocation18], 16
    $region89: #{tpu_custom_call.1} parent=1 // pred_fallthru
      _
    %v179 = vld [vmem:[#allocation2] sm:$0xff]
    %v180 = vld [vmem:[#allocation2 + $0x8] sm:$0xff]
    %v181 = vld [vmem:[#allocation2 + $0x10] sm:$0xff]
    %v182 = vld [vmem:[#allocation2 + $0x18] sm:$0xff]
    %v183 = vld [vmem:[#allocation2 + $0x20] sm:$0xff]
    %v184 = vld [vmem:[#allocation2 + $0x28] sm:$0xff]
    %v185 = vld [vmem:[#allocation2 + $0x30] sm:$0xff]
    %v186 = vld [vmem:[#allocation2 + $0x38] sm:$0xff]
    %v187 = vld [vmem:[#allocation2 + $0x40] sm:$0xff]
    %v188 = vld [vmem:[#allocation2 + $0x48] sm:$0xff]
    %v189 = vld [vmem:[#allocation2 + $0x50] sm:$0xff]
    %v190 = vld [vmem:[#allocation2 + $0x58] sm:$0xff]
    %v191 = vld [vmem:[#allocation2 + $0x60] sm:$0xff]
    %v192 = vld [vmem:[#allocation2 + $0x68] sm:$0xff]
    %v193 = vld [vmem:[#allocation2 + $0x70] sm:$0xff]
    %v194 = vld [vmem:[#allocation2 + $0x78] sm:$0xff]
    %v195 = vld [vmem:[#allocation2 + $0x80] sm:$0xff]
    %v196 = vld [vmem:[#allocation2 + $0x88] sm:$0xff]
    %v197 = vld [vmem:[#allocation2 + $0x90] sm:$0xff]
    %v198 = vld [vmem:[#allocation2 + $0x98] sm:$0xff]
    %v199 = vld [vmem:[#allocation2 + $0xa0] sm:$0xff]
    %v200 = vld [vmem:[#allocation2 + $0xa8] sm:$0xff]
    %v201 = vld [vmem:[#allocation2 + $0xb0] sm:$0xff]
    %v202 = vld [vmem:[#allocation2 + $0xb8] sm:$0xff]
    %v203 = vld [vmem:[#allocation5] sm:$0xff]
    %v204 = vld [vmem:[#allocation5 + $0x8] sm:$0xff]
    %v205 = vld [vmem:[#allocation5 + $0x10] sm:$0xff]
    %v206 = vld [vmem:[#allocation5 + $0x18] sm:$0xff]
    %v207 = vld [vmem:[#allocation5 + $0x20] sm:$0xff]
    %v208 = vld [vmem:[#allocation5 + $0x28] sm:$0xff]
    %v209 = vld [vmem:[#allocation5 + $0x30] sm:$0xff]
    %v210 = vld [vmem:[#allocation5 + $0x38] sm:$0xff]
    %v211 = vld [vmem:[#allocation5 + $0x40] sm:$0xff]
    %v212 = vld [vmem:[#allocation5 + $0x48] sm:$0xff]
    %v213 = vld [vmem:[#allocation5 + $0x50] sm:$0xff]
    %v214 = vld [vmem:[#allocation5 + $0x58] sm:$0xff]
    %v215 = vld [vmem:[#allocation5 + $0x60] sm:$0xff]
    %v216 = vld [vmem:[#allocation5 + $0x68] sm:$0xff]
    %v217 = vld [vmem:[#allocation5 + $0x70] sm:$0xff]
    %v218 = vld [vmem:[#allocation5 + $0x78] sm:$0xff]
    %v219 = vld [vmem:[#allocation5 + $0x80] sm:$0xff]
    %v220 = vld [vmem:[#allocation5 + $0x88] sm:$0xff]
    %v221 = vld [vmem:[#allocation5 + $0x90] sm:$0xff]
    %v222 = vld [vmem:[#allocation5 + $0x98] sm:$0xff]
    %v223 = vld [vmem:[#allocation5 + $0xa0] sm:$0xff]
    %v224 = vld [vmem:[#allocation5 + $0xa8] sm:$0xff]
    %v225 = vld [vmem:[#allocation5 + $0xb0] sm:$0xff]
    %v226 = vld [vmem:[#allocation5 + $0xb8] sm:$0xff]
    %v227 = vld [vmem:[#allocation5 + $0xc0] sm:$0xff]
    %v228 = vld [vmem:[#allocation5 + $0xc8] sm:$0xff]
    %v229 = vld [vmem:[#allocation5 + $0xd0] sm:$0xff]
    %v230 = vld [vmem:[#allocation5 + $0xd8] sm:$0xff]
    %v231 = vld [vmem:[#allocation5 + $0xe0] sm:$0xff]
    %v232 = vld [vmem:[#allocation5 + $0xe8] sm:$0xff]
    %v233 = vld [vmem:[#allocation5 + $0xf0] sm:$0xff]
    %v234 = vld [vmem:[#allocation5 + $0xf8] sm:$0xff]
    %v235 = vld [vmem:[#allocation5 + $0x100] sm:$0xff]
    %v236 = vld [vmem:[#allocation5 + $0x108] sm:$0xff]
    %v237 = vld [vmem:[#allocation5 + $0x110] sm:$0xff]
    %v238 = vld [vmem:[#allocation5 + $0x118] sm:$0xff]
    %v239 = vld [vmem:[#allocation5 + $0x120] sm:$0xff]
    %v240 = vld [vmem:[#allocation5 + $0x128] sm:$0xff]
    %v241 = vld [vmem:[#allocation5 + $0x130] sm:$0xff]
    %v242 = vld [vmem:[#allocation5 + $0x138] sm:$0xff]
    %v243 = vld [vmem:[#allocation5 + $0x140] sm:$0xff]
    %v244 = vld [vmem:[#allocation5 + $0x148] sm:$0xff]
    %v245 = vld [vmem:[#allocation5 + $0x150] sm:$0xff]
    %v246 = vld [vmem:[#allocation5 + $0x158] sm:$0xff]
    %v247 = vld [vmem:[#allocation5 + $0x160] sm:$0xff]
    %v248 = vld [vmem:[#allocation5 + $0x168] sm:$0xff]
    %v249 = vld [vmem:[#allocation5 + $0x170] sm:$0xff]
    %v250 = vld [vmem:[#allocation5 + $0x178] sm:$0xff]
    %v251 = vld [vmem:[#allocation5 + $0x180] sm:$0xff]
    %v252 = vld [vmem:[#allocation5 + $0x188] sm:$0xff]
    %v253 = vld [vmem:[#allocation5 + $0x190] sm:$0xff]
    %v254 = vld [vmem:[#allocation5 + $0x198] sm:$0xff]
    %v255 = vld [vmem:[#allocation5 + $0x1a0] sm:$0xff]
    %v256 = vld [vmem:[#allocation5 + $0x1a8] sm:$0xff]
    %v257 = vld [vmem:[#allocation5 + $0x1b0] sm:$0xff]
    %v258 = vld [vmem:[#allocation5 + $0x1b8] sm:$0xff]
    %v259 = vld [vmem:[#allocation5 + $0x1c0] sm:$0xff]
    %v260 = vld [vmem:[#allocation5 + $0x1c8] sm:$0xff]
    %v261 = vld [vmem:[#allocation5 + $0x1d0] sm:$0xff]
    %v262 = vld [vmem:[#allocation5 + $0x1d8] sm:$0xff]
    %v263 = vld [vmem:[#allocation5 + $0x1e0] sm:$0xff]
    %v264 = vld [vmem:[#allocation5 + $0x1e8] sm:$0xff]
    %v265 = vld [vmem:[#allocation5 + $0x1f0] sm:$0xff]
    %v266 = vld [vmem:[#allocation5 + $0x1f8] sm:$0xff]
    %v267 = vld [vmem:[#allocation5 + $0x200] sm:$0xff]
    %v268 = vld [vmem:[#allocation5 + $0x208] sm:$0xff]
    %v269 = vld [vmem:[#allocation5 + $0x210] sm:$0xff]
    %v270 = vld [vmem:[#allocation5 + $0x218] sm:$0xff]
    %v271 = vld [vmem:[#allocation5 + $0x220] sm:$0xff]
    %v272 = vld [vmem:[#allocation5 + $0x228] sm:$0xff]
    %v273 = vld [vmem:[#allocation5 + $0x230] sm:$0xff]
    %v274 = vld [vmem:[#allocation5 + $0x238] sm:$0xff]
    %v275 = vld [vmem:[#allocation5 + $0x240] sm:$0xff]
    %v276 = vld [vmem:[#allocation5 + $0x248] sm:$0xff]
    %v277 = vld [vmem:[#allocation5 + $0x250] sm:$0xff]
    %v278 = vld [vmem:[#allocation5 + $0x258] sm:$0xff]
    %v279 = vld [vmem:[#allocation5 + $0x260] sm:$0xff]
    %v280 = vld [vmem:[#allocation5 + $0x268] sm:$0xff]
    %v281 = vld [vmem:[#allocation5 + $0x270] sm:$0xff]
    %v282 = vld [vmem:[#allocation5 + $0x278] sm:$0xff]
    %v283 = vld [vmem:[#allocation5 + $0x280] sm:$0xff]
    %v284 = vld [vmem:[#allocation5 + $0x288] sm:$0xff]
    %v285 = vld [vmem:[#allocation5 + $0x290] sm:$0xff]
    %v286 = vld [vmem:[#allocation5 + $0x298] sm:$0xff]
    %v287 = vld [vmem:[#allocation5 + $0x2a0] sm:$0xff]
    %v288 = vld [vmem:[#allocation5 + $0x2a8] sm:$0xff]
    %v289 = vld [vmem:[#allocation5 + $0x2b0] sm:$0xff]
    %v290 = vld [vmem:[#allocation5 + $0x2b8] sm:$0xff]
    %v291 = vld [vmem:[#allocation5 + $0x2c0] sm:$0xff]
    %v292 = vld [vmem:[#allocation5 + $0x2c8] sm:$0xff]
    %v293 = vld [vmem:[#allocation5 + $0x2d0] sm:$0xff]
    %v294 = vld [vmem:[#allocation5 + $0x2d8] sm:$0xff]
    %v295 = vld [vmem:[#allocation5 + $0x2e0] sm:$0xff]
    %v296 = vld [vmem:[#allocation5 + $0x2e8] sm:$0xff]
    %v297 = vld [vmem:[#allocation5 + $0x2f0] sm:$0xff]
    %v298 = vld [vmem:[#allocation5 + $0x2f8] sm:$0xff]
    %v299 = vld [vmem:[#allocation5 + $0x300] sm:$0xff]
    %v300 = vld [vmem:[#allocation5 + $0x308] sm:$0xff]
    %v301 = vld [vmem:[#allocation5 + $0x310] sm:$0xff]
    %v302 = vld [vmem:[#allocation5 + $0x318] sm:$0xff]
    %v303 = vld [vmem:[#allocation5 + $0x320] sm:$0xff]
    %v304 = vld [vmem:[#allocation5 + $0x328] sm:$0xff]
    %v305 = vld [vmem:[#allocation5 + $0x330] sm:$0xff]
    %v306 = vld [vmem:[#allocation5 + $0x338] sm:$0xff]
    %v307 = vld [vmem:[#allocation5 + $0x340] sm:$0xff]
    %v308 = vld [vmem:[#allocation5 + $0x348] sm:$0xff]
    %v309 = vld [vmem:[#allocation5 + $0x350] sm:$0xff]
    %v310 = vld [vmem:[#allocation5 + $0x358] sm:$0xff]
    %v311 = vld [vmem:[#allocation5 + $0x360] sm:$0xff]
    %v312 = vld [vmem:[#allocation5 + $0x368] sm:$0xff]
    %v313 = vld [vmem:[#allocation5 + $0x370] sm:$0xff]
    %v314 = vld [vmem:[#allocation5 + $0x378] sm:$0xff]
    %v315 = vld [vmem:[#allocation5 + $0x380] sm:$0xff]
    %v316 = vld [vmem:[#allocation5 + $0x388] sm:$0xff]
    %v317 = vld [vmem:[#allocation5 + $0x390] sm:$0xff]
    %v318 = vld [vmem:[#allocation5 + $0x398] sm:$0xff]
    %v319 = vld [vmem:[#allocation5 + $0x3a0] sm:$0xff]
    %v320 = vld [vmem:[#allocation5 + $0x3a8] sm:$0xff]
    %v321 = vld [vmem:[#allocation5 + $0x3b0] sm:$0xff]
    %v322 = vld [vmem:[#allocation5 + $0x3b8] sm:$0xff]
    %v323 = vld [vmem:[#allocation5 + $0x3c0] sm:$0xff]
    %v324 = vld [vmem:[#allocation5 + $0x3c8] sm:$0xff]
    %v325 = vld [vmem:[#allocation5 + $0x3d0] sm:$0xff]
    %v326 = vld [vmem:[#allocation5 + $0x3d8] sm:$0xff]
    %v327 = vld [vmem:[#allocation5 + $0x3e0] sm:$0xff]
    %v328 = vld [vmem:[#allocation5 + $0x3e8] sm:$0xff]
    %v329 = vld [vmem:[#allocation5 + $0x3f0] sm:$0xff]
    %v330 = vld [vmem:[#allocation5 + $0x3f8] sm:$0xff]
    %v331 = vld [vmem:[#allocation5 + $0x400] sm:$0xff]
    %v332 = vld [vmem:[#allocation5 + $0x408] sm:$0xff]
    %v333 = vld [vmem:[#allocation5 + $0x410] sm:$0xff]
    %v334 = vld [vmem:[#allocation5 + $0x418] sm:$0xff]
    %v335 = vld [vmem:[#allocation5 + $0x420] sm:$0xff]
    %v336 = vld [vmem:[#allocation5 + $0x428] sm:$0xff]
    %v337 = vld [vmem:[#allocation5 + $0x430] sm:$0xff]
    %v338 = vld [vmem:[#allocation5 + $0x438] sm:$0xff]
    %v339 = vld [vmem:[#allocation5 + $0x440] sm:$0xff]
    %v340 = vld [vmem:[#allocation5 + $0x448] sm:$0xff]
    %v341 = vld [vmem:[#allocation5 + $0x450] sm:$0xff]
    %v342 = vld [vmem:[#allocation5 + $0x458] sm:$0xff]
    %v343 = vld [vmem:[#allocation5 + $0x460] sm:$0xff]
    %v344 = vld [vmem:[#allocation5 + $0x468] sm:$0xff]
    %v345 = vld [vmem:[#allocation5 + $0x470] sm:$0xff]
    %v346 = vld [vmem:[#allocation5 + $0x478] sm:$0xff]
    %v347 = vld [vmem:[#allocation5 + $0x480] sm:$0xff]
    %v348 = vld [vmem:[#allocation5 + $0x488] sm:$0xff]
    %v349 = vld [vmem:[#allocation5 + $0x490] sm:$0xff]
    %v350 = vld [vmem:[#allocation5 + $0x498] sm:$0xff]
    %v351 = vld [vmem:[#allocation5 + $0x4a0] sm:$0xff]
    %v352 = vld [vmem:[#allocation5 + $0x4a8] sm:$0xff]
    %v353 = vld [vmem:[#allocation5 + $0x4b0] sm:$0xff]
    %v354 = vld [vmem:[#allocation5 + $0x4b8] sm:$0xff]
    %v355 = vld [vmem:[#allocation5 + $0x4c0] sm:$0xff]
    %v356 = vld [vmem:[#allocation5 + $0x4c8] sm:$0xff]
    %v357 = vld [vmem:[#allocation5 + $0x4d0] sm:$0xff]
    %v358 = vld [vmem:[#allocation5 + $0x4d8] sm:$0xff]
    %v359 = vld [vmem:[#allocation5 + $0x4e0] sm:$0xff]
    %v360 = vld [vmem:[#allocation5 + $0x4e8] sm:$0xff]
    %v361 = vld [vmem:[#allocation5 + $0x4f0] sm:$0xff]
    %v362 = vld [vmem:[#allocation5 + $0x4f8] sm:$0xff]
    %v363 = vld [vmem:[#allocation5 + $0x500] sm:$0xff]
    %v364 = vld [vmem:[#allocation5 + $0x508] sm:$0xff]
    %v365 = vld [vmem:[#allocation5 + $0x510] sm:$0xff]
    %v366 = vld [vmem:[#allocation5 + $0x518] sm:$0xff]
    %v367 = vld [vmem:[#allocation5 + $0x520] sm:$0xff]
    %v368 = vld [vmem:[#allocation5 + $0x528] sm:$0xff]
    %v369 = vld [vmem:[#allocation5 + $0x530] sm:$0xff]
    %v370 = vld [vmem:[#allocation5 + $0x538] sm:$0xff]
    %v371 = vld [vmem:[#allocation5 + $0x540] sm:$0xff]
    %v372 = vld [vmem:[#allocation5 + $0x548] sm:$0xff]
    %v373 = vld [vmem:[#allocation5 + $0x550] sm:$0xff]
    %v374 = vld [vmem:[#allocation5 + $0x558] sm:$0xff]
    %v375 = vld [vmem:[#allocation5 + $0x560] sm:$0xff]
    %v376 = vld [vmem:[#allocation5 + $0x568] sm:$0xff]
    %v377 = vld [vmem:[#allocation5 + $0x570] sm:$0xff]
    %v378 = vld [vmem:[#allocation5 + $0x578] sm:$0xff]
    %v379 = vld [vmem:[#allocation5 + $0x580] sm:$0xff]
    %v380 = vld [vmem:[#allocation5 + $0x588] sm:$0xff]
    %v381 = vld [vmem:[#allocation5 + $0x590] sm:$0xff]
    %v382 = vld [vmem:[#allocation5 + $0x598] sm:$0xff]
    %v383 = vld [vmem:[#allocation5 + $0x5a0] sm:$0xff]
    %v384 = vld [vmem:[#allocation5 + $0x5a8] sm:$0xff]
    %v385 = vld [vmem:[#allocation5 + $0x5b0] sm:$0xff]
    %v386 = vld [vmem:[#allocation5 + $0x5b8] sm:$0xff]
    %v387 = vld [vmem:[#allocation5 + $0x5c0] sm:$0xff]
    %v388 = vld [vmem:[#allocation5 + $0x5c8] sm:$0xff]
    %v389 = vld [vmem:[#allocation5 + $0x5d0] sm:$0xff]
    %v390 = vld [vmem:[#allocation5 + $0x5d8] sm:$0xff]
    %v391 = vld [vmem:[#allocation5 + $0x5e0] sm:$0xff]
    %v392 = vld [vmem:[#allocation5 + $0x5e8] sm:$0xff]
    %v393 = vld [vmem:[#allocation5 + $0x5f0] sm:$0xff]
    %v394 = vld [vmem:[#allocation5 + $0x5f8] sm:$0xff]
    %v395 = vld [vmem:[#allocation5 + $0x600] sm:$0xff]
    %v396 = vld [vmem:[#allocation5 + $0x608] sm:$0xff]
    %v397 = vld [vmem:[#allocation5 + $0x610] sm:$0xff]
    %v398 = vld [vmem:[#allocation5 + $0x618] sm:$0xff]
    %v399 = vld [vmem:[#allocation5 + $0x620] sm:$0xff]
    %v400 = vld [vmem:[#allocation5 + $0x628] sm:$0xff]
    %v401 = vld [vmem:[#allocation5 + $0x630] sm:$0xff]
    %v402 = vld [vmem:[#allocation5 + $0x638] sm:$0xff]
    %v403 = vld [vmem:[#allocation5 + $0x640] sm:$0xff]
    %v404 = vld [vmem:[#allocation5 + $0x648] sm:$0xff]
    %v405 = vld [vmem:[#allocation5 + $0x650] sm:$0xff]
    %v406 = vld [vmem:[#allocation5 + $0x658] sm:$0xff]
    %v407 = vld [vmem:[#allocation5 + $0x660] sm:$0xff]
    %v408 = vld [vmem:[#allocation5 + $0x668] sm:$0xff]
    %v409 = vld [vmem:[#allocation5 + $0x670] sm:$0xff]
    %v410 = vld [vmem:[#allocation5 + $0x678] sm:$0xff]
    %v411 = vld [vmem:[#allocation5 + $0x680] sm:$0xff]
    %v412 = vld [vmem:[#allocation5 + $0x688] sm:$0xff]
    %v413 = vld [vmem:[#allocation5 + $0x690] sm:$0xff]
    %v414 = vld [vmem:[#allocation5 + $0x698] sm:$0xff]
    %v415 = vld [vmem:[#allocation5 + $0x6a0] sm:$0xff]
    %v416 = vld [vmem:[#allocation5 + $0x6a8] sm:$0xff]
    %v417 = vld [vmem:[#allocation5 + $0x6b0] sm:$0xff]
    %v418 = vld [vmem:[#allocation5 + $0x6b8] sm:$0xff]
    %v419 = vld [vmem:[#allocation5 + $0x6c0] sm:$0xff]
    %v420 = vld [vmem:[#allocation5 + $0x6c8] sm:$0xff]
    %v421 = vld [vmem:[#allocation5 + $0x6d0] sm:$0xff]
    %v422 = vld [vmem:[#allocation5 + $0x6d8] sm:$0xff]
    %v423 = vld [vmem:[#allocation5 + $0x6e0] sm:$0xff]
    %v424 = vld [vmem:[#allocation5 + $0x6e8] sm:$0xff]
    %v425 = vld [vmem:[#allocation5 + $0x6f0] sm:$0xff]
    %v426 = vld [vmem:[#allocation5 + $0x6f8] sm:$0xff]
    %v427 = vld [vmem:[#allocation5 + $0x700] sm:$0xff]
    %v428 = vld [vmem:[#allocation5 + $0x708] sm:$0xff]
    %v429 = vld [vmem:[#allocation5 + $0x710] sm:$0xff]
    %v430 = vld [vmem:[#allocation5 + $0x718] sm:$0xff]
    %v431 = vld [vmem:[#allocation5 + $0x720] sm:$0xff]
    %v432 = vld [vmem:[#allocation5 + $0x728] sm:$0xff]
    %v433 = vld [vmem:[#allocation5 + $0x730] sm:$0xff]
    %v434 = vld [vmem:[#allocation5 + $0x738] sm:$0xff]
    %v435 = vld [vmem:[#allocation5 + $0x740] sm:$0xff]
    %v436 = vld [vmem:[#allocation5 + $0x748] sm:$0xff]
    %v437 = vld [vmem:[#allocation5 + $0x750] sm:$0xff]
    %v438 = vld [vmem:[#allocation5 + $0x758] sm:$0xff]
    %v439 = vld [vmem:[#allocation5 + $0x760] sm:$0xff]
    %v440 = vld [vmem:[#allocation5 + $0x768] sm:$0xff]
    %v441 = vld [vmem:[#allocation5 + $0x770] sm:$0xff]
    %v442 = vld [vmem:[#allocation5 + $0x778] sm:$0xff]
    %v443 = vld [vmem:[#allocation5 + $0x780] sm:$0xff]
    %v444 = vld [vmem:[#allocation5 + $0x788] sm:$0xff]
    %v445 = vld [vmem:[#allocation5 + $0x790] sm:$0xff]
    %v446 = vld [vmem:[#allocation5 + $0x798] sm:$0xff]
    %v447 = vld [vmem:[#allocation5 + $0x7a0] sm:$0xff]
    %v448 = vld [vmem:[#allocation5 + $0x7a8] sm:$0xff]
    %v449 = vld [vmem:[#allocation5 + $0x7b0] sm:$0xff]
    %v450 = vld [vmem:[#allocation5 + $0x7b8] sm:$0xff]
    %v451 = vld [vmem:[#allocation5 + $0x7c0] sm:$0xff]
    %v452 = vld [vmem:[#allocation5 + $0x7c8] sm:$0xff]
    %v453 = vld [vmem:[#allocation5 + $0x7d0] sm:$0xff]
    %v454 = vld [vmem:[#allocation5 + $0x7d8] sm:$0xff]
    %v455 = vld [vmem:[#allocation5 + $0x7e0] sm:$0xff]
    %v456 = vld [vmem:[#allocation5 + $0x7e8] sm:$0xff]
    %v457 = vld [vmem:[#allocation5 + $0x7f0] sm:$0xff]
    %v458 = vld [vmem:[#allocation5 + $0x7f8] sm:$0xff]
    %v459 = vld [vmem:[#allocation5 + $0x800] sm:$0xff]
    %v460 = vld [vmem:[#allocation5 + $0x808] sm:$0xff]
    %v461 = vld [vmem:[#allocation5 + $0x810] sm:$0xff]
    %v462 = vld [vmem:[#allocation5 + $0x818] sm:$0xff]
    %v463 = vld [vmem:[#allocation5 + $0x820] sm:$0xff]
    %v464 = vld [vmem:[#allocation5 + $0x828] sm:$0xff]
    %v465 = vld [vmem:[#allocation5 + $0x830] sm:$0xff]
    %v466 = vld [vmem:[#allocation5 + $0x838] sm:$0xff]
    %v467 = vld [vmem:[#allocation5 + $0x840] sm:$0xff]
    %v468 = vld [vmem:[#allocation5 + $0x848] sm:$0xff]
    %v469 = vld [vmem:[#allocation5 + $0x850] sm:$0xff]
    %v470 = vld [vmem:[#allocation5 + $0x858] sm:$0xff]
    %v471 = vld [vmem:[#allocation5 + $0x860] sm:$0xff]
    %v472 = vld [vmem:[#allocation5 + $0x868] sm:$0xff]
    %v473 = vld [vmem:[#allocation5 + $0x870] sm:$0xff]
    %v474 = vld [vmem:[#allocation5 + $0x878] sm:$0xff]
    %v475 = vld [vmem:[#allocation5 + $0x880] sm:$0xff]
    %v476 = vld [vmem:[#allocation5 + $0x888] sm:$0xff]
    %v477 = vld [vmem:[#allocation5 + $0x890] sm:$0xff]
    %v478 = vld [vmem:[#allocation5 + $0x898] sm:$0xff]
    %v479 = vld [vmem:[#allocation5 + $0x8a0] sm:$0xff]
    %v480 = vld [vmem:[#allocation5 + $0x8a8] sm:$0xff]
    %v481 = vld [vmem:[#allocation5 + $0x8b0] sm:$0xff]
    %v482 = vld [vmem:[#allocation5 + $0x8b8] sm:$0xff]
    %v483 = vld [vmem:[#allocation5 + $0x8c0] sm:$0xff]
    %v484 = vld [vmem:[#allocation5 + $0x8c8] sm:$0xff]
    %v485 = vld [vmem:[#allocation5 + $0x8d0] sm:$0xff]
    %v486 = vld [vmem:[#allocation5 + $0x8d8] sm:$0xff]
    %v487 = vld [vmem:[#allocation5 + $0x8e0] sm:$0xff]
    %v488 = vld [vmem:[#allocation5 + $0x8e8] sm:$0xff]
    %v489 = vld [vmem:[#allocation5 + $0x8f0] sm:$0xff]
    %v490 = vld [vmem:[#allocation5 + $0x8f8] sm:$0xff]
    %v491 = vld [vmem:[#allocation5 + $0x900] sm:$0xff]
    %v492 = vld [vmem:[#allocation5 + $0x908] sm:$0xff]
    %v493 = vld [vmem:[#allocation5 + $0x910] sm:$0xff]
    %v494 = vld [vmem:[#allocation5 + $0x918] sm:$0xff]
    %v495 = vld [vmem:[#allocation5 + $0x920] sm:$0xff]
    %v496 = vld [vmem:[#allocation5 + $0x928] sm:$0xff]
    %v497 = vld [vmem:[#allocation5 + $0x930] sm:$0xff]
    %v498 = vld [vmem:[#allocation5 + $0x938] sm:$0xff]
    %v499 = vld [vmem:[#allocation5 + $0x940] sm:$0xff]
    %v500 = vld [vmem:[#allocation5 + $0x948] sm:$0xff]
    %v501 = vld [vmem:[#allocation5 + $0x950] sm:$0xff]
    %v502 = vld [vmem:[#allocation5 + $0x958] sm:$0xff]
    %v503 = vld [vmem:[#allocation5 + $0x960] sm:$0xff]
    %v504 = vld [vmem:[#allocation5 + $0x968] sm:$0xff]
    %v505 = vld [vmem:[#allocation5 + $0x970] sm:$0xff]
    %v506 = vld [vmem:[#allocation5 + $0x978] sm:$0xff]
    %v507 = vld [vmem:[#allocation5 + $0x980] sm:$0xff]
    %v508 = vld [vmem:[#allocation5 + $0x988] sm:$0xff]
    %v509 = vld [vmem:[#allocation5 + $0x990] sm:$0xff]
    %v510 = vld [vmem:[#allocation5 + $0x998] sm:$0xff]
    %v511 = vld [vmem:[#allocation5 + $0x9a0] sm:$0xff]
    %v512 = vld [vmem:[#allocation5 + $0x9a8] sm:$0xff]
    %v513 = vld [vmem:[#allocation5 + $0x9b0] sm:$0xff]
    %v514 = vld [vmem:[#allocation5 + $0x9b8] sm:$0xff]
    %v515 = vld [vmem:[#allocation5 + $0x9c0] sm:$0xff]
    %v516 = vld [vmem:[#allocation5 + $0x9c8] sm:$0xff]
    %v517 = vld [vmem:[#allocation5 + $0x9d0] sm:$0xff]
    %v518 = vld [vmem:[#allocation5 + $0x9d8] sm:$0xff]
    %v519 = vld [vmem:[#allocation5 + $0x9e0] sm:$0xff]
    %v520 = vld [vmem:[#allocation5 + $0x9e8] sm:$0xff]
    %v521 = vld [vmem:[#allocation5 + $0x9f0] sm:$0xff]
    %v522 = vld [vmem:[#allocation5 + $0x9f8] sm:$0xff]
    %v523 = vld [vmem:[#allocation5 + $0xa00] sm:$0xff]
    %v524 = vld [vmem:[#allocation5 + $0xa08] sm:$0xff]
    %v525 = vld [vmem:[#allocation5 + $0xa10] sm:$0xff]
    %v526 = vld [vmem:[#allocation5 + $0xa18] sm:$0xff]
    %v527 = vld [vmem:[#allocation5 + $0xa20] sm:$0xff]
    %v528 = vld [vmem:[#allocation5 + $0xa28] sm:$0xff]
    %v529 = vld [vmem:[#allocation5 + $0xa30] sm:$0xff]
    %v530 = vld [vmem:[#allocation5 + $0xa38] sm:$0xff]
    %v531 = vld [vmem:[#allocation5 + $0xa40] sm:$0xff]
    %v532 = vld [vmem:[#allocation5 + $0xa48] sm:$0xff]
    %v533 = vld [vmem:[#allocation5 + $0xa50] sm:$0xff]
    %v534 = vld [vmem:[#allocation5 + $0xa58] sm:$0xff]
    %v535 = vld [vmem:[#allocation5 + $0xa60] sm:$0xff]
    %v536 = vld [vmem:[#allocation5 + $0xa68] sm:$0xff]
    %v537 = vld [vmem:[#allocation5 + $0xa70] sm:$0xff]
    %v538 = vld [vmem:[#allocation5 + $0xa78] sm:$0xff]
    %v539 = vld [vmem:[#allocation5 + $0xa80] sm:$0xff]
    %v540 = vld [vmem:[#allocation5 + $0xa88] sm:$0xff]
    %v541 = vld [vmem:[#allocation5 + $0xa90] sm:$0xff]
    %v542 = vld [vmem:[#allocation5 + $0xa98] sm:$0xff]
    %v543 = vld [vmem:[#allocation5 + $0xaa0] sm:$0xff]
    %v544 = vld [vmem:[#allocation5 + $0xaa8] sm:$0xff]
    %v545 = vld [vmem:[#allocation5 + $0xab0] sm:$0xff]
    %v546 = vld [vmem:[#allocation5 + $0xab8] sm:$0xff]
    %v547 = vld [vmem:[#allocation5 + $0xac0] sm:$0xff]
    %v548 = vld [vmem:[#allocation5 + $0xac8] sm:$0xff]
    %v549 = vld [vmem:[#allocation5 + $0xad0] sm:$0xff]
    %v550 = vld [vmem:[#allocation5 + $0xad8] sm:$0xff]
    %v551 = vld [vmem:[#allocation5 + $0xae0] sm:$0xff]
    %v552 = vld [vmem:[#allocation5 + $0xae8] sm:$0xff]
    %v553 = vld [vmem:[#allocation5 + $0xaf0] sm:$0xff]
    %v554 = vld [vmem:[#allocation5 + $0xaf8] sm:$0xff]
    %v555 = vld [vmem:[#allocation5 + $0xb00] sm:$0xff]
    %v556 = vld [vmem:[#allocation5 + $0xb08] sm:$0xff]
    %v557 = vld [vmem:[#allocation5 + $0xb10] sm:$0xff]
    %v558 = vld [vmem:[#allocation5 + $0xb18] sm:$0xff]
    %v559 = vld [vmem:[#allocation5 + $0xb20] sm:$0xff]
    %v560 = vld [vmem:[#allocation5 + $0xb28] sm:$0xff]
    %v561 = vld [vmem:[#allocation5 + $0xb30] sm:$0xff]
    %v562 = vld [vmem:[#allocation5 + $0xb38] sm:$0xff]
    %v563 = vld [vmem:[#allocation5 + $0xb40] sm:$0xff]
    %v564 = vld [vmem:[#allocation5 + $0xb48] sm:$0xff]
    %v565 = vld [vmem:[#allocation5 + $0xb50] sm:$0xff]
    %v566 = vld [vmem:[#allocation5 + $0xb58] sm:$0xff]
    %v567 = vld [vmem:[#allocation5 + $0xb60] sm:$0xff]
    %v568 = vld [vmem:[#allocation5 + $0xb68] sm:$0xff]
    %v569 = vld [vmem:[#allocation5 + $0xb70] sm:$0xff]
    %v570 = vld [vmem:[#allocation5 + $0xb78] sm:$0xff]
    %v571 = vld [vmem:[#allocation5 + $0xb80] sm:$0xff]
    %v572 = vld [vmem:[#allocation5 + $0xb88] sm:$0xff]
    %v573 = vld [vmem:[#allocation5 + $0xb90] sm:$0xff]
    %v574 = vld [vmem:[#allocation5 + $0xb98] sm:$0xff]
    %v575 = vld [vmem:[#allocation5 + $0xba0] sm:$0xff]
    %v576 = vld [vmem:[#allocation5 + $0xba8] sm:$0xff]
    %v577 = vld [vmem:[#allocation5 + $0xbb0] sm:$0xff]
    %v578 = vld [vmem:[#allocation5 + $0xbb8] sm:$0xff]
    %v579 = vld [vmem:[#allocation5 + $0xbc0] sm:$0xff]
    %v580 = vld [vmem:[#allocation5 + $0xbc8] sm:$0xff]
    %v581 = vld [vmem:[#allocation5 + $0xbd0] sm:$0xff]
    %v582 = vld [vmem:[#allocation5 + $0xbd8] sm:$0xff]
    %v583 = vld [vmem:[#allocation5 + $0xbe0] sm:$0xff]
    %v584 = vld [vmem:[#allocation5 + $0xbe8] sm:$0xff]
    %v585 = vld [vmem:[#allocation5 + $0xbf0] sm:$0xff]
    %v586 = vld [vmem:[#allocation5 + $0xbf8] sm:$0xff]
    %v587 = vld [vmem:[#allocation5 + $0xc00] sm:$0xff]
    %v588 = vld [vmem:[#allocation5 + $0xc08] sm:$0xff]
    %v589 = vld [vmem:[#allocation5 + $0xc10] sm:$0xff]
    %v590 = vld [vmem:[#allocation5 + $0xc18] sm:$0xff]
    %v591 = vld [vmem:[#allocation5 + $0xc20] sm:$0xff]
    %v592 = vld [vmem:[#allocation5 + $0xc28] sm:$0xff]
    %v593 = vld [vmem:[#allocation5 + $0xc30] sm:$0xff]
    %v594 = vld [vmem:[#allocation5 + $0xc38] sm:$0xff]
    %v595 = vld [vmem:[#allocation5 + $0xc40] sm:$0xff]
    %v596 = vld [vmem:[#allocation5 + $0xc48] sm:$0xff]
    %v597 = vld [vmem:[#allocation5 + $0xc50] sm:$0xff]
    %v598 = vld [vmem:[#allocation5 + $0xc58] sm:$0xff]
    %v599 = vld [vmem:[#allocation5 + $0xc60] sm:$0xff]
    %v600 = vld [vmem:[#allocation5 + $0xc68] sm:$0xff]
    %v601 = vld [vmem:[#allocation5 + $0xc70] sm:$0xff]
    %v602 = vld [vmem:[#allocation5 + $0xc78] sm:$0xff]
    %v603 = vld [vmem:[#allocation5 + $0xc80] sm:$0xff]
    %v604 = vld [vmem:[#allocation5 + $0xc88] sm:$0xff]
    %v605 = vld [vmem:[#allocation5 + $0xc90] sm:$0xff]
    %v606 = vld [vmem:[#allocation5 + $0xc98] sm:$0xff]
    %v607 = vld [vmem:[#allocation5 + $0xca0] sm:$0xff]
    %v608 = vld [vmem:[#allocation5 + $0xca8] sm:$0xff]
    %v609 = vld [vmem:[#allocation5 + $0xcb0] sm:$0xff]
    %v610 = vld [vmem:[#allocation5 + $0xcb8] sm:$0xff]
    %v611 = vld [vmem:[#allocation5 + $0xcc0] sm:$0xff]
    %v612 = vld [vmem:[#allocation5 + $0xcc8] sm:$0xff]
    %v613 = vld [vmem:[#allocation5 + $0xcd0] sm:$0xff]
    %v614 = vld [vmem:[#allocation5 + $0xcd8] sm:$0xff]
    %v615 = vld [vmem:[#allocation5 + $0xce0] sm:$0xff]
    %v616 = vld [vmem:[#allocation5 + $0xce8] sm:$0xff]
    %v617 = vld [vmem:[#allocation5 + $0xcf0] sm:$0xff]
    %v618 = vld [vmem:[#allocation5 + $0xcf8] sm:$0xff]
    %v619 = vld [vmem:[#allocation5 + $0xd00] sm:$0xff]
    %v620 = vld [vmem:[#allocation5 + $0xd08] sm:$0xff]
    %v621 = vld [vmem:[#allocation5 + $0xd10] sm:$0xff]
    %v622 = vld [vmem:[#allocation5 + $0xd18] sm:$0xff]
    %v623 = vld [vmem:[#allocation5 + $0xd20] sm:$0xff]
    %v624 = vld [vmem:[#allocation5 + $0xd28] sm:$0xff]
    %v625 = vld [vmem:[#allocation5 + $0xd30] sm:$0xff]
    %v626 = vld [vmem:[#allocation5 + $0xd38] sm:$0xff]
    %v627 = vld [vmem:[#allocation5 + $0xd40] sm:$0xff]
    %v628 = vld [vmem:[#allocation5 + $0xd48] sm:$0xff]
    %v629 = vld [vmem:[#allocation5 + $0xd50] sm:$0xff]
    %v630 = vld [vmem:[#allocation5 + $0xd58] sm:$0xff]
    %v631 = vld [vmem:[#allocation5 + $0xd60] sm:$0xff]
    %v632 = vld [vmem:[#allocation5 + $0xd68] sm:$0xff]
    %v633 = vld [vmem:[#allocation5 + $0xd70] sm:$0xff]
    %v634 = vld [vmem:[#allocation5 + $0xd78] sm:$0xff]
    %v635 = vld [vmem:[#allocation5 + $0xd80] sm:$0xff]
    %v636 = vld [vmem:[#allocation5 + $0xd88] sm:$0xff]
    %v637 = vld [vmem:[#allocation5 + $0xd90] sm:$0xff]
    %v638 = vld [vmem:[#allocation5 + $0xd98] sm:$0xff]
    %v639 = vld [vmem:[#allocation5 + $0xda0] sm:$0xff]
    %v640 = vld [vmem:[#allocation5 + $0xda8] sm:$0xff]
    %v641 = vld [vmem:[#allocation5 + $0xdb0] sm:$0xff]
    %v642 = vld [vmem:[#allocation5 + $0xdb8] sm:$0xff]
    %v643 = vld [vmem:[#allocation5 + $0xdc0] sm:$0xff]
    %v644 = vld [vmem:[#allocation5 + $0xdc8] sm:$0xff]
    %v645 = vld [vmem:[#allocation5 + $0xdd0] sm:$0xff]
    %v646 = vld [vmem:[#allocation5 + $0xdd8] sm:$0xff]
    %v647 = vld [vmem:[#allocation5 + $0xde0] sm:$0xff]
    %v648 = vld [vmem:[#allocation5 + $0xde8] sm:$0xff]
    %v649 = vld [vmem:[#allocation5 + $0xdf0] sm:$0xff]
    %v650 = vld [vmem:[#allocation5 + $0xdf8] sm:$0xff]
    %v651 = vld [vmem:[#allocation5 + $0xe00] sm:$0xff]
    %v652 = vld [vmem:[#allocation5 + $0xe08] sm:$0xff]
    %v653 = vld [vmem:[#allocation5 + $0xe10] sm:$0xff]
    %v654 = vld [vmem:[#allocation5 + $0xe18] sm:$0xff]
    %v655 = vld [vmem:[#allocation5 + $0xe20] sm:$0xff]
    %v656 = vld [vmem:[#allocation5 + $0xe28] sm:$0xff]
    %v657 = vld [vmem:[#allocation5 + $0xe30] sm:$0xff]
    %v658 = vld [vmem:[#allocation5 + $0xe38] sm:$0xff]
    %v659 = vld [vmem:[#allocation5 + $0xe40] sm:$0xff]
    %v660 = vld [vmem:[#allocation5 + $0xe48] sm:$0xff]
    %v661 = vld [vmem:[#allocation5 + $0xe50] sm:$0xff]
    %v662 = vld [vmem:[#allocation5 + $0xe58] sm:$0xff]
    %v663 = vld [vmem:[#allocation5 + $0xe60] sm:$0xff]
    %v664 = vld [vmem:[#allocation5 + $0xe68] sm:$0xff]
    %v665 = vld [vmem:[#allocation5 + $0xe70] sm:$0xff]
    %v666 = vld [vmem:[#allocation5 + $0xe78] sm:$0xff]
    %v667 = vld [vmem:[#allocation5 + $0xe80] sm:$0xff]
    %v668 = vld [vmem:[#allocation5 + $0xe88] sm:$0xff]
    %v669 = vld [vmem:[#allocation5 + $0xe90] sm:$0xff]
    %v670 = vld [vmem:[#allocation5 + $0xe98] sm:$0xff]
    %v671 = vld [vmem:[#allocation5 + $0xea0] sm:$0xff]
    %v672 = vld [vmem:[#allocation5 + $0xea8] sm:$0xff]
    %v673 = vld [vmem:[#allocation5 + $0xeb0] sm:$0xff]
    %v674 = vld [vmem:[#allocation5 + $0xeb8] sm:$0xff]
    %v675 = vld [vmem:[#allocation5 + $0xec0] sm:$0xff]
    %v676 = vld [vmem:[#allocation5 + $0xec8] sm:$0xff]
    %v677 = vld [vmem:[#allocation5 + $0xed0] sm:$0xff]
    %v678 = vld [vmem:[#allocation5 + $0xed8] sm:$0xff]
    %v679 = vld [vmem:[#allocation5 + $0xee0] sm:$0xff]
    %v680 = vld [vmem:[#allocation5 + $0xee8] sm:$0xff]
    %v681 = vld [vmem:[#allocation5 + $0xef0] sm:$0xff]
    %v682 = vld [vmem:[#allocation5 + $0xef8] sm:$0xff]
    %v683 = vld [vmem:[#allocation5 + $0xf00] sm:$0xff]
    %v684 = vld [vmem:[#allocation5 + $0xf08] sm:$0xff]
    %v685 = vld [vmem:[#allocation5 + $0xf10] sm:$0xff]
    %v686 = vld [vmem:[#allocation5 + $0xf18] sm:$0xff]
    %v687 = vld [vmem:[#allocation5 + $0xf20] sm:$0xff]
    %v688 = vld [vmem:[#allocation5 + $0xf28] sm:$0xff]
    %v689 = vld [vmem:[#allocation5 + $0xf30] sm:$0xff]
    %v690 = vld [vmem:[#allocation5 + $0xf38] sm:$0xff]
    %v691 = vld [vmem:[#allocation5 + $0xf40] sm:$0xff]
    %v692 = vld [vmem:[#allocation5 + $0xf48] sm:$0xff]
    %v693 = vld [vmem:[#allocation5 + $0xf50] sm:$0xff]
    %v694 = vld [vmem:[#allocation5 + $0xf58] sm:$0xff]
    %v695 = vld [vmem:[#allocation5 + $0xf60] sm:$0xff]
    %v696 = vld [vmem:[#allocation5 + $0xf68] sm:$0xff]
    %v697 = vld [vmem:[#allocation5 + $0xf70] sm:$0xff]
    %v698 = vld [vmem:[#allocation5 + $0xf78] sm:$0xff]
    %v699 = vld [vmem:[#allocation5 + $0xf80] sm:$0xff]
    %v700 = vld [vmem:[#allocation5 + $0xf88] sm:$0xff]
    %v701 = vld [vmem:[#allocation5 + $0xf90] sm:$0xff]
    %v702 = vld [vmem:[#allocation5 + $0xf98] sm:$0xff]
    %v703 = vld [vmem:[#allocation5 + $0xfa0] sm:$0xff]
    %v704 = vld [vmem:[#allocation5 + $0xfa8] sm:$0xff]
    %v705 = vld [vmem:[#allocation5 + $0xfb0] sm:$0xff]
    %v706 = vld [vmem:[#allocation5 + $0xfb8] sm:$0xff]
    %v707 = vld [vmem:[#allocation5 + $0xfc0] sm:$0xff]
    %v708 = vld [vmem:[#allocation5 + $0xfc8] sm:$0xff]
    %v709 = vld [vmem:[#allocation5 + $0xfd0] sm:$0xff]
    %v710 = vld [vmem:[#allocation5 + $0xfd8] sm:$0xff]
    %v711 = vld [vmem:[#allocation5 + $0xfe0] sm:$0xff]
    %v712 = vld [vmem:[#allocation5 + $0xfe8] sm:$0xff]
    %v713 = vld [vmem:[#allocation5 + $0xff0] sm:$0xff]
    %v714 = vld [vmem:[#allocation5 + $0xff8] sm:$0xff]
    %v715 = vld [vmem:[#allocation5 + $0x1000] sm:$0xff]
    %v716 = vld [vmem:[#allocation5 + $0x1008] sm:$0xff]
    %v717 = vld [vmem:[#allocation5 + $0x1010] sm:$0xff]
    %v718 = vld [vmem:[#allocation5 + $0x1018] sm:$0xff]
    %v719 = vld [vmem:[#allocation5 + $0x1020] sm:$0xff]
    %v720 = vld [vmem:[#allocation5 + $0x1028] sm:$0xff]
    %v721 = vld [vmem:[#allocation5 + $0x1030] sm:$0xff]
    %v722 = vld [vmem:[#allocation5 + $0x1038] sm:$0xff]
    %v723 = vld [vmem:[#allocation5 + $0x1040] sm:$0xff]
    %v724 = vld [vmem:[#allocation5 + $0x1048] sm:$0xff]
    %v725 = vld [vmem:[#allocation5 + $0x1050] sm:$0xff]
    %v726 = vld [vmem:[#allocation5 + $0x1058] sm:$0xff]
    %v727 = vld [vmem:[#allocation5 + $0x1060] sm:$0xff]
    %v728 = vld [vmem:[#allocation5 + $0x1068] sm:$0xff]
    %v729 = vld [vmem:[#allocation5 + $0x1070] sm:$0xff]
    %v730 = vld [vmem:[#allocation5 + $0x1078] sm:$0xff]
    %v731 = vld [vmem:[#allocation5 + $0x1080] sm:$0xff]
    %v732 = vld [vmem:[#allocation5 + $0x1088] sm:$0xff]
    %v733 = vld [vmem:[#allocation5 + $0x1090] sm:$0xff]
    %v734 = vld [vmem:[#allocation5 + $0x1098] sm:$0xff]
    %v735 = vld [vmem:[#allocation5 + $0x10a0] sm:$0xff]
    %v736 = vld [vmem:[#allocation5 + $0x10a8] sm:$0xff]
    %v737 = vld [vmem:[#allocation5 + $0x10b0] sm:$0xff]
    %v738 = vld [vmem:[#allocation5 + $0x10b8] sm:$0xff]
    %v739 = vld [vmem:[#allocation5 + $0x10c0] sm:$0xff]
    %v740 = vld [vmem:[#allocation5 + $0x10c8] sm:$0xff]
    %v741 = vld [vmem:[#allocation5 + $0x10d0] sm:$0xff]
    %v742 = vld [vmem:[#allocation5 + $0x10d8] sm:$0xff]
    %v743 = vld [vmem:[#allocation5 + $0x10e0] sm:$0xff]
    %v744 = vld [vmem:[#allocation5 + $0x10e8] sm:$0xff]
    %v745 = vld [vmem:[#allocation5 + $0x10f0] sm:$0xff]
    %v746 = vld [vmem:[#allocation5 + $0x10f8] sm:$0xff]
    %v747 = vld [vmem:[#allocation5 + $0x1100] sm:$0xff]
    %v748 = vld [vmem:[#allocation5 + $0x1108] sm:$0xff]
    %v749 = vld [vmem:[#allocation5 + $0x1110] sm:$0xff]
    %v750 = vld [vmem:[#allocation5 + $0x1118] sm:$0xff]
    %v751 = vld [vmem:[#allocation5 + $0x1120] sm:$0xff]
    %v752 = vld [vmem:[#allocation5 + $0x1128] sm:$0xff]
    %v753 = vld [vmem:[#allocation5 + $0x1130] sm:$0xff]
    %v754 = vld [vmem:[#allocation5 + $0x1138] sm:$0xff]
    %v755 = vld [vmem:[#allocation5 + $0x1140] sm:$0xff]
    %v756 = vld [vmem:[#allocation5 + $0x1148] sm:$0xff]
    %v757 = vld [vmem:[#allocation5 + $0x1150] sm:$0xff]
    %v758 = vld [vmem:[#allocation5 + $0x1158] sm:$0xff]
    %v759 = vld [vmem:[#allocation5 + $0x1160] sm:$0xff]
    %v760 = vld [vmem:[#allocation5 + $0x1168] sm:$0xff]
    %v761 = vld [vmem:[#allocation5 + $0x1170] sm:$0xff]
    %v762 = vld [vmem:[#allocation5 + $0x1178] sm:$0xff]
    %v763 = vld [vmem:[#allocation5 + $0x1180] sm:$0xff]
    %v764 = vld [vmem:[#allocation5 + $0x1188] sm:$0xff]
    %v765 = vld [vmem:[#allocation5 + $0x1190] sm:$0xff]
    %v766 = vld [vmem:[#allocation5 + $0x1198] sm:$0xff]
    %v767 = vld [vmem:[#allocation5 + $0x11a0] sm:$0xff]
    %v768 = vld [vmem:[#allocation5 + $0x11a8] sm:$0xff]
    %v769 = vld [vmem:[#allocation5 + $0x11b0] sm:$0xff]
    %v770 = vld [vmem:[#allocation5 + $0x11b8] sm:$0xff]
    %v771 = vld [vmem:[#allocation5 + $0x11c0] sm:$0xff]
    %v772 = vld [vmem:[#allocation5 + $0x11c8] sm:$0xff]
    %v773 = vld [vmem:[#allocation5 + $0x11d0] sm:$0xff]
    %v774 = vld [vmem:[#allocation5 + $0x11d8] sm:$0xff]
    %v775 = vld [vmem:[#allocation5 + $0x11e0] sm:$0xff]
    %v776 = vld [vmem:[#allocation5 + $0x11e8] sm:$0xff]
    %v777 = vld [vmem:[#allocation5 + $0x11f0] sm:$0xff]
    %v778 = vld [vmem:[#allocation5 + $0x11f8] sm:$0xff]
    %v779 = vld [vmem:[#allocation5 + $0x1200] sm:$0xff]
    %v780 = vld [vmem:[#allocation5 + $0x1208] sm:$0xff]
    %v781 = vld [vmem:[#allocation5 + $0x1210] sm:$0xff]
    %v782 = vld [vmem:[#allocation5 + $0x1218] sm:$0xff]
    %v783 = vld [vmem:[#allocation5 + $0x1220] sm:$0xff]
    %v784 = vld [vmem:[#allocation5 + $0x1228] sm:$0xff]
    %v785 = vld [vmem:[#allocation5 + $0x1230] sm:$0xff]
    %v786 = vld [vmem:[#allocation5 + $0x1238] sm:$0xff]
    %v787 = vld [vmem:[#allocation5 + $0x1240] sm:$0xff]
    %v788 = vld [vmem:[#allocation5 + $0x1248] sm:$0xff]
    %v789 = vld [vmem:[#allocation5 + $0x1250] sm:$0xff]
    %v790 = vld [vmem:[#allocation5 + $0x1258] sm:$0xff]
    %v791 = vld [vmem:[#allocation5 + $0x1260] sm:$0xff]
    %v792 = vld [vmem:[#allocation5 + $0x1268] sm:$0xff]
    %v793 = vld [vmem:[#allocation5 + $0x1270] sm:$0xff]
    %v794 = vld [vmem:[#allocation5 + $0x1278] sm:$0xff]
    %v795 = vld [vmem:[#allocation5 + $0x1280] sm:$0xff]
    %v796 = vld [vmem:[#allocation5 + $0x1288] sm:$0xff]
    %v797 = vld [vmem:[#allocation5 + $0x1290] sm:$0xff]
    %v798 = vld [vmem:[#allocation5 + $0x1298] sm:$0xff]
    %v799 = vld [vmem:[#allocation5 + $0x12a0] sm:$0xff]
    %v800 = vld [vmem:[#allocation5 + $0x12a8] sm:$0xff]
    %v801 = vld [vmem:[#allocation5 + $0x12b0] sm:$0xff]
    %v802 = vld [vmem:[#allocation5 + $0x12b8] sm:$0xff]
    %v803 = vld [vmem:[#allocation5 + $0x12c0] sm:$0xff]
    %v804 = vld [vmem:[#allocation5 + $0x12c8] sm:$0xff]
    %v805 = vld [vmem:[#allocation5 + $0x12d0] sm:$0xff]
    %v806 = vld [vmem:[#allocation5 + $0x12d8] sm:$0xff]
    %v807 = vld [vmem:[#allocation5 + $0x12e0] sm:$0xff]
    %v808 = vld [vmem:[#allocation5 + $0x12e8] sm:$0xff]
    %v809 = vld [vmem:[#allocation5 + $0x12f0] sm:$0xff]
    %v810 = vld [vmem:[#allocation5 + $0x12f8] sm:$0xff]
    %v811 = vld [vmem:[#allocation5 + $0x1300] sm:$0xff]
    %v812 = vld [vmem:[#allocation5 + $0x1308] sm:$0xff]
    %v813 = vld [vmem:[#allocation5 + $0x1310] sm:$0xff]
    %v814 = vld [vmem:[#allocation5 + $0x1318] sm:$0xff]
    %v815 = vld [vmem:[#allocation5 + $0x1320] sm:$0xff]
    %v816 = vld [vmem:[#allocation5 + $0x1328] sm:$0xff]
    %v817 = vld [vmem:[#allocation5 + $0x1330] sm:$0xff]
    %v818 = vld [vmem:[#allocation5 + $0x1338] sm:$0xff]
    %v819 = vld [vmem:[#allocation5 + $0x1340] sm:$0xff]
    %v820 = vld [vmem:[#allocation5 + $0x1348] sm:$0xff]
    %v821 = vld [vmem:[#allocation5 + $0x1350] sm:$0xff]
    %v822 = vld [vmem:[#allocation5 + $0x1358] sm:$0xff]
    %v823 = vld [vmem:[#allocation5 + $0x1360] sm:$0xff]
    %v824 = vld [vmem:[#allocation5 + $0x1368] sm:$0xff]
    %v825 = vld [vmem:[#allocation5 + $0x1370] sm:$0xff]
    %v826 = vld [vmem:[#allocation5 + $0x1378] sm:$0xff]
    %v827 = vld [vmem:[#allocation5 + $0x1380] sm:$0xff]
    %v828 = vld [vmem:[#allocation5 + $0x1388] sm:$0xff]
    %v829 = vld [vmem:[#allocation5 + $0x1390] sm:$0xff]
    %v830 = vld [vmem:[#allocation5 + $0x1398] sm:$0xff]
    %v831 = vld [vmem:[#allocation5 + $0x13a0] sm:$0xff]
    %v832 = vld [vmem:[#allocation5 + $0x13a8] sm:$0xff]
    %v833 = vld [vmem:[#allocation5 + $0x13b0] sm:$0xff]
    %v834 = vld [vmem:[#allocation5 + $0x13b8] sm:$0xff]
    %v835 = vld [vmem:[#allocation5 + $0x13c0] sm:$0xff]
    %v836 = vld [vmem:[#allocation5 + $0x13c8] sm:$0xff]
    %v837 = vld [vmem:[#allocation5 + $0x13d0] sm:$0xff]
    %v838 = vld [vmem:[#allocation5 + $0x13d8] sm:$0xff]
    %v839 = vld [vmem:[#allocation5 + $0x13e0] sm:$0xff]
    %v840 = vld [vmem:[#allocation5 + $0x13e8] sm:$0xff]
    %v841 = vld [vmem:[#allocation5 + $0x13f0] sm:$0xff]
    %v842 = vld [vmem:[#allocation5 + $0x13f8] sm:$0xff]
    %v843 = vld [vmem:[#allocation5 + $0x1400] sm:$0xff]
    %v844 = vld [vmem:[#allocation5 + $0x1408] sm:$0xff]
    %v845 = vld [vmem:[#allocation5 + $0x1410] sm:$0xff]
    %v846 = vld [vmem:[#allocation5 + $0x1418] sm:$0xff]
    %v847 = vld [vmem:[#allocation5 + $0x1420] sm:$0xff]
    %v848 = vld [vmem:[#allocation5 + $0x1428] sm:$0xff]
    %v849 = vld [vmem:[#allocation5 + $0x1430] sm:$0xff]
    %v850 = vld [vmem:[#allocation5 + $0x1438] sm:$0xff]
    %v851 = vld [vmem:[#allocation5 + $0x1440] sm:$0xff]
    %v852 = vld [vmem:[#allocation5 + $0x1448] sm:$0xff]
    %v853 = vld [vmem:[#allocation5 + $0x1450] sm:$0xff]
    %v854 = vld [vmem:[#allocation5 + $0x1458] sm:$0xff]
    %v855 = vld [vmem:[#allocation5 + $0x1460] sm:$0xff]
    %v856 = vld [vmem:[#allocation5 + $0x1468] sm:$0xff]
    %v857 = vld [vmem:[#allocation5 + $0x1470] sm:$0xff]
    %v858 = vld [vmem:[#allocation5 + $0x1478] sm:$0xff]
    %v859 = vld [vmem:[#allocation5 + $0x1480] sm:$0xff]
    %v860 = vld [vmem:[#allocation5 + $0x1488] sm:$0xff]
    %v861 = vld [vmem:[#allocation5 + $0x1490] sm:$0xff]
    %v862 = vld [vmem:[#allocation5 + $0x1498] sm:$0xff]
    %v863 = vld [vmem:[#allocation5 + $0x14a0] sm:$0xff]
    %v864 = vld [vmem:[#allocation5 + $0x14a8] sm:$0xff]
    %v865 = vld [vmem:[#allocation5 + $0x14b0] sm:$0xff]
    %v866 = vld [vmem:[#allocation5 + $0x14b8] sm:$0xff]
    %v867 = vld [vmem:[#allocation5 + $0x14c0] sm:$0xff]
    %v868 = vld [vmem:[#allocation5 + $0x14c8] sm:$0xff]
    %v869 = vld [vmem:[#allocation5 + $0x14d0] sm:$0xff]
    %v870 = vld [vmem:[#allocation5 + $0x14d8] sm:$0xff]
    %v871 = vld [vmem:[#allocation5 + $0x14e0] sm:$0xff]
    %v872 = vld [vmem:[#allocation5 + $0x14e8] sm:$0xff]
    %v873 = vld [vmem:[#allocation5 + $0x14f0] sm:$0xff]
    %v874 = vld [vmem:[#allocation5 + $0x14f8] sm:$0xff]
    %v875 = vld [vmem:[#allocation5 + $0x1500] sm:$0xff]
    %v876 = vld [vmem:[#allocation5 + $0x1508] sm:$0xff]
    %v877 = vld [vmem:[#allocation5 + $0x1510] sm:$0xff]
    %v878 = vld [vmem:[#allocation5 + $0x1518] sm:$0xff]
    %v879 = vld [vmem:[#allocation5 + $0x1520] sm:$0xff]
    %v880 = vld [vmem:[#allocation5 + $0x1528] sm:$0xff]
    %v881 = vld [vmem:[#allocation5 + $0x1530] sm:$0xff]
    %v882 = vld [vmem:[#allocation5 + $0x1538] sm:$0xff]
    %v883 = vld [vmem:[#allocation5 + $0x1540] sm:$0xff]
    %v884 = vld [vmem:[#allocation5 + $0x1548] sm:$0xff]
    %v885 = vld [vmem:[#allocation5 + $0x1550] sm:$0xff]
    %v886 = vld [vmem:[#allocation5 + $0x1558] sm:$0xff]
    %v887 = vld [vmem:[#allocation5 + $0x1560] sm:$0xff]
    %v888 = vld [vmem:[#allocation5 + $0x1568] sm:$0xff]
    %v889 = vld [vmem:[#allocation5 + $0x1570] sm:$0xff]
    %v890 = vld [vmem:[#allocation5 + $0x1578] sm:$0xff]
    %v891 = vld [vmem:[#allocation5 + $0x1580] sm:$0xff]
    %v892 = vld [vmem:[#allocation5 + $0x1588] sm:$0xff]
    %v893 = vld [vmem:[#allocation5 + $0x1590] sm:$0xff]
    %v894 = vld [vmem:[#allocation5 + $0x1598] sm:$0xff]
    %v895 = vld [vmem:[#allocation5 + $0x15a0] sm:$0xff]
    %v896 = vld [vmem:[#allocation5 + $0x15a8] sm:$0xff]
    %v897 = vld [vmem:[#allocation5 + $0x15b0] sm:$0xff]
    %v898 = vld [vmem:[#allocation5 + $0x15b8] sm:$0xff]
    %v899 = vld [vmem:[#allocation5 + $0x15c0] sm:$0xff]
    %v900 = vld [vmem:[#allocation5 + $0x15c8] sm:$0xff]
    %v901 = vld [vmem:[#allocation5 + $0x15d0] sm:$0xff]
    %v902 = vld [vmem:[#allocation5 + $0x15d8] sm:$0xff]
    %v903 = vld [vmem:[#allocation5 + $0x15e0] sm:$0xff]
    %v904 = vld [vmem:[#allocation5 + $0x15e8] sm:$0xff]
    %v905 = vld [vmem:[#allocation5 + $0x15f0] sm:$0xff]
    %v906 = vld [vmem:[#allocation5 + $0x15f8] sm:$0xff]
    %v907 = vld [vmem:[#allocation5 + $0x1600] sm:$0xff]
    %v908 = vld [vmem:[#allocation5 + $0x1608] sm:$0xff]
    %v909 = vld [vmem:[#allocation5 + $0x1610] sm:$0xff]
    %v910 = vld [vmem:[#allocation5 + $0x1618] sm:$0xff]
    %v911 = vld [vmem:[#allocation5 + $0x1620] sm:$0xff]
    %v912 = vld [vmem:[#allocation5 + $0x1628] sm:$0xff]
    %v913 = vld [vmem:[#allocation5 + $0x1630] sm:$0xff]
    %v914 = vld [vmem:[#allocation5 + $0x1638] sm:$0xff]
    %v915 = vld [vmem:[#allocation5 + $0x1640] sm:$0xff]
    %v916 = vld [vmem:[#allocation5 + $0x1648] sm:$0xff]
    %v917 = vld [vmem:[#allocation5 + $0x1650] sm:$0xff]
    %v918 = vld [vmem:[#allocation5 + $0x1658] sm:$0xff]
    %v919 = vld [vmem:[#allocation5 + $0x1660] sm:$0xff]
    %v920 = vld [vmem:[#allocation5 + $0x1668] sm:$0xff]
    %v921 = vld [vmem:[#allocation5 + $0x1670] sm:$0xff]
    %v922 = vld [vmem:[#allocation5 + $0x1678] sm:$0xff]
    %v923 = vld [vmem:[#allocation5 + $0x1680] sm:$0xff]
    %v924 = vld [vmem:[#allocation5 + $0x1688] sm:$0xff]
    %v925 = vld [vmem:[#allocation5 + $0x1690] sm:$0xff]
    %v926 = vld [vmem:[#allocation5 + $0x1698] sm:$0xff]
    %v927 = vld [vmem:[#allocation5 + $0x16a0] sm:$0xff]
    %v928 = vld [vmem:[#allocation5 + $0x16a8] sm:$0xff]
    %v929 = vld [vmem:[#allocation5 + $0x16b0] sm:$0xff]
    %v930 = vld [vmem:[#allocation5 + $0x16b8] sm:$0xff]
    %v931 = vld [vmem:[#allocation5 + $0x16c0] sm:$0xff]
    %v932 = vld [vmem:[#allocation5 + $0x16c8] sm:$0xff]
    %v933 = vld [vmem:[#allocation5 + $0x16d0] sm:$0xff]
    %v934 = vld [vmem:[#allocation5 + $0x16d8] sm:$0xff]
    %v935 = vld [vmem:[#allocation5 + $0x16e0] sm:$0xff]
    %v936 = vld [vmem:[#allocation5 + $0x16e8] sm:$0xff]
    %v937 = vld [vmem:[#allocation5 + $0x16f0] sm:$0xff]
    %v938 = vld [vmem:[#allocation5 + $0x16f8] sm:$0xff]
    %v939 = vld [vmem:[#allocation5 + $0x1700] sm:$0xff]
    %v940 = vld [vmem:[#allocation5 + $0x1708] sm:$0xff]
    %v941 = vld [vmem:[#allocation5 + $0x1710] sm:$0xff]
    %v942 = vld [vmem:[#allocation5 + $0x1718] sm:$0xff]
    %v943 = vld [vmem:[#allocation5 + $0x1720] sm:$0xff]
    %v944 = vld [vmem:[#allocation5 + $0x1728] sm:$0xff]
    %v945 = vld [vmem:[#allocation5 + $0x1730] sm:$0xff]
    %v946 = vld [vmem:[#allocation5 + $0x1738] sm:$0xff]
    %v947 = vld [vmem:[#allocation5 + $0x1740] sm:$0xff]
    %v948 = vld [vmem:[#allocation5 + $0x1748] sm:$0xff]
    %v949 = vld [vmem:[#allocation5 + $0x1750] sm:$0xff]
    %v950 = vld [vmem:[#allocation5 + $0x1758] sm:$0xff]
    %v951 = vld [vmem:[#allocation5 + $0x1760] sm:$0xff]
    %v952 = vld [vmem:[#allocation5 + $0x1768] sm:$0xff]
    %v953 = vld [vmem:[#allocation5 + $0x1770] sm:$0xff]
    %v954 = vld [vmem:[#allocation5 + $0x1778] sm:$0xff]
    %v955 = vld [vmem:[#allocation5 + $0x1780] sm:$0xff]
    %v956 = vld [vmem:[#allocation5 + $0x1788] sm:$0xff]
    %v957 = vld [vmem:[#allocation5 + $0x1790] sm:$0xff]
    %v958 = vld [vmem:[#allocation5 + $0x1798] sm:$0xff]
    %v959 = vld [vmem:[#allocation5 + $0x17a0] sm:$0xff]
    %v960 = vld [vmem:[#allocation5 + $0x17a8] sm:$0xff]
    %v961 = vld [vmem:[#allocation5 + $0x17b0] sm:$0xff]
    %v962 = vld [vmem:[#allocation5 + $0x17b8] sm:$0xff]
    %v963 = vld [vmem:[#allocation5 + $0x17c0] sm:$0xff]
    %v964 = vld [vmem:[#allocation5 + $0x17c8] sm:$0xff]
    %v965 = vld [vmem:[#allocation5 + $0x17d0] sm:$0xff]
    %v966 = vld [vmem:[#allocation5 + $0x17d8] sm:$0xff]
    %v967 = vld [vmem:[#allocation5 + $0x17e0] sm:$0xff]
    %v968 = vld [vmem:[#allocation5 + $0x17e8] sm:$0xff]
    %v969 = vld [vmem:[#allocation5 + $0x17f0] sm:$0xff]
    %v970 = vld [vmem:[#allocation5 + $0x17f8] sm:$0xff]
    %v971 = vld [vmem:[#allocation5 + $0x1800] sm:$0xff]
    %v972 = vld [vmem:[#allocation5 + $0x1808] sm:$0xff]
    %v973 = vld [vmem:[#allocation5 + $0x1810] sm:$0xff]
    %v974 = vld [vmem:[#allocation5 + $0x1818] sm:$0xff]
    %v975 = vld [vmem:[#allocation5 + $0x1820] sm:$0xff]
    %v976 = vld [vmem:[#allocation5 + $0x1828] sm:$0xff]
    %v977 = vld [vmem:[#allocation5 + $0x1830] sm:$0xff]
    %v978 = vld [vmem:[#allocation5 + $0x1838] sm:$0xff]
    %v979 = vld [vmem:[#allocation5 + $0x1840] sm:$0xff]
    %v980 = vld [vmem:[#allocation5 + $0x1848] sm:$0xff]
    %v981 = vld [vmem:[#allocation5 + $0x1850] sm:$0xff]
    %v982 = vld [vmem:[#allocation5 + $0x1858] sm:$0xff]
    %v983 = vld [vmem:[#allocation5 + $0x1860] sm:$0xff]
    %v984 = vld [vmem:[#allocation5 + $0x1868] sm:$0xff]
    %v985 = vld [vmem:[#allocation5 + $0x1870] sm:$0xff]
    %v986 = vld [vmem:[#allocation5 + $0x1878] sm:$0xff]
    %v987 = vld [vmem:[#allocation5 + $0x1880] sm:$0xff]
    %v988 = vld [vmem:[#allocation5 + $0x1888] sm:$0xff]
    %v989 = vld [vmem:[#allocation5 + $0x1890] sm:$0xff]
    %v990 = vld [vmem:[#allocation5 + $0x1898] sm:$0xff]
    %v991 = vld [vmem:[#allocation5 + $0x18a0] sm:$0xff]
    %v992 = vld [vmem:[#allocation5 + $0x18a8] sm:$0xff]
    %v993 = vld [vmem:[#allocation5 + $0x18b0] sm:$0xff]
    %v994 = vld [vmem:[#allocation5 + $0x18b8] sm:$0xff]
    %v995 = vld [vmem:[#allocation5 + $0x18c0] sm:$0xff]
    %v996 = vld [vmem:[#allocation5 + $0x18c8] sm:$0xff]
    %v997 = vld [vmem:[#allocation5 + $0x18d0] sm:$0xff]
    %v998 = vld [vmem:[#allocation5 + $0x18d8] sm:$0xff]
    %v999 = vld [vmem:[#allocation5 + $0x18e0] sm:$0xff]
    %v1000 = vld [vmem:[#allocation5 + $0x18e8] sm:$0xff]
    %v1001 = vld [vmem:[#allocation5 + $0x18f0] sm:$0xff]
    %v1002 = vld [vmem:[#allocation5 + $0x18f8] sm:$0xff]
    %v1003 = vld [vmem:[#allocation5 + $0x1900] sm:$0xff]
    %v1004 = vld [vmem:[#allocation5 + $0x1908] sm:$0xff]
    %v1005 = vld [vmem:[#allocation5 + $0x1910] sm:$0xff]
    %v1006 = vld [vmem:[#allocation5 + $0x1918] sm:$0xff]
    %v1007 = vld [vmem:[#allocation5 + $0x1920] sm:$0xff]
    %v1008 = vld [vmem:[#allocation5 + $0x1928] sm:$0xff]
    %v1009 = vld [vmem:[#allocation5 + $0x1930] sm:$0xff]
    %v1010 = vld [vmem:[#allocation5 + $0x1938] sm:$0xff]
    %v1011 = vld [vmem:[#allocation5 + $0x1940] sm:$0xff]
    %v1012 = vld [vmem:[#allocation5 + $0x1948] sm:$0xff]
    %v1013 = vld [vmem:[#allocation5 + $0x1950] sm:$0xff]
    %v1014 = vld [vmem:[#allocation5 + $0x1958] sm:$0xff]
    %v1015 = vld [vmem:[#allocation5 + $0x1960] sm:$0xff]
    %v1016 = vld [vmem:[#allocation5 + $0x1968] sm:$0xff]
    %v1017 = vld [vmem:[#allocation5 + $0x1970] sm:$0xff]
    %v1018 = vld [vmem:[#allocation5 + $0x1978] sm:$0xff]
    %v1019 = vld [vmem:[#allocation5 + $0x1980] sm:$0xff]
    %v1020 = vld [vmem:[#allocation5 + $0x1988] sm:$0xff]
    %v1021 = vld [vmem:[#allocation5 + $0x1990] sm:$0xff]
    %v1022 = vld [vmem:[#allocation5 + $0x1998] sm:$0xff]
    %v1023 = vld [vmem:[#allocation5 + $0x19a0] sm:$0xff]
    %v1024 = vld [vmem:[#allocation5 + $0x19a8] sm:$0xff]
    %v1025 = vld [vmem:[#allocation5 + $0x19b0] sm:$0xff]
    %v1026 = vld [vmem:[#allocation5 + $0x19b8] sm:$0xff]
    %v1027 = vld [vmem:[#allocation5 + $0x19c0] sm:$0xff]
    %v1028 = vld [vmem:[#allocation5 + $0x19c8] sm:$0xff]
    %v1029 = vld [vmem:[#allocation5 + $0x19d0] sm:$0xff]
    %v1030 = vld [vmem:[#allocation5 + $0x19d8] sm:$0xff]
    %v1031 = vld [vmem:[#allocation5 + $0x19e0] sm:$0xff]
    %v1032 = vld [vmem:[#allocation5 + $0x19e8] sm:$0xff]
    %v1033 = vld [vmem:[#allocation5 + $0x19f0] sm:$0xff]
    %v1034 = vld [vmem:[#allocation5 + $0x19f8] sm:$0xff]
    %v1035 = vld [vmem:[#allocation5 + $0x1a00] sm:$0xff]
    %v1036 = vld [vmem:[#allocation5 + $0x1a08] sm:$0xff]
    %v1037 = vld [vmem:[#allocation5 + $0x1a10] sm:$0xff]
    %v1038 = vld [vmem:[#allocation5 + $0x1a18] sm:$0xff]
    %v1039 = vld [vmem:[#allocation5 + $0x1a20] sm:$0xff]
    %v1040 = vld [vmem:[#allocation5 + $0x1a28] sm:$0xff]
    %v1041 = vld [vmem:[#allocation5 + $0x1a30] sm:$0xff]
    %v1042 = vld [vmem:[#allocation5 + $0x1a38] sm:$0xff]
    %v1043 = vld [vmem:[#allocation5 + $0x1a40] sm:$0xff]
    %v1044 = vld [vmem:[#allocation5 + $0x1a48] sm:$0xff]
    %v1045 = vld [vmem:[#allocation5 + $0x1a50] sm:$0xff]
    %v1046 = vld [vmem:[#allocation5 + $0x1a58] sm:$0xff]
    %v1047 = vld [vmem:[#allocation5 + $0x1a60] sm:$0xff]
    %v1048 = vld [vmem:[#allocation5 + $0x1a68] sm:$0xff]
    %v1049 = vld [vmem:[#allocation5 + $0x1a70] sm:$0xff]
    %v1050 = vld [vmem:[#allocation5 + $0x1a78] sm:$0xff]
    %v1051 = vld [vmem:[#allocation5 + $0x1a80] sm:$0xff]
    %v1052 = vld [vmem:[#allocation5 + $0x1a88] sm:$0xff]
    %v1053 = vld [vmem:[#allocation5 + $0x1a90] sm:$0xff]
    %v1054 = vld [vmem:[#allocation5 + $0x1a98] sm:$0xff]
    %v1055 = vld [vmem:[#allocation5 + $0x1aa0] sm:$0xff]
    %v1056 = vld [vmem:[#allocation5 + $0x1aa8] sm:$0xff]
    %v1057 = vld [vmem:[#allocation5 + $0x1ab0] sm:$0xff]
    %v1058 = vld [vmem:[#allocation5 + $0x1ab8] sm:$0xff]
    %v1059 = vld [vmem:[#allocation5 + $0x1ac0] sm:$0xff]
    %v1060 = vld [vmem:[#allocation5 + $0x1ac8] sm:$0xff]
    %v1061 = vld [vmem:[#allocation5 + $0x1ad0] sm:$0xff]
    %v1062 = vld [vmem:[#allocation5 + $0x1ad8] sm:$0xff]
    %v1063 = vld [vmem:[#allocation5 + $0x1ae0] sm:$0xff]
    %v1064 = vld [vmem:[#allocation5 + $0x1ae8] sm:$0xff]
    %v1065 = vld [vmem:[#allocation5 + $0x1af0] sm:$0xff]
    %v1066 = vld [vmem:[#allocation5 + $0x1af8] sm:$0xff]
    %v1067 = vld [vmem:[#allocation5 + $0x1b00] sm:$0xff]
    %v1068 = vld [vmem:[#allocation5 + $0x1b08] sm:$0xff]
    %v1069 = vld [vmem:[#allocation5 + $0x1b10] sm:$0xff]
    %v1070 = vld [vmem:[#allocation5 + $0x1b18] sm:$0xff]
    %v1071 = vld [vmem:[#allocation5 + $0x1b20] sm:$0xff]
    %v1072 = vld [vmem:[#allocation5 + $0x1b28] sm:$0xff]
    %v1073 = vld [vmem:[#allocation5 + $0x1b30] sm:$0xff]
    %v1074 = vld [vmem:[#allocation5 + $0x1b38] sm:$0xff]
    %v1075 = vld [vmem:[#allocation5 + $0x1b40] sm:$0xff]
    %v1076 = vld [vmem:[#allocation5 + $0x1b48] sm:$0xff]
    %v1077 = vld [vmem:[#allocation5 + $0x1b50] sm:$0xff]
    %v1078 = vld [vmem:[#allocation5 + $0x1b58] sm:$0xff]
    %v1079 = vld [vmem:[#allocation5 + $0x1b60] sm:$0xff]
    %v1080 = vld [vmem:[#allocation5 + $0x1b68] sm:$0xff]
    %v1081 = vld [vmem:[#allocation5 + $0x1b70] sm:$0xff]
    %v1082 = vld [vmem:[#allocation5 + $0x1b78] sm:$0xff]
    %v1083 = vld [vmem:[#allocation5 + $0x1b80] sm:$0xff]
    %v1084 = vld [vmem:[#allocation5 + $0x1b88] sm:$0xff]
    %v1085 = vld [vmem:[#allocation5 + $0x1b90] sm:$0xff]
    %v1086 = vld [vmem:[#allocation5 + $0x1b98] sm:$0xff]
    %v1087 = vld [vmem:[#allocation5 + $0x1ba0] sm:$0xff]
    %v1088 = vld [vmem:[#allocation5 + $0x1ba8] sm:$0xff]
    %v1089 = vld [vmem:[#allocation5 + $0x1bb0] sm:$0xff]
    %v1090 = vld [vmem:[#allocation5 + $0x1bb8] sm:$0xff]
    %v1091 = vld [vmem:[#allocation5 + $0x1bc0] sm:$0xff]
    %v1092 = vld [vmem:[#allocation5 + $0x1bc8] sm:$0xff]
    %v1093 = vld [vmem:[#allocation5 + $0x1bd0] sm:$0xff]
    %v1094 = vld [vmem:[#allocation5 + $0x1bd8] sm:$0xff]
    %v1095 = vld [vmem:[#allocation5 + $0x1be0] sm:$0xff]
    %v1096 = vld [vmem:[#allocation5 + $0x1be8] sm:$0xff]
    %v1097 = vld [vmem:[#allocation5 + $0x1bf0] sm:$0xff]
    %v1098 = vld [vmem:[#allocation5 + $0x1bf8] sm:$0xff]
    %v1099 = vld [vmem:[#allocation5 + $0x1c00] sm:$0xff]
    %v1100 = vld [vmem:[#allocation5 + $0x1c08] sm:$0xff]
    %v1101 = vld [vmem:[#allocation5 + $0x1c10] sm:$0xff]
    %v1102 = vld [vmem:[#allocation5 + $0x1c18] sm:$0xff]
    %v1103 = vld [vmem:[#allocation5 + $0x1c20] sm:$0xff]
    %v1104 = vld [vmem:[#allocation5 + $0x1c28] sm:$0xff]
    %v1105 = vld [vmem:[#allocation5 + $0x1c30] sm:$0xff]
    %v1106 = vld [vmem:[#allocation5 + $0x1c38] sm:$0xff]
    %v1107 = vld [vmem:[#allocation5 + $0x1c40] sm:$0xff]
    %v1108 = vld [vmem:[#allocation5 + $0x1c48] sm:$0xff]
    %v1109 = vld [vmem:[#allocation5 + $0x1c50] sm:$0xff]
    %v1110 = vld [vmem:[#allocation5 + $0x1c58] sm:$0xff]
    %v1111 = vld [vmem:[#allocation5 + $0x1c60] sm:$0xff]
    %v1112 = vld [vmem:[#allocation5 + $0x1c68] sm:$0xff]
    %v1113 = vld [vmem:[#allocation5 + $0x1c70] sm:$0xff]
    %v1114 = vld [vmem:[#allocation5 + $0x1c78] sm:$0xff]
    %v1115 = vld [vmem:[#allocation5 + $0x1c80] sm:$0xff]
    %v1116 = vld [vmem:[#allocation5 + $0x1c88] sm:$0xff]
    %v1117 = vld [vmem:[#allocation5 + $0x1c90] sm:$0xff]
    %v1118 = vld [vmem:[#allocation5 + $0x1c98] sm:$0xff]
    %v1119 = vld [vmem:[#allocation5 + $0x1ca0] sm:$0xff]
    %v1120 = vld [vmem:[#allocation5 + $0x1ca8] sm:$0xff]
    %v1121 = vld [vmem:[#allocation5 + $0x1cb0] sm:$0xff]
    %v1122 = vld [vmem:[#allocation5 + $0x1cb8] sm:$0xff]
    %v1123 = vld [vmem:[#allocation5 + $0x1cc0] sm:$0xff]
    %v1124 = vld [vmem:[#allocation5 + $0x1cc8] sm:$0xff]
    %v1125 = vld [vmem:[#allocation5 + $0x1cd0] sm:$0xff]
    %v1126 = vld [vmem:[#allocation5 + $0x1cd8] sm:$0xff]
    %v1127 = vld [vmem:[#allocation5 + $0x1ce0] sm:$0xff]
    %v1128 = vld [vmem:[#allocation5 + $0x1ce8] sm:$0xff]
    %v1129 = vld [vmem:[#allocation5 + $0x1cf0] sm:$0xff]
    %v1130 = vld [vmem:[#allocation5 + $0x1cf8] sm:$0xff]
    %v1131 = vld [vmem:[#allocation5 + $0x1d00] sm:$0xff]
    %v1132 = vld [vmem:[#allocation5 + $0x1d08] sm:$0xff]
    %v1133 = vld [vmem:[#allocation5 + $0x1d10] sm:$0xff]
    %v1134 = vld [vmem:[#allocation5 + $0x1d18] sm:$0xff]
    %v1135 = vld [vmem:[#allocation5 + $0x1d20] sm:$0xff]
    %v1136 = vld [vmem:[#allocation5 + $0x1d28] sm:$0xff]
    %v1137 = vld [vmem:[#allocation5 + $0x1d30] sm:$0xff]
    %v1138 = vld [vmem:[#allocation5 + $0x1d38] sm:$0xff]
    %v1139 = vld [vmem:[#allocation5 + $0x1d40] sm:$0xff]
    %v1140 = vld [vmem:[#allocation5 + $0x1d48] sm:$0xff]
    %v1141 = vld [vmem:[#allocation5 + $0x1d50] sm:$0xff]
    %v1142 = vld [vmem:[#allocation5 + $0x1d58] sm:$0xff]
    %v1143 = vld [vmem:[#allocation5 + $0x1d60] sm:$0xff]
    %v1144 = vld [vmem:[#allocation5 + $0x1d68] sm:$0xff]
    %v1145 = vld [vmem:[#allocation5 + $0x1d70] sm:$0xff]
    %v1146 = vld [vmem:[#allocation5 + $0x1d78] sm:$0xff]
    %v1147 = vld [vmem:[#allocation5 + $0x1d80] sm:$0xff]
    %v1148 = vld [vmem:[#allocation5 + $0x1d88] sm:$0xff]
    %v1149 = vld [vmem:[#allocation5 + $0x1d90] sm:$0xff]
    %v1150 = vld [vmem:[#allocation5 + $0x1d98] sm:$0xff]
    %v1151 = vld [vmem:[#allocation5 + $0x1da0] sm:$0xff]
    %v1152 = vld [vmem:[#allocation5 + $0x1da8] sm:$0xff]
    %v1153 = vld [vmem:[#allocation5 + $0x1db0] sm:$0xff]
    %v1154 = vld [vmem:[#allocation5 + $0x1db8] sm:$0xff]
    %v1155 = vld [vmem:[#allocation5 + $0x1dc0] sm:$0xff]
    %v1156 = vld [vmem:[#allocation5 + $0x1dc8] sm:$0xff]
    %v1157 = vld [vmem:[#allocation5 + $0x1dd0] sm:$0xff]
    %v1158 = vld [vmem:[#allocation5 + $0x1dd8] sm:$0xff]
    %v1159 = vld [vmem:[#allocation5 + $0x1de0] sm:$0xff]
    %v1160 = vld [vmem:[#allocation5 + $0x1de8] sm:$0xff]
    %v1161 = vld [vmem:[#allocation5 + $0x1df0] sm:$0xff]
    %v1162 = vld [vmem:[#allocation5 + $0x1df8] sm:$0xff]
    %v1163 = vld [vmem:[#allocation5 + $0x1e00] sm:$0xff]
    %v1164 = vld [vmem:[#allocation5 + $0x1e08] sm:$0xff]
    %v1165 = vld [vmem:[#allocation5 + $0x1e10] sm:$0xff]
    %v1166 = vld [vmem:[#allocation5 + $0x1e18] sm:$0xff]
    %v1167 = vld [vmem:[#allocation5 + $0x1e20] sm:$0xff]
    %v1168 = vld [vmem:[#allocation5 + $0x1e28] sm:$0xff]
    %v1169 = vld [vmem:[#allocation5 + $0x1e30] sm:$0xff]
    %v1170 = vld [vmem:[#allocation5 + $0x1e38] sm:$0xff]
    %v1171 = vld [vmem:[#allocation5 + $0x1e40] sm:$0xff]
    %v1172 = vld [vmem:[#allocation5 + $0x1e48] sm:$0xff]
    %v1173 = vld [vmem:[#allocation5 + $0x1e50] sm:$0xff]
    %v1174 = vld [vmem:[#allocation5 + $0x1e58] sm:$0xff]
    %v1175 = vld [vmem:[#allocation5 + $0x1e60] sm:$0xff]
    %v1176 = vld [vmem:[#allocation5 + $0x1e68] sm:$0xff]
    %v1177 = vld [vmem:[#allocation5 + $0x1e70] sm:$0xff]
    %v1178 = vld [vmem:[#allocation5 + $0x1e78] sm:$0xff]
    %v1179 = vld [vmem:[#allocation5 + $0x1e80] sm:$0xff]
    %v1180 = vld [vmem:[#allocation5 + $0x1e88] sm:$0xff]
    %v1181 = vld [vmem:[#allocation5 + $0x1e90] sm:$0xff]
    %v1182 = vld [vmem:[#allocation5 + $0x1e98] sm:$0xff]
    %v1183 = vld [vmem:[#allocation5 + $0x1ea0] sm:$0xff]
    %v1184 = vld [vmem:[#allocation5 + $0x1ea8] sm:$0xff]
    %v1185 = vld [vmem:[#allocation5 + $0x1eb0] sm:$0xff]
    %v1186 = vld [vmem:[#allocation5 + $0x1eb8] sm:$0xff]
    %v1187 = vld [vmem:[#allocation5 + $0x1ec0] sm:$0xff]
    %v1188 = vld [vmem:[#allocation5 + $0x1ec8] sm:$0xff]
    %v1189 = vld [vmem:[#allocation5 + $0x1ed0] sm:$0xff]
    %v1190 = vld [vmem:[#allocation5 + $0x1ed8] sm:$0xff]
    %v1191 = vld [vmem:[#allocation5 + $0x1ee0] sm:$0xff]
    %v1192 = vld [vmem:[#allocation5 + $0x1ee8] sm:$0xff]
    %v1193 = vld [vmem:[#allocation5 + $0x1ef0] sm:$0xff]
    %v1194 = vld [vmem:[#allocation5 + $0x1ef8] sm:$0xff]
    %v1195 = vld [vmem:[#allocation5 + $0x1f00] sm:$0xff]
    %v1196 = vld [vmem:[#allocation5 + $0x1f08] sm:$0xff]
    %v1197 = vld [vmem:[#allocation5 + $0x1f10] sm:$0xff]
    %v1198 = vld [vmem:[#allocation5 + $0x1f18] sm:$0xff]
    %v1199 = vld [vmem:[#allocation5 + $0x1f20] sm:$0xff]
    %v1200 = vld [vmem:[#allocation5 + $0x1f28] sm:$0xff]
    %v1201 = vld [vmem:[#allocation5 + $0x1f30] sm:$0xff]
    %v1202 = vld [vmem:[#allocation5 + $0x1f38] sm:$0xff]
    %v1203 = vld [vmem:[#allocation5 + $0x1f40] sm:$0xff]
    %v1204 = vld [vmem:[#allocation5 + $0x1f48] sm:$0xff]
    %v1205 = vld [vmem:[#allocation5 + $0x1f50] sm:$0xff]
    %v1206 = vld [vmem:[#allocation5 + $0x1f58] sm:$0xff]
    %v1207 = vld [vmem:[#allocation5 + $0x1f60] sm:$0xff]
    %v1208 = vld [vmem:[#allocation5 + $0x1f68] sm:$0xff]
    %v1209 = vld [vmem:[#allocation5 + $0x1f70] sm:$0xff]
    %v1210 = vld [vmem:[#allocation5 + $0x1f78] sm:$0xff]
    %v1211 = vld [vmem:[#allocation5 + $0x1f80] sm:$0xff]
    %v1212 = vld [vmem:[#allocation5 + $0x1f88] sm:$0xff]
    %v1213 = vld [vmem:[#allocation5 + $0x1f90] sm:$0xff]
    %v1214 = vld [vmem:[#allocation5 + $0x1f98] sm:$0xff]
    %v1215 = vld [vmem:[#allocation5 + $0x1fa0] sm:$0xff]
    %v1216 = vld [vmem:[#allocation5 + $0x1fa8] sm:$0xff]
    %v1217 = vld [vmem:[#allocation5 + $0x1fb0] sm:$0xff]
    %v1218 = vld [vmem:[#allocation5 + $0x1fb8] sm:$0xff]
    %v1219 = vld [vmem:[#allocation5 + $0x1fc0] sm:$0xff]
    %v1220 = vld [vmem:[#allocation5 + $0x1fc8] sm:$0xff]
    %v1221 = vld [vmem:[#allocation5 + $0x1fd0] sm:$0xff]
    %v1222 = vld [vmem:[#allocation5 + $0x1fd8] sm:$0xff]
    %v1223 = vld [vmem:[#allocation5 + $0x1fe0] sm:$0xff]
    %v1224 = vld [vmem:[#allocation5 + $0x1fe8] sm:$0xff]
    %v1225 = vld [vmem:[#allocation5 + $0x1ff0] sm:$0xff]
    %v1226 = vld [vmem:[#allocation5 + $0x1ff8] sm:$0xff]
    %v1227 = vld [vmem:[#allocation5 + $0x2000] sm:$0xff]
    %v1228 = vld [vmem:[#allocation5 + $0x2008] sm:$0xff]
    %v1229 = vld [vmem:[#allocation5 + $0x2010] sm:$0xff]
    %v1230 = vld [vmem:[#allocation5 + $0x2018] sm:$0xff]
    %v1231 = vld [vmem:[#allocation5 + $0x2020] sm:$0xff]
    %v1232 = vld [vmem:[#allocation5 + $0x2028] sm:$0xff]
    %v1233 = vld [vmem:[#allocation5 + $0x2030] sm:$0xff]
    %v1234 = vld [vmem:[#allocation5 + $0x2038] sm:$0xff]
    %v1235 = vld [vmem:[#allocation5 + $0x2040] sm:$0xff]
    %v1236 = vld [vmem:[#allocation5 + $0x2048] sm:$0xff]
    %v1237 = vld [vmem:[#allocation5 + $0x2050] sm:$0xff]
    %v1238 = vld [vmem:[#allocation5 + $0x2058] sm:$0xff]
    %v1239 = vld [vmem:[#allocation5 + $0x2060] sm:$0xff]
    %v1240 = vld [vmem:[#allocation5 + $0x2068] sm:$0xff]
    %v1241 = vld [vmem:[#allocation5 + $0x2070] sm:$0xff]
    %v1242 = vld [vmem:[#allocation5 + $0x2078] sm:$0xff]
    %v1243 = vld [vmem:[#allocation5 + $0x2080] sm:$0xff]
    %v1244 = vld [vmem:[#allocation5 + $0x2088] sm:$0xff]
    %v1245 = vld [vmem:[#allocation5 + $0x2090] sm:$0xff]
    %v1246 = vld [vmem:[#allocation5 + $0x2098] sm:$0xff]
    %v1247 = vld [vmem:[#allocation5 + $0x20a0] sm:$0xff]
    %v1248 = vld [vmem:[#allocation5 + $0x20a8] sm:$0xff]
    %v1249 = vld [vmem:[#allocation5 + $0x20b0] sm:$0xff]
    %v1250 = vld [vmem:[#allocation5 + $0x20b8] sm:$0xff]
    %v1251 = vld [vmem:[#allocation5 + $0x20c0] sm:$0xff]
    %v1252 = vld [vmem:[#allocation5 + $0x20c8] sm:$0xff]
    %v1253 = vld [vmem:[#allocation5 + $0x20d0] sm:$0xff]
    %v1254 = vld [vmem:[#allocation5 + $0x20d8] sm:$0xff]
    %v1255 = vld [vmem:[#allocation5 + $0x20e0] sm:$0xff]
    %v1256 = vld [vmem:[#allocation5 + $0x20e8] sm:$0xff]
    %v1257 = vld [vmem:[#allocation5 + $0x20f0] sm:$0xff]
    %v1258 = vld [vmem:[#allocation5 + $0x20f8] sm:$0xff]
    %v1259 = vld [vmem:[#allocation5 + $0x2100] sm:$0xff]
    %v1260 = vld [vmem:[#allocation5 + $0x2108] sm:$0xff]
    %v1261 = vld [vmem:[#allocation5 + $0x2110] sm:$0xff]
    %v1262 = vld [vmem:[#allocation5 + $0x2118] sm:$0xff]
    %v1263 = vld [vmem:[#allocation5 + $0x2120] sm:$0xff]
    %v1264 = vld [vmem:[#allocation5 + $0x2128] sm:$0xff]
    %v1265 = vld [vmem:[#allocation5 + $0x2130] sm:$0xff]
    %v1266 = vld [vmem:[#allocation5 + $0x2138] sm:$0xff]
    %v1267 = vld [vmem:[#allocation5 + $0x2140] sm:$0xff]
    %v1268 = vld [vmem:[#allocation5 + $0x2148] sm:$0xff]
    %v1269 = vld [vmem:[#allocation5 + $0x2150] sm:$0xff]
    %v1270 = vld [vmem:[#allocation5 + $0x2158] sm:$0xff]
    %v1271 = vld [vmem:[#allocation5 + $0x2160] sm:$0xff]
    %v1272 = vld [vmem:[#allocation5 + $0x2168] sm:$0xff]
    %v1273 = vld [vmem:[#allocation5 + $0x2170] sm:$0xff]
    %v1274 = vld [vmem:[#allocation5 + $0x2178] sm:$0xff]
    %v1275 = vld [vmem:[#allocation5 + $0x2180] sm:$0xff]
    %v1276 = vld [vmem:[#allocation5 + $0x2188] sm:$0xff]
    %v1277 = vld [vmem:[#allocation5 + $0x2190] sm:$0xff]
    %v1278 = vld [vmem:[#allocation5 + $0x2198] sm:$0xff]
    %v1279 = vld [vmem:[#allocation5 + $0x21a0] sm:$0xff]
    %v1280 = vld [vmem:[#allocation5 + $0x21a8] sm:$0xff]
    %v1281 = vld [vmem:[#allocation5 + $0x21b0] sm:$0xff]
    %v1282 = vld [vmem:[#allocation5 + $0x21b8] sm:$0xff]
    %v1283 = vld [vmem:[#allocation5 + $0x21c0] sm:$0xff]
    %v1284 = vld [vmem:[#allocation5 + $0x21c8] sm:$0xff]
    %v1285 = vld [vmem:[#allocation5 + $0x21d0] sm:$0xff]
    %v1286 = vld [vmem:[#allocation5 + $0x21d8] sm:$0xff]
    %v1287 = vld [vmem:[#allocation5 + $0x21e0] sm:$0xff]
    %v1288 = vld [vmem:[#allocation5 + $0x21e8] sm:$0xff]
    %v1289 = vld [vmem:[#allocation5 + $0x21f0] sm:$0xff]
    %v1290 = vld [vmem:[#allocation5 + $0x21f8] sm:$0xff]
    %v1291 = vld [vmem:[#allocation5 + $0x2200] sm:$0xff]
    %v1292 = vld [vmem:[#allocation5 + $0x2208] sm:$0xff]
    %v1293 = vld [vmem:[#allocation5 + $0x2210] sm:$0xff]
    %v1294 = vld [vmem:[#allocation5 + $0x2218] sm:$0xff]
    %v1295 = vld [vmem:[#allocation5 + $0x2220] sm:$0xff]
    %v1296 = vld [vmem:[#allocation5 + $0x2228] sm:$0xff]
    %v1297 = vld [vmem:[#allocation5 + $0x2230] sm:$0xff]
    %v1298 = vld [vmem:[#allocation5 + $0x2238] sm:$0xff]
    %v1299 = vld [vmem:[#allocation5 + $0x2240] sm:$0xff]
    %v1300 = vld [vmem:[#allocation5 + $0x2248] sm:$0xff]
    %v1301 = vld [vmem:[#allocation5 + $0x2250] sm:$0xff]
    %v1302 = vld [vmem:[#allocation5 + $0x2258] sm:$0xff]
    %v1303 = vld [vmem:[#allocation5 + $0x2260] sm:$0xff]
    %v1304 = vld [vmem:[#allocation5 + $0x2268] sm:$0xff]
    %v1305 = vld [vmem:[#allocation5 + $0x2270] sm:$0xff]
    %v1306 = vld [vmem:[#allocation5 + $0x2278] sm:$0xff]
    %v1307 = vld [vmem:[#allocation5 + $0x2280] sm:$0xff]
    %v1308 = vld [vmem:[#allocation5 + $0x2288] sm:$0xff]
    %v1309 = vld [vmem:[#allocation5 + $0x2290] sm:$0xff]
    %v1310 = vld [vmem:[#allocation5 + $0x2298] sm:$0xff]
    %v1311 = vld [vmem:[#allocation5 + $0x22a0] sm:$0xff]
    %v1312 = vld [vmem:[#allocation5 + $0x22a8] sm:$0xff]
    %v1313 = vld [vmem:[#allocation5 + $0x22b0] sm:$0xff]
    %v1314 = vld [vmem:[#allocation5 + $0x22b8] sm:$0xff]
    %v1315 = vld [vmem:[#allocation5 + $0x22c0] sm:$0xff]
    %v1316 = vld [vmem:[#allocation5 + $0x22c8] sm:$0xff]
    %v1317 = vld [vmem:[#allocation5 + $0x22d0] sm:$0xff]
    %v1318 = vld [vmem:[#allocation5 + $0x22d8] sm:$0xff]
    %v1319 = vld [vmem:[#allocation5 + $0x22e0] sm:$0xff]
    %v1320 = vld [vmem:[#allocation5 + $0x22e8] sm:$0xff]
    %v1321 = vld [vmem:[#allocation5 + $0x22f0] sm:$0xff]
    %v1322 = vld [vmem:[#allocation5 + $0x22f8] sm:$0xff]
    %v1323 = vld [vmem:[#allocation5 + $0x2300] sm:$0xff]
    %v1324 = vld [vmem:[#allocation5 + $0x2308] sm:$0xff]
    %v1325 = vld [vmem:[#allocation5 + $0x2310] sm:$0xff]
    %v1326 = vld [vmem:[#allocation5 + $0x2318] sm:$0xff]
    %v1327 = vld [vmem:[#allocation5 + $0x2320] sm:$0xff]
    %v1328 = vld [vmem:[#allocation5 + $0x2328] sm:$0xff]
    %v1329 = vld [vmem:[#allocation5 + $0x2330] sm:$0xff]
    %v1330 = vld [vmem:[#allocation5 + $0x2338] sm:$0xff]
    %v1331 = vld [vmem:[#allocation5 + $0x2340] sm:$0xff]
    %v1332 = vld [vmem:[#allocation5 + $0x2348] sm:$0xff]
    %v1333 = vld [vmem:[#allocation5 + $0x2350] sm:$0xff]
    %v1334 = vld [vmem:[#allocation5 + $0x2358] sm:$0xff]
    %v1335 = vld [vmem:[#allocation5 + $0x2360] sm:$0xff]
    %v1336 = vld [vmem:[#allocation5 + $0x2368] sm:$0xff]
    %v1337 = vld [vmem:[#allocation5 + $0x2370] sm:$0xff]
    %v1338 = vld [vmem:[#allocation5 + $0x2378] sm:$0xff]
    %v1339 = vld [vmem:[#allocation5 + $0x2380] sm:$0xff]
    %v1340 = vld [vmem:[#allocation5 + $0x2388] sm:$0xff]
    %v1341 = vld [vmem:[#allocation5 + $0x2390] sm:$0xff]
    %v1342 = vld [vmem:[#allocation5 + $0x2398] sm:$0xff]
    %v1343 = vld [vmem:[#allocation5 + $0x23a0] sm:$0xff]
    %v1344 = vld [vmem:[#allocation5 + $0x23a8] sm:$0xff]
    %v1345 = vld [vmem:[#allocation5 + $0x23b0] sm:$0xff]
    %v1346 = vld [vmem:[#allocation5 + $0x23b8] sm:$0xff]
    %v1347 = vld [vmem:[#allocation5 + $0x23c0] sm:$0xff]
    %v1348 = vld [vmem:[#allocation5 + $0x23c8] sm:$0xff]
    %v1349 = vld [vmem:[#allocation5 + $0x23d0] sm:$0xff]
    %v1350 = vld [vmem:[#allocation5 + $0x23d8] sm:$0xff]
    %v1351 = vld [vmem:[#allocation5 + $0x23e0] sm:$0xff]
    %v1352 = vld [vmem:[#allocation5 + $0x23e8] sm:$0xff]
    %v1353 = vld [vmem:[#allocation5 + $0x23f0] sm:$0xff]
    %v1354 = vld [vmem:[#allocation5 + $0x23f8] sm:$0xff]
    %v1355 = vld [vmem:[#allocation5 + $0x2400] sm:$0xff]
    %v1356 = vld [vmem:[#allocation5 + $0x2408] sm:$0xff]
    %v1357 = vld [vmem:[#allocation5 + $0x2410] sm:$0xff]
    %v1358 = vld [vmem:[#allocation5 + $0x2418] sm:$0xff]
    %v1359 = vld [vmem:[#allocation5 + $0x2420] sm:$0xff]
    %v1360 = vld [vmem:[#allocation5 + $0x2428] sm:$0xff]
    %v1361 = vld [vmem:[#allocation5 + $0x2430] sm:$0xff]
    %v1362 = vld [vmem:[#allocation5 + $0x2438] sm:$0xff]
    %v1363 = vld [vmem:[#allocation5 + $0x2440] sm:$0xff]
    %v1364 = vld [vmem:[#allocation5 + $0x2448] sm:$0xff]
    %v1365 = vld [vmem:[#allocation5 + $0x2450] sm:$0xff]
    %v1366 = vld [vmem:[#allocation5 + $0x2458] sm:$0xff]
    %v1367 = vld [vmem:[#allocation5 + $0x2460] sm:$0xff]
    %v1368 = vld [vmem:[#allocation5 + $0x2468] sm:$0xff]
    %v1369 = vld [vmem:[#allocation5 + $0x2470] sm:$0xff]
    %v1370 = vld [vmem:[#allocation5 + $0x2478] sm:$0xff]
    %v1371 = vld [vmem:[#allocation5 + $0x2480] sm:$0xff]
    %v1372 = vld [vmem:[#allocation5 + $0x2488] sm:$0xff]
    %v1373 = vld [vmem:[#allocation5 + $0x2490] sm:$0xff]
    %v1374 = vld [vmem:[#allocation5 + $0x2498] sm:$0xff]
    %v1375 = vld [vmem:[#allocation5 + $0x24a0] sm:$0xff]
    %v1376 = vld [vmem:[#allocation5 + $0x24a8] sm:$0xff]
    %v1377 = vld [vmem:[#allocation5 + $0x24b0] sm:$0xff]
    %v1378 = vld [vmem:[#allocation5 + $0x24b8] sm:$0xff]
    %v1379 = vld [vmem:[#allocation5 + $0x24c0] sm:$0xff]
    %v1380 = vld [vmem:[#allocation5 + $0x24c8] sm:$0xff]
    %v1381 = vld [vmem:[#allocation5 + $0x24d0] sm:$0xff]
    %v1382 = vld [vmem:[#allocation5 + $0x24d8] sm:$0xff]
    %v1383 = vld [vmem:[#allocation5 + $0x24e0] sm:$0xff]
    %v1384 = vld [vmem:[#allocation5 + $0x24e8] sm:$0xff]
    %v1385 = vld [vmem:[#allocation5 + $0x24f0] sm:$0xff]
    %v1386 = vld [vmem:[#allocation5 + $0x24f8] sm:$0xff]
    %v1387 = vld [vmem:[#allocation5 + $0x2500] sm:$0xff]
    %v1388 = vld [vmem:[#allocation5 + $0x2508] sm:$0xff]
    %v1389 = vld [vmem:[#allocation5 + $0x2510] sm:$0xff]
    %v1390 = vld [vmem:[#allocation5 + $0x2518] sm:$0xff]
    %v1391 = vld [vmem:[#allocation5 + $0x2520] sm:$0xff]
    %v1392 = vld [vmem:[#allocation5 + $0x2528] sm:$0xff]
    %v1393 = vld [vmem:[#allocation5 + $0x2530] sm:$0xff]
    %v1394 = vld [vmem:[#allocation5 + $0x2538] sm:$0xff]
    %v1395 = vld [vmem:[#allocation5 + $0x2540] sm:$0xff]
    %v1396 = vld [vmem:[#allocation5 + $0x2548] sm:$0xff]
    %v1397 = vld [vmem:[#allocation5 + $0x2550] sm:$0xff]
    %v1398 = vld [vmem:[#allocation5 + $0x2558] sm:$0xff]
    %v1399 = vld [vmem:[#allocation5 + $0x2560] sm:$0xff]
    %v1400 = vld [vmem:[#allocation5 + $0x2568] sm:$0xff]
    %v1401 = vld [vmem:[#allocation5 + $0x2570] sm:$0xff]
    %v1402 = vld [vmem:[#allocation5 + $0x2578] sm:$0xff]
    %v1403 = vld [vmem:[#allocation5 + $0x2580] sm:$0xff]
    %v1404 = vld [vmem:[#allocation5 + $0x2588] sm:$0xff]
    %v1405 = vld [vmem:[#allocation5 + $0x2590] sm:$0xff]
    %v1406 = vld [vmem:[#allocation5 + $0x2598] sm:$0xff]
    %v1407 = vld [vmem:[#allocation5 + $0x25a0] sm:$0xff]
    %v1408 = vld [vmem:[#allocation5 + $0x25a8] sm:$0xff]
    %v1409 = vld [vmem:[#allocation5 + $0x25b0] sm:$0xff]
    %v1410 = vld [vmem:[#allocation5 + $0x25b8] sm:$0xff]
    %v1411 = vld [vmem:[#allocation5 + $0x25c0] sm:$0xff]
    %v1412 = vld [vmem:[#allocation5 + $0x25c8] sm:$0xff]
    %v1413 = vld [vmem:[#allocation5 + $0x25d0] sm:$0xff]
    %v1414 = vld [vmem:[#allocation5 + $0x25d8] sm:$0xff]
    %v1415 = vld [vmem:[#allocation5 + $0x25e0] sm:$0xff]
    %v1416 = vld [vmem:[#allocation5 + $0x25e8] sm:$0xff]
    %v1417 = vld [vmem:[#allocation5 + $0x25f0] sm:$0xff]
    %v1418 = vld [vmem:[#allocation5 + $0x25f8] sm:$0xff]
    %v1419 = vld [vmem:[#allocation5 + $0x2600] sm:$0xff]
    %v1420 = vld [vmem:[#allocation5 + $0x2608] sm:$0xff]
    %v1421 = vld [vmem:[#allocation5 + $0x2610] sm:$0xff]
    %v1422 = vld [vmem:[#allocation5 + $0x2618] sm:$0xff]
    %v1423 = vld [vmem:[#allocation5 + $0x2620] sm:$0xff]
    %v1424 = vld [vmem:[#allocation5 + $0x2628] sm:$0xff]
    %v1425 = vld [vmem:[#allocation5 + $0x2630] sm:$0xff]
    %v1426 = vld [vmem:[#allocation5 + $0x2638] sm:$0xff]
    %v1427 = vld [vmem:[#allocation5 + $0x2640] sm:$0xff]
    %v1428 = vld [vmem:[#allocation5 + $0x2648] sm:$0xff]
    %v1429 = vld [vmem:[#allocation5 + $0x2650] sm:$0xff]
    %v1430 = vld [vmem:[#allocation5 + $0x2658] sm:$0xff]
    %v1431 = vld [vmem:[#allocation5 + $0x2660] sm:$0xff]
    %v1432 = vld [vmem:[#allocation5 + $0x2668] sm:$0xff]
    %v1433 = vld [vmem:[#allocation5 + $0x2670] sm:$0xff]
    %v1434 = vld [vmem:[#allocation5 + $0x2678] sm:$0xff]
    %v1435 = vld [vmem:[#allocation5 + $0x2680] sm:$0xff]
    %v1436 = vld [vmem:[#allocation5 + $0x2688] sm:$0xff]
    %v1437 = vld [vmem:[#allocation5 + $0x2690] sm:$0xff]
    %v1438 = vld [vmem:[#allocation5 + $0x2698] sm:$0xff]
    %v1439 = vld [vmem:[#allocation5 + $0x26a0] sm:$0xff]
    %v1440 = vld [vmem:[#allocation5 + $0x26a8] sm:$0xff]
    %v1441 = vld [vmem:[#allocation5 + $0x26b0] sm:$0xff]
    %v1442 = vld [vmem:[#allocation5 + $0x26b8] sm:$0xff]
    %v1443 = vld [vmem:[#allocation5 + $0x26c0] sm:$0xff]
    %v1444 = vld [vmem:[#allocation5 + $0x26c8] sm:$0xff]
    %v1445 = vld [vmem:[#allocation5 + $0x26d0] sm:$0xff]
    %v1446 = vld [vmem:[#allocation5 + $0x26d8] sm:$0xff]
    %v1447 = vld [vmem:[#allocation5 + $0x26e0] sm:$0xff]
    %v1448 = vld [vmem:[#allocation5 + $0x26e8] sm:$0xff]
    %v1449 = vld [vmem:[#allocation5 + $0x26f0] sm:$0xff]
    %v1450 = vld [vmem:[#allocation5 + $0x26f8] sm:$0xff]
    %v1451 = vld [vmem:[#allocation5 + $0x2700] sm:$0xff]
    %v1452 = vld [vmem:[#allocation5 + $0x2708] sm:$0xff]
    %v1453 = vld [vmem:[#allocation5 + $0x2710] sm:$0xff]
    %v1454 = vld [vmem:[#allocation5 + $0x2718] sm:$0xff]
    %v1455 = vld [vmem:[#allocation5 + $0x2720] sm:$0xff]
    %v1456 = vld [vmem:[#allocation5 + $0x2728] sm:$0xff]
    %v1457 = vld [vmem:[#allocation5 + $0x2730] sm:$0xff]
    %v1458 = vld [vmem:[#allocation5 + $0x2738] sm:$0xff]
    %v1459 = vld [vmem:[#allocation5 + $0x2740] sm:$0xff]
    %v1460 = vld [vmem:[#allocation5 + $0x2748] sm:$0xff]
    %v1461 = vld [vmem:[#allocation5 + $0x2750] sm:$0xff]
    %v1462 = vld [vmem:[#allocation5 + $0x2758] sm:$0xff]
    %v1463 = vld [vmem:[#allocation5 + $0x2760] sm:$0xff]
    %v1464 = vld [vmem:[#allocation5 + $0x2768] sm:$0xff]
    %v1465 = vld [vmem:[#allocation5 + $0x2770] sm:$0xff]
    %v1466 = vld [vmem:[#allocation5 + $0x2778] sm:$0xff]
    %v1467 = vld [vmem:[#allocation5 + $0x2780] sm:$0xff]
    %v1468 = vld [vmem:[#allocation5 + $0x2788] sm:$0xff]
    %v1469 = vld [vmem:[#allocation5 + $0x2790] sm:$0xff]
    %v1470 = vld [vmem:[#allocation5 + $0x2798] sm:$0xff]
    %v1471 = vld [vmem:[#allocation5 + $0x27a0] sm:$0xff]
    %v1472 = vld [vmem:[#allocation5 + $0x27a8] sm:$0xff]
    %v1473 = vld [vmem:[#allocation5 + $0x27b0] sm:$0xff]
    %v1474 = vld [vmem:[#allocation5 + $0x27b8] sm:$0xff]
    %v1475 = vld [vmem:[#allocation5 + $0x27c0] sm:$0xff]
    %v1476 = vld [vmem:[#allocation5 + $0x27c8] sm:$0xff]
    %v1477 = vld [vmem:[#allocation5 + $0x27d0] sm:$0xff]
    %v1478 = vld [vmem:[#allocation5 + $0x27d8] sm:$0xff]
    %v1479 = vld [vmem:[#allocation5 + $0x27e0] sm:$0xff]
    %v1480 = vld [vmem:[#allocation5 + $0x27e8] sm:$0xff]
    %v1481 = vld [vmem:[#allocation5 + $0x27f0] sm:$0xff]
    %v1482 = vld [vmem:[#allocation5 + $0x27f8] sm:$0xff]
    %v1483 = vld [vmem:[#allocation5 + $0x2800] sm:$0xff]
    %v1484 = vld [vmem:[#allocation5 + $0x2808] sm:$0xff]
    %v1485 = vld [vmem:[#allocation5 + $0x2810] sm:$0xff]
    %v1486 = vld [vmem:[#allocation5 + $0x2818] sm:$0xff]
    %v1487 = vld [vmem:[#allocation5 + $0x2820] sm:$0xff]
    %v1488 = vld [vmem:[#allocation5 + $0x2828] sm:$0xff]
    %v1489 = vld [vmem:[#allocation5 + $0x2830] sm:$0xff]
    %v1490 = vld [vmem:[#allocation5 + $0x2838] sm:$0xff]
    %v1491 = vld [vmem:[#allocation5 + $0x2840] sm:$0xff]
    %v1492 = vld [vmem:[#allocation5 + $0x2848] sm:$0xff]
    %v1493 = vld [vmem:[#allocation5 + $0x2850] sm:$0xff]
    %v1494 = vld [vmem:[#allocation5 + $0x2858] sm:$0xff]
    %v1495 = vld [vmem:[#allocation5 + $0x2860] sm:$0xff]
    %v1496 = vld [vmem:[#allocation5 + $0x2868] sm:$0xff]
    %v1497 = vld [vmem:[#allocation5 + $0x2870] sm:$0xff]
    %v1498 = vld [vmem:[#allocation5 + $0x2878] sm:$0xff]
    %v1499 = vld [vmem:[#allocation5 + $0x2880] sm:$0xff]
    %v1500 = vld [vmem:[#allocation5 + $0x2888] sm:$0xff]
    %v1501 = vld [vmem:[#allocation5 + $0x2890] sm:$0xff]
    %v1502 = vld [vmem:[#allocation5 + $0x2898] sm:$0xff]
    %v1503 = vld [vmem:[#allocation5 + $0x28a0] sm:$0xff]
    %v1504 = vld [vmem:[#allocation5 + $0x28a8] sm:$0xff]
    %v1505 = vld [vmem:[#allocation5 + $0x28b0] sm:$0xff]
    %v1506 = vld [vmem:[#allocation5 + $0x28b8] sm:$0xff]
    %v1507 = vld [vmem:[#allocation5 + $0x28c0] sm:$0xff]
    %v1508 = vld [vmem:[#allocation5 + $0x28c8] sm:$0xff]
    %v1509 = vld [vmem:[#allocation5 + $0x28d0] sm:$0xff]
    %v1510 = vld [vmem:[#allocation5 + $0x28d8] sm:$0xff]
    %v1511 = vld [vmem:[#allocation5 + $0x28e0] sm:$0xff]
    %v1512 = vld [vmem:[#allocation5 + $0x28e8] sm:$0xff]
    %v1513 = vld [vmem:[#allocation5 + $0x28f0] sm:$0xff]
    %v1514 = vld [vmem:[#allocation5 + $0x28f8] sm:$0xff]
    %v1515 = vld [vmem:[#allocation5 + $0x2900] sm:$0xff]
    %v1516 = vld [vmem:[#allocation5 + $0x2908] sm:$0xff]
    %v1517 = vld [vmem:[#allocation5 + $0x2910] sm:$0xff]
    %v1518 = vld [vmem:[#allocation5 + $0x2918] sm:$0xff]
    %v1519 = vld [vmem:[#allocation5 + $0x2920] sm:$0xff]
    %v1520 = vld [vmem:[#allocation5 + $0x2928] sm:$0xff]
    %v1521 = vld [vmem:[#allocation5 + $0x2930] sm:$0xff]
    %v1522 = vld [vmem:[#allocation5 + $0x2938] sm:$0xff]
    %v1523 = vld [vmem:[#allocation5 + $0x2940] sm:$0xff]
    %v1524 = vld [vmem:[#allocation5 + $0x2948] sm:$0xff]
    %v1525 = vld [vmem:[#allocation5 + $0x2950] sm:$0xff]
    %v1526 = vld [vmem:[#allocation5 + $0x2958] sm:$0xff]
    %v1527 = vld [vmem:[#allocation5 + $0x2960] sm:$0xff]
    %v1528 = vld [vmem:[#allocation5 + $0x2968] sm:$0xff]
    %v1529 = vld [vmem:[#allocation5 + $0x2970] sm:$0xff]
    %v1530 = vld [vmem:[#allocation5 + $0x2978] sm:$0xff]
    %v1531 = vld [vmem:[#allocation5 + $0x2980] sm:$0xff]
    %v1532 = vld [vmem:[#allocation5 + $0x2988] sm:$0xff]
    %v1533 = vld [vmem:[#allocation5 + $0x2990] sm:$0xff]
    %v1534 = vld [vmem:[#allocation5 + $0x2998] sm:$0xff]
    %v1535 = vld [vmem:[#allocation5 + $0x29a0] sm:$0xff]
    %v1536 = vld [vmem:[#allocation5 + $0x29a8] sm:$0xff]
    %v1537 = vld [vmem:[#allocation5 + $0x29b0] sm:$0xff]
    %v1538 = vld [vmem:[#allocation5 + $0x29b8] sm:$0xff]
    %v1539 = vld [vmem:[#allocation5 + $0x29c0] sm:$0xff]
    %v1540 = vld [vmem:[#allocation5 + $0x29c8] sm:$0xff]
    %v1541 = vld [vmem:[#allocation5 + $0x29d0] sm:$0xff]
    %v1542 = vld [vmem:[#allocation5 + $0x29d8] sm:$0xff]
    %v1543 = vld [vmem:[#allocation5 + $0x29e0] sm:$0xff]
    %v1544 = vld [vmem:[#allocation5 + $0x29e8] sm:$0xff]
    %v1545 = vld [vmem:[#allocation5 + $0x29f0] sm:$0xff]
    %v1546 = vld [vmem:[#allocation5 + $0x29f8] sm:$0xff]
    %v1547 = vld [vmem:[#allocation5 + $0x2a00] sm:$0xff]
    %v1548 = vld [vmem:[#allocation5 + $0x2a08] sm:$0xff]
    %v1549 = vld [vmem:[#allocation5 + $0x2a10] sm:$0xff]
    %v1550 = vld [vmem:[#allocation5 + $0x2a18] sm:$0xff]
    %v1551 = vld [vmem:[#allocation5 + $0x2a20] sm:$0xff]
    %v1552 = vld [vmem:[#allocation5 + $0x2a28] sm:$0xff]
    %v1553 = vld [vmem:[#allocation5 + $0x2a30] sm:$0xff]
    %v1554 = vld [vmem:[#allocation5 + $0x2a38] sm:$0xff]
    %v1555 = vld [vmem:[#allocation5 + $0x2a40] sm:$0xff]
    %v1556 = vld [vmem:[#allocation5 + $0x2a48] sm:$0xff]
    %v1557 = vld [vmem:[#allocation5 + $0x2a50] sm:$0xff]
    %v1558 = vld [vmem:[#allocation5 + $0x2a58] sm:$0xff]
    %v1559 = vld [vmem:[#allocation5 + $0x2a60] sm:$0xff]
    %v1560 = vld [vmem:[#allocation5 + $0x2a68] sm:$0xff]
    %v1561 = vld [vmem:[#allocation5 + $0x2a70] sm:$0xff]
    %v1562 = vld [vmem:[#allocation5 + $0x2a78] sm:$0xff]
    %v1563 = vld [vmem:[#allocation5 + $0x2a80] sm:$0xff]
    %v1564 = vld [vmem:[#allocation5 + $0x2a88] sm:$0xff]
    %v1565 = vld [vmem:[#allocation5 + $0x2a90] sm:$0xff]
    %v1566 = vld [vmem:[#allocation5 + $0x2a98] sm:$0xff]
    %v1567 = vld [vmem:[#allocation5 + $0x2aa0] sm:$0xff]
    %v1568 = vld [vmem:[#allocation5 + $0x2aa8] sm:$0xff]
    %v1569 = vld [vmem:[#allocation5 + $0x2ab0] sm:$0xff]
    %v1570 = vld [vmem:[#allocation5 + $0x2ab8] sm:$0xff]
    %v1571 = vld [vmem:[#allocation5 + $0x2ac0] sm:$0xff]
    %v1572 = vld [vmem:[#allocation5 + $0x2ac8] sm:$0xff]
    %v1573 = vld [vmem:[#allocation5 + $0x2ad0] sm:$0xff]
    %v1574 = vld [vmem:[#allocation5 + $0x2ad8] sm:$0xff]
    %v1575 = vld [vmem:[#allocation5 + $0x2ae0] sm:$0xff]
    %v1576 = vld [vmem:[#allocation5 + $0x2ae8] sm:$0xff]
    %v1577 = vld [vmem:[#allocation5 + $0x2af0] sm:$0xff]
    %v1578 = vld [vmem:[#allocation5 + $0x2af8] sm:$0xff]
    %v1579 = vld [vmem:[#allocation5 + $0x2b00] sm:$0xff]
    %v1580 = vld [vmem:[#allocation5 + $0x2b08] sm:$0xff]
    %v1581 = vld [vmem:[#allocation5 + $0x2b10] sm:$0xff]
    %v1582 = vld [vmem:[#allocation5 + $0x2b18] sm:$0xff]
    %v1583 = vld [vmem:[#allocation5 + $0x2b20] sm:$0xff]
    %v1584 = vld [vmem:[#allocation5 + $0x2b28] sm:$0xff]
    %v1585 = vld [vmem:[#allocation5 + $0x2b30] sm:$0xff]
    %v1586 = vld [vmem:[#allocation5 + $0x2b38] sm:$0xff]
    %v1587 = vld [vmem:[#allocation5 + $0x2b40] sm:$0xff]
    %v1588 = vld [vmem:[#allocation5 + $0x2b48] sm:$0xff]
    %v1589 = vld [vmem:[#allocation5 + $0x2b50] sm:$0xff]
    %v1590 = vld [vmem:[#allocation5 + $0x2b58] sm:$0xff]
    %v1591 = vld [vmem:[#allocation5 + $0x2b60] sm:$0xff]
    %v1592 = vld [vmem:[#allocation5 + $0x2b68] sm:$0xff]
    %v1593 = vld [vmem:[#allocation5 + $0x2b70] sm:$0xff]
    %v1594 = vld [vmem:[#allocation5 + $0x2b78] sm:$0xff]
    %v1595 = vld [vmem:[#allocation5 + $0x2b80] sm:$0xff]
    %v1596 = vld [vmem:[#allocation5 + $0x2b88] sm:$0xff]
    %v1597 = vld [vmem:[#allocation5 + $0x2b90] sm:$0xff]
    %v1598 = vld [vmem:[#allocation5 + $0x2b98] sm:$0xff]
    %v1599 = vld [vmem:[#allocation5 + $0x2ba0] sm:$0xff]
    %v1600 = vld [vmem:[#allocation5 + $0x2ba8] sm:$0xff]
    %v1601 = vld [vmem:[#allocation5 + $0x2bb0] sm:$0xff]
    %v1602 = vld [vmem:[#allocation5 + $0x2bb8] sm:$0xff]
    %v1603 = vld [vmem:[#allocation5 + $0x2bc0] sm:$0xff]
    %v1604 = vld [vmem:[#allocation5 + $0x2bc8] sm:$0xff]
    %v1605 = vld [vmem:[#allocation5 + $0x2bd0] sm:$0xff]
    %v1606 = vld [vmem:[#allocation5 + $0x2bd8] sm:$0xff]
    %v1607 = vld [vmem:[#allocation5 + $0x2be0] sm:$0xff]
    %v1608 = vld [vmem:[#allocation5 + $0x2be8] sm:$0xff]
    %v1609 = vld [vmem:[#allocation5 + $0x2bf0] sm:$0xff]
    %v1610 = vld [vmem:[#allocation5 + $0x2bf8] sm:$0xff]
    %v1611 = vld [vmem:[#allocation5 + $0x2c00] sm:$0xff]
    %v1612 = vld [vmem:[#allocation5 + $0x2c08] sm:$0xff]
    %v1613 = vld [vmem:[#allocation5 + $0x2c10] sm:$0xff]
    %v1614 = vld [vmem:[#allocation5 + $0x2c18] sm:$0xff]
    %v1615 = vld [vmem:[#allocation5 + $0x2c20] sm:$0xff]
    %v1616 = vld [vmem:[#allocation5 + $0x2c28] sm:$0xff]
    %v1617 = vld [vmem:[#allocation5 + $0x2c30] sm:$0xff]
    %v1618 = vld [vmem:[#allocation5 + $0x2c38] sm:$0xff]
    %v1619 = vld [vmem:[#allocation5 + $0x2c40] sm:$0xff]
    %v1620 = vld [vmem:[#allocation5 + $0x2c48] sm:$0xff]
    %v1621 = vld [vmem:[#allocation5 + $0x2c50] sm:$0xff]
    %v1622 = vld [vmem:[#allocation5 + $0x2c58] sm:$0xff]
    %v1623 = vld [vmem:[#allocation5 + $0x2c60] sm:$0xff]
    %v1624 = vld [vmem:[#allocation5 + $0x2c68] sm:$0xff]
    %v1625 = vld [vmem:[#allocation5 + $0x2c70] sm:$0xff]
    %v1626 = vld [vmem:[#allocation5 + $0x2c78] sm:$0xff]
    %v1627 = vld [vmem:[#allocation5 + $0x2c80] sm:$0xff]
    %v1628 = vld [vmem:[#allocation5 + $0x2c88] sm:$0xff]
    %v1629 = vld [vmem:[#allocation5 + $0x2c90] sm:$0xff]
    %v1630 = vld [vmem:[#allocation5 + $0x2c98] sm:$0xff]
    %v1631 = vld [vmem:[#allocation5 + $0x2ca0] sm:$0xff]
    %v1632 = vld [vmem:[#allocation5 + $0x2ca8] sm:$0xff]
    %v1633 = vld [vmem:[#allocation5 + $0x2cb0] sm:$0xff]
    %v1634 = vld [vmem:[#allocation5 + $0x2cb8] sm:$0xff]
    %v1635 = vld [vmem:[#allocation5 + $0x2cc0] sm:$0xff]
    %v1636 = vld [vmem:[#allocation5 + $0x2cc8] sm:$0xff]
    %v1637 = vld [vmem:[#allocation5 + $0x2cd0] sm:$0xff]
    %v1638 = vld [vmem:[#allocation5 + $0x2cd8] sm:$0xff]
    %v1639 = vld [vmem:[#allocation5 + $0x2ce0] sm:$0xff]
    %v1640 = vld [vmem:[#allocation5 + $0x2ce8] sm:$0xff]
    %v1641 = vld [vmem:[#allocation5 + $0x2cf0] sm:$0xff]
    %v1642 = vld [vmem:[#allocation5 + $0x2cf8] sm:$0xff]
    %v1643 = vld [vmem:[#allocation5 + $0x2d00] sm:$0xff]
    %v1644 = vld [vmem:[#allocation5 + $0x2d08] sm:$0xff]
    %v1645 = vld [vmem:[#allocation5 + $0x2d10] sm:$0xff]
    %v1646 = vld [vmem:[#allocation5 + $0x2d18] sm:$0xff]
    %v1647 = vld [vmem:[#allocation5 + $0x2d20] sm:$0xff]
    %v1648 = vld [vmem:[#allocation5 + $0x2d28] sm:$0xff]
    %v1649 = vld [vmem:[#allocation5 + $0x2d30] sm:$0xff]
    %v1650 = vld [vmem:[#allocation5 + $0x2d38] sm:$0xff]
    %v1651 = vld [vmem:[#allocation5 + $0x2d40] sm:$0xff]
    %v1652 = vld [vmem:[#allocation5 + $0x2d48] sm:$0xff]
    %v1653 = vld [vmem:[#allocation5 + $0x2d50] sm:$0xff]
    %v1654 = vld [vmem:[#allocation5 + $0x2d58] sm:$0xff]
    %v1655 = vld [vmem:[#allocation5 + $0x2d60] sm:$0xff]
    %v1656 = vld [vmem:[#allocation5 + $0x2d68] sm:$0xff]
    %v1657 = vld [vmem:[#allocation5 + $0x2d70] sm:$0xff]
    %v1658 = vld [vmem:[#allocation5 + $0x2d78] sm:$0xff]
    %v1659 = vld [vmem:[#allocation5 + $0x2d80] sm:$0xff]
    %v1660 = vld [vmem:[#allocation5 + $0x2d88] sm:$0xff]
    %v1661 = vld [vmem:[#allocation5 + $0x2d90] sm:$0xff]
    %v1662 = vld [vmem:[#allocation5 + $0x2d98] sm:$0xff]
    %v1663 = vld [vmem:[#allocation5 + $0x2da0] sm:$0xff]
    %v1664 = vld [vmem:[#allocation5 + $0x2da8] sm:$0xff]
    %v1665 = vld [vmem:[#allocation5 + $0x2db0] sm:$0xff]
    %v1666 = vld [vmem:[#allocation5 + $0x2db8] sm:$0xff]
    %v1667 = vld [vmem:[#allocation5 + $0x2dc0] sm:$0xff]
    %v1668 = vld [vmem:[#allocation5 + $0x2dc8] sm:$0xff]
    %v1669 = vld [vmem:[#allocation5 + $0x2dd0] sm:$0xff]
    %v1670 = vld [vmem:[#allocation5 + $0x2dd8] sm:$0xff]
    %v1671 = vld [vmem:[#allocation5 + $0x2de0] sm:$0xff]
    %v1672 = vld [vmem:[#allocation5 + $0x2de8] sm:$0xff]
    %v1673 = vld [vmem:[#allocation5 + $0x2df0] sm:$0xff]
    %v1674 = vld [vmem:[#allocation5 + $0x2df8] sm:$0xff]
    %v1675 = vld [vmem:[#allocation5 + $0x2e00] sm:$0xff]
    %v1676 = vld [vmem:[#allocation5 + $0x2e08] sm:$0xff]
    %v1677 = vld [vmem:[#allocation5 + $0x2e10] sm:$0xff]
    %v1678 = vld [vmem:[#allocation5 + $0x2e18] sm:$0xff]
    %v1679 = vld [vmem:[#allocation5 + $0x2e20] sm:$0xff]
    %v1680 = vld [vmem:[#allocation5 + $0x2e28] sm:$0xff]
    %v1681 = vld [vmem:[#allocation5 + $0x2e30] sm:$0xff]
    %v1682 = vld [vmem:[#allocation5 + $0x2e38] sm:$0xff]
    %v1683 = vld [vmem:[#allocation5 + $0x2e40] sm:$0xff]
    %v1684 = vld [vmem:[#allocation5 + $0x2e48] sm:$0xff]
    %v1685 = vld [vmem:[#allocation5 + $0x2e50] sm:$0xff]
    %v1686 = vld [vmem:[#allocation5 + $0x2e58] sm:$0xff]
    %v1687 = vld [vmem:[#allocation5 + $0x2e60] sm:$0xff]
    %v1688 = vld [vmem:[#allocation5 + $0x2e68] sm:$0xff]
    %v1689 = vld [vmem:[#allocation5 + $0x2e70] sm:$0xff]
    %v1690 = vld [vmem:[#allocation5 + $0x2e78] sm:$0xff]
    %v1691 = vld [vmem:[#allocation5 + $0x2e80] sm:$0xff]
    %v1692 = vld [vmem:[#allocation5 + $0x2e88] sm:$0xff]
    %v1693 = vld [vmem:[#allocation5 + $0x2e90] sm:$0xff]
    %v1694 = vld [vmem:[#allocation5 + $0x2e98] sm:$0xff]
    %v1695 = vld [vmem:[#allocation5 + $0x2ea0] sm:$0xff]
    %v1696 = vld [vmem:[#allocation5 + $0x2ea8] sm:$0xff]
    %v1697 = vld [vmem:[#allocation5 + $0x2eb0] sm:$0xff]
    %v1698 = vld [vmem:[#allocation5 + $0x2eb8] sm:$0xff]
    %v1699 = vld [vmem:[#allocation5 + $0x2ec0] sm:$0xff]
    %v1700 = vld [vmem:[#allocation5 + $0x2ec8] sm:$0xff]
    %v1701 = vld [vmem:[#allocation5 + $0x2ed0] sm:$0xff]
    %v1702 = vld [vmem:[#allocation5 + $0x2ed8] sm:$0xff]
    %v1703 = vld [vmem:[#allocation5 + $0x2ee0] sm:$0xff]
    %v1704 = vld [vmem:[#allocation5 + $0x2ee8] sm:$0xff]
    %v1705 = vld [vmem:[#allocation5 + $0x2ef0] sm:$0xff]
    %v1706 = vld [vmem:[#allocation5 + $0x2ef8] sm:$0xff]
    %v1707 = vld [vmem:[#allocation5 + $0x2f00] sm:$0xff]
    %v1708 = vld [vmem:[#allocation5 + $0x2f08] sm:$0xff]
    %v1709 = vld [vmem:[#allocation5 + $0x2f10] sm:$0xff]
    %v1710 = vld [vmem:[#allocation5 + $0x2f18] sm:$0xff]
    %v1711 = vld [vmem:[#allocation5 + $0x2f20] sm:$0xff]
    %v1712 = vld [vmem:[#allocation5 + $0x2f28] sm:$0xff]
    %v1713 = vld [vmem:[#allocation5 + $0x2f30] sm:$0xff]
    %v1714 = vld [vmem:[#allocation5 + $0x2f38] sm:$0xff]
    %v1715 = vld [vmem:[#allocation5 + $0x2f40] sm:$0xff]
    %v1716 = vld [vmem:[#allocation5 + $0x2f48] sm:$0xff]
    %v1717 = vld [vmem:[#allocation5 + $0x2f50] sm:$0xff]
    %v1718 = vld [vmem:[#allocation5 + $0x2f58] sm:$0xff]
    %v1719 = vld [vmem:[#allocation5 + $0x2f60] sm:$0xff]
    %v1720 = vld [vmem:[#allocation5 + $0x2f68] sm:$0xff]
    %v1721 = vld [vmem:[#allocation5 + $0x2f70] sm:$0xff]
    %v1722 = vld [vmem:[#allocation5 + $0x2f78] sm:$0xff]
    %v1723 = vld [vmem:[#allocation5 + $0x2f80] sm:$0xff]
    %v1724 = vld [vmem:[#allocation5 + $0x2f88] sm:$0xff]
    %v1725 = vld [vmem:[#allocation5 + $0x2f90] sm:$0xff]
    %v1726 = vld [vmem:[#allocation5 + $0x2f98] sm:$0xff]
    %v1727 = vld [vmem:[#allocation5 + $0x2fa0] sm:$0xff]
    %v1728 = vld [vmem:[#allocation5 + $0x2fa8] sm:$0xff]
    %v1729 = vld [vmem:[#allocation5 + $0x2fb0] sm:$0xff]
    %v1730 = vld [vmem:[#allocation5 + $0x2fb8] sm:$0xff]
    %v1731 = vld [vmem:[#allocation5 + $0x2fc0] sm:$0xff]
    %v1732 = vld [vmem:[#allocation5 + $0x2fc8] sm:$0xff]
    %v1733 = vld [vmem:[#allocation5 + $0x2fd0] sm:$0xff]
    %v1734 = vld [vmem:[#allocation5 + $0x2fd8] sm:$0xff]
    %v1735 = vld [vmem:[#allocation5 + $0x2fe0] sm:$0xff]
    %v1736 = vld [vmem:[#allocation5 + $0x2fe8] sm:$0xff]
    %v1737 = vld [vmem:[#allocation5 + $0x2ff0] sm:$0xff]
    %v1738 = vld [vmem:[#allocation5 + $0x2ff8] sm:$0xff]
    %v1739 = vld [vmem:[#allocation7] sm:$0xff]
    %v1741 = vlaneseq
    %v1742 = vshrl.u32 %v1741, 7
    %v1743 = vsub.s32 0, %v1742
    %v1744 = vrot.slane %v1739, %v1743
    %v1745 = vlaneseq
    %v1746 = vshrl.u32 %v1745, 7
    %v1747 = vsub.s32 1, %v1746
    %v1748 = vrot.slane %v1739, %v1747
    %v1749 = vlaneseq
    %v1750 = vshrl.u32 %v1749, 7
    %v1751 = vsub.s32 2, %v1750
    %v1752 = vrot.slane %v1739, %v1751
    %v1753 = vlaneseq
    %v1754 = vshrl.u32 %v1753, 7
    %v1755 = vsub.s32 3, %v1754
    %v1756 = vrot.slane %v1739, %v1755
    %v1757 = vlaneseq
    %v1758 = vshrl.u32 %v1757, 7
    %v1759 = vsub.s32 4, %v1758
    %v1760 = vrot.slane %v1739, %v1759
    %v1761 = vlaneseq
    %v1762 = vshrl.u32 %v1761, 7
    %v1763 = vsub.s32 5, %v1762
    %v1764 = vrot.slane %v1739, %v1763
    %v1765 = vlaneseq
    %v1766 = vshrl.u32 %v1765, 7
    %v1767 = vsub.s32 6, %v1766
    %v1768 = vrot.slane %v1739, %v1767
    %v1769 = vlaneseq
    %v1770 = vshrl.u32 %v1769, 7
    %v1771 = vsub.s32 7, %v1770
    %v1772 = vrot.slane %v1739, %v1771
    %v1805 = vunpack.c.l.b16 %v179
    %v1806 = vunpack.c.h.b16 %v179
    %v1807 = vunpack.c.l.b16 %v180
    %v1808 = vunpack.c.h.b16 %v180
    %v1809 = vunpack.c.l.b16 %v181
    %v1810 = vunpack.c.h.b16 %v181
    %v1811 = vunpack.c.l.b16 %v182
    %v1812 = vunpack.c.h.b16 %v182
    %v1813 = vunpack.c.l.b16 %v183
    %v1814 = vunpack.c.h.b16 %v183
    %v1815 = vunpack.c.l.b16 %v184
    %v1816 = vunpack.c.h.b16 %v184
    %v1817 = vunpack.c.l.b16 %v185
    %v1818 = vunpack.c.h.b16 %v185
    %v1819 = vunpack.c.l.b16 %v186
    %v1820 = vunpack.c.h.b16 %v186
    %v1821 = vunpack.c.l.b16 %v187
    %v1822 = vunpack.c.h.b16 %v187
    %v1823 = vunpack.c.l.b16 %v188
    %v1824 = vunpack.c.h.b16 %v188
    %v1825 = vunpack.c.l.b16 %v189
    %v1826 = vunpack.c.h.b16 %v189
    %v1827 = vunpack.c.l.b16 %v190
    %v1828 = vunpack.c.h.b16 %v190
    %v1829 = vunpack.c.l.b16 %v191
    %v1830 = vunpack.c.h.b16 %v191
    %v1831 = vunpack.c.l.b16 %v192
    %v1832 = vunpack.c.h.b16 %v192
    %v1833 = vunpack.c.l.b16 %v193
    %v1834 = vunpack.c.h.b16 %v193
    %v1835 = vunpack.c.l.b16 %v194
    %v1836 = vunpack.c.h.b16 %v194
    %v1837 = vunpack.c.l.b16 %v195
    %v1838 = vunpack.c.h.b16 %v195
    %v1839 = vunpack.c.l.b16 %v196
    %v1840 = vunpack.c.h.b16 %v196
    %v1841 = vunpack.c.l.b16 %v197
    %v1842 = vunpack.c.h.b16 %v197
    %v1843 = vunpack.c.l.b16 %v198
    %v1844 = vunpack.c.h.b16 %v198
    %v1845 = vunpack.c.l.b16 %v199
    %v1846 = vunpack.c.h.b16 %v199
    %v1847 = vunpack.c.l.b16 %v200
    %v1848 = vunpack.c.h.b16 %v200
    %v1849 = vunpack.c.l.b16 %v201
    %v1850 = vunpack.c.h.b16 %v201
    %v1851 = vunpack.c.l.b16 %v202
    %v1852 = vunpack.c.h.b16 %v202
    %v1853 = vpack.c.b16 %v1829, %v1805
    %v1854 = vpack.c.b16 %v1830, %v1806
    %v1855 = vpack.c.b16 %v1831, %v1807
    %v1856 = vpack.c.b16 %v1832, %v1808
    %v1857 = vpack.c.b16 %v1833, %v1809
    %v1858 = vpack.c.b16 %v1834, %v1810
    %v1859 = vpack.c.b16 %v1835, %v1811
    %v1860 = vpack.c.b16 %v1836, %v1812
    %v1861 = vpack.c.b16 %v1837, %v1813
    %v1862 = vpack.c.b16 %v1838, %v1814
    %v1863 = vpack.c.b16 %v1839, %v1815
    %v1864 = vpack.c.b16 %v1840, %v1816
    %v1865 = vpack.c.b16 %v1841, %v1817
    %v1866 = vpack.c.b16 %v1842, %v1818
    %v1867 = vpack.c.b16 %v1843, %v1819
    %v1868 = vpack.c.b16 %v1844, %v1820
    %v1869 = vpack.c.b16 %v1845, %v1821
    %v1870 = vpack.c.b16 %v1846, %v1822
    %v1871 = vpack.c.b16 %v1847, %v1823
    %v1872 = vpack.c.b16 %v1848, %v1824
    %v1873 = vpack.c.b16 %v1849, %v1825
    %v1874 = vpack.c.b16 %v1850, %v1826
    %v1875 = vpack.c.b16 %v1851, %v1827
    %v1876 = vpack.c.b16 %v1852, %v1828
    %v3437 = vunpack.c.l.b16 %v203
    %v3438 = vunpack.c.h.b16 %v203
    %v3439 = vunpack.c.l.b16 %v204
    %v3440 = vunpack.c.h.b16 %v204
    %v3441 = vunpack.c.l.b16 %v205
    %v3442 = vunpack.c.h.b16 %v205
    %v3443 = vunpack.c.l.b16 %v206
    %v3444 = vunpack.c.h.b16 %v206
    %v3445 = vunpack.c.l.b16 %v207
    %v3446 = vunpack.c.h.b16 %v207
    %v3447 = vunpack.c.l.b16 %v208
    %v3448 = vunpack.c.h.b16 %v208
    %v3449 = vunpack.c.l.b16 %v209
    %v3450 = vunpack.c.h.b16 %v209
    %v3451 = vunpack.c.l.b16 %v210
    %v3452 = vunpack.c.h.b16 %v210
    %v3453 = vunpack.c.l.b16 %v211
    %v3454 = vunpack.c.h.b16 %v211
    %v3455 = vunpack.c.l.b16 %v212
    %v3456 = vunpack.c.h.b16 %v212
    %v3457 = vunpack.c.l.b16 %v213
    %v3458 = vunpack.c.h.b16 %v213
    %v3459 = vunpack.c.l.b16 %v214
    %v3460 = vunpack.c.h.b16 %v214
    %v3461 = vunpack.c.l.b16 %v215
    %v3462 = vunpack.c.h.b16 %v215
    %v3463 = vunpack.c.l.b16 %v216
    %v3464 = vunpack.c.h.b16 %v216
    %v3465 = vunpack.c.l.b16 %v217
    %v3466 = vunpack.c.h.b16 %v217
    %v3467 = vunpack.c.l.b16 %v218
    %v3468 = vunpack.c.h.b16 %v218
    %v3469 = vunpack.c.l.b16 %v219
    %v3470 = vunpack.c.h.b16 %v219
    %v3471 = vunpack.c.l.b16 %v220
    %v3472 = vunpack.c.h.b16 %v220
    %v3473 = vunpack.c.l.b16 %v221
    %v3474 = vunpack.c.h.b16 %v221
    %v3475 = vunpack.c.l.b16 %v222
    %v3476 = vunpack.c.h.b16 %v222
    %v3477 = vunpack.c.l.b16 %v223
    %v3478 = vunpack.c.h.b16 %v223
    %v3479 = vunpack.c.l.b16 %v224
    %v3480 = vunpack.c.h.b16 %v224
    %v3481 = vunpack.c.l.b16 %v225
    %v3482 = vunpack.c.h.b16 %v225
    %v3483 = vunpack.c.l.b16 %v226
    %v3484 = vunpack.c.h.b16 %v226
    %v3485 = vunpack.c.l.b16 %v227
    %v3486 = vunpack.c.h.b16 %v227
    %v3487 = vunpack.c.l.b16 %v228
    %v3488 = vunpack.c.h.b16 %v228
    %v3489 = vunpack.c.l.b16 %v229
    %v3490 = vunpack.c.h.b16 %v229
    %v3491 = vunpack.c.l.b16 %v230
    %v3492 = vunpack.c.h.b16 %v230
    %v3493 = vunpack.c.l.b16 %v231
    %v3494 = vunpack.c.h.b16 %v231
    %v3495 = vunpack.c.l.b16 %v232
    %v3496 = vunpack.c.h.b16 %v232
    %v3497 = vunpack.c.l.b16 %v233
    %v3498 = vunpack.c.h.b16 %v233
    %v3499 = vunpack.c.l.b16 %v234
    %v3500 = vunpack.c.h.b16 %v234
    %v3501 = vunpack.c.l.b16 %v235
    %v3502 = vunpack.c.h.b16 %v235
    %v3503 = vunpack.c.l.b16 %v236
    %v3504 = vunpack.c.h.b16 %v236
    %v3505 = vunpack.c.l.b16 %v237
    %v3506 = vunpack.c.h.b16 %v237
    %v3507 = vunpack.c.l.b16 %v238
    %v3508 = vunpack.c.h.b16 %v238
    %v3509 = vunpack.c.l.b16 %v239
    %v3510 = vunpack.c.h.b16 %v239
    %v3511 = vunpack.c.l.b16 %v240
    %v3512 = vunpack.c.h.b16 %v240
    %v3513 = vunpack.c.l.b16 %v241
    %v3514 = vunpack.c.h.b16 %v241
    %v3515 = vunpack.c.l.b16 %v242
    %v3516 = vunpack.c.h.b16 %v242
    %v3517 = vunpack.c.l.b16 %v243
    %v3518 = vunpack.c.h.b16 %v243
    %v3519 = vunpack.c.l.b16 %v244
    %v3520 = vunpack.c.h.b16 %v244
    %v3521 = vunpack.c.l.b16 %v245
    %v3522 = vunpack.c.h.b16 %v245
    %v3523 = vunpack.c.l.b16 %v246
    %v3524 = vunpack.c.h.b16 %v246
    %v3525 = vunpack.c.l.b16 %v247
    %v3526 = vunpack.c.h.b16 %v247
    %v3527 = vunpack.c.l.b16 %v248
    %v3528 = vunpack.c.h.b16 %v248
    %v3529 = vunpack.c.l.b16 %v249
    %v3530 = vunpack.c.h.b16 %v249
    %v3531 = vunpack.c.l.b16 %v250
    %v3532 = vunpack.c.h.b16 %v250
    %v3533 = vunpack.c.l.b16 %v251
    %v3534 = vunpack.c.h.b16 %v251
    %v3535 = vunpack.c.l.b16 %v252
    %v3536 = vunpack.c.h.b16 %v252
    %v3537 = vunpack.c.l.b16 %v253
    %v3538 = vunpack.c.h.b16 %v253
    %v3539 = vunpack.c.l.b16 %v254
    %v3540 = vunpack.c.h.b16 %v254
    %v3541 = vunpack.c.l.b16 %v255
    %v3542 = vunpack.c.h.b16 %v255
    %v3543 = vunpack.c.l.b16 %v256
    %v3544 = vunpack.c.h.b16 %v256
    %v3545 = vunpack.c.l.b16 %v257
    %v3546 = vunpack.c.h.b16 %v257
    %v3547 = vunpack.c.l.b16 %v258
    %v3548 = vunpack.c.h.b16 %v258
    %v3549 = vunpack.c.l.b16 %v259
    %v3550 = vunpack.c.h.b16 %v259
    %v3551 = vunpack.c.l.b16 %v260
    %v3552 = vunpack.c.h.b16 %v260
    %v3553 = vunpack.c.l.b16 %v261
    %v3554 = vunpack.c.h.b16 %v261
    %v3555 = vunpack.c.l.b16 %v262
    %v3556 = vunpack.c.h.b16 %v262
    %v3557 = vunpack.c.l.b16 %v263
    %v3558 = vunpack.c.h.b16 %v263
    %v3559 = vunpack.c.l.b16 %v264
    %v3560 = vunpack.c.h.b16 %v264
    %v3561 = vunpack.c.l.b16 %v265
    %v3562 = vunpack.c.h.b16 %v265
    %v3563 = vunpack.c.l.b16 %v266
    %v3564 = vunpack.c.h.b16 %v266
    %v3565 = vunpack.c.l.b16 %v267
    %v3566 = vunpack.c.h.b16 %v267
    %v3567 = vunpack.c.l.b16 %v268
    %v3568 = vunpack.c.h.b16 %v268
    %v3569 = vunpack.c.l.b16 %v269
    %v3570 = vunpack.c.h.b16 %v269
    %v3571 = vunpack.c.l.b16 %v270
    %v3572 = vunpack.c.h.b16 %v270
    %v3573 = vunpack.c.l.b16 %v271
    %v3574 = vunpack.c.h.b16 %v271
    %v3575 = vunpack.c.l.b16 %v272
    %v3576 = vunpack.c.h.b16 %v272
    %v3577 = vunpack.c.l.b16 %v273
    %v3578 = vunpack.c.h.b16 %v273
    %v3579 = vunpack.c.l.b16 %v274
    %v3580 = vunpack.c.h.b16 %v274
    %v3581 = vunpack.c.l.b16 %v275
    %v3582 = vunpack.c.h.b16 %v275
    %v3583 = vunpack.c.l.b16 %v276
    %v3584 = vunpack.c.h.b16 %v276
    %v3585 = vunpack.c.l.b16 %v277
    %v3586 = vunpack.c.h.b16 %v277
    %v3587 = vunpack.c.l.b16 %v278
    %v3588 = vunpack.c.h.b16 %v278
    %v3589 = vunpack.c.l.b16 %v279
    %v3590 = vunpack.c.h.b16 %v279
    %v3591 = vunpack.c.l.b16 %v280
    %v3592 = vunpack.c.h.b16 %v280
    %v3593 = vunpack.c.l.b16 %v281
    %v3594 = vunpack.c.h.b16 %v281
    %v3595 = vunpack.c.l.b16 %v282
    %v3596 = vunpack.c.h.b16 %v282
    %v3597 = vunpack.c.l.b16 %v283
    %v3598 = vunpack.c.h.b16 %v283
    %v3599 = vunpack.c.l.b16 %v284
    %v3600 = vunpack.c.h.b16 %v284
    %v3601 = vunpack.c.l.b16 %v285
    %v3602 = vunpack.c.h.b16 %v285
    %v3603 = vunpack.c.l.b16 %v286
    %v3604 = vunpack.c.h.b16 %v286
    %v3605 = vunpack.c.l.b16 %v287
    %v3606 = vunpack.c.h.b16 %v287
    %v3607 = vunpack.c.l.b16 %v288
    %v3608 = vunpack.c.h.b16 %v288
    %v3609 = vunpack.c.l.b16 %v289
    %v3610 = vunpack.c.h.b16 %v289
    %v3611 = vunpack.c.l.b16 %v290
    %v3612 = vunpack.c.h.b16 %v290
    %v3613 = vunpack.c.l.b16 %v291
    %v3614 = vunpack.c.h.b16 %v291
    %v3615 = vunpack.c.l.b16 %v292
    %v3616 = vunpack.c.h.b16 %v292
    %v3617 = vunpack.c.l.b16 %v293
    %v3618 = vunpack.c.h.b16 %v293
    %v3619 = vunpack.c.l.b16 %v294
    %v3620 = vunpack.c.h.b16 %v294
    %v3621 = vunpack.c.l.b16 %v295
    %v3622 = vunpack.c.h.b16 %v295
    %v3623 = vunpack.c.l.b16 %v296
    %v3624 = vunpack.c.h.b16 %v296
    %v3625 = vunpack.c.l.b16 %v297
    %v3626 = vunpack.c.h.b16 %v297
    %v3627 = vunpack.c.l.b16 %v298
    %v3628 = vunpack.c.h.b16 %v298
    %v3629 = vunpack.c.l.b16 %v299
    %v3630 = vunpack.c.h.b16 %v299
    %v3631 = vunpack.c.l.b16 %v300
    %v3632 = vunpack.c.h.b16 %v300
    %v3633 = vunpack.c.l.b16 %v301
    %v3634 = vunpack.c.h.b16 %v301
    %v3635 = vunpack.c.l.b16 %v302
    %v3636 = vunpack.c.h.b16 %v302
    %v3637 = vunpack.c.l.b16 %v303
    %v3638 = vunpack.c.h.b16 %v303
    %v3639 = vunpack.c.l.b16 %v304
    %v3640 = vunpack.c.h.b16 %v304
    %v3641 = vunpack.c.l.b16 %v305
    %v3642 = vunpack.c.h.b16 %v305
    %v3643 = vunpack.c.l.b16 %v306
    %v3644 = vunpack.c.h.b16 %v306
    %v3645 = vunpack.c.l.b16 %v307
    %v3646 = vunpack.c.h.b16 %v307
    %v3647 = vunpack.c.l.b16 %v308
    %v3648 = vunpack.c.h.b16 %v308
    %v3649 = vunpack.c.l.b16 %v309
    %v3650 = vunpack.c.h.b16 %v309
    %v3651 = vunpack.c.l.b16 %v310
    %v3652 = vunpack.c.h.b16 %v310
    %v3653 = vunpack.c.l.b16 %v311
    %v3654 = vunpack.c.h.b16 %v311
    %v3655 = vunpack.c.l.b16 %v312
    %v3656 = vunpack.c.h.b16 %v312
    %v3657 = vunpack.c.l.b16 %v313
    %v3658 = vunpack.c.h.b16 %v313
    %v3659 = vunpack.c.l.b16 %v314
    %v3660 = vunpack.c.h.b16 %v314
    %v3661 = vunpack.c.l.b16 %v315
    %v3662 = vunpack.c.h.b16 %v315
    %v3663 = vunpack.c.l.b16 %v316
    %v3664 = vunpack.c.h.b16 %v316
    %v3665 = vunpack.c.l.b16 %v317
    %v3666 = vunpack.c.h.b16 %v317
    %v3667 = vunpack.c.l.b16 %v318
    %v3668 = vunpack.c.h.b16 %v318
    %v3669 = vunpack.c.l.b16 %v319
    %v3670 = vunpack.c.h.b16 %v319
    %v3671 = vunpack.c.l.b16 %v320
    %v3672 = vunpack.c.h.b16 %v320
    %v3673 = vunpack.c.l.b16 %v321
    %v3674 = vunpack.c.h.b16 %v321
    %v3675 = vunpack.c.l.b16 %v322
    %v3676 = vunpack.c.h.b16 %v322
    %v3677 = vunpack.c.l.b16 %v323
    %v3678 = vunpack.c.h.b16 %v323
    %v3679 = vunpack.c.l.b16 %v324
    %v3680 = vunpack.c.h.b16 %v324
    %v3681 = vunpack.c.l.b16 %v325
    %v3682 = vunpack.c.h.b16 %v325
    %v3683 = vunpack.c.l.b16 %v326
    %v3684 = vunpack.c.h.b16 %v326
    %v3685 = vunpack.c.l.b16 %v327
    %v3686 = vunpack.c.h.b16 %v327
    %v3687 = vunpack.c.l.b16 %v328
    %v3688 = vunpack.c.h.b16 %v328
    %v3689 = vunpack.c.l.b16 %v329
    %v3690 = vunpack.c.h.b16 %v329
    %v3691 = vunpack.c.l.b16 %v330
    %v3692 = vunpack.c.h.b16 %v330
    %v3693 = vunpack.c.l.b16 %v331
    %v3694 = vunpack.c.h.b16 %v331
    %v3695 = vunpack.c.l.b16 %v332
    %v3696 = vunpack.c.h.b16 %v332
    %v3697 = vunpack.c.l.b16 %v333
    %v3698 = vunpack.c.h.b16 %v333
    %v3699 = vunpack.c.l.b16 %v334
    %v3700 = vunpack.c.h.b16 %v334
    %v3701 = vunpack.c.l.b16 %v335
    %v3702 = vunpack.c.h.b16 %v335
    %v3703 = vunpack.c.l.b16 %v336
    %v3704 = vunpack.c.h.b16 %v336
    %v3705 = vunpack.c.l.b16 %v337
    %v3706 = vunpack.c.h.b16 %v337
    %v3707 = vunpack.c.l.b16 %v338
    %v3708 = vunpack.c.h.b16 %v338
    %v3709 = vunpack.c.l.b16 %v339
    %v3710 = vunpack.c.h.b16 %v339
    %v3711 = vunpack.c.l.b16 %v340
    %v3712 = vunpack.c.h.b16 %v340
    %v3713 = vunpack.c.l.b16 %v341
    %v3714 = vunpack.c.h.b16 %v341
    %v3715 = vunpack.c.l.b16 %v342
    %v3716 = vunpack.c.h.b16 %v342
    %v3717 = vunpack.c.l.b16 %v343
    %v3718 = vunpack.c.h.b16 %v343
    %v3719 = vunpack.c.l.b16 %v344
    %v3720 = vunpack.c.h.b16 %v344
    %v3721 = vunpack.c.l.b16 %v345
    %v3722 = vunpack.c.h.b16 %v345
    %v3723 = vunpack.c.l.b16 %v346
    %v3724 = vunpack.c.h.b16 %v346
    %v3725 = vunpack.c.l.b16 %v347
    %v3726 = vunpack.c.h.b16 %v347
    %v3727 = vunpack.c.l.b16 %v348
    %v3728 = vunpack.c.h.b16 %v348
    %v3729 = vunpack.c.l.b16 %v349
    %v3730 = vunpack.c.h.b16 %v349
    %v3731 = vunpack.c.l.b16 %v350
    %v3732 = vunpack.c.h.b16 %v350
    %v3733 = vunpack.c.l.b16 %v351
    %v3734 = vunpack.c.h.b16 %v351
    %v3735 = vunpack.c.l.b16 %v352
    %v3736 = vunpack.c.h.b16 %v352
    %v3737 = vunpack.c.l.b16 %v353
    %v3738 = vunpack.c.h.b16 %v353
    %v3739 = vunpack.c.l.b16 %v354
    %v3740 = vunpack.c.h.b16 %v354
    %v3741 = vunpack.c.l.b16 %v355
    %v3742 = vunpack.c.h.b16 %v355
    %v3743 = vunpack.c.l.b16 %v356
    %v3744 = vunpack.c.h.b16 %v356
    %v3745 = vunpack.c.l.b16 %v357
    %v3746 = vunpack.c.h.b16 %v357
    %v3747 = vunpack.c.l.b16 %v358
    %v3748 = vunpack.c.h.b16 %v358
    %v3749 = vunpack.c.l.b16 %v359
    %v3750 = vunpack.c.h.b16 %v359
    %v3751 = vunpack.c.l.b16 %v360
    %v3752 = vunpack.c.h.b16 %v360
    %v3753 = vunpack.c.l.b16 %v361
    %v3754 = vunpack.c.h.b16 %v361
    %v3755 = vunpack.c.l.b16 %v362
    %v3756 = vunpack.c.h.b16 %v362
    %v3757 = vunpack.c.l.b16 %v363
    %v3758 = vunpack.c.h.b16 %v363
    %v3759 = vunpack.c.l.b16 %v364
    %v3760 = vunpack.c.h.b16 %v364
    %v3761 = vunpack.c.l.b16 %v365
    %v3762 = vunpack.c.h.b16 %v365
    %v3763 = vunpack.c.l.b16 %v366
    %v3764 = vunpack.c.h.b16 %v366
    %v3765 = vunpack.c.l.b16 %v367
    %v3766 = vunpack.c.h.b16 %v367
    %v3767 = vunpack.c.l.b16 %v368
    %v3768 = vunpack.c.h.b16 %v368
    %v3769 = vunpack.c.l.b16 %v369
    %v3770 = vunpack.c.h.b16 %v369
    %v3771 = vunpack.c.l.b16 %v370
    %v3772 = vunpack.c.h.b16 %v370
    %v3773 = vunpack.c.l.b16 %v371
    %v3774 = vunpack.c.h.b16 %v371
    %v3775 = vunpack.c.l.b16 %v372
    %v3776 = vunpack.c.h.b16 %v372
    %v3777 = vunpack.c.l.b16 %v373
    %v3778 = vunpack.c.h.b16 %v373
    %v3779 = vunpack.c.l.b16 %v374
    %v3780 = vunpack.c.h.b16 %v374
    %v3781 = vunpack.c.l.b16 %v375
    %v3782 = vunpack.c.h.b16 %v375
    %v3783 = vunpack.c.l.b16 %v376
    %v3784 = vunpack.c.h.b16 %v376
    %v3785 = vunpack.c.l.b16 %v377
    %v3786 = vunpack.c.h.b16 %v377
    %v3787 = vunpack.c.l.b16 %v378
    %v3788 = vunpack.c.h.b16 %v378
    %v3789 = vunpack.c.l.b16 %v379
    %v3790 = vunpack.c.h.b16 %v379
    %v3791 = vunpack.c.l.b16 %v380
    %v3792 = vunpack.c.h.b16 %v380
    %v3793 = vunpack.c.l.b16 %v381
    %v3794 = vunpack.c.h.b16 %v381
    %v3795 = vunpack.c.l.b16 %v382
    %v3796 = vunpack.c.h.b16 %v382
    %v3797 = vunpack.c.l.b16 %v383
    %v3798 = vunpack.c.h.b16 %v383
    %v3799 = vunpack.c.l.b16 %v384
    %v3800 = vunpack.c.h.b16 %v384
    %v3801 = vunpack.c.l.b16 %v385
    %v3802 = vunpack.c.h.b16 %v385
    %v3803 = vunpack.c.l.b16 %v386
    %v3804 = vunpack.c.h.b16 %v386
    %v3805 = vunpack.c.l.b16 %v387
    %v3806 = vunpack.c.h.b16 %v387
    %v3807 = vunpack.c.l.b16 %v388
    %v3808 = vunpack.c.h.b16 %v388
    %v3809 = vunpack.c.l.b16 %v389
    %v3810 = vunpack.c.h.b16 %v389
    %v3811 = vunpack.c.l.b16 %v390
    %v3812 = vunpack.c.h.b16 %v390
    %v3813 = vunpack.c.l.b16 %v391
    %v3814 = vunpack.c.h.b16 %v391
    %v3815 = vunpack.c.l.b16 %v392
    %v3816 = vunpack.c.h.b16 %v392
    %v3817 = vunpack.c.l.b16 %v393
    %v3818 = vunpack.c.h.b16 %v393
    %v3819 = vunpack.c.l.b16 %v394
    %v3820 = vunpack.c.h.b16 %v394
    %v3821 = vunpack.c.l.b16 %v395
    %v3822 = vunpack.c.h.b16 %v395
    %v3823 = vunpack.c.l.b16 %v396
    %v3824 = vunpack.c.h.b16 %v396
    %v3825 = vunpack.c.l.b16 %v397
    %v3826 = vunpack.c.h.b16 %v397
    %v3827 = vunpack.c.l.b16 %v398
    %v3828 = vunpack.c.h.b16 %v398
    %v3829 = vunpack.c.l.b16 %v399
    %v3830 = vunpack.c.h.b16 %v399
    %v3831 = vunpack.c.l.b16 %v400
    %v3832 = vunpack.c.h.b16 %v400
    %v3833 = vunpack.c.l.b16 %v401
    %v3834 = vunpack.c.h.b16 %v401
    %v3835 = vunpack.c.l.b16 %v402
    %v3836 = vunpack.c.h.b16 %v402
    %v3837 = vunpack.c.l.b16 %v403
    %v3838 = vunpack.c.h.b16 %v403
    %v3839 = vunpack.c.l.b16 %v404
    %v3840 = vunpack.c.h.b16 %v404
    %v3841 = vunpack.c.l.b16 %v405
    %v3842 = vunpack.c.h.b16 %v405
    %v3843 = vunpack.c.l.b16 %v406
    %v3844 = vunpack.c.h.b16 %v406
    %v3845 = vunpack.c.l.b16 %v407
    %v3846 = vunpack.c.h.b16 %v407
    %v3847 = vunpack.c.l.b16 %v408
    %v3848 = vunpack.c.h.b16 %v408
    %v3849 = vunpack.c.l.b16 %v409
    %v3850 = vunpack.c.h.b16 %v409
    %v3851 = vunpack.c.l.b16 %v410
    %v3852 = vunpack.c.h.b16 %v410
    %v3853 = vunpack.c.l.b16 %v411
    %v3854 = vunpack.c.h.b16 %v411
    %v3855 = vunpack.c.l.b16 %v412
    %v3856 = vunpack.c.h.b16 %v412
    %v3857 = vunpack.c.l.b16 %v413
    %v3858 = vunpack.c.h.b16 %v413
    %v3859 = vunpack.c.l.b16 %v414
    %v3860 = vunpack.c.h.b16 %v414
    %v3861 = vunpack.c.l.b16 %v415
    %v3862 = vunpack.c.h.b16 %v415
    %v3863 = vunpack.c.l.b16 %v416
    %v3864 = vunpack.c.h.b16 %v416
    %v3865 = vunpack.c.l.b16 %v417
    %v3866 = vunpack.c.h.b16 %v417
    %v3867 = vunpack.c.l.b16 %v418
    %v3868 = vunpack.c.h.b16 %v418
    %v3869 = vunpack.c.l.b16 %v419
    %v3870 = vunpack.c.h.b16 %v419
    %v3871 = vunpack.c.l.b16 %v420
    %v3872 = vunpack.c.h.b16 %v420
    %v3873 = vunpack.c.l.b16 %v421
    %v3874 = vunpack.c.h.b16 %v421
    %v3875 = vunpack.c.l.b16 %v422
    %v3876 = vunpack.c.h.b16 %v422
    %v3877 = vunpack.c.l.b16 %v423
    %v3878 = vunpack.c.h.b16 %v423
    %v3879 = vunpack.c.l.b16 %v424
    %v3880 = vunpack.c.h.b16 %v424
    %v3881 = vunpack.c.l.b16 %v425
    %v3882 = vunpack.c.h.b16 %v425
    %v3883 = vunpack.c.l.b16 %v426
    %v3884 = vunpack.c.h.b16 %v426
    %v3885 = vunpack.c.l.b16 %v427
    %v3886 = vunpack.c.h.b16 %v427
    %v3887 = vunpack.c.l.b16 %v428
    %v3888 = vunpack.c.h.b16 %v428
    %v3889 = vunpack.c.l.b16 %v429
    %v3890 = vunpack.c.h.b16 %v429
    %v3891 = vunpack.c.l.b16 %v430
    %v3892 = vunpack.c.h.b16 %v430
    %v3893 = vunpack.c.l.b16 %v431
    %v3894 = vunpack.c.h.b16 %v431
    %v3895 = vunpack.c.l.b16 %v432
    %v3896 = vunpack.c.h.b16 %v432
    %v3897 = vunpack.c.l.b16 %v433
    %v3898 = vunpack.c.h.b16 %v433
    %v3899 = vunpack.c.l.b16 %v434
    %v3900 = vunpack.c.h.b16 %v434
    %v3901 = vunpack.c.l.b16 %v435
    %v3902 = vunpack.c.h.b16 %v435
    %v3903 = vunpack.c.l.b16 %v436
    %v3904 = vunpack.c.h.b16 %v436
    %v3905 = vunpack.c.l.b16 %v437
    %v3906 = vunpack.c.h.b16 %v437
    %v3907 = vunpack.c.l.b16 %v438
    %v3908 = vunpack.c.h.b16 %v438
    %v3909 = vunpack.c.l.b16 %v439
    %v3910 = vunpack.c.h.b16 %v439
    %v3911 = vunpack.c.l.b16 %v440
    %v3912 = vunpack.c.h.b16 %v440
    %v3913 = vunpack.c.l.b16 %v441
    %v3914 = vunpack.c.h.b16 %v441
    %v3915 = vunpack.c.l.b16 %v442
    %v3916 = vunpack.c.h.b16 %v442
    %v3917 = vunpack.c.l.b16 %v443
    %v3918 = vunpack.c.h.b16 %v443
    %v3919 = vunpack.c.l.b16 %v444
    %v3920 = vunpack.c.h.b16 %v444
    %v3921 = vunpack.c.l.b16 %v445
    %v3922 = vunpack.c.h.b16 %v445
    %v3923 = vunpack.c.l.b16 %v446
    %v3924 = vunpack.c.h.b16 %v446
    %v3925 = vunpack.c.l.b16 %v447
    %v3926 = vunpack.c.h.b16 %v447
    %v3927 = vunpack.c.l.b16 %v448
    %v3928 = vunpack.c.h.b16 %v448
    %v3929 = vunpack.c.l.b16 %v449
    %v3930 = vunpack.c.h.b16 %v449
    %v3931 = vunpack.c.l.b16 %v450
    %v3932 = vunpack.c.h.b16 %v450
    %v3933 = vunpack.c.l.b16 %v451
    %v3934 = vunpack.c.h.b16 %v451
    %v3935 = vunpack.c.l.b16 %v452
    %v3936 = vunpack.c.h.b16 %v452
    %v3937 = vunpack.c.l.b16 %v453
    %v3938 = vunpack.c.h.b16 %v453
    %v3939 = vunpack.c.l.b16 %v454
    %v3940 = vunpack.c.h.b16 %v454
    %v3941 = vunpack.c.l.b16 %v455
    %v3942 = vunpack.c.h.b16 %v455
    %v3943 = vunpack.c.l.b16 %v456
    %v3944 = vunpack.c.h.b16 %v456
    %v3945 = vunpack.c.l.b16 %v457
    %v3946 = vunpack.c.h.b16 %v457
    %v3947 = vunpack.c.l.b16 %v458
    %v3948 = vunpack.c.h.b16 %v458
    %v3949 = vunpack.c.l.b16 %v459
    %v3950 = vunpack.c.h.b16 %v459
    %v3951 = vunpack.c.l.b16 %v460
    %v3952 = vunpack.c.h.b16 %v460
    %v3953 = vunpack.c.l.b16 %v461
    %v3954 = vunpack.c.h.b16 %v461
    %v3955 = vunpack.c.l.b16 %v462
    %v3956 = vunpack.c.h.b16 %v462
    %v3957 = vunpack.c.l.b16 %v463
    %v3958 = vunpack.c.h.b16 %v463
    %v3959 = vunpack.c.l.b16 %v464
    %v3960 = vunpack.c.h.b16 %v464
    %v3961 = vunpack.c.l.b16 %v465
    %v3962 = vunpack.c.h.b16 %v465
    %v3963 = vunpack.c.l.b16 %v466
    %v3964 = vunpack.c.h.b16 %v466
    %v3965 = vunpack.c.l.b16 %v467
    %v3966 = vunpack.c.h.b16 %v467
    %v3967 = vunpack.c.l.b16 %v468
    %v3968 = vunpack.c.h.b16 %v468
    %v3969 = vunpack.c.l.b16 %v469
    %v3970 = vunpack.c.h.b16 %v469
    %v3971 = vunpack.c.l.b16 %v470
    %v3972 = vunpack.c.h.b16 %v470
    %v3973 = vunpack.c.l.b16 %v471
    %v3974 = vunpack.c.h.b16 %v471
    %v3975 = vunpack.c.l.b16 %v472
    %v3976 = vunpack.c.h.b16 %v472
    %v3977 = vunpack.c.l.b16 %v473
    %v3978 = vunpack.c.h.b16 %v473
    %v3979 = vunpack.c.l.b16 %v474
    %v3980 = vunpack.c.h.b16 %v474
    %v3981 = vunpack.c.l.b16 %v475
    %v3982 = vunpack.c.h.b16 %v475
    %v3983 = vunpack.c.l.b16 %v476
    %v3984 = vunpack.c.h.b16 %v476
    %v3985 = vunpack.c.l.b16 %v477
    %v3986 = vunpack.c.h.b16 %v477
    %v3987 = vunpack.c.l.b16 %v478
    %v3988 = vunpack.c.h.b16 %v478
    %v3989 = vunpack.c.l.b16 %v479
    %v3990 = vunpack.c.h.b16 %v479
    %v3991 = vunpack.c.l.b16 %v480
    %v3992 = vunpack.c.h.b16 %v480
    %v3993 = vunpack.c.l.b16 %v481
    %v3994 = vunpack.c.h.b16 %v481
    %v3995 = vunpack.c.l.b16 %v482
    %v3996 = vunpack.c.h.b16 %v482
    %v3997 = vunpack.c.l.b16 %v483
    %v3998 = vunpack.c.h.b16 %v483
    %v3999 = vunpack.c.l.b16 %v484
    %v4000 = vunpack.c.h.b16 %v484
    %v4001 = vunpack.c.l.b16 %v485
    %v4002 = vunpack.c.h.b16 %v485
    %v4003 = vunpack.c.l.b16 %v486
    %v4004 = vunpack.c.h.b16 %v486
    %v4005 = vunpack.c.l.b16 %v487
    %v4006 = vunpack.c.h.b16 %v487
    %v4007 = vunpack.c.l.b16 %v488
    %v4008 = vunpack.c.h.b16 %v488
    %v4009 = vunpack.c.l.b16 %v489
    %v4010 = vunpack.c.h.b16 %v489
    %v4011 = vunpack.c.l.b16 %v490
    %v4012 = vunpack.c.h.b16 %v490
    %v4013 = vunpack.c.l.b16 %v491
    %v4014 = vunpack.c.h.b16 %v491
    %v4015 = vunpack.c.l.b16 %v492
    %v4016 = vunpack.c.h.b16 %v492
    %v4017 = vunpack.c.l.b16 %v493
    %v4018 = vunpack.c.h.b16 %v493
    %v4019 = vunpack.c.l.b16 %v494
    %v4020 = vunpack.c.h.b16 %v494
    %v4021 = vunpack.c.l.b16 %v495
    %v4022 = vunpack.c.h.b16 %v495
    %v4023 = vunpack.c.l.b16 %v496
    %v4024 = vunpack.c.h.b16 %v496
    %v4025 = vunpack.c.l.b16 %v497
    %v4026 = vunpack.c.h.b16 %v497
    %v4027 = vunpack.c.l.b16 %v498
    %v4028 = vunpack.c.h.b16 %v498
    %v4029 = vunpack.c.l.b16 %v499
    %v4030 = vunpack.c.h.b16 %v499
    %v4031 = vunpack.c.l.b16 %v500
    %v4032 = vunpack.c.h.b16 %v500
    %v4033 = vunpack.c.l.b16 %v501
    %v4034 = vunpack.c.h.b16 %v501
    %v4035 = vunpack.c.l.b16 %v502
    %v4036 = vunpack.c.h.b16 %v502
    %v4037 = vunpack.c.l.b16 %v503
    %v4038 = vunpack.c.h.b16 %v503
    %v4039 = vunpack.c.l.b16 %v504
    %v4040 = vunpack.c.h.b16 %v504
    %v4041 = vunpack.c.l.b16 %v505
    %v4042 = vunpack.c.h.b16 %v505
    %v4043 = vunpack.c.l.b16 %v506
    %v4044 = vunpack.c.h.b16 %v506
    %v4045 = vunpack.c.l.b16 %v507
    %v4046 = vunpack.c.h.b16 %v507
    %v4047 = vunpack.c.l.b16 %v508
    %v4048 = vunpack.c.h.b16 %v508
    %v4049 = vunpack.c.l.b16 %v509
    %v4050 = vunpack.c.h.b16 %v509
    %v4051 = vunpack.c.l.b16 %v510
    %v4052 = vunpack.c.h.b16 %v510
    %v4053 = vunpack.c.l.b16 %v511
    %v4054 = vunpack.c.h.b16 %v511
    %v4055 = vunpack.c.l.b16 %v512
    %v4056 = vunpack.c.h.b16 %v512
    %v4057 = vunpack.c.l.b16 %v513
    %v4058 = vunpack.c.h.b16 %v513
    %v4059 = vunpack.c.l.b16 %v514
    %v4060 = vunpack.c.h.b16 %v514
    %v4061 = vunpack.c.l.b16 %v515
    %v4062 = vunpack.c.h.b16 %v515
    %v4063 = vunpack.c.l.b16 %v516
    %v4064 = vunpack.c.h.b16 %v516
    %v4065 = vunpack.c.l.b16 %v517
    %v4066 = vunpack.c.h.b16 %v517
    %v4067 = vunpack.c.l.b16 %v518
    %v4068 = vunpack.c.h.b16 %v518
    %v4069 = vunpack.c.l.b16 %v519
    %v4070 = vunpack.c.h.b16 %v519
    %v4071 = vunpack.c.l.b16 %v520
    %v4072 = vunpack.c.h.b16 %v520
    %v4073 = vunpack.c.l.b16 %v521
    %v4074 = vunpack.c.h.b16 %v521
    %v4075 = vunpack.c.l.b16 %v522
    %v4076 = vunpack.c.h.b16 %v522
    %v4077 = vunpack.c.l.b16 %v523
    %v4078 = vunpack.c.h.b16 %v523
    %v4079 = vunpack.c.l.b16 %v524
    %v4080 = vunpack.c.h.b16 %v524
    %v4081 = vunpack.c.l.b16 %v525
    %v4082 = vunpack.c.h.b16 %v525
    %v4083 = vunpack.c.l.b16 %v526
    %v4084 = vunpack.c.h.b16 %v526
    %v4085 = vunpack.c.l.b16 %v527
    %v4086 = vunpack.c.h.b16 %v527
    %v4087 = vunpack.c.l.b16 %v528
    %v4088 = vunpack.c.h.b16 %v528
    %v4089 = vunpack.c.l.b16 %v529
    %v4090 = vunpack.c.h.b16 %v529
    %v4091 = vunpack.c.l.b16 %v530
    %v4092 = vunpack.c.h.b16 %v530
    %v4093 = vunpack.c.l.b16 %v531
    %v4094 = vunpack.c.h.b16 %v531
    %v4095 = vunpack.c.l.b16 %v532
    %v4096 = vunpack.c.h.b16 %v532
    %v4097 = vunpack.c.l.b16 %v533
    %v4098 = vunpack.c.h.b16 %v533
    %v4099 = vunpack.c.l.b16 %v534
    %v4100 = vunpack.c.h.b16 %v534
    %v4101 = vunpack.c.l.b16 %v535
    %v4102 = vunpack.c.h.b16 %v535
    %v4103 = vunpack.c.l.b16 %v536
    %v4104 = vunpack.c.h.b16 %v536
    %v4105 = vunpack.c.l.b16 %v537
    %v4106 = vunpack.c.h.b16 %v537
    %v4107 = vunpack.c.l.b16 %v538
    %v4108 = vunpack.c.h.b16 %v538
    %v4109 = vunpack.c.l.b16 %v539
    %v4110 = vunpack.c.h.b16 %v539
    %v4111 = vunpack.c.l.b16 %v540
    %v4112 = vunpack.c.h.b16 %v540
    %v4113 = vunpack.c.l.b16 %v541
    %v4114 = vunpack.c.h.b16 %v541
    %v4115 = vunpack.c.l.b16 %v542
    %v4116 = vunpack.c.h.b16 %v542
    %v4117 = vunpack.c.l.b16 %v543
    %v4118 = vunpack.c.h.b16 %v543
    %v4119 = vunpack.c.l.b16 %v544
    %v4120 = vunpack.c.h.b16 %v544
    %v4121 = vunpack.c.l.b16 %v545
    %v4122 = vunpack.c.h.b16 %v545
    %v4123 = vunpack.c.l.b16 %v546
    %v4124 = vunpack.c.h.b16 %v546
    %v4125 = vunpack.c.l.b16 %v547
    %v4126 = vunpack.c.h.b16 %v547
    %v4127 = vunpack.c.l.b16 %v548
    %v4128 = vunpack.c.h.b16 %v548
    %v4129 = vunpack.c.l.b16 %v549
    %v4130 = vunpack.c.h.b16 %v549
    %v4131 = vunpack.c.l.b16 %v550
    %v4132 = vunpack.c.h.b16 %v550
    %v4133 = vunpack.c.l.b16 %v551
    %v4134 = vunpack.c.h.b16 %v551
    %v4135 = vunpack.c.l.b16 %v552
    %v4136 = vunpack.c.h.b16 %v552
    %v4137 = vunpack.c.l.b16 %v553
    %v4138 = vunpack.c.h.b16 %v553
    %v4139 = vunpack.c.l.b16 %v554
    %v4140 = vunpack.c.h.b16 %v554
    %v4141 = vunpack.c.l.b16 %v555
    %v4142 = vunpack.c.h.b16 %v555
    %v4143 = vunpack.c.l.b16 %v556
    %v4144 = vunpack.c.h.b16 %v556
    %v4145 = vunpack.c.l.b16 %v557
    %v4146 = vunpack.c.h.b16 %v557
    %v4147 = vunpack.c.l.b16 %v558
    %v4148 = vunpack.c.h.b16 %v558
    %v4149 = vunpack.c.l.b16 %v559
    %v4150 = vunpack.c.h.b16 %v559
    %v4151 = vunpack.c.l.b16 %v560
    %v4152 = vunpack.c.h.b16 %v560
    %v4153 = vunpack.c.l.b16 %v561
    %v4154 = vunpack.c.h.b16 %v561
    %v4155 = vunpack.c.l.b16 %v562
    %v4156 = vunpack.c.h.b16 %v562
    %v4157 = vunpack.c.l.b16 %v563
    %v4158 = vunpack.c.h.b16 %v563
    %v4159 = vunpack.c.l.b16 %v564
    %v4160 = vunpack.c.h.b16 %v564
    %v4161 = vunpack.c.l.b16 %v565
    %v4162 = vunpack.c.h.b16 %v565
    %v4163 = vunpack.c.l.b16 %v566
    %v4164 = vunpack.c.h.b16 %v566
    %v4165 = vunpack.c.l.b16 %v567
    %v4166 = vunpack.c.h.b16 %v567
    %v4167 = vunpack.c.l.b16 %v568
    %v4168 = vunpack.c.h.b16 %v568
    %v4169 = vunpack.c.l.b16 %v569
    %v4170 = vunpack.c.h.b16 %v569
    %v4171 = vunpack.c.l.b16 %v570
    %v4172 = vunpack.c.h.b16 %v570
    %v4173 = vunpack.c.l.b16 %v571
    %v4174 = vunpack.c.h.b16 %v571
    %v4175 = vunpack.c.l.b16 %v572
    %v4176 = vunpack.c.h.b16 %v572
    %v4177 = vunpack.c.l.b16 %v573
    %v4178 = vunpack.c.h.b16 %v573
    %v4179 = vunpack.c.l.b16 %v574
    %v4180 = vunpack.c.h.b16 %v574
    %v4181 = vunpack.c.l.b16 %v575
    %v4182 = vunpack.c.h.b16 %v575
    %v4183 = vunpack.c.l.b16 %v576
    %v4184 = vunpack.c.h.b16 %v576
    %v4185 = vunpack.c.l.b16 %v577
    %v4186 = vunpack.c.h.b16 %v577
    %v4187 = vunpack.c.l.b16 %v578
    %v4188 = vunpack.c.h.b16 %v578
    %v4189 = vunpack.c.l.b16 %v579
    %v4190 = vunpack.c.h.b16 %v579
    %v4191 = vunpack.c.l.b16 %v580
    %v4192 = vunpack.c.h.b16 %v580
    %v4193 = vunpack.c.l.b16 %v581
    %v4194 = vunpack.c.h.b16 %v581
    %v4195 = vunpack.c.l.b16 %v582
    %v4196 = vunpack.c.h.b16 %v582
    %v4197 = vunpack.c.l.b16 %v583
    %v4198 = vunpack.c.h.b16 %v583
    %v4199 = vunpack.c.l.b16 %v584
    %v4200 = vunpack.c.h.b16 %v584
    %v4201 = vunpack.c.l.b16 %v585
    %v4202 = vunpack.c.h.b16 %v585
    %v4203 = vunpack.c.l.b16 %v586
    %v4204 = vunpack.c.h.b16 %v586
    %v4205 = vunpack.c.l.b16 %v587
    %v4206 = vunpack.c.h.b16 %v587
    %v4207 = vunpack.c.l.b16 %v588
    %v4208 = vunpack.c.h.b16 %v588
    %v4209 = vunpack.c.l.b16 %v589
    %v4210 = vunpack.c.h.b16 %v589
    %v4211 = vunpack.c.l.b16 %v590
    %v4212 = vunpack.c.h.b16 %v590
    %v4213 = vunpack.c.l.b16 %v591
    %v4214 = vunpack.c.h.b16 %v591
    %v4215 = vunpack.c.l.b16 %v592
    %v4216 = vunpack.c.h.b16 %v592
    %v4217 = vunpack.c.l.b16 %v593
    %v4218 = vunpack.c.h.b16 %v593
    %v4219 = vunpack.c.l.b16 %v594
    %v4220 = vunpack.c.h.b16 %v594
    %v4221 = vunpack.c.l.b16 %v595
    %v4222 = vunpack.c.h.b16 %v595
    %v4223 = vunpack.c.l.b16 %v596
    %v4224 = vunpack.c.h.b16 %v596
    %v4225 = vunpack.c.l.b16 %v597
    %v4226 = vunpack.c.h.b16 %v597
    %v4227 = vunpack.c.l.b16 %v598
    %v4228 = vunpack.c.h.b16 %v598
    %v4229 = vunpack.c.l.b16 %v599
    %v4230 = vunpack.c.h.b16 %v599
    %v4231 = vunpack.c.l.b16 %v600
    %v4232 = vunpack.c.h.b16 %v600
    %v4233 = vunpack.c.l.b16 %v601
    %v4234 = vunpack.c.h.b16 %v601
    %v4235 = vunpack.c.l.b16 %v602
    %v4236 = vunpack.c.h.b16 %v602
    %v4237 = vunpack.c.l.b16 %v603
    %v4238 = vunpack.c.h.b16 %v603
    %v4239 = vunpack.c.l.b16 %v604
    %v4240 = vunpack.c.h.b16 %v604
    %v4241 = vunpack.c.l.b16 %v605
    %v4242 = vunpack.c.h.b16 %v605
    %v4243 = vunpack.c.l.b16 %v606
    %v4244 = vunpack.c.h.b16 %v606
    %v4245 = vunpack.c.l.b16 %v607
    %v4246 = vunpack.c.h.b16 %v607
    %v4247 = vunpack.c.l.b16 %v608
    %v4248 = vunpack.c.h.b16 %v608
    %v4249 = vunpack.c.l.b16 %v609
    %v4250 = vunpack.c.h.b16 %v609
    %v4251 = vunpack.c.l.b16 %v610
    %v4252 = vunpack.c.h.b16 %v610
    %v4253 = vunpack.c.l.b16 %v611
    %v4254 = vunpack.c.h.b16 %v611
    %v4255 = vunpack.c.l.b16 %v612
    %v4256 = vunpack.c.h.b16 %v612
    %v4257 = vunpack.c.l.b16 %v613
    %v4258 = vunpack.c.h.b16 %v613
    %v4259 = vunpack.c.l.b16 %v614
    %v4260 = vunpack.c.h.b16 %v614
    %v4261 = vunpack.c.l.b16 %v615
    %v4262 = vunpack.c.h.b16 %v615
    %v4263 = vunpack.c.l.b16 %v616
    %v4264 = vunpack.c.h.b16 %v616
    %v4265 = vunpack.c.l.b16 %v617
    %v4266 = vunpack.c.h.b16 %v617
    %v4267 = vunpack.c.l.b16 %v618
    %v4268 = vunpack.c.h.b16 %v618
    %v4269 = vunpack.c.l.b16 %v619
    %v4270 = vunpack.c.h.b16 %v619
    %v4271 = vunpack.c.l.b16 %v620
    %v4272 = vunpack.c.h.b16 %v620
    %v4273 = vunpack.c.l.b16 %v621
    %v4274 = vunpack.c.h.b16 %v621
    %v4275 = vunpack.c.l.b16 %v622
    %v4276 = vunpack.c.h.b16 %v622
    %v4277 = vunpack.c.l.b16 %v623
    %v4278 = vunpack.c.h.b16 %v623
    %v4279 = vunpack.c.l.b16 %v624
    %v4280 = vunpack.c.h.b16 %v624
    %v4281 = vunpack.c.l.b16 %v625
    %v4282 = vunpack.c.h.b16 %v625
    %v4283 = vunpack.c.l.b16 %v626
    %v4284 = vunpack.c.h.b16 %v626
    %v4285 = vunpack.c.l.b16 %v627
    %v4286 = vunpack.c.h.b16 %v627
    %v4287 = vunpack.c.l.b16 %v628
    %v4288 = vunpack.c.h.b16 %v628
    %v4289 = vunpack.c.l.b16 %v629
    %v4290 = vunpack.c.h.b16 %v629
    %v4291 = vunpack.c.l.b16 %v630
    %v4292 = vunpack.c.h.b16 %v630
    %v4293 = vunpack.c.l.b16 %v631
    %v4294 = vunpack.c.h.b16 %v631
    %v4295 = vunpack.c.l.b16 %v632
    %v4296 = vunpack.c.h.b16 %v632
    %v4297 = vunpack.c.l.b16 %v633
    %v4298 = vunpack.c.h.b16 %v633
    %v4299 = vunpack.c.l.b16 %v634
    %v4300 = vunpack.c.h.b16 %v634
    %v4301 = vunpack.c.l.b16 %v635
    %v4302 = vunpack.c.h.b16 %v635
    %v4303 = vunpack.c.l.b16 %v636
    %v4304 = vunpack.c.h.b16 %v636
    %v4305 = vunpack.c.l.b16 %v637
    %v4306 = vunpack.c.h.b16 %v637
    %v4307 = vunpack.c.l.b16 %v638
    %v4308 = vunpack.c.h.b16 %v638
    %v4309 = vunpack.c.l.b16 %v639
    %v4310 = vunpack.c.h.b16 %v639
    %v4311 = vunpack.c.l.b16 %v640
    %v4312 = vunpack.c.h.b16 %v640
    %v4313 = vunpack.c.l.b16 %v641
    %v4314 = vunpack.c.h.b16 %v641
    %v4315 = vunpack.c.l.b16 %v642
    %v4316 = vunpack.c.h.b16 %v642
    %v4317 = vunpack.c.l.b16 %v643
    %v4318 = vunpack.c.h.b16 %v643
    %v4319 = vunpack.c.l.b16 %v644
    %v4320 = vunpack.c.h.b16 %v644
    %v4321 = vunpack.c.l.b16 %v645
    %v4322 = vunpack.c.h.b16 %v645
    %v4323 = vunpack.c.l.b16 %v646
    %v4324 = vunpack.c.h.b16 %v646
    %v4325 = vunpack.c.l.b16 %v647
    %v4326 = vunpack.c.h.b16 %v647
    %v4327 = vunpack.c.l.b16 %v648
    %v4328 = vunpack.c.h.b16 %v648
    %v4329 = vunpack.c.l.b16 %v649
    %v4330 = vunpack.c.h.b16 %v649
    %v4331 = vunpack.c.l.b16 %v650
    %v4332 = vunpack.c.h.b16 %v650
    %v4333 = vunpack.c.l.b16 %v651
    %v4334 = vunpack.c.h.b16 %v651
    %v4335 = vunpack.c.l.b16 %v652
    %v4336 = vunpack.c.h.b16 %v652
    %v4337 = vunpack.c.l.b16 %v653
    %v4338 = vunpack.c.h.b16 %v653
    %v4339 = vunpack.c.l.b16 %v654
    %v4340 = vunpack.c.h.b16 %v654
    %v4341 = vunpack.c.l.b16 %v655
    %v4342 = vunpack.c.h.b16 %v655
    %v4343 = vunpack.c.l.b16 %v656
    %v4344 = vunpack.c.h.b16 %v656
    %v4345 = vunpack.c.l.b16 %v657
    %v4346 = vunpack.c.h.b16 %v657
    %v4347 = vunpack.c.l.b16 %v658
    %v4348 = vunpack.c.h.b16 %v658
    %v4349 = vunpack.c.l.b16 %v659
    %v4350 = vunpack.c.h.b16 %v659
    %v4351 = vunpack.c.l.b16 %v660
    %v4352 = vunpack.c.h.b16 %v660
    %v4353 = vunpack.c.l.b16 %v661
    %v4354 = vunpack.c.h.b16 %v661
    %v4355 = vunpack.c.l.b16 %v662
    %v4356 = vunpack.c.h.b16 %v662
    %v4357 = vunpack.c.l.b16 %v663
    %v4358 = vunpack.c.h.b16 %v663
    %v4359 = vunpack.c.l.b16 %v664
    %v4360 = vunpack.c.h.b16 %v664
    %v4361 = vunpack.c.l.b16 %v665
    %v4362 = vunpack.c.h.b16 %v665
    %v4363 = vunpack.c.l.b16 %v666
    %v4364 = vunpack.c.h.b16 %v666
    %v4365 = vunpack.c.l.b16 %v667
    %v4366 = vunpack.c.h.b16 %v667
    %v4367 = vunpack.c.l.b16 %v668
    %v4368 = vunpack.c.h.b16 %v668
    %v4369 = vunpack.c.l.b16 %v669
    %v4370 = vunpack.c.h.b16 %v669
    %v4371 = vunpack.c.l.b16 %v670
    %v4372 = vunpack.c.h.b16 %v670
    %v4373 = vunpack.c.l.b16 %v671
    %v4374 = vunpack.c.h.b16 %v671
    %v4375 = vunpack.c.l.b16 %v672
    %v4376 = vunpack.c.h.b16 %v672
    %v4377 = vunpack.c.l.b16 %v673
    %v4378 = vunpack.c.h.b16 %v673
    %v4379 = vunpack.c.l.b16 %v674
    %v4380 = vunpack.c.h.b16 %v674
    %v4381 = vunpack.c.l.b16 %v675
    %v4382 = vunpack.c.h.b16 %v675
    %v4383 = vunpack.c.l.b16 %v676
    %v4384 = vunpack.c.h.b16 %v676
    %v4385 = vunpack.c.l.b16 %v677
    %v4386 = vunpack.c.h.b16 %v677
    %v4387 = vunpack.c.l.b16 %v678
    %v4388 = vunpack.c.h.b16 %v678
    %v4389 = vunpack.c.l.b16 %v679
    %v4390 = vunpack.c.h.b16 %v679
    %v4391 = vunpack.c.l.b16 %v680
    %v4392 = vunpack.c.h.b16 %v680
    %v4393 = vunpack.c.l.b16 %v681
    %v4394 = vunpack.c.h.b16 %v681
    %v4395 = vunpack.c.l.b16 %v682
    %v4396 = vunpack.c.h.b16 %v682
    %v4397 = vunpack.c.l.b16 %v683
    %v4398 = vunpack.c.h.b16 %v683
    %v4399 = vunpack.c.l.b16 %v684
    %v4400 = vunpack.c.h.b16 %v684
    %v4401 = vunpack.c.l.b16 %v685
    %v4402 = vunpack.c.h.b16 %v685
    %v4403 = vunpack.c.l.b16 %v686
    %v4404 = vunpack.c.h.b16 %v686
    %v4405 = vunpack.c.l.b16 %v687
    %v4406 = vunpack.c.h.b16 %v687
    %v4407 = vunpack.c.l.b16 %v688
    %v4408 = vunpack.c.h.b16 %v688
    %v4409 = vunpack.c.l.b16 %v689
    %v4410 = vunpack.c.h.b16 %v689
    %v4411 = vunpack.c.l.b16 %v690
    %v4412 = vunpack.c.h.b16 %v690
    %v4413 = vunpack.c.l.b16 %v691
    %v4414 = vunpack.c.h.b16 %v691
    %v4415 = vunpack.c.l.b16 %v692
    %v4416 = vunpack.c.h.b16 %v692
    %v4417 = vunpack.c.l.b16 %v693
    %v4418 = vunpack.c.h.b16 %v693
    %v4419 = vunpack.c.l.b16 %v694
    %v4420 = vunpack.c.h.b16 %v694
    %v4421 = vunpack.c.l.b16 %v695
    %v4422 = vunpack.c.h.b16 %v695
    %v4423 = vunpack.c.l.b16 %v696
    %v4424 = vunpack.c.h.b16 %v696
    %v4425 = vunpack.c.l.b16 %v697
    %v4426 = vunpack.c.h.b16 %v697
    %v4427 = vunpack.c.l.b16 %v698
    %v4428 = vunpack.c.h.b16 %v698
    %v4429 = vunpack.c.l.b16 %v699
    %v4430 = vunpack.c.h.b16 %v699
    %v4431 = vunpack.c.l.b16 %v700
    %v4432 = vunpack.c.h.b16 %v700
    %v4433 = vunpack.c.l.b16 %v701
    %v4434 = vunpack.c.h.b16 %v701
    %v4435 = vunpack.c.l.b16 %v702
    %v4436 = vunpack.c.h.b16 %v702
    %v4437 = vunpack.c.l.b16 %v703
    %v4438 = vunpack.c.h.b16 %v703
    %v4439 = vunpack.c.l.b16 %v704
    %v4440 = vunpack.c.h.b16 %v704
    %v4441 = vunpack.c.l.b16 %v705
    %v4442 = vunpack.c.h.b16 %v705
    %v4443 = vunpack.c.l.b16 %v706
    %v4444 = vunpack.c.h.b16 %v706
    %v4445 = vunpack.c.l.b16 %v707
    %v4446 = vunpack.c.h.b16 %v707
    %v4447 = vunpack.c.l.b16 %v708
    %v4448 = vunpack.c.h.b16 %v708
    %v4449 = vunpack.c.l.b16 %v709
    %v4450 = vunpack.c.h.b16 %v709
    %v4451 = vunpack.c.l.b16 %v710
    %v4452 = vunpack.c.h.b16 %v710
    %v4453 = vunpack.c.l.b16 %v711
    %v4454 = vunpack.c.h.b16 %v711
    %v4455 = vunpack.c.l.b16 %v712
    %v4456 = vunpack.c.h.b16 %v712
    %v4457 = vunpack.c.l.b16 %v713
    %v4458 = vunpack.c.h.b16 %v713
    %v4459 = vunpack.c.l.b16 %v714
    %v4460 = vunpack.c.h.b16 %v714
    %v4461 = vunpack.c.l.b16 %v715
    %v4462 = vunpack.c.h.b16 %v715
    %v4463 = vunpack.c.l.b16 %v716
    %v4464 = vunpack.c.h.b16 %v716
    %v4465 = vunpack.c.l.b16 %v717
    %v4466 = vunpack.c.h.b16 %v717
    %v4467 = vunpack.c.l.b16 %v718
    %v4468 = vunpack.c.h.b16 %v718
    %v4469 = vunpack.c.l.b16 %v719
    %v4470 = vunpack.c.h.b16 %v719
    %v4471 = vunpack.c.l.b16 %v720
    %v4472 = vunpack.c.h.b16 %v720
    %v4473 = vunpack.c.l.b16 %v721
    %v4474 = vunpack.c.h.b16 %v721
    %v4475 = vunpack.c.l.b16 %v722
    %v4476 = vunpack.c.h.b16 %v722
    %v4477 = vunpack.c.l.b16 %v723
    %v4478 = vunpack.c.h.b16 %v723
    %v4479 = vunpack.c.l.b16 %v724
    %v4480 = vunpack.c.h.b16 %v724
    %v4481 = vunpack.c.l.b16 %v725
    %v4482 = vunpack.c.h.b16 %v725
    %v4483 = vunpack.c.l.b16 %v726
    %v4484 = vunpack.c.h.b16 %v726
    %v4485 = vunpack.c.l.b16 %v727
    %v4486 = vunpack.c.h.b16 %v727
    %v4487 = vunpack.c.l.b16 %v728
    %v4488 = vunpack.c.h.b16 %v728
    %v4489 = vunpack.c.l.b16 %v729
    %v4490 = vunpack.c.h.b16 %v729
    %v4491 = vunpack.c.l.b16 %v730
    %v4492 = vunpack.c.h.b16 %v730
    %v4493 = vunpack.c.l.b16 %v731
    %v4494 = vunpack.c.h.b16 %v731
    %v4495 = vunpack.c.l.b16 %v732
    %v4496 = vunpack.c.h.b16 %v732
    %v4497 = vunpack.c.l.b16 %v733
    %v4498 = vunpack.c.h.b16 %v733
    %v4499 = vunpack.c.l.b16 %v734
    %v4500 = vunpack.c.h.b16 %v734
    %v4501 = vunpack.c.l.b16 %v735
    %v4502 = vunpack.c.h.b16 %v735
    %v4503 = vunpack.c.l.b16 %v736
    %v4504 = vunpack.c.h.b16 %v736
    %v4505 = vunpack.c.l.b16 %v737
    %v4506 = vunpack.c.h.b16 %v737
    %v4507 = vunpack.c.l.b16 %v738
    %v4508 = vunpack.c.h.b16 %v738
    %v4509 = vunpack.c.l.b16 %v739
    %v4510 = vunpack.c.h.b16 %v739
    %v4511 = vunpack.c.l.b16 %v740
    %v4512 = vunpack.c.h.b16 %v740
    %v4513 = vunpack.c.l.b16 %v741
    %v4514 = vunpack.c.h.b16 %v741
    %v4515 = vunpack.c.l.b16 %v742
    %v4516 = vunpack.c.h.b16 %v742
    %v4517 = vunpack.c.l.b16 %v743
    %v4518 = vunpack.c.h.b16 %v743
    %v4519 = vunpack.c.l.b16 %v744
    %v4520 = vunpack.c.h.b16 %v744
    %v4521 = vunpack.c.l.b16 %v745
    %v4522 = vunpack.c.h.b16 %v745
    %v4523 = vunpack.c.l.b16 %v746
    %v4524 = vunpack.c.h.b16 %v746
    %v4525 = vunpack.c.l.b16 %v747
    %v4526 = vunpack.c.h.b16 %v747
    %v4527 = vunpack.c.l.b16 %v748
    %v4528 = vunpack.c.h.b16 %v748
    %v4529 = vunpack.c.l.b16 %v749
    %v4530 = vunpack.c.h.b16 %v749
    %v4531 = vunpack.c.l.b16 %v750
    %v4532 = vunpack.c.h.b16 %v750
    %v4533 = vunpack.c.l.b16 %v751
    %v4534 = vunpack.c.h.b16 %v751
    %v4535 = vunpack.c.l.b16 %v752
    %v4536 = vunpack.c.h.b16 %v752
    %v4537 = vunpack.c.l.b16 %v753
    %v4538 = vunpack.c.h.b16 %v753
    %v4539 = vunpack.c.l.b16 %v754
    %v4540 = vunpack.c.h.b16 %v754
    %v4541 = vunpack.c.l.b16 %v755
    %v4542 = vunpack.c.h.b16 %v755
    %v4543 = vunpack.c.l.b16 %v756
    %v4544 = vunpack.c.h.b16 %v756
    %v4545 = vunpack.c.l.b16 %v757
    %v4546 = vunpack.c.h.b16 %v757
    %v4547 = vunpack.c.l.b16 %v758
    %v4548 = vunpack.c.h.b16 %v758
    %v4549 = vunpack.c.l.b16 %v759
    %v4550 = vunpack.c.h.b16 %v759
    %v4551 = vunpack.c.l.b16 %v760
    %v4552 = vunpack.c.h.b16 %v760
    %v4553 = vunpack.c.l.b16 %v761
    %v4554 = vunpack.c.h.b16 %v761
    %v4555 = vunpack.c.l.b16 %v762
    %v4556 = vunpack.c.h.b16 %v762
    %v4557 = vunpack.c.l.b16 %v763
    %v4558 = vunpack.c.h.b16 %v763
    %v4559 = vunpack.c.l.b16 %v764
    %v4560 = vunpack.c.h.b16 %v764
    %v4561 = vunpack.c.l.b16 %v765
    %v4562 = vunpack.c.h.b16 %v765
    %v4563 = vunpack.c.l.b16 %v766
    %v4564 = vunpack.c.h.b16 %v766
    %v4565 = vunpack.c.l.b16 %v767
    %v4566 = vunpack.c.h.b16 %v767
    %v4567 = vunpack.c.l.b16 %v768
    %v4568 = vunpack.c.h.b16 %v768
    %v4569 = vunpack.c.l.b16 %v769
    %v4570 = vunpack.c.h.b16 %v769
    %v4571 = vunpack.c.l.b16 %v770
    %v4572 = vunpack.c.h.b16 %v770
    %v4573 = vunpack.c.l.b16 %v771
    %v4574 = vunpack.c.h.b16 %v771
    %v4575 = vunpack.c.l.b16 %v772
    %v4576 = vunpack.c.h.b16 %v772
    %v4577 = vunpack.c.l.b16 %v773
    %v4578 = vunpack.c.h.b16 %v773
    %v4579 = vunpack.c.l.b16 %v774
    %v4580 = vunpack.c.h.b16 %v774
    %v4581 = vunpack.c.l.b16 %v775
    %v4582 = vunpack.c.h.b16 %v775
    %v4583 = vunpack.c.l.b16 %v776
    %v4584 = vunpack.c.h.b16 %v776
    %v4585 = vunpack.c.l.b16 %v777
    %v4586 = vunpack.c.h.b16 %v777
    %v4587 = vunpack.c.l.b16 %v778
    %v4588 = vunpack.c.h.b16 %v778
    %v4589 = vunpack.c.l.b16 %v779
    %v4590 = vunpack.c.h.b16 %v779
    %v4591 = vunpack.c.l.b16 %v780
    %v4592 = vunpack.c.h.b16 %v780
    %v4593 = vunpack.c.l.b16 %v781
    %v4594 = vunpack.c.h.b16 %v781
    %v4595 = vunpack.c.l.b16 %v782
    %v4596 = vunpack.c.h.b16 %v782
    %v4597 = vunpack.c.l.b16 %v783
    %v4598 = vunpack.c.h.b16 %v783
    %v4599 = vunpack.c.l.b16 %v784
    %v4600 = vunpack.c.h.b16 %v784
    %v4601 = vunpack.c.l.b16 %v785
    %v4602 = vunpack.c.h.b16 %v785
    %v4603 = vunpack.c.l.b16 %v786
    %v4604 = vunpack.c.h.b16 %v786
    %v4605 = vunpack.c.l.b16 %v787
    %v4606 = vunpack.c.h.b16 %v787
    %v4607 = vunpack.c.l.b16 %v788
    %v4608 = vunpack.c.h.b16 %v788
    %v4609 = vunpack.c.l.b16 %v789
    %v4610 = vunpack.c.h.b16 %v789
    %v4611 = vunpack.c.l.b16 %v790
    %v4612 = vunpack.c.h.b16 %v790
    %v4613 = vunpack.c.l.b16 %v791
    %v4614 = vunpack.c.h.b16 %v791
    %v4615 = vunpack.c.l.b16 %v792
    %v4616 = vunpack.c.h.b16 %v792
    %v4617 = vunpack.c.l.b16 %v793
    %v4618 = vunpack.c.h.b16 %v793
    %v4619 = vunpack.c.l.b16 %v794
    %v4620 = vunpack.c.h.b16 %v794
    %v4621 = vunpack.c.l.b16 %v795
    %v4622 = vunpack.c.h.b16 %v795
    %v4623 = vunpack.c.l.b16 %v796
    %v4624 = vunpack.c.h.b16 %v796
    %v4625 = vunpack.c.l.b16 %v797
    %v4626 = vunpack.c.h.b16 %v797
    %v4627 = vunpack.c.l.b16 %v798
    %v4628 = vunpack.c.h.b16 %v798
    %v4629 = vunpack.c.l.b16 %v799
    %v4630 = vunpack.c.h.b16 %v799
    %v4631 = vunpack.c.l.b16 %v800
    %v4632 = vunpack.c.h.b16 %v800
    %v4633 = vunpack.c.l.b16 %v801
    %v4634 = vunpack.c.h.b16 %v801
    %v4635 = vunpack.c.l.b16 %v802
    %v4636 = vunpack.c.h.b16 %v802
    %v4637 = vunpack.c.l.b16 %v803
    %v4638 = vunpack.c.h.b16 %v803
    %v4639 = vunpack.c.l.b16 %v804
    %v4640 = vunpack.c.h.b16 %v804
    %v4641 = vunpack.c.l.b16 %v805
    %v4642 = vunpack.c.h.b16 %v805
    %v4643 = vunpack.c.l.b16 %v806
    %v4644 = vunpack.c.h.b16 %v806
    %v4645 = vunpack.c.l.b16 %v807
    %v4646 = vunpack.c.h.b16 %v807
    %v4647 = vunpack.c.l.b16 %v808
    %v4648 = vunpack.c.h.b16 %v808
    %v4649 = vunpack.c.l.b16 %v809
    %v4650 = vunpack.c.h.b16 %v809
    %v4651 = vunpack.c.l.b16 %v810
    %v4652 = vunpack.c.h.b16 %v810
    %v4653 = vunpack.c.l.b16 %v811
    %v4654 = vunpack.c.h.b16 %v811
    %v4655 = vunpack.c.l.b16 %v812
    %v4656 = vunpack.c.h.b16 %v812
    %v4657 = vunpack.c.l.b16 %v813
    %v4658 = vunpack.c.h.b16 %v813
    %v4659 = vunpack.c.l.b16 %v814
    %v4660 = vunpack.c.h.b16 %v814
    %v4661 = vunpack.c.l.b16 %v815
    %v4662 = vunpack.c.h.b16 %v815
    %v4663 = vunpack.c.l.b16 %v816
    %v4664 = vunpack.c.h.b16 %v816
    %v4665 = vunpack.c.l.b16 %v817
    %v4666 = vunpack.c.h.b16 %v817
    %v4667 = vunpack.c.l.b16 %v818
    %v4668 = vunpack.c.h.b16 %v818
    %v4669 = vunpack.c.l.b16 %v819
    %v4670 = vunpack.c.h.b16 %v819
    %v4671 = vunpack.c.l.b16 %v820
    %v4672 = vunpack.c.h.b16 %v820
    %v4673 = vunpack.c.l.b16 %v821
    %v4674 = vunpack.c.h.b16 %v821
    %v4675 = vunpack.c.l.b16 %v822
    %v4676 = vunpack.c.h.b16 %v822
    %v4677 = vunpack.c.l.b16 %v823
    %v4678 = vunpack.c.h.b16 %v823
    %v4679 = vunpack.c.l.b16 %v824
    %v4680 = vunpack.c.h.b16 %v824
    %v4681 = vunpack.c.l.b16 %v825
    %v4682 = vunpack.c.h.b16 %v825
    %v4683 = vunpack.c.l.b16 %v826
    %v4684 = vunpack.c.h.b16 %v826
    %v4685 = vunpack.c.l.b16 %v827
    %v4686 = vunpack.c.h.b16 %v827
    %v4687 = vunpack.c.l.b16 %v828
    %v4688 = vunpack.c.h.b16 %v828
    %v4689 = vunpack.c.l.b16 %v829
    %v4690 = vunpack.c.h.b16 %v829
    %v4691 = vunpack.c.l.b16 %v830
    %v4692 = vunpack.c.h.b16 %v830
    %v4693 = vunpack.c.l.b16 %v831
    %v4694 = vunpack.c.h.b16 %v831
    %v4695 = vunpack.c.l.b16 %v832
    %v4696 = vunpack.c.h.b16 %v832
    %v4697 = vunpack.c.l.b16 %v833
    %v4698 = vunpack.c.h.b16 %v833
    %v4699 = vunpack.c.l.b16 %v834
    %v4700 = vunpack.c.h.b16 %v834
    %v4701 = vunpack.c.l.b16 %v835
    %v4702 = vunpack.c.h.b16 %v835
    %v4703 = vunpack.c.l.b16 %v836
    %v4704 = vunpack.c.h.b16 %v836
    %v4705 = vunpack.c.l.b16 %v837
    %v4706 = vunpack.c.h.b16 %v837
    %v4707 = vunpack.c.l.b16 %v838
    %v4708 = vunpack.c.h.b16 %v838
    %v4709 = vunpack.c.l.b16 %v839
    %v4710 = vunpack.c.h.b16 %v839
    %v4711 = vunpack.c.l.b16 %v840
    %v4712 = vunpack.c.h.b16 %v840
    %v4713 = vunpack.c.l.b16 %v841
    %v4714 = vunpack.c.h.b16 %v841
    %v4715 = vunpack.c.l.b16 %v842
    %v4716 = vunpack.c.h.b16 %v842
    %v4717 = vunpack.c.l.b16 %v843
    %v4718 = vunpack.c.h.b16 %v843
    %v4719 = vunpack.c.l.b16 %v844
    %v4720 = vunpack.c.h.b16 %v844
    %v4721 = vunpack.c.l.b16 %v845
    %v4722 = vunpack.c.h.b16 %v845
    %v4723 = vunpack.c.l.b16 %v846
    %v4724 = vunpack.c.h.b16 %v846
    %v4725 = vunpack.c.l.b16 %v847
    %v4726 = vunpack.c.h.b16 %v847
    %v4727 = vunpack.c.l.b16 %v848
    %v4728 = vunpack.c.h.b16 %v848
    %v4729 = vunpack.c.l.b16 %v849
    %v4730 = vunpack.c.h.b16 %v849
    %v4731 = vunpack.c.l.b16 %v850
    %v4732 = vunpack.c.h.b16 %v850
    %v4733 = vunpack.c.l.b16 %v851
    %v4734 = vunpack.c.h.b16 %v851
    %v4735 = vunpack.c.l.b16 %v852
    %v4736 = vunpack.c.h.b16 %v852
    %v4737 = vunpack.c.l.b16 %v853
    %v4738 = vunpack.c.h.b16 %v853
    %v4739 = vunpack.c.l.b16 %v854
    %v4740 = vunpack.c.h.b16 %v854
    %v4741 = vunpack.c.l.b16 %v855
    %v4742 = vunpack.c.h.b16 %v855
    %v4743 = vunpack.c.l.b16 %v856
    %v4744 = vunpack.c.h.b16 %v856
    %v4745 = vunpack.c.l.b16 %v857
    %v4746 = vunpack.c.h.b16 %v857
    %v4747 = vunpack.c.l.b16 %v858
    %v4748 = vunpack.c.h.b16 %v858
    %v4749 = vunpack.c.l.b16 %v859
    %v4750 = vunpack.c.h.b16 %v859
    %v4751 = vunpack.c.l.b16 %v860
    %v4752 = vunpack.c.h.b16 %v860
    %v4753 = vunpack.c.l.b16 %v861
    %v4754 = vunpack.c.h.b16 %v861
    %v4755 = vunpack.c.l.b16 %v862
    %v4756 = vunpack.c.h.b16 %v862
    %v4757 = vunpack.c.l.b16 %v863
    %v4758 = vunpack.c.h.b16 %v863
    %v4759 = vunpack.c.l.b16 %v864
    %v4760 = vunpack.c.h.b16 %v864
    %v4761 = vunpack.c.l.b16 %v865
    %v4762 = vunpack.c.h.b16 %v865
    %v4763 = vunpack.c.l.b16 %v866
    %v4764 = vunpack.c.h.b16 %v866
    %v4765 = vunpack.c.l.b16 %v867
    %v4766 = vunpack.c.h.b16 %v867
    %v4767 = vunpack.c.l.b16 %v868
    %v4768 = vunpack.c.h.b16 %v868
    %v4769 = vunpack.c.l.b16 %v869
    %v4770 = vunpack.c.h.b16 %v869
    %v4771 = vunpack.c.l.b16 %v870
    %v4772 = vunpack.c.h.b16 %v870
    %v4773 = vunpack.c.l.b16 %v871
    %v4774 = vunpack.c.h.b16 %v871
    %v4775 = vunpack.c.l.b16 %v872
    %v4776 = vunpack.c.h.b16 %v872
    %v4777 = vunpack.c.l.b16 %v873
    %v4778 = vunpack.c.h.b16 %v873
    %v4779 = vunpack.c.l.b16 %v874
    %v4780 = vunpack.c.h.b16 %v874
    %v4781 = vunpack.c.l.b16 %v875
    %v4782 = vunpack.c.h.b16 %v875
    %v4783 = vunpack.c.l.b16 %v876
    %v4784 = vunpack.c.h.b16 %v876
    %v4785 = vunpack.c.l.b16 %v877
    %v4786 = vunpack.c.h.b16 %v877
    %v4787 = vunpack.c.l.b16 %v878
    %v4788 = vunpack.c.h.b16 %v878
    %v4789 = vunpack.c.l.b16 %v879
    %v4790 = vunpack.c.h.b16 %v879
    %v4791 = vunpack.c.l.b16 %v880
    %v4792 = vunpack.c.h.b16 %v880
    %v4793 = vunpack.c.l.b16 %v881
    %v4794 = vunpack.c.h.b16 %v881
    %v4795 = vunpack.c.l.b16 %v882
    %v4796 = vunpack.c.h.b16 %v882
    %v4797 = vunpack.c.l.b16 %v883
    %v4798 = vunpack.c.h.b16 %v883
    %v4799 = vunpack.c.l.b16 %v884
    %v4800 = vunpack.c.h.b16 %v884
    %v4801 = vunpack.c.l.b16 %v885
    %v4802 = vunpack.c.h.b16 %v885
    %v4803 = vunpack.c.l.b16 %v886
    %v4804 = vunpack.c.h.b16 %v886
    %v4805 = vunpack.c.l.b16 %v887
    %v4806 = vunpack.c.h.b16 %v887
    %v4807 = vunpack.c.l.b16 %v888
    %v4808 = vunpack.c.h.b16 %v888
    %v4809 = vunpack.c.l.b16 %v889
    %v4810 = vunpack.c.h.b16 %v889
    %v4811 = vunpack.c.l.b16 %v890
    %v4812 = vunpack.c.h.b16 %v890
    %v4813 = vunpack.c.l.b16 %v891
    %v4814 = vunpack.c.h.b16 %v891
    %v4815 = vunpack.c.l.b16 %v892
    %v4816 = vunpack.c.h.b16 %v892
    %v4817 = vunpack.c.l.b16 %v893
    %v4818 = vunpack.c.h.b16 %v893
    %v4819 = vunpack.c.l.b16 %v894
    %v4820 = vunpack.c.h.b16 %v894
    %v4821 = vunpack.c.l.b16 %v895
    %v4822 = vunpack.c.h.b16 %v895
    %v4823 = vunpack.c.l.b16 %v896
    %v4824 = vunpack.c.h.b16 %v896
    %v4825 = vunpack.c.l.b16 %v897
    %v4826 = vunpack.c.h.b16 %v897
    %v4827 = vunpack.c.l.b16 %v898
    %v4828 = vunpack.c.h.b16 %v898
    %v4829 = vunpack.c.l.b16 %v899
    %v4830 = vunpack.c.h.b16 %v899
    %v4831 = vunpack.c.l.b16 %v900
    %v4832 = vunpack.c.h.b16 %v900
    %v4833 = vunpack.c.l.b16 %v901
    %v4834 = vunpack.c.h.b16 %v901
    %v4835 = vunpack.c.l.b16 %v902
    %v4836 = vunpack.c.h.b16 %v902
    %v4837 = vunpack.c.l.b16 %v903
    %v4838 = vunpack.c.h.b16 %v903
    %v4839 = vunpack.c.l.b16 %v904
    %v4840 = vunpack.c.h.b16 %v904
    %v4841 = vunpack.c.l.b16 %v905
    %v4842 = vunpack.c.h.b16 %v905
    %v4843 = vunpack.c.l.b16 %v906
    %v4844 = vunpack.c.h.b16 %v906
    %v4845 = vunpack.c.l.b16 %v907
    %v4846 = vunpack.c.h.b16 %v907
    %v4847 = vunpack.c.l.b16 %v908
    %v4848 = vunpack.c.h.b16 %v908
    %v4849 = vunpack.c.l.b16 %v909
    %v4850 = vunpack.c.h.b16 %v909
    %v4851 = vunpack.c.l.b16 %v910
    %v4852 = vunpack.c.h.b16 %v910
    %v4853 = vunpack.c.l.b16 %v911
    %v4854 = vunpack.c.h.b16 %v911
    %v4855 = vunpack.c.l.b16 %v912
    %v4856 = vunpack.c.h.b16 %v912
    %v4857 = vunpack.c.l.b16 %v913
    %v4858 = vunpack.c.h.b16 %v913
    %v4859 = vunpack.c.l.b16 %v914
    %v4860 = vunpack.c.h.b16 %v914
    %v4861 = vunpack.c.l.b16 %v915
    %v4862 = vunpack.c.h.b16 %v915
    %v4863 = vunpack.c.l.b16 %v916
    %v4864 = vunpack.c.h.b16 %v916
    %v4865 = vunpack.c.l.b16 %v917
    %v4866 = vunpack.c.h.b16 %v917
    %v4867 = vunpack.c.l.b16 %v918
    %v4868 = vunpack.c.h.b16 %v918
    %v4869 = vunpack.c.l.b16 %v919
    %v4870 = vunpack.c.h.b16 %v919
    %v4871 = vunpack.c.l.b16 %v920
    %v4872 = vunpack.c.h.b16 %v920
    %v4873 = vunpack.c.l.b16 %v921
    %v4874 = vunpack.c.h.b16 %v921
    %v4875 = vunpack.c.l.b16 %v922
    %v4876 = vunpack.c.h.b16 %v922
    %v4877 = vunpack.c.l.b16 %v923
    %v4878 = vunpack.c.h.b16 %v923
    %v4879 = vunpack.c.l.b16 %v924
    %v4880 = vunpack.c.h.b16 %v924
    %v4881 = vunpack.c.l.b16 %v925
    %v4882 = vunpack.c.h.b16 %v925
    %v4883 = vunpack.c.l.b16 %v926
    %v4884 = vunpack.c.h.b16 %v926
    %v4885 = vunpack.c.l.b16 %v927
    %v4886 = vunpack.c.h.b16 %v927
    %v4887 = vunpack.c.l.b16 %v928
    %v4888 = vunpack.c.h.b16 %v928
    %v4889 = vunpack.c.l.b16 %v929
    %v4890 = vunpack.c.h.b16 %v929
    %v4891 = vunpack.c.l.b16 %v930
    %v4892 = vunpack.c.h.b16 %v930
    %v4893 = vunpack.c.l.b16 %v931
    %v4894 = vunpack.c.h.b16 %v931
    %v4895 = vunpack.c.l.b16 %v932
    %v4896 = vunpack.c.h.b16 %v932
    %v4897 = vunpack.c.l.b16 %v933
    %v4898 = vunpack.c.h.b16 %v933
    %v4899 = vunpack.c.l.b16 %v934
    %v4900 = vunpack.c.h.b16 %v934
    %v4901 = vunpack.c.l.b16 %v935
    %v4902 = vunpack.c.h.b16 %v935
    %v4903 = vunpack.c.l.b16 %v936
    %v4904 = vunpack.c.h.b16 %v936
    %v4905 = vunpack.c.l.b16 %v937
    %v4906 = vunpack.c.h.b16 %v937
    %v4907 = vunpack.c.l.b16 %v938
    %v4908 = vunpack.c.h.b16 %v938
    %v4909 = vunpack.c.l.b16 %v939
    %v4910 = vunpack.c.h.b16 %v939
    %v4911 = vunpack.c.l.b16 %v940
    %v4912 = vunpack.c.h.b16 %v940
    %v4913 = vunpack.c.l.b16 %v941
    %v4914 = vunpack.c.h.b16 %v941
    %v4915 = vunpack.c.l.b16 %v942
    %v4916 = vunpack.c.h.b16 %v942
    %v4917 = vunpack.c.l.b16 %v943
    %v4918 = vunpack.c.h.b16 %v943
    %v4919 = vunpack.c.l.b16 %v944
    %v4920 = vunpack.c.h.b16 %v944
    %v4921 = vunpack.c.l.b16 %v945
    %v4922 = vunpack.c.h.b16 %v945
    %v4923 = vunpack.c.l.b16 %v946
    %v4924 = vunpack.c.h.b16 %v946
    %v4925 = vunpack.c.l.b16 %v947
    %v4926 = vunpack.c.h.b16 %v947
    %v4927 = vunpack.c.l.b16 %v948
    %v4928 = vunpack.c.h.b16 %v948
    %v4929 = vunpack.c.l.b16 %v949
    %v4930 = vunpack.c.h.b16 %v949
    %v4931 = vunpack.c.l.b16 %v950
    %v4932 = vunpack.c.h.b16 %v950
    %v4933 = vunpack.c.l.b16 %v951
    %v4934 = vunpack.c.h.b16 %v951
    %v4935 = vunpack.c.l.b16 %v952
    %v4936 = vunpack.c.h.b16 %v952
    %v4937 = vunpack.c.l.b16 %v953
    %v4938 = vunpack.c.h.b16 %v953
    %v4939 = vunpack.c.l.b16 %v954
    %v4940 = vunpack.c.h.b16 %v954
    %v4941 = vunpack.c.l.b16 %v955
    %v4942 = vunpack.c.h.b16 %v955
    %v4943 = vunpack.c.l.b16 %v956
    %v4944 = vunpack.c.h.b16 %v956
    %v4945 = vunpack.c.l.b16 %v957
    %v4946 = vunpack.c.h.b16 %v957
    %v4947 = vunpack.c.l.b16 %v958
    %v4948 = vunpack.c.h.b16 %v958
    %v4949 = vunpack.c.l.b16 %v959
    %v4950 = vunpack.c.h.b16 %v959
    %v4951 = vunpack.c.l.b16 %v960
    %v4952 = vunpack.c.h.b16 %v960
    %v4953 = vunpack.c.l.b16 %v961
    %v4954 = vunpack.c.h.b16 %v961
    %v4955 = vunpack.c.l.b16 %v962
    %v4956 = vunpack.c.h.b16 %v962
    %v4957 = vunpack.c.l.b16 %v963
    %v4958 = vunpack.c.h.b16 %v963
    %v4959 = vunpack.c.l.b16 %v964
    %v4960 = vunpack.c.h.b16 %v964
    %v4961 = vunpack.c.l.b16 %v965
    %v4962 = vunpack.c.h.b16 %v965
    %v4963 = vunpack.c.l.b16 %v966
    %v4964 = vunpack.c.h.b16 %v966
    %v4965 = vunpack.c.l.b16 %v967
    %v4966 = vunpack.c.h.b16 %v967
    %v4967 = vunpack.c.l.b16 %v968
    %v4968 = vunpack.c.h.b16 %v968
    %v4969 = vunpack.c.l.b16 %v969
    %v4970 = vunpack.c.h.b16 %v969
    %v4971 = vunpack.c.l.b16 %v970
    %v4972 = vunpack.c.h.b16 %v970
    %v4973 = vunpack.c.l.b16 %v971
    %v4974 = vunpack.c.h.b16 %v971
    %v4975 = vunpack.c.l.b16 %v972
    %v4976 = vunpack.c.h.b16 %v972
    %v4977 = vunpack.c.l.b16 %v973
    %v4978 = vunpack.c.h.b16 %v973
    %v4979 = vunpack.c.l.b16 %v974
    %v4980 = vunpack.c.h.b16 %v974
    %v4981 = vunpack.c.l.b16 %v975
    %v4982 = vunpack.c.h.b16 %v975
    %v4983 = vunpack.c.l.b16 %v976
    %v4984 = vunpack.c.h.b16 %v976
    %v4985 = vunpack.c.l.b16 %v977
    %v4986 = vunpack.c.h.b16 %v977
    %v4987 = vunpack.c.l.b16 %v978
    %v4988 = vunpack.c.h.b16 %v978
    %v4989 = vunpack.c.l.b16 %v979
    %v4990 = vunpack.c.h.b16 %v979
    %v4991 = vunpack.c.l.b16 %v980
    %v4992 = vunpack.c.h.b16 %v980
    %v4993 = vunpack.c.l.b16 %v981
    %v4994 = vunpack.c.h.b16 %v981
    %v4995 = vunpack.c.l.b16 %v982
    %v4996 = vunpack.c.h.b16 %v982
    %v4997 = vunpack.c.l.b16 %v983
    %v4998 = vunpack.c.h.b16 %v983
    %v4999 = vunpack.c.l.b16 %v984
    %v5000 = vunpack.c.h.b16 %v984
    %v5001 = vunpack.c.l.b16 %v985
    %v5002 = vunpack.c.h.b16 %v985
    %v5003 = vunpack.c.l.b16 %v986
    %v5004 = vunpack.c.h.b16 %v986
    %v5005 = vunpack.c.l.b16 %v987
    %v5006 = vunpack.c.h.b16 %v987
    %v5007 = vunpack.c.l.b16 %v988
    %v5008 = vunpack.c.h.b16 %v988
    %v5009 = vunpack.c.l.b16 %v989
    %v5010 = vunpack.c.h.b16 %v989
    %v5011 = vunpack.c.l.b16 %v990
    %v5012 = vunpack.c.h.b16 %v990
    %v5013 = vunpack.c.l.b16 %v991
    %v5014 = vunpack.c.h.b16 %v991
    %v5015 = vunpack.c.l.b16 %v992
    %v5016 = vunpack.c.h.b16 %v992
    %v5017 = vunpack.c.l.b16 %v993
    %v5018 = vunpack.c.h.b16 %v993
    %v5019 = vunpack.c.l.b16 %v994
    %v5020 = vunpack.c.h.b16 %v994
    %v5021 = vunpack.c.l.b16 %v995
    %v5022 = vunpack.c.h.b16 %v995
    %v5023 = vunpack.c.l.b16 %v996
    %v5024 = vunpack.c.h.b16 %v996
    %v5025 = vunpack.c.l.b16 %v997
    %v5026 = vunpack.c.h.b16 %v997
    %v5027 = vunpack.c.l.b16 %v998
    %v5028 = vunpack.c.h.b16 %v998
    %v5029 = vunpack.c.l.b16 %v999
    %v5030 = vunpack.c.h.b16 %v999
    %v5031 = vunpack.c.l.b16 %v1000
    %v5032 = vunpack.c.h.b16 %v1000
    %v5033 = vunpack.c.l.b16 %v1001
    %v5034 = vunpack.c.h.b16 %v1001
    %v5035 = vunpack.c.l.b16 %v1002
    %v5036 = vunpack.c.h.b16 %v1002
    %v5037 = vunpack.c.l.b16 %v1003
    %v5038 = vunpack.c.h.b16 %v1003
    %v5039 = vunpack.c.l.b16 %v1004
    %v5040 = vunpack.c.h.b16 %v1004
    %v5041 = vunpack.c.l.b16 %v1005
    %v5042 = vunpack.c.h.b16 %v1005
    %v5043 = vunpack.c.l.b16 %v1006
    %v5044 = vunpack.c.h.b16 %v1006
    %v5045 = vunpack.c.l.b16 %v1007
    %v5046 = vunpack.c.h.b16 %v1007
    %v5047 = vunpack.c.l.b16 %v1008
    %v5048 = vunpack.c.h.b16 %v1008
    %v5049 = vunpack.c.l.b16 %v1009
    %v5050 = vunpack.c.h.b16 %v1009
    %v5051 = vunpack.c.l.b16 %v1010
    %v5052 = vunpack.c.h.b16 %v1010
    %v5053 = vunpack.c.l.b16 %v1011
    %v5054 = vunpack.c.h.b16 %v1011
    %v5055 = vunpack.c.l.b16 %v1012
    %v5056 = vunpack.c.h.b16 %v1012
    %v5057 = vunpack.c.l.b16 %v1013
    %v5058 = vunpack.c.h.b16 %v1013
    %v5059 = vunpack.c.l.b16 %v1014
    %v5060 = vunpack.c.h.b16 %v1014
    %v5061 = vunpack.c.l.b16 %v1015
    %v5062 = vunpack.c.h.b16 %v1015
    %v5063 = vunpack.c.l.b16 %v1016
    %v5064 = vunpack.c.h.b16 %v1016
    %v5065 = vunpack.c.l.b16 %v1017
    %v5066 = vunpack.c.h.b16 %v1017
    %v5067 = vunpack.c.l.b16 %v1018
    %v5068 = vunpack.c.h.b16 %v1018
    %v5069 = vunpack.c.l.b16 %v1019
    %v5070 = vunpack.c.h.b16 %v1019
    %v5071 = vunpack.c.l.b16 %v1020
    %v5072 = vunpack.c.h.b16 %v1020
    %v5073 = vunpack.c.l.b16 %v1021
    %v5074 = vunpack.c.h.b16 %v1021
    %v5075 = vunpack.c.l.b16 %v1022
    %v5076 = vunpack.c.h.b16 %v1022
    %v5077 = vunpack.c.l.b16 %v1023
    %v5078 = vunpack.c.h.b16 %v1023
    %v5079 = vunpack.c.l.b16 %v1024
    %v5080 = vunpack.c.h.b16 %v1024
    %v5081 = vunpack.c.l.b16 %v1025
    %v5082 = vunpack.c.h.b16 %v1025
    %v5083 = vunpack.c.l.b16 %v1026
    %v5084 = vunpack.c.h.b16 %v1026
    %v5085 = vunpack.c.l.b16 %v1027
    %v5086 = vunpack.c.h.b16 %v1027
    %v5087 = vunpack.c.l.b16 %v1028
    %v5088 = vunpack.c.h.b16 %v1028
    %v5089 = vunpack.c.l.b16 %v1029
    %v5090 = vunpack.c.h.b16 %v1029
    %v5091 = vunpack.c.l.b16 %v1030
    %v5092 = vunpack.c.h.b16 %v1030
    %v5093 = vunpack.c.l.b16 %v1031
    %v5094 = vunpack.c.h.b16 %v1031
    %v5095 = vunpack.c.l.b16 %v1032
    %v5096 = vunpack.c.h.b16 %v1032
    %v5097 = vunpack.c.l.b16 %v1033
    %v5098 = vunpack.c.h.b16 %v1033
    %v5099 = vunpack.c.l.b16 %v1034
    %v5100 = vunpack.c.h.b16 %v1034
    %v5101 = vunpack.c.l.b16 %v1035
    %v5102 = vunpack.c.h.b16 %v1035
    %v5103 = vunpack.c.l.b16 %v1036
    %v5104 = vunpack.c.h.b16 %v1036
    %v5105 = vunpack.c.l.b16 %v1037
    %v5106 = vunpack.c.h.b16 %v1037
    %v5107 = vunpack.c.l.b16 %v1038
    %v5108 = vunpack.c.h.b16 %v1038
    %v5109 = vunpack.c.l.b16 %v1039
    %v5110 = vunpack.c.h.b16 %v1039
    %v5111 = vunpack.c.l.b16 %v1040
    %v5112 = vunpack.c.h.b16 %v1040
    %v5113 = vunpack.c.l.b16 %v1041
    %v5114 = vunpack.c.h.b16 %v1041
    %v5115 = vunpack.c.l.b16 %v1042
    %v5116 = vunpack.c.h.b16 %v1042
    %v5117 = vunpack.c.l.b16 %v1043
    %v5118 = vunpack.c.h.b16 %v1043
    %v5119 = vunpack.c.l.b16 %v1044
    %v5120 = vunpack.c.h.b16 %v1044
    %v5121 = vunpack.c.l.b16 %v1045
    %v5122 = vunpack.c.h.b16 %v1045
    %v5123 = vunpack.c.l.b16 %v1046
    %v5124 = vunpack.c.h.b16 %v1046
    %v5125 = vunpack.c.l.b16 %v1047
    %v5126 = vunpack.c.h.b16 %v1047
    %v5127 = vunpack.c.l.b16 %v1048
    %v5128 = vunpack.c.h.b16 %v1048
    %v5129 = vunpack.c.l.b16 %v1049
    %v5130 = vunpack.c.h.b16 %v1049
    %v5131 = vunpack.c.l.b16 %v1050
    %v5132 = vunpack.c.h.b16 %v1050
    %v5133 = vunpack.c.l.b16 %v1051
    %v5134 = vunpack.c.h.b16 %v1051
    %v5135 = vunpack.c.l.b16 %v1052
    %v5136 = vunpack.c.h.b16 %v1052
    %v5137 = vunpack.c.l.b16 %v1053
    %v5138 = vunpack.c.h.b16 %v1053
    %v5139 = vunpack.c.l.b16 %v1054
    %v5140 = vunpack.c.h.b16 %v1054
    %v5141 = vunpack.c.l.b16 %v1055
    %v5142 = vunpack.c.h.b16 %v1055
    %v5143 = vunpack.c.l.b16 %v1056
    %v5144 = vunpack.c.h.b16 %v1056
    %v5145 = vunpack.c.l.b16 %v1057
    %v5146 = vunpack.c.h.b16 %v1057
    %v5147 = vunpack.c.l.b16 %v1058
    %v5148 = vunpack.c.h.b16 %v1058
    %v5149 = vunpack.c.l.b16 %v1059
    %v5150 = vunpack.c.h.b16 %v1059
    %v5151 = vunpack.c.l.b16 %v1060
    %v5152 = vunpack.c.h.b16 %v1060
    %v5153 = vunpack.c.l.b16 %v1061
    %v5154 = vunpack.c.h.b16 %v1061
    %v5155 = vunpack.c.l.b16 %v1062
    %v5156 = vunpack.c.h.b16 %v1062
    %v5157 = vunpack.c.l.b16 %v1063
    %v5158 = vunpack.c.h.b16 %v1063
    %v5159 = vunpack.c.l.b16 %v1064
    %v5160 = vunpack.c.h.b16 %v1064
    %v5161 = vunpack.c.l.b16 %v1065
    %v5162 = vunpack.c.h.b16 %v1065
    %v5163 = vunpack.c.l.b16 %v1066
    %v5164 = vunpack.c.h.b16 %v1066
    %v5165 = vunpack.c.l.b16 %v1067
    %v5166 = vunpack.c.h.b16 %v1067
    %v5167 = vunpack.c.l.b16 %v1068
    %v5168 = vunpack.c.h.b16 %v1068
    %v5169 = vunpack.c.l.b16 %v1069
    %v5170 = vunpack.c.h.b16 %v1069
    %v5171 = vunpack.c.l.b16 %v1070
    %v5172 = vunpack.c.h.b16 %v1070
    %v5173 = vunpack.c.l.b16 %v1071
    %v5174 = vunpack.c.h.b16 %v1071
    %v5175 = vunpack.c.l.b16 %v1072
    %v5176 = vunpack.c.h.b16 %v1072
    %v5177 = vunpack.c.l.b16 %v1073
    %v5178 = vunpack.c.h.b16 %v1073
    %v5179 = vunpack.c.l.b16 %v1074
    %v5180 = vunpack.c.h.b16 %v1074
    %v5181 = vunpack.c.l.b16 %v1075
    %v5182 = vunpack.c.h.b16 %v1075
    %v5183 = vunpack.c.l.b16 %v1076
    %v5184 = vunpack.c.h.b16 %v1076
    %v5185 = vunpack.c.l.b16 %v1077
    %v5186 = vunpack.c.h.b16 %v1077
    %v5187 = vunpack.c.l.b16 %v1078
    %v5188 = vunpack.c.h.b16 %v1078
    %v5189 = vunpack.c.l.b16 %v1079
    %v5190 = vunpack.c.h.b16 %v1079
    %v5191 = vunpack.c.l.b16 %v1080
    %v5192 = vunpack.c.h.b16 %v1080
    %v5193 = vunpack.c.l.b16 %v1081
    %v5194 = vunpack.c.h.b16 %v1081
    %v5195 = vunpack.c.l.b16 %v1082
    %v5196 = vunpack.c.h.b16 %v1082
    %v5197 = vunpack.c.l.b16 %v1083
    %v5198 = vunpack.c.h.b16 %v1083
    %v5199 = vunpack.c.l.b16 %v1084
    %v5200 = vunpack.c.h.b16 %v1084
    %v5201 = vunpack.c.l.b16 %v1085
    %v5202 = vunpack.c.h.b16 %v1085
    %v5203 = vunpack.c.l.b16 %v1086
    %v5204 = vunpack.c.h.b16 %v1086
    %v5205 = vunpack.c.l.b16 %v1087
    %v5206 = vunpack.c.h.b16 %v1087
    %v5207 = vunpack.c.l.b16 %v1088
    %v5208 = vunpack.c.h.b16 %v1088
    %v5209 = vunpack.c.l.b16 %v1089
    %v5210 = vunpack.c.h.b16 %v1089
    %v5211 = vunpack.c.l.b16 %v1090
    %v5212 = vunpack.c.h.b16 %v1090
    %v5213 = vunpack.c.l.b16 %v1091
    %v5214 = vunpack.c.h.b16 %v1091
    %v5215 = vunpack.c.l.b16 %v1092
    %v5216 = vunpack.c.h.b16 %v1092
    %v5217 = vunpack.c.l.b16 %v1093
    %v5218 = vunpack.c.h.b16 %v1093
    %v5219 = vunpack.c.l.b16 %v1094
    %v5220 = vunpack.c.h.b16 %v1094
    %v5221 = vunpack.c.l.b16 %v1095
    %v5222 = vunpack.c.h.b16 %v1095
    %v5223 = vunpack.c.l.b16 %v1096
    %v5224 = vunpack.c.h.b16 %v1096
    %v5225 = vunpack.c.l.b16 %v1097
    %v5226 = vunpack.c.h.b16 %v1097
    %v5227 = vunpack.c.l.b16 %v1098
    %v5228 = vunpack.c.h.b16 %v1098
    %v5229 = vunpack.c.l.b16 %v1099
    %v5230 = vunpack.c.h.b16 %v1099
    %v5231 = vunpack.c.l.b16 %v1100
    %v5232 = vunpack.c.h.b16 %v1100
    %v5233 = vunpack.c.l.b16 %v1101
    %v5234 = vunpack.c.h.b16 %v1101
    %v5235 = vunpack.c.l.b16 %v1102
    %v5236 = vunpack.c.h.b16 %v1102
    %v5237 = vunpack.c.l.b16 %v1103
    %v5238 = vunpack.c.h.b16 %v1103
    %v5239 = vunpack.c.l.b16 %v1104
    %v5240 = vunpack.c.h.b16 %v1104
    %v5241 = vunpack.c.l.b16 %v1105
    %v5242 = vunpack.c.h.b16 %v1105
    %v5243 = vunpack.c.l.b16 %v1106
    %v5244 = vunpack.c.h.b16 %v1106
    %v5245 = vunpack.c.l.b16 %v1107
    %v5246 = vunpack.c.h.b16 %v1107
    %v5247 = vunpack.c.l.b16 %v1108
    %v5248 = vunpack.c.h.b16 %v1108
    %v5249 = vunpack.c.l.b16 %v1109
    %v5250 = vunpack.c.h.b16 %v1109
    %v5251 = vunpack.c.l.b16 %v1110
    %v5252 = vunpack.c.h.b16 %v1110
    %v5253 = vunpack.c.l.b16 %v1111
    %v5254 = vunpack.c.h.b16 %v1111
    %v5255 = vunpack.c.l.b16 %v1112
    %v5256 = vunpack.c.h.b16 %v1112
    %v5257 = vunpack.c.l.b16 %v1113
    %v5258 = vunpack.c.h.b16 %v1113
    %v5259 = vunpack.c.l.b16 %v1114
    %v5260 = vunpack.c.h.b16 %v1114
    %v5261 = vunpack.c.l.b16 %v1115
    %v5262 = vunpack.c.h.b16 %v1115
    %v5263 = vunpack.c.l.b16 %v1116
    %v5264 = vunpack.c.h.b16 %v1116
    %v5265 = vunpack.c.l.b16 %v1117
    %v5266 = vunpack.c.h.b16 %v1117
    %v5267 = vunpack.c.l.b16 %v1118
    %v5268 = vunpack.c.h.b16 %v1118
    %v5269 = vunpack.c.l.b16 %v1119
    %v5270 = vunpack.c.h.b16 %v1119
    %v5271 = vunpack.c.l.b16 %v1120
    %v5272 = vunpack.c.h.b16 %v1120
    %v5273 = vunpack.c.l.b16 %v1121
    %v5274 = vunpack.c.h.b16 %v1121
    %v5275 = vunpack.c.l.b16 %v1122
    %v5276 = vunpack.c.h.b16 %v1122
    %v5277 = vunpack.c.l.b16 %v1123
    %v5278 = vunpack.c.h.b16 %v1123
    %v5279 = vunpack.c.l.b16 %v1124
    %v5280 = vunpack.c.h.b16 %v1124
    %v5281 = vunpack.c.l.b16 %v1125
    %v5282 = vunpack.c.h.b16 %v1125
    %v5283 = vunpack.c.l.b16 %v1126
    %v5284 = vunpack.c.h.b16 %v1126
    %v5285 = vunpack.c.l.b16 %v1127
    %v5286 = vunpack.c.h.b16 %v1127
    %v5287 = vunpack.c.l.b16 %v1128
    %v5288 = vunpack.c.h.b16 %v1128
    %v5289 = vunpack.c.l.b16 %v1129
    %v5290 = vunpack.c.h.b16 %v1129
    %v5291 = vunpack.c.l.b16 %v1130
    %v5292 = vunpack.c.h.b16 %v1130
    %v5293 = vunpack.c.l.b16 %v1131
    %v5294 = vunpack.c.h.b16 %v1131
    %v5295 = vunpack.c.l.b16 %v1132
    %v5296 = vunpack.c.h.b16 %v1132
    %v5297 = vunpack.c.l.b16 %v1133
    %v5298 = vunpack.c.h.b16 %v1133
    %v5299 = vunpack.c.l.b16 %v1134
    %v5300 = vunpack.c.h.b16 %v1134
    %v5301 = vunpack.c.l.b16 %v1135
    %v5302 = vunpack.c.h.b16 %v1135
    %v5303 = vunpack.c.l.b16 %v1136
    %v5304 = vunpack.c.h.b16 %v1136
    %v5305 = vunpack.c.l.b16 %v1137
    %v5306 = vunpack.c.h.b16 %v1137
    %v5307 = vunpack.c.l.b16 %v1138
    %v5308 = vunpack.c.h.b16 %v1138
    %v5309 = vunpack.c.l.b16 %v1139
    %v5310 = vunpack.c.h.b16 %v1139
    %v5311 = vunpack.c.l.b16 %v1140
    %v5312 = vunpack.c.h.b16 %v1140
    %v5313 = vunpack.c.l.b16 %v1141
    %v5314 = vunpack.c.h.b16 %v1141
    %v5315 = vunpack.c.l.b16 %v1142
    %v5316 = vunpack.c.h.b16 %v1142
    %v5317 = vunpack.c.l.b16 %v1143
    %v5318 = vunpack.c.h.b16 %v1143
    %v5319 = vunpack.c.l.b16 %v1144
    %v5320 = vunpack.c.h.b16 %v1144
    %v5321 = vunpack.c.l.b16 %v1145
    %v5322 = vunpack.c.h.b16 %v1145
    %v5323 = vunpack.c.l.b16 %v1146
    %v5324 = vunpack.c.h.b16 %v1146
    %v5325 = vunpack.c.l.b16 %v1147
    %v5326 = vunpack.c.h.b16 %v1147
    %v5327 = vunpack.c.l.b16 %v1148
    %v5328 = vunpack.c.h.b16 %v1148
    %v5329 = vunpack.c.l.b16 %v1149
    %v5330 = vunpack.c.h.b16 %v1149
    %v5331 = vunpack.c.l.b16 %v1150
    %v5332 = vunpack.c.h.b16 %v1150
    %v5333 = vunpack.c.l.b16 %v1151
    %v5334 = vunpack.c.h.b16 %v1151
    %v5335 = vunpack.c.l.b16 %v1152
    %v5336 = vunpack.c.h.b16 %v1152
    %v5337 = vunpack.c.l.b16 %v1153
    %v5338 = vunpack.c.h.b16 %v1153
    %v5339 = vunpack.c.l.b16 %v1154
    %v5340 = vunpack.c.h.b16 %v1154
    %v5341 = vunpack.c.l.b16 %v1155
    %v5342 = vunpack.c.h.b16 %v1155
    %v5343 = vunpack.c.l.b16 %v1156
    %v5344 = vunpack.c.h.b16 %v1156
    %v5345 = vunpack.c.l.b16 %v1157
    %v5346 = vunpack.c.h.b16 %v1157
    %v5347 = vunpack.c.l.b16 %v1158
    %v5348 = vunpack.c.h.b16 %v1158
    %v5349 = vunpack.c.l.b16 %v1159
    %v5350 = vunpack.c.h.b16 %v1159
    %v5351 = vunpack.c.l.b16 %v1160
    %v5352 = vunpack.c.h.b16 %v1160
    %v5353 = vunpack.c.l.b16 %v1161
    %v5354 = vunpack.c.h.b16 %v1161
    %v5355 = vunpack.c.l.b16 %v1162
    %v5356 = vunpack.c.h.b16 %v1162
    %v5357 = vunpack.c.l.b16 %v1163
    %v5358 = vunpack.c.h.b16 %v1163
    %v5359 = vunpack.c.l.b16 %v1164
    %v5360 = vunpack.c.h.b16 %v1164
    %v5361 = vunpack.c.l.b16 %v1165
    %v5362 = vunpack.c.h.b16 %v1165
    %v5363 = vunpack.c.l.b16 %v1166
    %v5364 = vunpack.c.h.b16 %v1166
    %v5365 = vunpack.c.l.b16 %v1167
    %v5366 = vunpack.c.h.b16 %v1167
    %v5367 = vunpack.c.l.b16 %v1168
    %v5368 = vunpack.c.h.b16 %v1168
    %v5369 = vunpack.c.l.b16 %v1169
    %v5370 = vunpack.c.h.b16 %v1169
    %v5371 = vunpack.c.l.b16 %v1170
    %v5372 = vunpack.c.h.b16 %v1170
    %v5373 = vunpack.c.l.b16 %v1171
    %v5374 = vunpack.c.h.b16 %v1171
    %v5375 = vunpack.c.l.b16 %v1172
    %v5376 = vunpack.c.h.b16 %v1172
    %v5377 = vunpack.c.l.b16 %v1173
    %v5378 = vunpack.c.h.b16 %v1173
    %v5379 = vunpack.c.l.b16 %v1174
    %v5380 = vunpack.c.h.b16 %v1174
    %v5381 = vunpack.c.l.b16 %v1175
    %v5382 = vunpack.c.h.b16 %v1175
    %v5383 = vunpack.c.l.b16 %v1176
    %v5384 = vunpack.c.h.b16 %v1176
    %v5385 = vunpack.c.l.b16 %v1177
    %v5386 = vunpack.c.h.b16 %v1177
    %v5387 = vunpack.c.l.b16 %v1178
    %v5388 = vunpack.c.h.b16 %v1178
    %v5389 = vunpack.c.l.b16 %v1179
    %v5390 = vunpack.c.h.b16 %v1179
    %v5391 = vunpack.c.l.b16 %v1180
    %v5392 = vunpack.c.h.b16 %v1180
    %v5393 = vunpack.c.l.b16 %v1181
    %v5394 = vunpack.c.h.b16 %v1181
    %v5395 = vunpack.c.l.b16 %v1182
    %v5396 = vunpack.c.h.b16 %v1182
    %v5397 = vunpack.c.l.b16 %v1183
    %v5398 = vunpack.c.h.b16 %v1183
    %v5399 = vunpack.c.l.b16 %v1184
    %v5400 = vunpack.c.h.b16 %v1184
    %v5401 = vunpack.c.l.b16 %v1185
    %v5402 = vunpack.c.h.b16 %v1185
    %v5403 = vunpack.c.l.b16 %v1186
    %v5404 = vunpack.c.h.b16 %v1186
    %v5405 = vunpack.c.l.b16 %v1187
    %v5406 = vunpack.c.h.b16 %v1187
    %v5407 = vunpack.c.l.b16 %v1188
    %v5408 = vunpack.c.h.b16 %v1188
    %v5409 = vunpack.c.l.b16 %v1189
    %v5410 = vunpack.c.h.b16 %v1189
    %v5411 = vunpack.c.l.b16 %v1190
    %v5412 = vunpack.c.h.b16 %v1190
    %v5413 = vunpack.c.l.b16 %v1191
    %v5414 = vunpack.c.h.b16 %v1191
    %v5415 = vunpack.c.l.b16 %v1192
    %v5416 = vunpack.c.h.b16 %v1192
    %v5417 = vunpack.c.l.b16 %v1193
    %v5418 = vunpack.c.h.b16 %v1193
    %v5419 = vunpack.c.l.b16 %v1194
    %v5420 = vunpack.c.h.b16 %v1194
    %v5421 = vunpack.c.l.b16 %v1195
    %v5422 = vunpack.c.h.b16 %v1195
    %v5423 = vunpack.c.l.b16 %v1196
    %v5424 = vunpack.c.h.b16 %v1196
    %v5425 = vunpack.c.l.b16 %v1197
    %v5426 = vunpack.c.h.b16 %v1197
    %v5427 = vunpack.c.l.b16 %v1198
    %v5428 = vunpack.c.h.b16 %v1198
    %v5429 = vunpack.c.l.b16 %v1199
    %v5430 = vunpack.c.h.b16 %v1199
    %v5431 = vunpack.c.l.b16 %v1200
    %v5432 = vunpack.c.h.b16 %v1200
    %v5433 = vunpack.c.l.b16 %v1201
    %v5434 = vunpack.c.h.b16 %v1201
    %v5435 = vunpack.c.l.b16 %v1202
    %v5436 = vunpack.c.h.b16 %v1202
    %v5437 = vunpack.c.l.b16 %v1203
    %v5438 = vunpack.c.h.b16 %v1203
    %v5439 = vunpack.c.l.b16 %v1204
    %v5440 = vunpack.c.h.b16 %v1204
    %v5441 = vunpack.c.l.b16 %v1205
    %v5442 = vunpack.c.h.b16 %v1205
    %v5443 = vunpack.c.l.b16 %v1206
    %v5444 = vunpack.c.h.b16 %v1206
    %v5445 = vunpack.c.l.b16 %v1207
    %v5446 = vunpack.c.h.b16 %v1207
    %v5447 = vunpack.c.l.b16 %v1208
    %v5448 = vunpack.c.h.b16 %v1208
    %v5449 = vunpack.c.l.b16 %v1209
    %v5450 = vunpack.c.h.b16 %v1209
    %v5451 = vunpack.c.l.b16 %v1210
    %v5452 = vunpack.c.h.b16 %v1210
    %v5453 = vunpack.c.l.b16 %v1211
    %v5454 = vunpack.c.h.b16 %v1211
    %v5455 = vunpack.c.l.b16 %v1212
    %v5456 = vunpack.c.h.b16 %v1212
    %v5457 = vunpack.c.l.b16 %v1213
    %v5458 = vunpack.c.h.b16 %v1213
    %v5459 = vunpack.c.l.b16 %v1214
    %v5460 = vunpack.c.h.b16 %v1214
    %v5461 = vunpack.c.l.b16 %v1215
    %v5462 = vunpack.c.h.b16 %v1215
    %v5463 = vunpack.c.l.b16 %v1216
    %v5464 = vunpack.c.h.b16 %v1216
    %v5465 = vunpack.c.l.b16 %v1217
    %v5466 = vunpack.c.h.b16 %v1217
    %v5467 = vunpack.c.l.b16 %v1218
    %v5468 = vunpack.c.h.b16 %v1218
    %v5469 = vunpack.c.l.b16 %v1219
    %v5470 = vunpack.c.h.b16 %v1219
    %v5471 = vunpack.c.l.b16 %v1220
    %v5472 = vunpack.c.h.b16 %v1220
    %v5473 = vunpack.c.l.b16 %v1221
    %v5474 = vunpack.c.h.b16 %v1221
    %v5475 = vunpack.c.l.b16 %v1222
    %v5476 = vunpack.c.h.b16 %v1222
    %v5477 = vunpack.c.l.b16 %v1223
    %v5478 = vunpack.c.h.b16 %v1223
    %v5479 = vunpack.c.l.b16 %v1224
    %v5480 = vunpack.c.h.b16 %v1224
    %v5481 = vunpack.c.l.b16 %v1225
    %v5482 = vunpack.c.h.b16 %v1225
    %v5483 = vunpack.c.l.b16 %v1226
    %v5484 = vunpack.c.h.b16 %v1226
    %v5485 = vunpack.c.l.b16 %v1227
    %v5486 = vunpack.c.h.b16 %v1227
    %v5487 = vunpack.c.l.b16 %v1228
    %v5488 = vunpack.c.h.b16 %v1228
    %v5489 = vunpack.c.l.b16 %v1229
    %v5490 = vunpack.c.h.b16 %v1229
    %v5491 = vunpack.c.l.b16 %v1230
    %v5492 = vunpack.c.h.b16 %v1230
    %v5493 = vunpack.c.l.b16 %v1231
    %v5494 = vunpack.c.h.b16 %v1231
    %v5495 = vunpack.c.l.b16 %v1232
    %v5496 = vunpack.c.h.b16 %v1232
    %v5497 = vunpack.c.l.b16 %v1233
    %v5498 = vunpack.c.h.b16 %v1233
    %v5499 = vunpack.c.l.b16 %v1234
    %v5500 = vunpack.c.h.b16 %v1234
    %v5501 = vunpack.c.l.b16 %v1235
    %v5502 = vunpack.c.h.b16 %v1235
    %v5503 = vunpack.c.l.b16 %v1236
    %v5504 = vunpack.c.h.b16 %v1236
    %v5505 = vunpack.c.l.b16 %v1237
    %v5506 = vunpack.c.h.b16 %v1237
    %v5507 = vunpack.c.l.b16 %v1238
    %v5508 = vunpack.c.h.b16 %v1238
    %v5509 = vunpack.c.l.b16 %v1239
    %v5510 = vunpack.c.h.b16 %v1239
    %v5511 = vunpack.c.l.b16 %v1240
    %v5512 = vunpack.c.h.b16 %v1240
    %v5513 = vunpack.c.l.b16 %v1241
    %v5514 = vunpack.c.h.b16 %v1241
    %v5515 = vunpack.c.l.b16 %v1242
    %v5516 = vunpack.c.h.b16 %v1242
    %v5517 = vunpack.c.l.b16 %v1243
    %v5518 = vunpack.c.h.b16 %v1243
    %v5519 = vunpack.c.l.b16 %v1244
    %v5520 = vunpack.c.h.b16 %v1244
    %v5521 = vunpack.c.l.b16 %v1245
    %v5522 = vunpack.c.h.b16 %v1245
    %v5523 = vunpack.c.l.b16 %v1246
    %v5524 = vunpack.c.h.b16 %v1246
    %v5525 = vunpack.c.l.b16 %v1247
    %v5526 = vunpack.c.h.b16 %v1247
    %v5527 = vunpack.c.l.b16 %v1248
    %v5528 = vunpack.c.h.b16 %v1248
    %v5529 = vunpack.c.l.b16 %v1249
    %v5530 = vunpack.c.h.b16 %v1249
    %v5531 = vunpack.c.l.b16 %v1250
    %v5532 = vunpack.c.h.b16 %v1250
    %v5533 = vunpack.c.l.b16 %v1251
    %v5534 = vunpack.c.h.b16 %v1251
    %v5535 = vunpack.c.l.b16 %v1252
    %v5536 = vunpack.c.h.b16 %v1252
    %v5537 = vunpack.c.l.b16 %v1253
    %v5538 = vunpack.c.h.b16 %v1253
    %v5539 = vunpack.c.l.b16 %v1254
    %v5540 = vunpack.c.h.b16 %v1254
    %v5541 = vunpack.c.l.b16 %v1255
    %v5542 = vunpack.c.h.b16 %v1255
    %v5543 = vunpack.c.l.b16 %v1256
    %v5544 = vunpack.c.h.b16 %v1256
    %v5545 = vunpack.c.l.b16 %v1257
    %v5546 = vunpack.c.h.b16 %v1257
    %v5547 = vunpack.c.l.b16 %v1258
    %v5548 = vunpack.c.h.b16 %v1258
    %v5549 = vunpack.c.l.b16 %v1259
    %v5550 = vunpack.c.h.b16 %v1259
    %v5551 = vunpack.c.l.b16 %v1260
    %v5552 = vunpack.c.h.b16 %v1260
    %v5553 = vunpack.c.l.b16 %v1261
    %v5554 = vunpack.c.h.b16 %v1261
    %v5555 = vunpack.c.l.b16 %v1262
    %v5556 = vunpack.c.h.b16 %v1262
    %v5557 = vunpack.c.l.b16 %v1263
    %v5558 = vunpack.c.h.b16 %v1263
    %v5559 = vunpack.c.l.b16 %v1264
    %v5560 = vunpack.c.h.b16 %v1264
    %v5561 = vunpack.c.l.b16 %v1265
    %v5562 = vunpack.c.h.b16 %v1265
    %v5563 = vunpack.c.l.b16 %v1266
    %v5564 = vunpack.c.h.b16 %v1266
    %v5565 = vunpack.c.l.b16 %v1267
    %v5566 = vunpack.c.h.b16 %v1267
    %v5567 = vunpack.c.l.b16 %v1268
    %v5568 = vunpack.c.h.b16 %v1268
    %v5569 = vunpack.c.l.b16 %v1269
    %v5570 = vunpack.c.h.b16 %v1269
    %v5571 = vunpack.c.l.b16 %v1270
    %v5572 = vunpack.c.h.b16 %v1270
    %v5573 = vunpack.c.l.b16 %v1271
    %v5574 = vunpack.c.h.b16 %v1271
    %v5575 = vunpack.c.l.b16 %v1272
    %v5576 = vunpack.c.h.b16 %v1272
    %v5577 = vunpack.c.l.b16 %v1273
    %v5578 = vunpack.c.h.b16 %v1273
    %v5579 = vunpack.c.l.b16 %v1274
    %v5580 = vunpack.c.h.b16 %v1274
    %v5581 = vunpack.c.l.b16 %v1275
    %v5582 = vunpack.c.h.b16 %v1275
    %v5583 = vunpack.c.l.b16 %v1276
    %v5584 = vunpack.c.h.b16 %v1276
    %v5585 = vunpack.c.l.b16 %v1277
    %v5586 = vunpack.c.h.b16 %v1277
    %v5587 = vunpack.c.l.b16 %v1278
    %v5588 = vunpack.c.h.b16 %v1278
    %v5589 = vunpack.c.l.b16 %v1279
    %v5590 = vunpack.c.h.b16 %v1279
    %v5591 = vunpack.c.l.b16 %v1280
    %v5592 = vunpack.c.h.b16 %v1280
    %v5593 = vunpack.c.l.b16 %v1281
    %v5594 = vunpack.c.h.b16 %v1281
    %v5595 = vunpack.c.l.b16 %v1282
    %v5596 = vunpack.c.h.b16 %v1282
    %v5597 = vunpack.c.l.b16 %v1283
    %v5598 = vunpack.c.h.b16 %v1283
    %v5599 = vunpack.c.l.b16 %v1284
    %v5600 = vunpack.c.h.b16 %v1284
    %v5601 = vunpack.c.l.b16 %v1285
    %v5602 = vunpack.c.h.b16 %v1285
    %v5603 = vunpack.c.l.b16 %v1286
    %v5604 = vunpack.c.h.b16 %v1286
    %v5605 = vunpack.c.l.b16 %v1287
    %v5606 = vunpack.c.h.b16 %v1287
    %v5607 = vunpack.c.l.b16 %v1288
    %v5608 = vunpack.c.h.b16 %v1288
    %v5609 = vunpack.c.l.b16 %v1289
    %v5610 = vunpack.c.h.b16 %v1289
    %v5611 = vunpack.c.l.b16 %v1290
    %v5612 = vunpack.c.h.b16 %v1290
    %v5613 = vunpack.c.l.b16 %v1291
    %v5614 = vunpack.c.h.b16 %v1291
    %v5615 = vunpack.c.l.b16 %v1292
    %v5616 = vunpack.c.h.b16 %v1292
    %v5617 = vunpack.c.l.b16 %v1293
    %v5618 = vunpack.c.h.b16 %v1293
    %v5619 = vunpack.c.l.b16 %v1294
    %v5620 = vunpack.c.h.b16 %v1294
    %v5621 = vunpack.c.l.b16 %v1295
    %v5622 = vunpack.c.h.b16 %v1295
    %v5623 = vunpack.c.l.b16 %v1296
    %v5624 = vunpack.c.h.b16 %v1296
    %v5625 = vunpack.c.l.b16 %v1297
    %v5626 = vunpack.c.h.b16 %v1297
    %v5627 = vunpack.c.l.b16 %v1298
    %v5628 = vunpack.c.h.b16 %v1298
    %v5629 = vunpack.c.l.b16 %v1299
    %v5630 = vunpack.c.h.b16 %v1299
    %v5631 = vunpack.c.l.b16 %v1300
    %v5632 = vunpack.c.h.b16 %v1300
    %v5633 = vunpack.c.l.b16 %v1301
    %v5634 = vunpack.c.h.b16 %v1301
    %v5635 = vunpack.c.l.b16 %v1302
    %v5636 = vunpack.c.h.b16 %v1302
    %v5637 = vunpack.c.l.b16 %v1303
    %v5638 = vunpack.c.h.b16 %v1303
    %v5639 = vunpack.c.l.b16 %v1304
    %v5640 = vunpack.c.h.b16 %v1304
    %v5641 = vunpack.c.l.b16 %v1305
    %v5642 = vunpack.c.h.b16 %v1305
    %v5643 = vunpack.c.l.b16 %v1306
    %v5644 = vunpack.c.h.b16 %v1306
    %v5645 = vunpack.c.l.b16 %v1307
    %v5646 = vunpack.c.h.b16 %v1307
    %v5647 = vunpack.c.l.b16 %v1308
    %v5648 = vunpack.c.h.b16 %v1308
    %v5649 = vunpack.c.l.b16 %v1309
    %v5650 = vunpack.c.h.b16 %v1309
    %v5651 = vunpack.c.l.b16 %v1310
    %v5652 = vunpack.c.h.b16 %v1310
    %v5653 = vunpack.c.l.b16 %v1311
    %v5654 = vunpack.c.h.b16 %v1311
    %v5655 = vunpack.c.l.b16 %v1312
    %v5656 = vunpack.c.h.b16 %v1312
    %v5657 = vunpack.c.l.b16 %v1313
    %v5658 = vunpack.c.h.b16 %v1313
    %v5659 = vunpack.c.l.b16 %v1314
    %v5660 = vunpack.c.h.b16 %v1314
    %v5661 = vunpack.c.l.b16 %v1315
    %v5662 = vunpack.c.h.b16 %v1315
    %v5663 = vunpack.c.l.b16 %v1316
    %v5664 = vunpack.c.h.b16 %v1316
    %v5665 = vunpack.c.l.b16 %v1317
    %v5666 = vunpack.c.h.b16 %v1317
    %v5667 = vunpack.c.l.b16 %v1318
    %v5668 = vunpack.c.h.b16 %v1318
    %v5669 = vunpack.c.l.b16 %v1319
    %v5670 = vunpack.c.h.b16 %v1319
    %v5671 = vunpack.c.l.b16 %v1320
    %v5672 = vunpack.c.h.b16 %v1320
    %v5673 = vunpack.c.l.b16 %v1321
    %v5674 = vunpack.c.h.b16 %v1321
    %v5675 = vunpack.c.l.b16 %v1322
    %v5676 = vunpack.c.h.b16 %v1322
    %v5677 = vunpack.c.l.b16 %v1323
    %v5678 = vunpack.c.h.b16 %v1323
    %v5679 = vunpack.c.l.b16 %v1324
    %v5680 = vunpack.c.h.b16 %v1324
    %v5681 = vunpack.c.l.b16 %v1325
    %v5682 = vunpack.c.h.b16 %v1325
    %v5683 = vunpack.c.l.b16 %v1326
    %v5684 = vunpack.c.h.b16 %v1326
    %v5685 = vunpack.c.l.b16 %v1327
    %v5686 = vunpack.c.h.b16 %v1327
    %v5687 = vunpack.c.l.b16 %v1328
    %v5688 = vunpack.c.h.b16 %v1328
    %v5689 = vunpack.c.l.b16 %v1329
    %v5690 = vunpack.c.h.b16 %v1329
    %v5691 = vunpack.c.l.b16 %v1330
    %v5692 = vunpack.c.h.b16 %v1330
    %v5693 = vunpack.c.l.b16 %v1331
    %v5694 = vunpack.c.h.b16 %v1331
    %v5695 = vunpack.c.l.b16 %v1332
    %v5696 = vunpack.c.h.b16 %v1332
    %v5697 = vunpack.c.l.b16 %v1333
    %v5698 = vunpack.c.h.b16 %v1333
    %v5699 = vunpack.c.l.b16 %v1334
    %v5700 = vunpack.c.h.b16 %v1334
    %v5701 = vunpack.c.l.b16 %v1335
    %v5702 = vunpack.c.h.b16 %v1335
    %v5703 = vunpack.c.l.b16 %v1336
    %v5704 = vunpack.c.h.b16 %v1336
    %v5705 = vunpack.c.l.b16 %v1337
    %v5706 = vunpack.c.h.b16 %v1337
    %v5707 = vunpack.c.l.b16 %v1338
    %v5708 = vunpack.c.h.b16 %v1338
    %v5709 = vunpack.c.l.b16 %v1339
    %v5710 = vunpack.c.h.b16 %v1339
    %v5711 = vunpack.c.l.b16 %v1340
    %v5712 = vunpack.c.h.b16 %v1340
    %v5713 = vunpack.c.l.b16 %v1341
    %v5714 = vunpack.c.h.b16 %v1341
    %v5715 = vunpack.c.l.b16 %v1342
    %v5716 = vunpack.c.h.b16 %v1342
    %v5717 = vunpack.c.l.b16 %v1343
    %v5718 = vunpack.c.h.b16 %v1343
    %v5719 = vunpack.c.l.b16 %v1344
    %v5720 = vunpack.c.h.b16 %v1344
    %v5721 = vunpack.c.l.b16 %v1345
    %v5722 = vunpack.c.h.b16 %v1345
    %v5723 = vunpack.c.l.b16 %v1346
    %v5724 = vunpack.c.h.b16 %v1346
    %v5725 = vunpack.c.l.b16 %v1347
    %v5726 = vunpack.c.h.b16 %v1347
    %v5727 = vunpack.c.l.b16 %v1348
    %v5728 = vunpack.c.h.b16 %v1348
    %v5729 = vunpack.c.l.b16 %v1349
    %v5730 = vunpack.c.h.b16 %v1349
    %v5731 = vunpack.c.l.b16 %v1350
    %v5732 = vunpack.c.h.b16 %v1350
    %v5733 = vunpack.c.l.b16 %v1351
    %v5734 = vunpack.c.h.b16 %v1351
    %v5735 = vunpack.c.l.b16 %v1352
    %v5736 = vunpack.c.h.b16 %v1352
    %v5737 = vunpack.c.l.b16 %v1353
    %v5738 = vunpack.c.h.b16 %v1353
    %v5739 = vunpack.c.l.b16 %v1354
    %v5740 = vunpack.c.h.b16 %v1354
    %v5741 = vunpack.c.l.b16 %v1355
    %v5742 = vunpack.c.h.b16 %v1355
    %v5743 = vunpack.c.l.b16 %v1356
    %v5744 = vunpack.c.h.b16 %v1356
    %v5745 = vunpack.c.l.b16 %v1357
    %v5746 = vunpack.c.h.b16 %v1357
    %v5747 = vunpack.c.l.b16 %v1358
    %v5748 = vunpack.c.h.b16 %v1358
    %v5749 = vunpack.c.l.b16 %v1359
    %v5750 = vunpack.c.h.b16 %v1359
    %v5751 = vunpack.c.l.b16 %v1360
    %v5752 = vunpack.c.h.b16 %v1360
    %v5753 = vunpack.c.l.b16 %v1361
    %v5754 = vunpack.c.h.b16 %v1361
    %v5755 = vunpack.c.l.b16 %v1362
    %v5756 = vunpack.c.h.b16 %v1362
    %v5757 = vunpack.c.l.b16 %v1363
    %v5758 = vunpack.c.h.b16 %v1363
    %v5759 = vunpack.c.l.b16 %v1364
    %v5760 = vunpack.c.h.b16 %v1364
    %v5761 = vunpack.c.l.b16 %v1365
    %v5762 = vunpack.c.h.b16 %v1365
    %v5763 = vunpack.c.l.b16 %v1366
    %v5764 = vunpack.c.h.b16 %v1366
    %v5765 = vunpack.c.l.b16 %v1367
    %v5766 = vunpack.c.h.b16 %v1367
    %v5767 = vunpack.c.l.b16 %v1368
    %v5768 = vunpack.c.h.b16 %v1368
    %v5769 = vunpack.c.l.b16 %v1369
    %v5770 = vunpack.c.h.b16 %v1369
    %v5771 = vunpack.c.l.b16 %v1370
    %v5772 = vunpack.c.h.b16 %v1370
    %v5773 = vunpack.c.l.b16 %v1371
    %v5774 = vunpack.c.h.b16 %v1371
    %v5775 = vunpack.c.l.b16 %v1372
    %v5776 = vunpack.c.h.b16 %v1372
    %v5777 = vunpack.c.l.b16 %v1373
    %v5778 = vunpack.c.h.b16 %v1373
    %v5779 = vunpack.c.l.b16 %v1374
    %v5780 = vunpack.c.h.b16 %v1374
    %v5781 = vunpack.c.l.b16 %v1375
    %v5782 = vunpack.c.h.b16 %v1375
    %v5783 = vunpack.c.l.b16 %v1376
    %v5784 = vunpack.c.h.b16 %v1376
    %v5785 = vunpack.c.l.b16 %v1377
    %v5786 = vunpack.c.h.b16 %v1377
    %v5787 = vunpack.c.l.b16 %v1378
    %v5788 = vunpack.c.h.b16 %v1378
    %v5789 = vunpack.c.l.b16 %v1379
    %v5790 = vunpack.c.h.b16 %v1379
    %v5791 = vunpack.c.l.b16 %v1380
    %v5792 = vunpack.c.h.b16 %v1380
    %v5793 = vunpack.c.l.b16 %v1381
    %v5794 = vunpack.c.h.b16 %v1381
    %v5795 = vunpack.c.l.b16 %v1382
    %v5796 = vunpack.c.h.b16 %v1382
    %v5797 = vunpack.c.l.b16 %v1383
    %v5798 = vunpack.c.h.b16 %v1383
    %v5799 = vunpack.c.l.b16 %v1384
    %v5800 = vunpack.c.h.b16 %v1384
    %v5801 = vunpack.c.l.b16 %v1385
    %v5802 = vunpack.c.h.b16 %v1385
    %v5803 = vunpack.c.l.b16 %v1386
    %v5804 = vunpack.c.h.b16 %v1386
    %v5805 = vunpack.c.l.b16 %v1387
    %v5806 = vunpack.c.h.b16 %v1387
    %v5807 = vunpack.c.l.b16 %v1388
    %v5808 = vunpack.c.h.b16 %v1388
    %v5809 = vunpack.c.l.b16 %v1389
    %v5810 = vunpack.c.h.b16 %v1389
    %v5811 = vunpack.c.l.b16 %v1390
    %v5812 = vunpack.c.h.b16 %v1390
    %v5813 = vunpack.c.l.b16 %v1391
    %v5814 = vunpack.c.h.b16 %v1391
    %v5815 = vunpack.c.l.b16 %v1392
    %v5816 = vunpack.c.h.b16 %v1392
    %v5817 = vunpack.c.l.b16 %v1393
    %v5818 = vunpack.c.h.b16 %v1393
    %v5819 = vunpack.c.l.b16 %v1394
    %v5820 = vunpack.c.h.b16 %v1394
    %v5821 = vunpack.c.l.b16 %v1395
    %v5822 = vunpack.c.h.b16 %v1395
    %v5823 = vunpack.c.l.b16 %v1396
    %v5824 = vunpack.c.h.b16 %v1396
    %v5825 = vunpack.c.l.b16 %v1397
    %v5826 = vunpack.c.h.b16 %v1397
    %v5827 = vunpack.c.l.b16 %v1398
    %v5828 = vunpack.c.h.b16 %v1398
    %v5829 = vunpack.c.l.b16 %v1399
    %v5830 = vunpack.c.h.b16 %v1399
    %v5831 = vunpack.c.l.b16 %v1400
    %v5832 = vunpack.c.h.b16 %v1400
    %v5833 = vunpack.c.l.b16 %v1401
    %v5834 = vunpack.c.h.b16 %v1401
    %v5835 = vunpack.c.l.b16 %v1402
    %v5836 = vunpack.c.h.b16 %v1402
    %v5837 = vunpack.c.l.b16 %v1403
    %v5838 = vunpack.c.h.b16 %v1403
    %v5839 = vunpack.c.l.b16 %v1404
    %v5840 = vunpack.c.h.b16 %v1404
    %v5841 = vunpack.c.l.b16 %v1405
    %v5842 = vunpack.c.h.b16 %v1405
    %v5843 = vunpack.c.l.b16 %v1406
    %v5844 = vunpack.c.h.b16 %v1406
    %v5845 = vunpack.c.l.b16 %v1407
    %v5846 = vunpack.c.h.b16 %v1407
    %v5847 = vunpack.c.l.b16 %v1408
    %v5848 = vunpack.c.h.b16 %v1408
    %v5849 = vunpack.c.l.b16 %v1409
    %v5850 = vunpack.c.h.b16 %v1409
    %v5851 = vunpack.c.l.b16 %v1410
    %v5852 = vunpack.c.h.b16 %v1410
    %v5853 = vunpack.c.l.b16 %v1411
    %v5854 = vunpack.c.h.b16 %v1411
    %v5855 = vunpack.c.l.b16 %v1412
    %v5856 = vunpack.c.h.b16 %v1412
    %v5857 = vunpack.c.l.b16 %v1413
    %v5858 = vunpack.c.h.b16 %v1413
    %v5859 = vunpack.c.l.b16 %v1414
    %v5860 = vunpack.c.h.b16 %v1414
    %v5861 = vunpack.c.l.b16 %v1415
    %v5862 = vunpack.c.h.b16 %v1415
    %v5863 = vunpack.c.l.b16 %v1416
    %v5864 = vunpack.c.h.b16 %v1416
    %v5865 = vunpack.c.l.b16 %v1417
    %v5866 = vunpack.c.h.b16 %v1417
    %v5867 = vunpack.c.l.b16 %v1418
    %v5868 = vunpack.c.h.b16 %v1418
    %v5869 = vunpack.c.l.b16 %v1419
    %v5870 = vunpack.c.h.b16 %v1419
    %v5871 = vunpack.c.l.b16 %v1420
    %v5872 = vunpack.c.h.b16 %v1420
    %v5873 = vunpack.c.l.b16 %v1421
    %v5874 = vunpack.c.h.b16 %v1421
    %v5875 = vunpack.c.l.b16 %v1422
    %v5876 = vunpack.c.h.b16 %v1422
    %v5877 = vunpack.c.l.b16 %v1423
    %v5878 = vunpack.c.h.b16 %v1423
    %v5879 = vunpack.c.l.b16 %v1424
    %v5880 = vunpack.c.h.b16 %v1424
    %v5881 = vunpack.c.l.b16 %v1425
    %v5882 = vunpack.c.h.b16 %v1425
    %v5883 = vunpack.c.l.b16 %v1426
    %v5884 = vunpack.c.h.b16 %v1426
    %v5885 = vunpack.c.l.b16 %v1427
    %v5886 = vunpack.c.h.b16 %v1427
    %v5887 = vunpack.c.l.b16 %v1428
    %v5888 = vunpack.c.h.b16 %v1428
    %v5889 = vunpack.c.l.b16 %v1429
    %v5890 = vunpack.c.h.b16 %v1429
    %v5891 = vunpack.c.l.b16 %v1430
    %v5892 = vunpack.c.h.b16 %v1430
    %v5893 = vunpack.c.l.b16 %v1431
    %v5894 = vunpack.c.h.b16 %v1431
    %v5895 = vunpack.c.l.b16 %v1432
    %v5896 = vunpack.c.h.b16 %v1432
    %v5897 = vunpack.c.l.b16 %v1433
    %v5898 = vunpack.c.h.b16 %v1433
    %v5899 = vunpack.c.l.b16 %v1434
    %v5900 = vunpack.c.h.b16 %v1434
    %v5901 = vunpack.c.l.b16 %v1435
    %v5902 = vunpack.c.h.b16 %v1435
    %v5903 = vunpack.c.l.b16 %v1436
    %v5904 = vunpack.c.h.b16 %v1436
    %v5905 = vunpack.c.l.b16 %v1437
    %v5906 = vunpack.c.h.b16 %v1437
    %v5907 = vunpack.c.l.b16 %v1438
    %v5908 = vunpack.c.h.b16 %v1438
    %v5909 = vunpack.c.l.b16 %v1439
    %v5910 = vunpack.c.h.b16 %v1439
    %v5911 = vunpack.c.l.b16 %v1440
    %v5912 = vunpack.c.h.b16 %v1440
    %v5913 = vunpack.c.l.b16 %v1441
    %v5914 = vunpack.c.h.b16 %v1441
    %v5915 = vunpack.c.l.b16 %v1442
    %v5916 = vunpack.c.h.b16 %v1442
    %v5917 = vunpack.c.l.b16 %v1443
    %v5918 = vunpack.c.h.b16 %v1443
    %v5919 = vunpack.c.l.b16 %v1444
    %v5920 = vunpack.c.h.b16 %v1444
    %v5921 = vunpack.c.l.b16 %v1445
    %v5922 = vunpack.c.h.b16 %v1445
    %v5923 = vunpack.c.l.b16 %v1446
    %v5924 = vunpack.c.h.b16 %v1446
    %v5925 = vunpack.c.l.b16 %v1447
    %v5926 = vunpack.c.h.b16 %v1447
    %v5927 = vunpack.c.l.b16 %v1448
    %v5928 = vunpack.c.h.b16 %v1448
    %v5929 = vunpack.c.l.b16 %v1449
    %v5930 = vunpack.c.h.b16 %v1449
    %v5931 = vunpack.c.l.b16 %v1450
    %v5932 = vunpack.c.h.b16 %v1450
    %v5933 = vunpack.c.l.b16 %v1451
    %v5934 = vunpack.c.h.b16 %v1451
    %v5935 = vunpack.c.l.b16 %v1452
    %v5936 = vunpack.c.h.b16 %v1452
    %v5937 = vunpack.c.l.b16 %v1453
    %v5938 = vunpack.c.h.b16 %v1453
    %v5939 = vunpack.c.l.b16 %v1454
    %v5940 = vunpack.c.h.b16 %v1454
    %v5941 = vunpack.c.l.b16 %v1455
    %v5942 = vunpack.c.h.b16 %v1455
    %v5943 = vunpack.c.l.b16 %v1456
    %v5944 = vunpack.c.h.b16 %v1456
    %v5945 = vunpack.c.l.b16 %v1457
    %v5946 = vunpack.c.h.b16 %v1457
    %v5947 = vunpack.c.l.b16 %v1458
    %v5948 = vunpack.c.h.b16 %v1458
    %v5949 = vunpack.c.l.b16 %v1459
    %v5950 = vunpack.c.h.b16 %v1459
    %v5951 = vunpack.c.l.b16 %v1460
    %v5952 = vunpack.c.h.b16 %v1460
    %v5953 = vunpack.c.l.b16 %v1461
    %v5954 = vunpack.c.h.b16 %v1461
    %v5955 = vunpack.c.l.b16 %v1462
    %v5956 = vunpack.c.h.b16 %v1462
    %v5957 = vunpack.c.l.b16 %v1463
    %v5958 = vunpack.c.h.b16 %v1463
    %v5959 = vunpack.c.l.b16 %v1464
    %v5960 = vunpack.c.h.b16 %v1464
    %v5961 = vunpack.c.l.b16 %v1465
    %v5962 = vunpack.c.h.b16 %v1465
    %v5963 = vunpack.c.l.b16 %v1466
    %v5964 = vunpack.c.h.b16 %v1466
    %v5965 = vunpack.c.l.b16 %v1467
    %v5966 = vunpack.c.h.b16 %v1467
    %v5967 = vunpack.c.l.b16 %v1468
    %v5968 = vunpack.c.h.b16 %v1468
    %v5969 = vunpack.c.l.b16 %v1469
    %v5970 = vunpack.c.h.b16 %v1469
    %v5971 = vunpack.c.l.b16 %v1470
    %v5972 = vunpack.c.h.b16 %v1470
    %v5973 = vunpack.c.l.b16 %v1471
    %v5974 = vunpack.c.h.b16 %v1471
    %v5975 = vunpack.c.l.b16 %v1472
    %v5976 = vunpack.c.h.b16 %v1472
    %v5977 = vunpack.c.l.b16 %v1473
    %v5978 = vunpack.c.h.b16 %v1473
    %v5979 = vunpack.c.l.b16 %v1474
    %v5980 = vunpack.c.h.b16 %v1474
    %v5981 = vunpack.c.l.b16 %v1475
    %v5982 = vunpack.c.h.b16 %v1475
    %v5983 = vunpack.c.l.b16 %v1476
    %v5984 = vunpack.c.h.b16 %v1476
    %v5985 = vunpack.c.l.b16 %v1477
    %v5986 = vunpack.c.h.b16 %v1477
    %v5987 = vunpack.c.l.b16 %v1478
    %v5988 = vunpack.c.h.b16 %v1478
    %v5989 = vunpack.c.l.b16 %v1479
    %v5990 = vunpack.c.h.b16 %v1479
    %v5991 = vunpack.c.l.b16 %v1480
    %v5992 = vunpack.c.h.b16 %v1480
    %v5993 = vunpack.c.l.b16 %v1481
    %v5994 = vunpack.c.h.b16 %v1481
    %v5995 = vunpack.c.l.b16 %v1482
    %v5996 = vunpack.c.h.b16 %v1482
    %v5997 = vunpack.c.l.b16 %v1483
    %v5998 = vunpack.c.h.b16 %v1483
    %v5999 = vunpack.c.l.b16 %v1484
    %v6000 = vunpack.c.h.b16 %v1484
    %v6001 = vunpack.c.l.b16 %v1485
    %v6002 = vunpack.c.h.b16 %v1485
    %v6003 = vunpack.c.l.b16 %v1486
    %v6004 = vunpack.c.h.b16 %v1486
    %v6005 = vunpack.c.l.b16 %v1487
    %v6006 = vunpack.c.h.b16 %v1487
    %v6007 = vunpack.c.l.b16 %v1488
    %v6008 = vunpack.c.h.b16 %v1488
    %v6009 = vunpack.c.l.b16 %v1489
    %v6010 = vunpack.c.h.b16 %v1489
    %v6011 = vunpack.c.l.b16 %v1490
    %v6012 = vunpack.c.h.b16 %v1490
    %v6013 = vunpack.c.l.b16 %v1491
    %v6014 = vunpack.c.h.b16 %v1491
    %v6015 = vunpack.c.l.b16 %v1492
    %v6016 = vunpack.c.h.b16 %v1492
    %v6017 = vunpack.c.l.b16 %v1493
    %v6018 = vunpack.c.h.b16 %v1493
    %v6019 = vunpack.c.l.b16 %v1494
    %v6020 = vunpack.c.h.b16 %v1494
    %v6021 = vunpack.c.l.b16 %v1495
    %v6022 = vunpack.c.h.b16 %v1495
    %v6023 = vunpack.c.l.b16 %v1496
    %v6024 = vunpack.c.h.b16 %v1496
    %v6025 = vunpack.c.l.b16 %v1497
    %v6026 = vunpack.c.h.b16 %v1497
    %v6027 = vunpack.c.l.b16 %v1498
    %v6028 = vunpack.c.h.b16 %v1498
    %v6029 = vunpack.c.l.b16 %v1499
    %v6030 = vunpack.c.h.b16 %v1499
    %v6031 = vunpack.c.l.b16 %v1500
    %v6032 = vunpack.c.h.b16 %v1500
    %v6033 = vunpack.c.l.b16 %v1501
    %v6034 = vunpack.c.h.b16 %v1501
    %v6035 = vunpack.c.l.b16 %v1502
    %v6036 = vunpack.c.h.b16 %v1502
    %v6037 = vunpack.c.l.b16 %v1503
    %v6038 = vunpack.c.h.b16 %v1503
    %v6039 = vunpack.c.l.b16 %v1504
    %v6040 = vunpack.c.h.b16 %v1504
    %v6041 = vunpack.c.l.b16 %v1505
    %v6042 = vunpack.c.h.b16 %v1505
    %v6043 = vunpack.c.l.b16 %v1506
    %v6044 = vunpack.c.h.b16 %v1506
    %v6045 = vunpack.c.l.b16 %v1507
    %v6046 = vunpack.c.h.b16 %v1507
    %v6047 = vunpack.c.l.b16 %v1508
    %v6048 = vunpack.c.h.b16 %v1508
    %v6049 = vunpack.c.l.b16 %v1509
    %v6050 = vunpack.c.h.b16 %v1509
    %v6051 = vunpack.c.l.b16 %v1510
    %v6052 = vunpack.c.h.b16 %v1510
    %v6053 = vunpack.c.l.b16 %v1511
    %v6054 = vunpack.c.h.b16 %v1511
    %v6055 = vunpack.c.l.b16 %v1512
    %v6056 = vunpack.c.h.b16 %v1512
    %v6057 = vunpack.c.l.b16 %v1513
    %v6058 = vunpack.c.h.b16 %v1513
    %v6059 = vunpack.c.l.b16 %v1514
    %v6060 = vunpack.c.h.b16 %v1514
    %v6061 = vunpack.c.l.b16 %v1515
    %v6062 = vunpack.c.h.b16 %v1515
    %v6063 = vunpack.c.l.b16 %v1516
    %v6064 = vunpack.c.h.b16 %v1516
    %v6065 = vunpack.c.l.b16 %v1517
    %v6066 = vunpack.c.h.b16 %v1517
    %v6067 = vunpack.c.l.b16 %v1518
    %v6068 = vunpack.c.h.b16 %v1518
    %v6069 = vunpack.c.l.b16 %v1519
    %v6070 = vunpack.c.h.b16 %v1519
    %v6071 = vunpack.c.l.b16 %v1520
    %v6072 = vunpack.c.h.b16 %v1520
    %v6073 = vunpack.c.l.b16 %v1521
    %v6074 = vunpack.c.h.b16 %v1521
    %v6075 = vunpack.c.l.b16 %v1522
    %v6076 = vunpack.c.h.b16 %v1522
    %v6077 = vunpack.c.l.b16 %v1523
    %v6078 = vunpack.c.h.b16 %v1523
    %v6079 = vunpack.c.l.b16 %v1524
    %v6080 = vunpack.c.h.b16 %v1524
    %v6081 = vunpack.c.l.b16 %v1525
    %v6082 = vunpack.c.h.b16 %v1525
    %v6083 = vunpack.c.l.b16 %v1526
    %v6084 = vunpack.c.h.b16 %v1526
    %v6085 = vunpack.c.l.b16 %v1527
    %v6086 = vunpack.c.h.b16 %v1527
    %v6087 = vunpack.c.l.b16 %v1528
    %v6088 = vunpack.c.h.b16 %v1528
    %v6089 = vunpack.c.l.b16 %v1529
    %v6090 = vunpack.c.h.b16 %v1529
    %v6091 = vunpack.c.l.b16 %v1530
    %v6092 = vunpack.c.h.b16 %v1530
    %v6093 = vunpack.c.l.b16 %v1531
    %v6094 = vunpack.c.h.b16 %v1531
    %v6095 = vunpack.c.l.b16 %v1532
    %v6096 = vunpack.c.h.b16 %v1532
    %v6097 = vunpack.c.l.b16 %v1533
    %v6098 = vunpack.c.h.b16 %v1533
    %v6099 = vunpack.c.l.b16 %v1534
    %v6100 = vunpack.c.h.b16 %v1534
    %v6101 = vunpack.c.l.b16 %v1535
    %v6102 = vunpack.c.h.b16 %v1535
    %v6103 = vunpack.c.l.b16 %v1536
    %v6104 = vunpack.c.h.b16 %v1536
    %v6105 = vunpack.c.l.b16 %v1537
    %v6106 = vunpack.c.h.b16 %v1537
    %v6107 = vunpack.c.l.b16 %v1538
    %v6108 = vunpack.c.h.b16 %v1538
    %v6109 = vunpack.c.l.b16 %v1539
    %v6110 = vunpack.c.h.b16 %v1539
    %v6111 = vunpack.c.l.b16 %v1540
    %v6112 = vunpack.c.h.b16 %v1540
    %v6113 = vunpack.c.l.b16 %v1541
    %v6114 = vunpack.c.h.b16 %v1541
    %v6115 = vunpack.c.l.b16 %v1542
    %v6116 = vunpack.c.h.b16 %v1542
    %v6117 = vunpack.c.l.b16 %v1543
    %v6118 = vunpack.c.h.b16 %v1543
    %v6119 = vunpack.c.l.b16 %v1544
    %v6120 = vunpack.c.h.b16 %v1544
    %v6121 = vunpack.c.l.b16 %v1545
    %v6122 = vunpack.c.h.b16 %v1545
    %v6123 = vunpack.c.l.b16 %v1546
    %v6124 = vunpack.c.h.b16 %v1546
    %v6125 = vunpack.c.l.b16 %v1547
    %v6126 = vunpack.c.h.b16 %v1547
    %v6127 = vunpack.c.l.b16 %v1548
    %v6128 = vunpack.c.h.b16 %v1548
    %v6129 = vunpack.c.l.b16 %v1549
    %v6130 = vunpack.c.h.b16 %v1549
    %v6131 = vunpack.c.l.b16 %v1550
    %v6132 = vunpack.c.h.b16 %v1550
    %v6133 = vunpack.c.l.b16 %v1551
    %v6134 = vunpack.c.h.b16 %v1551
    %v6135 = vunpack.c.l.b16 %v1552
    %v6136 = vunpack.c.h.b16 %v1552
    %v6137 = vunpack.c.l.b16 %v1553
    %v6138 = vunpack.c.h.b16 %v1553
    %v6139 = vunpack.c.l.b16 %v1554
    %v6140 = vunpack.c.h.b16 %v1554
    %v6141 = vunpack.c.l.b16 %v1555
    %v6142 = vunpack.c.h.b16 %v1555
    %v6143 = vunpack.c.l.b16 %v1556
    %v6144 = vunpack.c.h.b16 %v1556
    %v6145 = vunpack.c.l.b16 %v1557
    %v6146 = vunpack.c.h.b16 %v1557
    %v6147 = vunpack.c.l.b16 %v1558
    %v6148 = vunpack.c.h.b16 %v1558
    %v6149 = vunpack.c.l.b16 %v1559
    %v6150 = vunpack.c.h.b16 %v1559
    %v6151 = vunpack.c.l.b16 %v1560
    %v6152 = vunpack.c.h.b16 %v1560
    %v6153 = vunpack.c.l.b16 %v1561
    %v6154 = vunpack.c.h.b16 %v1561
    %v6155 = vunpack.c.l.b16 %v1562
    %v6156 = vunpack.c.h.b16 %v1562
    %v6157 = vunpack.c.l.b16 %v1563
    %v6158 = vunpack.c.h.b16 %v1563
    %v6159 = vunpack.c.l.b16 %v1564
    %v6160 = vunpack.c.h.b16 %v1564
    %v6161 = vunpack.c.l.b16 %v1565
    %v6162 = vunpack.c.h.b16 %v1565
    %v6163 = vunpack.c.l.b16 %v1566
    %v6164 = vunpack.c.h.b16 %v1566
    %v6165 = vunpack.c.l.b16 %v1567
    %v6166 = vunpack.c.h.b16 %v1567
    %v6167 = vunpack.c.l.b16 %v1568
    %v6168 = vunpack.c.h.b16 %v1568
    %v6169 = vunpack.c.l.b16 %v1569
    %v6170 = vunpack.c.h.b16 %v1569
    %v6171 = vunpack.c.l.b16 %v1570
    %v6172 = vunpack.c.h.b16 %v1570
    %v6173 = vunpack.c.l.b16 %v1571
    %v6174 = vunpack.c.h.b16 %v1571
    %v6175 = vunpack.c.l.b16 %v1572
    %v6176 = vunpack.c.h.b16 %v1572
    %v6177 = vunpack.c.l.b16 %v1573
    %v6178 = vunpack.c.h.b16 %v1573
    %v6179 = vunpack.c.l.b16 %v1574
    %v6180 = vunpack.c.h.b16 %v1574
    %v6181 = vunpack.c.l.b16 %v1575
    %v6182 = vunpack.c.h.b16 %v1575
    %v6183 = vunpack.c.l.b16 %v1576
    %v6184 = vunpack.c.h.b16 %v1576
    %v6185 = vunpack.c.l.b16 %v1577
    %v6186 = vunpack.c.h.b16 %v1577
    %v6187 = vunpack.c.l.b16 %v1578
    %v6188 = vunpack.c.h.b16 %v1578
    %v6189 = vunpack.c.l.b16 %v1579
    %v6190 = vunpack.c.h.b16 %v1579
    %v6191 = vunpack.c.l.b16 %v1580
    %v6192 = vunpack.c.h.b16 %v1580
    %v6193 = vunpack.c.l.b16 %v1581
    %v6194 = vunpack.c.h.b16 %v1581
    %v6195 = vunpack.c.l.b16 %v1582
    %v6196 = vunpack.c.h.b16 %v1582
    %v6197 = vunpack.c.l.b16 %v1583
    %v6198 = vunpack.c.h.b16 %v1583
    %v6199 = vunpack.c.l.b16 %v1584
    %v6200 = vunpack.c.h.b16 %v1584
    %v6201 = vunpack.c.l.b16 %v1585
    %v6202 = vunpack.c.h.b16 %v1585
    %v6203 = vunpack.c.l.b16 %v1586
    %v6204 = vunpack.c.h.b16 %v1586
    %v6205 = vunpack.c.l.b16 %v1587
    %v6206 = vunpack.c.h.b16 %v1587
    %v6207 = vunpack.c.l.b16 %v1588
    %v6208 = vunpack.c.h.b16 %v1588
    %v6209 = vunpack.c.l.b16 %v1589
    %v6210 = vunpack.c.h.b16 %v1589
    %v6211 = vunpack.c.l.b16 %v1590
    %v6212 = vunpack.c.h.b16 %v1590
    %v6213 = vunpack.c.l.b16 %v1591
    %v6214 = vunpack.c.h.b16 %v1591
    %v6215 = vunpack.c.l.b16 %v1592
    %v6216 = vunpack.c.h.b16 %v1592
    %v6217 = vunpack.c.l.b16 %v1593
    %v6218 = vunpack.c.h.b16 %v1593
    %v6219 = vunpack.c.l.b16 %v1594
    %v6220 = vunpack.c.h.b16 %v1594
    %v6221 = vunpack.c.l.b16 %v1595
    %v6222 = vunpack.c.h.b16 %v1595
    %v6223 = vunpack.c.l.b16 %v1596
    %v6224 = vunpack.c.h.b16 %v1596
    %v6225 = vunpack.c.l.b16 %v1597
    %v6226 = vunpack.c.h.b16 %v1597
    %v6227 = vunpack.c.l.b16 %v1598
    %v6228 = vunpack.c.h.b16 %v1598
    %v6229 = vunpack.c.l.b16 %v1599
    %v6230 = vunpack.c.h.b16 %v1599
    %v6231 = vunpack.c.l.b16 %v1600
    %v6232 = vunpack.c.h.b16 %v1600
    %v6233 = vunpack.c.l.b16 %v1601
    %v6234 = vunpack.c.h.b16 %v1601
    %v6235 = vunpack.c.l.b16 %v1602
    %v6236 = vunpack.c.h.b16 %v1602
    %v6237 = vunpack.c.l.b16 %v1603
    %v6238 = vunpack.c.h.b16 %v1603
    %v6239 = vunpack.c.l.b16 %v1604
    %v6240 = vunpack.c.h.b16 %v1604
    %v6241 = vunpack.c.l.b16 %v1605
    %v6242 = vunpack.c.h.b16 %v1605
    %v6243 = vunpack.c.l.b16 %v1606
    %v6244 = vunpack.c.h.b16 %v1606
    %v6245 = vunpack.c.l.b16 %v1607
    %v6246 = vunpack.c.h.b16 %v1607
    %v6247 = vunpack.c.l.b16 %v1608
    %v6248 = vunpack.c.h.b16 %v1608
    %v6249 = vunpack.c.l.b16 %v1609
    %v6250 = vunpack.c.h.b16 %v1609
    %v6251 = vunpack.c.l.b16 %v1610
    %v6252 = vunpack.c.h.b16 %v1610
    %v6253 = vunpack.c.l.b16 %v1611
    %v6254 = vunpack.c.h.b16 %v1611
    %v6255 = vunpack.c.l.b16 %v1612
    %v6256 = vunpack.c.h.b16 %v1612
    %v6257 = vunpack.c.l.b16 %v1613
    %v6258 = vunpack.c.h.b16 %v1613
    %v6259 = vunpack.c.l.b16 %v1614
    %v6260 = vunpack.c.h.b16 %v1614
    %v6261 = vunpack.c.l.b16 %v1615
    %v6262 = vunpack.c.h.b16 %v1615
    %v6263 = vunpack.c.l.b16 %v1616
    %v6264 = vunpack.c.h.b16 %v1616
    %v6265 = vunpack.c.l.b16 %v1617
    %v6266 = vunpack.c.h.b16 %v1617
    %v6267 = vunpack.c.l.b16 %v1618
    %v6268 = vunpack.c.h.b16 %v1618
    %v6269 = vunpack.c.l.b16 %v1619
    %v6270 = vunpack.c.h.b16 %v1619
    %v6271 = vunpack.c.l.b16 %v1620
    %v6272 = vunpack.c.h.b16 %v1620
    %v6273 = vunpack.c.l.b16 %v1621
    %v6274 = vunpack.c.h.b16 %v1621
    %v6275 = vunpack.c.l.b16 %v1622
    %v6276 = vunpack.c.h.b16 %v1622
    %v6277 = vunpack.c.l.b16 %v1623
    %v6278 = vunpack.c.h.b16 %v1623
    %v6279 = vunpack.c.l.b16 %v1624
    %v6280 = vunpack.c.h.b16 %v1624
    %v6281 = vunpack.c.l.b16 %v1625
    %v6282 = vunpack.c.h.b16 %v1625
    %v6283 = vunpack.c.l.b16 %v1626
    %v6284 = vunpack.c.h.b16 %v1626
    %v6285 = vunpack.c.l.b16 %v1627
    %v6286 = vunpack.c.h.b16 %v1627
    %v6287 = vunpack.c.l.b16 %v1628
    %v6288 = vunpack.c.h.b16 %v1628
    %v6289 = vunpack.c.l.b16 %v1629
    %v6290 = vunpack.c.h.b16 %v1629
    %v6291 = vunpack.c.l.b16 %v1630
    %v6292 = vunpack.c.h.b16 %v1630
    %v6293 = vunpack.c.l.b16 %v1631
    %v6294 = vunpack.c.h.b16 %v1631
    %v6295 = vunpack.c.l.b16 %v1632
    %v6296 = vunpack.c.h.b16 %v1632
    %v6297 = vunpack.c.l.b16 %v1633
    %v6298 = vunpack.c.h.b16 %v1633
    %v6299 = vunpack.c.l.b16 %v1634
    %v6300 = vunpack.c.h.b16 %v1634
    %v6301 = vunpack.c.l.b16 %v1635
    %v6302 = vunpack.c.h.b16 %v1635
    %v6303 = vunpack.c.l.b16 %v1636
    %v6304 = vunpack.c.h.b16 %v1636
    %v6305 = vunpack.c.l.b16 %v1637
    %v6306 = vunpack.c.h.b16 %v1637
    %v6307 = vunpack.c.l.b16 %v1638
    %v6308 = vunpack.c.h.b16 %v1638
    %v6309 = vunpack.c.l.b16 %v1639
    %v6310 = vunpack.c.h.b16 %v1639
    %v6311 = vunpack.c.l.b16 %v1640
    %v6312 = vunpack.c.h.b16 %v1640
    %v6313 = vunpack.c.l.b16 %v1641
    %v6314 = vunpack.c.h.b16 %v1641
    %v6315 = vunpack.c.l.b16 %v1642
    %v6316 = vunpack.c.h.b16 %v1642
    %v6317 = vunpack.c.l.b16 %v1643
    %v6318 = vunpack.c.h.b16 %v1643
    %v6319 = vunpack.c.l.b16 %v1644
    %v6320 = vunpack.c.h.b16 %v1644
    %v6321 = vunpack.c.l.b16 %v1645
    %v6322 = vunpack.c.h.b16 %v1645
    %v6323 = vunpack.c.l.b16 %v1646
    %v6324 = vunpack.c.h.b16 %v1646
    %v6325 = vunpack.c.l.b16 %v1647
    %v6326 = vunpack.c.h.b16 %v1647
    %v6327 = vunpack.c.l.b16 %v1648
    %v6328 = vunpack.c.h.b16 %v1648
    %v6329 = vunpack.c.l.b16 %v1649
    %v6330 = vunpack.c.h.b16 %v1649
    %v6331 = vunpack.c.l.b16 %v1650
    %v6332 = vunpack.c.h.b16 %v1650
    %v6333 = vunpack.c.l.b16 %v1651
    %v6334 = vunpack.c.h.b16 %v1651
    %v6335 = vunpack.c.l.b16 %v1652
    %v6336 = vunpack.c.h.b16 %v1652
    %v6337 = vunpack.c.l.b16 %v1653
    %v6338 = vunpack.c.h.b16 %v1653
    %v6339 = vunpack.c.l.b16 %v1654
    %v6340 = vunpack.c.h.b16 %v1654
    %v6341 = vunpack.c.l.b16 %v1655
    %v6342 = vunpack.c.h.b16 %v1655
    %v6343 = vunpack.c.l.b16 %v1656
    %v6344 = vunpack.c.h.b16 %v1656
    %v6345 = vunpack.c.l.b16 %v1657
    %v6346 = vunpack.c.h.b16 %v1657
    %v6347 = vunpack.c.l.b16 %v1658
    %v6348 = vunpack.c.h.b16 %v1658
    %v6349 = vunpack.c.l.b16 %v1659
    %v6350 = vunpack.c.h.b16 %v1659
    %v6351 = vunpack.c.l.b16 %v1660
    %v6352 = vunpack.c.h.b16 %v1660
    %v6353 = vunpack.c.l.b16 %v1661
    %v6354 = vunpack.c.h.b16 %v1661
    %v6355 = vunpack.c.l.b16 %v1662
    %v6356 = vunpack.c.h.b16 %v1662
    %v6357 = vunpack.c.l.b16 %v1663
    %v6358 = vunpack.c.h.b16 %v1663
    %v6359 = vunpack.c.l.b16 %v1664
    %v6360 = vunpack.c.h.b16 %v1664
    %v6361 = vunpack.c.l.b16 %v1665
    %v6362 = vunpack.c.h.b16 %v1665
    %v6363 = vunpack.c.l.b16 %v1666
    %v6364 = vunpack.c.h.b16 %v1666
    %v6365 = vunpack.c.l.b16 %v1667
    %v6366 = vunpack.c.h.b16 %v1667
    %v6367 = vunpack.c.l.b16 %v1668
    %v6368 = vunpack.c.h.b16 %v1668
    %v6369 = vunpack.c.l.b16 %v1669
    %v6370 = vunpack.c.h.b16 %v1669
    %v6371 = vunpack.c.l.b16 %v1670
    %v6372 = vunpack.c.h.b16 %v1670
    %v6373 = vunpack.c.l.b16 %v1671
    %v6374 = vunpack.c.h.b16 %v1671
    %v6375 = vunpack.c.l.b16 %v1672
    %v6376 = vunpack.c.h.b16 %v1672
    %v6377 = vunpack.c.l.b16 %v1673
    %v6378 = vunpack.c.h.b16 %v1673
    %v6379 = vunpack.c.l.b16 %v1674
    %v6380 = vunpack.c.h.b16 %v1674
    %v6381 = vunpack.c.l.b16 %v1675
    %v6382 = vunpack.c.h.b16 %v1675
    %v6383 = vunpack.c.l.b16 %v1676
    %v6384 = vunpack.c.h.b16 %v1676
    %v6385 = vunpack.c.l.b16 %v1677
    %v6386 = vunpack.c.h.b16 %v1677
    %v6387 = vunpack.c.l.b16 %v1678
    %v6388 = vunpack.c.h.b16 %v1678
    %v6389 = vunpack.c.l.b16 %v1679
    %v6390 = vunpack.c.h.b16 %v1679
    %v6391 = vunpack.c.l.b16 %v1680
    %v6392 = vunpack.c.h.b16 %v1680
    %v6393 = vunpack.c.l.b16 %v1681
    %v6394 = vunpack.c.h.b16 %v1681
    %v6395 = vunpack.c.l.b16 %v1682
    %v6396 = vunpack.c.h.b16 %v1682
    %v6397 = vunpack.c.l.b16 %v1683
    %v6398 = vunpack.c.h.b16 %v1683
    %v6399 = vunpack.c.l.b16 %v1684
    %v6400 = vunpack.c.h.b16 %v1684
    %v6401 = vunpack.c.l.b16 %v1685
    %v6402 = vunpack.c.h.b16 %v1685
    %v6403 = vunpack.c.l.b16 %v1686
    %v6404 = vunpack.c.h.b16 %v1686
    %v6405 = vunpack.c.l.b16 %v1687
    %v6406 = vunpack.c.h.b16 %v1687
    %v6407 = vunpack.c.l.b16 %v1688
    %v6408 = vunpack.c.h.b16 %v1688
    %v6409 = vunpack.c.l.b16 %v1689
    %v6410 = vunpack.c.h.b16 %v1689
    %v6411 = vunpack.c.l.b16 %v1690
    %v6412 = vunpack.c.h.b16 %v1690
    %v6413 = vunpack.c.l.b16 %v1691
    %v6414 = vunpack.c.h.b16 %v1691
    %v6415 = vunpack.c.l.b16 %v1692
    %v6416 = vunpack.c.h.b16 %v1692
    %v6417 = vunpack.c.l.b16 %v1693
    %v6418 = vunpack.c.h.b16 %v1693
    %v6419 = vunpack.c.l.b16 %v1694
    %v6420 = vunpack.c.h.b16 %v1694
    %v6421 = vunpack.c.l.b16 %v1695
    %v6422 = vunpack.c.h.b16 %v1695
    %v6423 = vunpack.c.l.b16 %v1696
    %v6424 = vunpack.c.h.b16 %v1696
    %v6425 = vunpack.c.l.b16 %v1697
    %v6426 = vunpack.c.h.b16 %v1697
    %v6427 = vunpack.c.l.b16 %v1698
    %v6428 = vunpack.c.h.b16 %v1698
    %v6429 = vunpack.c.l.b16 %v1699
    %v6430 = vunpack.c.h.b16 %v1699
    %v6431 = vunpack.c.l.b16 %v1700
    %v6432 = vunpack.c.h.b16 %v1700
    %v6433 = vunpack.c.l.b16 %v1701
    %v6434 = vunpack.c.h.b16 %v1701
    %v6435 = vunpack.c.l.b16 %v1702
    %v6436 = vunpack.c.h.b16 %v1702
    %v6437 = vunpack.c.l.b16 %v1703
    %v6438 = vunpack.c.h.b16 %v1703
    %v6439 = vunpack.c.l.b16 %v1704
    %v6440 = vunpack.c.h.b16 %v1704
    %v6441 = vunpack.c.l.b16 %v1705
    %v6442 = vunpack.c.h.b16 %v1705
    %v6443 = vunpack.c.l.b16 %v1706
    %v6444 = vunpack.c.h.b16 %v1706
    %v6445 = vunpack.c.l.b16 %v1707
    %v6446 = vunpack.c.h.b16 %v1707
    %v6447 = vunpack.c.l.b16 %v1708
    %v6448 = vunpack.c.h.b16 %v1708
    %v6449 = vunpack.c.l.b16 %v1709
    %v6450 = vunpack.c.h.b16 %v1709
    %v6451 = vunpack.c.l.b16 %v1710
    %v6452 = vunpack.c.h.b16 %v1710
    %v6453 = vunpack.c.l.b16 %v1711
    %v6454 = vunpack.c.h.b16 %v1711
    %v6455 = vunpack.c.l.b16 %v1712
    %v6456 = vunpack.c.h.b16 %v1712
    %v6457 = vunpack.c.l.b16 %v1713
    %v6458 = vunpack.c.h.b16 %v1713
    %v6459 = vunpack.c.l.b16 %v1714
    %v6460 = vunpack.c.h.b16 %v1714
    %v6461 = vunpack.c.l.b16 %v1715
    %v6462 = vunpack.c.h.b16 %v1715
    %v6463 = vunpack.c.l.b16 %v1716
    %v6464 = vunpack.c.h.b16 %v1716
    %v6465 = vunpack.c.l.b16 %v1717
    %v6466 = vunpack.c.h.b16 %v1717
    %v6467 = vunpack.c.l.b16 %v1718
    %v6468 = vunpack.c.h.b16 %v1718
    %v6469 = vunpack.c.l.b16 %v1719
    %v6470 = vunpack.c.h.b16 %v1719
    %v6471 = vunpack.c.l.b16 %v1720
    %v6472 = vunpack.c.h.b16 %v1720
    %v6473 = vunpack.c.l.b16 %v1721
    %v6474 = vunpack.c.h.b16 %v1721
    %v6475 = vunpack.c.l.b16 %v1722
    %v6476 = vunpack.c.h.b16 %v1722
    %v6477 = vunpack.c.l.b16 %v1723
    %v6478 = vunpack.c.h.b16 %v1723
    %v6479 = vunpack.c.l.b16 %v1724
    %v6480 = vunpack.c.h.b16 %v1724
    %v6481 = vunpack.c.l.b16 %v1725
    %v6482 = vunpack.c.h.b16 %v1725
    %v6483 = vunpack.c.l.b16 %v1726
    %v6484 = vunpack.c.h.b16 %v1726
    %v6485 = vunpack.c.l.b16 %v1727
    %v6486 = vunpack.c.h.b16 %v1727
    %v6487 = vunpack.c.l.b16 %v1728
    %v6488 = vunpack.c.h.b16 %v1728
    %v6489 = vunpack.c.l.b16 %v1729
    %v6490 = vunpack.c.h.b16 %v1729
    %v6491 = vunpack.c.l.b16 %v1730
    %v6492 = vunpack.c.h.b16 %v1730
    %v6493 = vunpack.c.l.b16 %v1731
    %v6494 = vunpack.c.h.b16 %v1731
    %v6495 = vunpack.c.l.b16 %v1732
    %v6496 = vunpack.c.h.b16 %v1732
    %v6497 = vunpack.c.l.b16 %v1733
    %v6498 = vunpack.c.h.b16 %v1733
    %v6499 = vunpack.c.l.b16 %v1734
    %v6500 = vunpack.c.h.b16 %v1734
    %v6501 = vunpack.c.l.b16 %v1735
    %v6502 = vunpack.c.h.b16 %v1735
    %v6503 = vunpack.c.l.b16 %v1736
    %v6504 = vunpack.c.h.b16 %v1736
    %v6505 = vunpack.c.l.b16 %v1737
    %v6506 = vunpack.c.h.b16 %v1737
    %v6507 = vunpack.c.l.b16 %v1738
    %v6508 = vunpack.c.h.b16 %v1738
    %v6509 = vpack.c.b16 %v3445, %v3437
    %v6510 = vpack.c.b16 %v3446, %v3438
    %v6511 = vpack.c.b16 %v3447, %v3439
    %v6512 = vpack.c.b16 %v3448, %v3440
    %v6513 = vpack.c.b16 %v3449, %v3441
    %v6514 = vpack.c.b16 %v3450, %v3442
    %v6515 = vpack.c.b16 %v3451, %v3443
    %v6516 = vpack.c.b16 %v3452, %v3444
    %v6517 = vpack.c.b16 %v3461, %v3453
    %v6518 = vpack.c.b16 %v3462, %v3454
    %v6519 = vpack.c.b16 %v3463, %v3455
    %v6520 = vpack.c.b16 %v3464, %v3456
    %v6521 = vpack.c.b16 %v3465, %v3457
    %v6522 = vpack.c.b16 %v3466, %v3458
    %v6523 = vpack.c.b16 %v3467, %v3459
    %v6524 = vpack.c.b16 %v3468, %v3460
    %v6525 = vpack.c.b16 %v3477, %v3469
    %v6526 = vpack.c.b16 %v3478, %v3470
    %v6527 = vpack.c.b16 %v3479, %v3471
    %v6528 = vpack.c.b16 %v3480, %v3472
    %v6529 = vpack.c.b16 %v3481, %v3473
    %v6530 = vpack.c.b16 %v3482, %v3474
    %v6531 = vpack.c.b16 %v3483, %v3475
    %v6532 = vpack.c.b16 %v3484, %v3476
    %v6533 = vpack.c.b16 %v3493, %v3485
    %v6534 = vpack.c.b16 %v3494, %v3486
    %v6535 = vpack.c.b16 %v3495, %v3487
    %v6536 = vpack.c.b16 %v3496, %v3488
    %v6537 = vpack.c.b16 %v3497, %v3489
    %v6538 = vpack.c.b16 %v3498, %v3490
    %v6539 = vpack.c.b16 %v3499, %v3491
    %v6540 = vpack.c.b16 %v3500, %v3492
    %v6541 = vpack.c.b16 %v3509, %v3501
    %v6542 = vpack.c.b16 %v3510, %v3502
    %v6543 = vpack.c.b16 %v3511, %v3503
    %v6544 = vpack.c.b16 %v3512, %v3504
    %v6545 = vpack.c.b16 %v3513, %v3505
    %v6546 = vpack.c.b16 %v3514, %v3506
    %v6547 = vpack.c.b16 %v3515, %v3507
    %v6548 = vpack.c.b16 %v3516, %v3508
    %v6549 = vpack.c.b16 %v3525, %v3517
    %v6550 = vpack.c.b16 %v3526, %v3518
    %v6551 = vpack.c.b16 %v3527, %v3519
    %v6552 = vpack.c.b16 %v3528, %v3520
    %v6553 = vpack.c.b16 %v3529, %v3521
    %v6554 = vpack.c.b16 %v3530, %v3522
    %v6555 = vpack.c.b16 %v3531, %v3523
    %v6556 = vpack.c.b16 %v3532, %v3524
    %v6557 = vpack.c.b16 %v3541, %v3533
    %v6558 = vpack.c.b16 %v3542, %v3534
    %v6559 = vpack.c.b16 %v3543, %v3535
    %v6560 = vpack.c.b16 %v3544, %v3536
    %v6561 = vpack.c.b16 %v3545, %v3537
    %v6562 = vpack.c.b16 %v3546, %v3538
    %v6563 = vpack.c.b16 %v3547, %v3539
    %v6564 = vpack.c.b16 %v3548, %v3540
    %v6565 = vpack.c.b16 %v3557, %v3549
    %v6566 = vpack.c.b16 %v3558, %v3550
    %v6567 = vpack.c.b16 %v3559, %v3551
    %v6568 = vpack.c.b16 %v3560, %v3552
    %v6569 = vpack.c.b16 %v3561, %v3553
    %v6570 = vpack.c.b16 %v3562, %v3554
    %v6571 = vpack.c.b16 %v3563, %v3555
    %v6572 = vpack.c.b16 %v3564, %v3556
    %v6573 = vpack.c.b16 %v3573, %v3565
    %v6574 = vpack.c.b16 %v3574, %v3566
    %v6575 = vpack.c.b16 %v3575, %v3567
    %v6576 = vpack.c.b16 %v3576, %v3568
    %v6577 = vpack.c.b16 %v3577, %v3569
    %v6578 = vpack.c.b16 %v3578, %v3570
    %v6579 = vpack.c.b16 %v3579, %v3571
    %v6580 = vpack.c.b16 %v3580, %v3572
    %v6581 = vpack.c.b16 %v3589, %v3581
    %v6582 = vpack.c.b16 %v3590, %v3582
    %v6583 = vpack.c.b16 %v3591, %v3583
    %v6584 = vpack.c.b16 %v3592, %v3584
    %v6585 = vpack.c.b16 %v3593, %v3585
    %v6586 = vpack.c.b16 %v3594, %v3586
    %v6587 = vpack.c.b16 %v3595, %v3587
    %v6588 = vpack.c.b16 %v3596, %v3588
    %v6589 = vpack.c.b16 %v3605, %v3597
    %v6590 = vpack.c.b16 %v3606, %v3598
    %v6591 = vpack.c.b16 %v3607, %v3599
    %v6592 = vpack.c.b16 %v3608, %v3600
    %v6593 = vpack.c.b16 %v3609, %v3601
    %v6594 = vpack.c.b16 %v3610, %v3602
    %v6595 = vpack.c.b16 %v3611, %v3603
    %v6596 = vpack.c.b16 %v3612, %v3604
    %v6597 = vpack.c.b16 %v3621, %v3613
    %v6598 = vpack.c.b16 %v3622, %v3614
    %v6599 = vpack.c.b16 %v3623, %v3615
    %v6600 = vpack.c.b16 %v3624, %v3616
    %v6601 = vpack.c.b16 %v3625, %v3617
    %v6602 = vpack.c.b16 %v3626, %v3618
    %v6603 = vpack.c.b16 %v3627, %v3619
    %v6604 = vpack.c.b16 %v3628, %v3620
    %v6605 = vpack.c.b16 %v3637, %v3629
    %v6606 = vpack.c.b16 %v3638, %v3630
    %v6607 = vpack.c.b16 %v3639, %v3631
    %v6608 = vpack.c.b16 %v3640, %v3632
    %v6609 = vpack.c.b16 %v3641, %v3633
    %v6610 = vpack.c.b16 %v3642, %v3634
    %v6611 = vpack.c.b16 %v3643, %v3635
    %v6612 = vpack.c.b16 %v3644, %v3636
    %v6613 = vpack.c.b16 %v3653, %v3645
    %v6614 = vpack.c.b16 %v3654, %v3646
    %v6615 = vpack.c.b16 %v3655, %v3647
    %v6616 = vpack.c.b16 %v3656, %v3648
    %v6617 = vpack.c.b16 %v3657, %v3649
    %v6618 = vpack.c.b16 %v3658, %v3650
    %v6619 = vpack.c.b16 %v3659, %v3651
    %v6620 = vpack.c.b16 %v3660, %v3652
    %v6621 = vpack.c.b16 %v3669, %v3661
    %v6622 = vpack.c.b16 %v3670, %v3662
    %v6623 = vpack.c.b16 %v3671, %v3663
    %v6624 = vpack.c.b16 %v3672, %v3664
    %v6625 = vpack.c.b16 %v3673, %v3665
    %v6626 = vpack.c.b16 %v3674, %v3666
    %v6627 = vpack.c.b16 %v3675, %v3667
    %v6628 = vpack.c.b16 %v3676, %v3668
    %v6629 = vpack.c.b16 %v3685, %v3677
    %v6630 = vpack.c.b16 %v3686, %v3678
    %v6631 = vpack.c.b16 %v3687, %v3679
    %v6632 = vpack.c.b16 %v3688, %v3680
    %v6633 = vpack.c.b16 %v3689, %v3681
    %v6634 = vpack.c.b16 %v3690, %v3682
    %v6635 = vpack.c.b16 %v3691, %v3683
    %v6636 = vpack.c.b16 %v3692, %v3684
    %v6637 = vpack.c.b16 %v3701, %v3693
    %v6638 = vpack.c.b16 %v3702, %v3694
    %v6639 = vpack.c.b16 %v3703, %v3695
    %v6640 = vpack.c.b16 %v3704, %v3696
    %v6641 = vpack.c.b16 %v3705, %v3697
    %v6642 = vpack.c.b16 %v3706, %v3698
    %v6643 = vpack.c.b16 %v3707, %v3699
    %v6644 = vpack.c.b16 %v3708, %v3700
    %v6645 = vpack.c.b16 %v3717, %v3709
    %v6646 = vpack.c.b16 %v3718, %v3710
    %v6647 = vpack.c.b16 %v3719, %v3711
    %v6648 = vpack.c.b16 %v3720, %v3712
    %v6649 = vpack.c.b16 %v3721, %v3713
    %v6650 = vpack.c.b16 %v3722, %v3714
    %v6651 = vpack.c.b16 %v3723, %v3715
    %v6652 = vpack.c.b16 %v3724, %v3716
    %v6653 = vpack.c.b16 %v3733, %v3725
    %v6654 = vpack.c.b16 %v3734, %v3726
    %v6655 = vpack.c.b16 %v3735, %v3727
    %v6656 = vpack.c.b16 %v3736, %v3728
    %v6657 = vpack.c.b16 %v3737, %v3729
    %v6658 = vpack.c.b16 %v3738, %v3730
    %v6659 = vpack.c.b16 %v3739, %v3731
    %v6660 = vpack.c.b16 %v3740, %v3732
    %v6661 = vpack.c.b16 %v3749, %v3741
    %v6662 = vpack.c.b16 %v3750, %v3742
    %v6663 = vpack.c.b16 %v3751, %v3743
    %v6664 = vpack.c.b16 %v3752, %v3744
    %v6665 = vpack.c.b16 %v3753, %v3745
    %v6666 = vpack.c.b16 %v3754, %v3746
    %v6667 = vpack.c.b16 %v3755, %v3747
    %v6668 = vpack.c.b16 %v3756, %v3748
    %v6669 = vpack.c.b16 %v3765, %v3757
    %v6670 = vpack.c.b16 %v3766, %v3758
    %v6671 = vpack.c.b16 %v3767, %v3759
    %v6672 = vpack.c.b16 %v3768, %v3760
    %v6673 = vpack.c.b16 %v3769, %v3761
    %v6674 = vpack.c.b16 %v3770, %v3762
    %v6675 = vpack.c.b16 %v3771, %v3763
    %v6676 = vpack.c.b16 %v3772, %v3764
    %v6677 = vpack.c.b16 %v3781, %v3773
    %v6678 = vpack.c.b16 %v3782, %v3774
    %v6679 = vpack.c.b16 %v3783, %v3775
    %v6680 = vpack.c.b16 %v3784, %v3776
    %v6681 = vpack.c.b16 %v3785, %v3777
    %v6682 = vpack.c.b16 %v3786, %v3778
    %v6683 = vpack.c.b16 %v3787, %v3779
    %v6684 = vpack.c.b16 %v3788, %v3780
    %v6685 = vpack.c.b16 %v3797, %v3789
    %v6686 = vpack.c.b16 %v3798, %v3790
    %v6687 = vpack.c.b16 %v3799, %v3791
    %v6688 = vpack.c.b16 %v3800, %v3792
    %v6689 = vpack.c.b16 %v3801, %v3793
    %v6690 = vpack.c.b16 %v3802, %v3794
    %v6691 = vpack.c.b16 %v3803, %v3795
    %v6692 = vpack.c.b16 %v3804, %v3796
    %v6693 = vpack.c.b16 %v3813, %v3805
    %v6694 = vpack.c.b16 %v3814, %v3806
    %v6695 = vpack.c.b16 %v3815, %v3807
    %v6696 = vpack.c.b16 %v3816, %v3808
    %v6697 = vpack.c.b16 %v3817, %v3809
    %v6698 = vpack.c.b16 %v3818, %v3810
    %v6699 = vpack.c.b16 %v3819, %v3811
    %v6700 = vpack.c.b16 %v3820, %v3812
    %v6701 = vpack.c.b16 %v3829, %v3821
    %v6702 = vpack.c.b16 %v3830, %v3822
    %v6703 = vpack.c.b16 %v3831, %v3823
    %v6704 = vpack.c.b16 %v3832, %v3824
    %v6705 = vpack.c.b16 %v3833, %v3825
    %v6706 = vpack.c.b16 %v3834, %v3826
    %v6707 = vpack.c.b16 %v3835, %v3827
    %v6708 = vpack.c.b16 %v3836, %v3828
    %v6709 = vpack.c.b16 %v3845, %v3837
    %v6710 = vpack.c.b16 %v3846, %v3838
    %v6711 = vpack.c.b16 %v3847, %v3839
    %v6712 = vpack.c.b16 %v3848, %v3840
    %v6713 = vpack.c.b16 %v3849, %v3841
    %v6714 = vpack.c.b16 %v3850, %v3842
    %v6715 = vpack.c.b16 %v3851, %v3843
    %v6716 = vpack.c.b16 %v3852, %v3844
    %v6717 = vpack.c.b16 %v3861, %v3853
    %v6718 = vpack.c.b16 %v3862, %v3854
    %v6719 = vpack.c.b16 %v3863, %v3855
    %v6720 = vpack.c.b16 %v3864, %v3856
    %v6721 = vpack.c.b16 %v3865, %v3857
    %v6722 = vpack.c.b16 %v3866, %v3858
    %v6723 = vpack.c.b16 %v3867, %v3859
    %v6724 = vpack.c.b16 %v3868, %v3860
    %v6725 = vpack.c.b16 %v3877, %v3869
    %v6726 = vpack.c.b16 %v3878, %v3870
    %v6727 = vpack.c.b16 %v3879, %v3871
    %v6728 = vpack.c.b16 %v3880, %v3872
    %v6729 = vpack.c.b16 %v3881, %v3873
    %v6730 = vpack.c.b16 %v3882, %v3874
    %v6731 = vpack.c.b16 %v3883, %v3875
    %v6732 = vpack.c.b16 %v3884, %v3876
    %v6733 = vpack.c.b16 %v3893, %v3885
    %v6734 = vpack.c.b16 %v3894, %v3886
    %v6735 = vpack.c.b16 %v3895, %v3887
    %v6736 = vpack.c.b16 %v3896, %v3888
    %v6737 = vpack.c.b16 %v3897, %v3889
    %v6738 = vpack.c.b16 %v3898, %v3890
    %v6739 = vpack.c.b16 %v3899, %v3891
    %v6740 = vpack.c.b16 %v3900, %v3892
    %v6741 = vpack.c.b16 %v3909, %v3901
    %v6742 = vpack.c.b16 %v3910, %v3902
    %v6743 = vpack.c.b16 %v3911, %v3903
    %v6744 = vpack.c.b16 %v3912, %v3904
    %v6745 = vpack.c.b16 %v3913, %v3905
    %v6746 = vpack.c.b16 %v3914, %v3906
    %v6747 = vpack.c.b16 %v3915, %v3907
    %v6748 = vpack.c.b16 %v3916, %v3908
    %v6749 = vpack.c.b16 %v3925, %v3917
    %v6750 = vpack.c.b16 %v3926, %v3918
    %v6751 = vpack.c.b16 %v3927, %v3919
    %v6752 = vpack.c.b16 %v3928, %v3920
    %v6753 = vpack.c.b16 %v3929, %v3921
    %v6754 = vpack.c.b16 %v3930, %v3922
    %v6755 = vpack.c.b16 %v3931, %v3923
    %v6756 = vpack.c.b16 %v3932, %v3924
    %v6757 = vpack.c.b16 %v3941, %v3933
    %v6758 = vpack.c.b16 %v3942, %v3934
    %v6759 = vpack.c.b16 %v3943, %v3935
    %v6760 = vpack.c.b16 %v3944, %v3936
    %v6761 = vpack.c.b16 %v3945, %v3937
    %v6762 = vpack.c.b16 %v3946, %v3938
    %v6763 = vpack.c.b16 %v3947, %v3939
    %v6764 = vpack.c.b16 %v3948, %v3940
    %v6765 = vpack.c.b16 %v3957, %v3949
    %v6766 = vpack.c.b16 %v3958, %v3950
    %v6767 = vpack.c.b16 %v3959, %v3951
    %v6768 = vpack.c.b16 %v3960, %v3952
    %v6769 = vpack.c.b16 %v3961, %v3953
    %v6770 = vpack.c.b16 %v3962, %v3954
    %v6771 = vpack.c.b16 %v3963, %v3955
    %v6772 = vpack.c.b16 %v3964, %v3956
    %v6773 = vpack.c.b16 %v3973, %v3965
    %v6774 = vpack.c.b16 %v3974, %v3966
    %v6775 = vpack.c.b16 %v3975, %v3967
    %v6776 = vpack.c.b16 %v3976, %v3968
    %v6777 = vpack.c.b16 %v3977, %v3969
    %v6778 = vpack.c.b16 %v3978, %v3970
    %v6779 = vpack.c.b16 %v3979, %v3971
    %v6780 = vpack.c.b16 %v3980, %v3972
    %v6781 = vpack.c.b16 %v3989, %v3981
    %v6782 = vpack.c.b16 %v3990, %v3982
    %v6783 = vpack.c.b16 %v3991, %v3983
    %v6784 = vpack.c.b16 %v3992, %v3984
    %v6785 = vpack.c.b16 %v3993, %v3985
    %v6786 = vpack.c.b16 %v3994, %v3986
    %v6787 = vpack.c.b16 %v3995, %v3987
    %v6788 = vpack.c.b16 %v3996, %v3988
    %v6789 = vpack.c.b16 %v4005, %v3997
    %v6790 = vpack.c.b16 %v4006, %v3998
    %v6791 = vpack.c.b16 %v4007, %v3999
    %v6792 = vpack.c.b16 %v4008, %v4000
    %v6793 = vpack.c.b16 %v4009, %v4001
    %v6794 = vpack.c.b16 %v4010, %v4002
    %v6795 = vpack.c.b16 %v4011, %v4003
    %v6796 = vpack.c.b16 %v4012, %v4004
    %v6797 = vpack.c.b16 %v4021, %v4013
    %v6798 = vpack.c.b16 %v4022, %v4014
    %v6799 = vpack.c.b16 %v4023, %v4015
    %v6800 = vpack.c.b16 %v4024, %v4016
    %v6801 = vpack.c.b16 %v4025, %v4017
    %v6802 = vpack.c.b16 %v4026, %v4018
    %v6803 = vpack.c.b16 %v4027, %v4019
    %v6804 = vpack.c.b16 %v4028, %v4020
    %v6805 = vpack.c.b16 %v4037, %v4029
    %v6806 = vpack.c.b16 %v4038, %v4030
    %v6807 = vpack.c.b16 %v4039, %v4031
    %v6808 = vpack.c.b16 %v4040, %v4032
    %v6809 = vpack.c.b16 %v4041, %v4033
    %v6810 = vpack.c.b16 %v4042, %v4034
    %v6811 = vpack.c.b16 %v4043, %v4035
    %v6812 = vpack.c.b16 %v4044, %v4036
    %v6813 = vpack.c.b16 %v4053, %v4045
    %v6814 = vpack.c.b16 %v4054, %v4046
    %v6815 = vpack.c.b16 %v4055, %v4047
    %v6816 = vpack.c.b16 %v4056, %v4048
    %v6817 = vpack.c.b16 %v4057, %v4049
    %v6818 = vpack.c.b16 %v4058, %v4050
    %v6819 = vpack.c.b16 %v4059, %v4051
    %v6820 = vpack.c.b16 %v4060, %v4052
    %v6821 = vpack.c.b16 %v4069, %v4061
    %v6822 = vpack.c.b16 %v4070, %v4062
    %v6823 = vpack.c.b16 %v4071, %v4063
    %v6824 = vpack.c.b16 %v4072, %v4064
    %v6825 = vpack.c.b16 %v4073, %v4065
    %v6826 = vpack.c.b16 %v4074, %v4066
    %v6827 = vpack.c.b16 %v4075, %v4067
    %v6828 = vpack.c.b16 %v4076, %v4068
    %v6829 = vpack.c.b16 %v4085, %v4077
    %v6830 = vpack.c.b16 %v4086, %v4078
    %v6831 = vpack.c.b16 %v4087, %v4079
    %v6832 = vpack.c.b16 %v4088, %v4080
    %v6833 = vpack.c.b16 %v4089, %v4081
    %v6834 = vpack.c.b16 %v4090, %v4082
    %v6835 = vpack.c.b16 %v4091, %v4083
    %v6836 = vpack.c.b16 %v4092, %v4084
    %v6837 = vpack.c.b16 %v4101, %v4093
    %v6838 = vpack.c.b16 %v4102, %v4094
    %v6839 = vpack.c.b16 %v4103, %v4095
    %v6840 = vpack.c.b16 %v4104, %v4096
    %v6841 = vpack.c.b16 %v4105, %v4097
    %v6842 = vpack.c.b16 %v4106, %v4098
    %v6843 = vpack.c.b16 %v4107, %v4099
    %v6844 = vpack.c.b16 %v4108, %v4100
    %v6845 = vpack.c.b16 %v4117, %v4109
    %v6846 = vpack.c.b16 %v4118, %v4110
    %v6847 = vpack.c.b16 %v4119, %v4111
    %v6848 = vpack.c.b16 %v4120, %v4112
    %v6849 = vpack.c.b16 %v4121, %v4113
    %v6850 = vpack.c.b16 %v4122, %v4114
    %v6851 = vpack.c.b16 %v4123, %v4115
    %v6852 = vpack.c.b16 %v4124, %v4116
    %v6853 = vpack.c.b16 %v4133, %v4125
    %v6854 = vpack.c.b16 %v4134, %v4126
    %v6855 = vpack.c.b16 %v4135, %v4127
    %v6856 = vpack.c.b16 %v4136, %v4128
    %v6857 = vpack.c.b16 %v4137, %v4129
    %v6858 = vpack.c.b16 %v4138, %v4130
    %v6859 = vpack.c.b16 %v4139, %v4131
    %v6860 = vpack.c.b16 %v4140, %v4132
    %v6861 = vpack.c.b16 %v4149, %v4141
    %v6862 = vpack.c.b16 %v4150, %v4142
    %v6863 = vpack.c.b16 %v4151, %v4143
    %v6864 = vpack.c.b16 %v4152, %v4144
    %v6865 = vpack.c.b16 %v4153, %v4145
    %v6866 = vpack.c.b16 %v4154, %v4146
    %v6867 = vpack.c.b16 %v4155, %v4147
    %v6868 = vpack.c.b16 %v4156, %v4148
    %v6869 = vpack.c.b16 %v4165, %v4157
    %v6870 = vpack.c.b16 %v4166, %v4158
    %v6871 = vpack.c.b16 %v4167, %v4159
    %v6872 = vpack.c.b16 %v4168, %v4160
    %v6873 = vpack.c.b16 %v4169, %v4161
    %v6874 = vpack.c.b16 %v4170, %v4162
    %v6875 = vpack.c.b16 %v4171, %v4163
    %v6876 = vpack.c.b16 %v4172, %v4164
    %v6877 = vpack.c.b16 %v4181, %v4173
    %v6878 = vpack.c.b16 %v4182, %v4174
    %v6879 = vpack.c.b16 %v4183, %v4175
    %v6880 = vpack.c.b16 %v4184, %v4176
    %v6881 = vpack.c.b16 %v4185, %v4177
    %v6882 = vpack.c.b16 %v4186, %v4178
    %v6883 = vpack.c.b16 %v4187, %v4179
    %v6884 = vpack.c.b16 %v4188, %v4180
    %v6885 = vpack.c.b16 %v4197, %v4189
    %v6886 = vpack.c.b16 %v4198, %v4190
    %v6887 = vpack.c.b16 %v4199, %v4191
    %v6888 = vpack.c.b16 %v4200, %v4192
    %v6889 = vpack.c.b16 %v4201, %v4193
    %v6890 = vpack.c.b16 %v4202, %v4194
    %v6891 = vpack.c.b16 %v4203, %v4195
    %v6892 = vpack.c.b16 %v4204, %v4196
    %v6893 = vpack.c.b16 %v4213, %v4205
    %v6894 = vpack.c.b16 %v4214, %v4206
    %v6895 = vpack.c.b16 %v4215, %v4207
    %v6896 = vpack.c.b16 %v4216, %v4208
    %v6897 = vpack.c.b16 %v4217, %v4209
    %v6898 = vpack.c.b16 %v4218, %v4210
    %v6899 = vpack.c.b16 %v4219, %v4211
    %v6900 = vpack.c.b16 %v4220, %v4212
    %v6901 = vpack.c.b16 %v4229, %v4221
    %v6902 = vpack.c.b16 %v4230, %v4222
    %v6903 = vpack.c.b16 %v4231, %v4223
    %v6904 = vpack.c.b16 %v4232, %v4224
    %v6905 = vpack.c.b16 %v4233, %v4225
    %v6906 = vpack.c.b16 %v4234, %v4226
    %v6907 = vpack.c.b16 %v4235, %v4227
    %v6908 = vpack.c.b16 %v4236, %v4228
    %v6909 = vpack.c.b16 %v4245, %v4237
    %v6910 = vpack.c.b16 %v4246, %v4238
    %v6911 = vpack.c.b16 %v4247, %v4239
    %v6912 = vpack.c.b16 %v4248, %v4240
    %v6913 = vpack.c.b16 %v4249, %v4241
    %v6914 = vpack.c.b16 %v4250, %v4242
    %v6915 = vpack.c.b16 %v4251, %v4243
    %v6916 = vpack.c.b16 %v4252, %v4244
    %v6917 = vpack.c.b16 %v4261, %v4253
    %v6918 = vpack.c.b16 %v4262, %v4254
    %v6919 = vpack.c.b16 %v4263, %v4255
    %v6920 = vpack.c.b16 %v4264, %v4256
    %v6921 = vpack.c.b16 %v4265, %v4257
    %v6922 = vpack.c.b16 %v4266, %v4258
    %v6923 = vpack.c.b16 %v4267, %v4259
    %v6924 = vpack.c.b16 %v4268, %v4260
    %v6925 = vpack.c.b16 %v4277, %v4269
    %v6926 = vpack.c.b16 %v4278, %v4270
    %v6927 = vpack.c.b16 %v4279, %v4271
    %v6928 = vpack.c.b16 %v4280, %v4272
    %v6929 = vpack.c.b16 %v4281, %v4273
    %v6930 = vpack.c.b16 %v4282, %v4274
    %v6931 = vpack.c.b16 %v4283, %v4275
    %v6932 = vpack.c.b16 %v4284, %v4276
    %v6933 = vpack.c.b16 %v4293, %v4285
    %v6934 = vpack.c.b16 %v4294, %v4286
    %v6935 = vpack.c.b16 %v4295, %v4287
    %v6936 = vpack.c.b16 %v4296, %v4288
    %v6937 = vpack.c.b16 %v4297, %v4289
    %v6938 = vpack.c.b16 %v4298, %v4290
    %v6939 = vpack.c.b16 %v4299, %v4291
    %v6940 = vpack.c.b16 %v4300, %v4292
    %v6941 = vpack.c.b16 %v4309, %v4301
    %v6942 = vpack.c.b16 %v4310, %v4302
    %v6943 = vpack.c.b16 %v4311, %v4303
    %v6944 = vpack.c.b16 %v4312, %v4304
    %v6945 = vpack.c.b16 %v4313, %v4305
    %v6946 = vpack.c.b16 %v4314, %v4306
    %v6947 = vpack.c.b16 %v4315, %v4307
    %v6948 = vpack.c.b16 %v4316, %v4308
    %v6949 = vpack.c.b16 %v4325, %v4317
    %v6950 = vpack.c.b16 %v4326, %v4318
    %v6951 = vpack.c.b16 %v4327, %v4319
    %v6952 = vpack.c.b16 %v4328, %v4320
    %v6953 = vpack.c.b16 %v4329, %v4321
    %v6954 = vpack.c.b16 %v4330, %v4322
    %v6955 = vpack.c.b16 %v4331, %v4323
    %v6956 = vpack.c.b16 %v4332, %v4324
    %v6957 = vpack.c.b16 %v4341, %v4333
    %v6958 = vpack.c.b16 %v4342, %v4334
    %v6959 = vpack.c.b16 %v4343, %v4335
    %v6960 = vpack.c.b16 %v4344, %v4336
    %v6961 = vpack.c.b16 %v4345, %v4337
    %v6962 = vpack.c.b16 %v4346, %v4338
    %v6963 = vpack.c.b16 %v4347, %v4339
    %v6964 = vpack.c.b16 %v4348, %v4340
    %v6965 = vpack.c.b16 %v4357, %v4349
    %v6966 = vpack.c.b16 %v4358, %v4350
    %v6967 = vpack.c.b16 %v4359, %v4351
    %v6968 = vpack.c.b16 %v4360, %v4352
    %v6969 = vpack.c.b16 %v4361, %v4353
    %v6970 = vpack.c.b16 %v4362, %v4354
    %v6971 = vpack.c.b16 %v4363, %v4355
    %v6972 = vpack.c.b16 %v4364, %v4356
    %v6973 = vpack.c.b16 %v4373, %v4365
    %v6974 = vpack.c.b16 %v4374, %v4366
    %v6975 = vpack.c.b16 %v4375, %v4367
    %v6976 = vpack.c.b16 %v4376, %v4368
    %v6977 = vpack.c.b16 %v4377, %v4369
    %v6978 = vpack.c.b16 %v4378, %v4370
    %v6979 = vpack.c.b16 %v4379, %v4371
    %v6980 = vpack.c.b16 %v4380, %v4372
    %v6981 = vpack.c.b16 %v4389, %v4381
    %v6982 = vpack.c.b16 %v4390, %v4382
    %v6983 = vpack.c.b16 %v4391, %v4383
    %v6984 = vpack.c.b16 %v4392, %v4384
    %v6985 = vpack.c.b16 %v4393, %v4385
    %v6986 = vpack.c.b16 %v4394, %v4386
    %v6987 = vpack.c.b16 %v4395, %v4387
    %v6988 = vpack.c.b16 %v4396, %v4388
    %v6989 = vpack.c.b16 %v4405, %v4397
    %v6990 = vpack.c.b16 %v4406, %v4398
    %v6991 = vpack.c.b16 %v4407, %v4399
    %v6992 = vpack.c.b16 %v4408, %v4400
    %v6993 = vpack.c.b16 %v4409, %v4401
    %v6994 = vpack.c.b16 %v4410, %v4402
    %v6995 = vpack.c.b16 %v4411, %v4403
    %v6996 = vpack.c.b16 %v4412, %v4404
    %v6997 = vpack.c.b16 %v4421, %v4413
    %v6998 = vpack.c.b16 %v4422, %v4414
    %v6999 = vpack.c.b16 %v4423, %v4415
    %v7000 = vpack.c.b16 %v4424, %v4416
    %v7001 = vpack.c.b16 %v4425, %v4417
    %v7002 = vpack.c.b16 %v4426, %v4418
    %v7003 = vpack.c.b16 %v4427, %v4419
    %v7004 = vpack.c.b16 %v4428, %v4420
    %v7005 = vpack.c.b16 %v4437, %v4429
    %v7006 = vpack.c.b16 %v4438, %v4430
    %v7007 = vpack.c.b16 %v4439, %v4431
    %v7008 = vpack.c.b16 %v4440, %v4432
    %v7009 = vpack.c.b16 %v4441, %v4433
    %v7010 = vpack.c.b16 %v4442, %v4434
    %v7011 = vpack.c.b16 %v4443, %v4435
    %v7012 = vpack.c.b16 %v4444, %v4436
    %v7013 = vpack.c.b16 %v4453, %v4445
    %v7014 = vpack.c.b16 %v4454, %v4446
    %v7015 = vpack.c.b16 %v4455, %v4447
    %v7016 = vpack.c.b16 %v4456, %v4448
    %v7017 = vpack.c.b16 %v4457, %v4449
    %v7018 = vpack.c.b16 %v4458, %v4450
    %v7019 = vpack.c.b16 %v4459, %v4451
    %v7020 = vpack.c.b16 %v4460, %v4452
    %v7021 = vpack.c.b16 %v4469, %v4461
    %v7022 = vpack.c.b16 %v4470, %v4462
    %v7023 = vpack.c.b16 %v4471, %v4463
    %v7024 = vpack.c.b16 %v4472, %v4464
    %v7025 = vpack.c.b16 %v4473, %v4465
    %v7026 = vpack.c.b16 %v4474, %v4466
    %v7027 = vpack.c.b16 %v4475, %v4467
    %v7028 = vpack.c.b16 %v4476, %v4468
    %v7029 = vpack.c.b16 %v4485, %v4477
    %v7030 = vpack.c.b16 %v4486, %v4478
    %v7031 = vpack.c.b16 %v4487, %v4479
    %v7032 = vpack.c.b16 %v4488, %v4480
    %v7033 = vpack.c.b16 %v4489, %v4481
    %v7034 = vpack.c.b16 %v4490, %v4482
    %v7035 = vpack.c.b16 %v4491, %v4483
    %v7036 = vpack.c.b16 %v4492, %v4484
    %v7037 = vpack.c.b16 %v4501, %v4493
    %v7038 = vpack.c.b16 %v4502, %v4494
    %v7039 = vpack.c.b16 %v4503, %v4495
    %v7040 = vpack.c.b16 %v4504, %v4496
    %v7041 = vpack.c.b16 %v4505, %v4497
    %v7042 = vpack.c.b16 %v4506, %v4498
    %v7043 = vpack.c.b16 %v4507, %v4499
    %v7044 = vpack.c.b16 %v4508, %v4500
    %v7045 = vpack.c.b16 %v4517, %v4509
    %v7046 = vpack.c.b16 %v4518, %v4510
    %v7047 = vpack.c.b16 %v4519, %v4511
    %v7048 = vpack.c.b16 %v4520, %v4512
    %v7049 = vpack.c.b16 %v4521, %v4513
    %v7050 = vpack.c.b16 %v4522, %v4514
    %v7051 = vpack.c.b16 %v4523, %v4515
    %v7052 = vpack.c.b16 %v4524, %v4516
    %v7053 = vpack.c.b16 %v4533, %v4525
    %v7054 = vpack.c.b16 %v4534, %v4526
    %v7055 = vpack.c.b16 %v4535, %v4527
    %v7056 = vpack.c.b16 %v4536, %v4528
    %v7057 = vpack.c.b16 %v4537, %v4529
    %v7058 = vpack.c.b16 %v4538, %v4530
    %v7059 = vpack.c.b16 %v4539, %v4531
    %v7060 = vpack.c.b16 %v4540, %v4532
    %v7061 = vpack.c.b16 %v4549, %v4541
    %v7062 = vpack.c.b16 %v4550, %v4542
    %v7063 = vpack.c.b16 %v4551, %v4543
    %v7064 = vpack.c.b16 %v4552, %v4544
    %v7065 = vpack.c.b16 %v4553, %v4545
    %v7066 = vpack.c.b16 %v4554, %v4546
    %v7067 = vpack.c.b16 %v4555, %v4547
    %v7068 = vpack.c.b16 %v4556, %v4548
    %v7069 = vpack.c.b16 %v4565, %v4557
    %v7070 = vpack.c.b16 %v4566, %v4558
    %v7071 = vpack.c.b16 %v4567, %v4559
    %v7072 = vpack.c.b16 %v4568, %v4560
    %v7073 = vpack.c.b16 %v4569, %v4561
    %v7074 = vpack.c.b16 %v4570, %v4562
    %v7075 = vpack.c.b16 %v4571, %v4563
    %v7076 = vpack.c.b16 %v4572, %v4564
    %v7077 = vpack.c.b16 %v4581, %v4573
    %v7078 = vpack.c.b16 %v4582, %v4574
    %v7079 = vpack.c.b16 %v4583, %v4575
    %v7080 = vpack.c.b16 %v4584, %v4576
    %v7081 = vpack.c.b16 %v4585, %v4577
    %v7082 = vpack.c.b16 %v4586, %v4578
    %v7083 = vpack.c.b16 %v4587, %v4579
    %v7084 = vpack.c.b16 %v4588, %v4580
    %v7085 = vpack.c.b16 %v4597, %v4589
    %v7086 = vpack.c.b16 %v4598, %v4590
    %v7087 = vpack.c.b16 %v4599, %v4591
    %v7088 = vpack.c.b16 %v4600, %v4592
    %v7089 = vpack.c.b16 %v4601, %v4593
    %v7090 = vpack.c.b16 %v4602, %v4594
    %v7091 = vpack.c.b16 %v4603, %v4595
    %v7092 = vpack.c.b16 %v4604, %v4596
    %v7093 = vpack.c.b16 %v4613, %v4605
    %v7094 = vpack.c.b16 %v4614, %v4606
    %v7095 = vpack.c.b16 %v4615, %v4607
    %v7096 = vpack.c.b16 %v4616, %v4608
    %v7097 = vpack.c.b16 %v4617, %v4609
    %v7098 = vpack.c.b16 %v4618, %v4610
    %v7099 = vpack.c.b16 %v4619, %v4611
    %v7100 = vpack.c.b16 %v4620, %v4612
    %v7101 = vpack.c.b16 %v4629, %v4621
    %v7102 = vpack.c.b16 %v4630, %v4622
    %v7103 = vpack.c.b16 %v4631, %v4623
    %v7104 = vpack.c.b16 %v4632, %v4624
    %v7105 = vpack.c.b16 %v4633, %v4625
    %v7106 = vpack.c.b16 %v4634, %v4626
    %v7107 = vpack.c.b16 %v4635, %v4627
    %v7108 = vpack.c.b16 %v4636, %v4628
    %v7109 = vpack.c.b16 %v4645, %v4637
    %v7110 = vpack.c.b16 %v4646, %v4638
    %v7111 = vpack.c.b16 %v4647, %v4639
    %v7112 = vpack.c.b16 %v4648, %v4640
    %v7113 = vpack.c.b16 %v4649, %v4641
    %v7114 = vpack.c.b16 %v4650, %v4642
    %v7115 = vpack.c.b16 %v4651, %v4643
    %v7116 = vpack.c.b16 %v4652, %v4644
    %v7117 = vpack.c.b16 %v4661, %v4653
    %v7118 = vpack.c.b16 %v4662, %v4654
    %v7119 = vpack.c.b16 %v4663, %v4655
    %v7120 = vpack.c.b16 %v4664, %v4656
    %v7121 = vpack.c.b16 %v4665, %v4657
    %v7122 = vpack.c.b16 %v4666, %v4658
    %v7123 = vpack.c.b16 %v4667, %v4659
    %v7124 = vpack.c.b16 %v4668, %v4660
    %v7125 = vpack.c.b16 %v4677, %v4669
    %v7126 = vpack.c.b16 %v4678, %v4670
    %v7127 = vpack.c.b16 %v4679, %v4671
    %v7128 = vpack.c.b16 %v4680, %v4672
    %v7129 = vpack.c.b16 %v4681, %v4673
    %v7130 = vpack.c.b16 %v4682, %v4674
    %v7131 = vpack.c.b16 %v4683, %v4675
    %v7132 = vpack.c.b16 %v4684, %v4676
    %v7133 = vpack.c.b16 %v4693, %v4685
    %v7134 = vpack.c.b16 %v4694, %v4686
    %v7135 = vpack.c.b16 %v4695, %v4687
    %v7136 = vpack.c.b16 %v4696, %v4688
    %v7137 = vpack.c.b16 %v4697, %v4689
    %v7138 = vpack.c.b16 %v4698, %v4690
    %v7139 = vpack.c.b16 %v4699, %v4691
    %v7140 = vpack.c.b16 %v4700, %v4692
    %v7141 = vpack.c.b16 %v4709, %v4701
    %v7142 = vpack.c.b16 %v4710, %v4702
    %v7143 = vpack.c.b16 %v4711, %v4703
    %v7144 = vpack.c.b16 %v4712, %v4704
    %v7145 = vpack.c.b16 %v4713, %v4705
    %v7146 = vpack.c.b16 %v4714, %v4706
    %v7147 = vpack.c.b16 %v4715, %v4707
    %v7148 = vpack.c.b16 %v4716, %v4708
    %v7149 = vpack.c.b16 %v4725, %v4717
    %v7150 = vpack.c.b16 %v4726, %v4718
    %v7151 = vpack.c.b16 %v4727, %v4719
    %v7152 = vpack.c.b16 %v4728, %v4720
    %v7153 = vpack.c.b16 %v4729, %v4721
    %v7154 = vpack.c.b16 %v4730, %v4722
    %v7155 = vpack.c.b16 %v4731, %v4723
    %v7156 = vpack.c.b16 %v4732, %v4724
    %v7157 = vpack.c.b16 %v4741, %v4733
    %v7158 = vpack.c.b16 %v4742, %v4734
    %v7159 = vpack.c.b16 %v4743, %v4735
    %v7160 = vpack.c.b16 %v4744, %v4736
    %v7161 = vpack.c.b16 %v4745, %v4737
    %v7162 = vpack.c.b16 %v4746, %v4738
    %v7163 = vpack.c.b16 %v4747, %v4739
    %v7164 = vpack.c.b16 %v4748, %v4740
    %v7165 = vpack.c.b16 %v4757, %v4749
    %v7166 = vpack.c.b16 %v4758, %v4750
    %v7167 = vpack.c.b16 %v4759, %v4751
    %v7168 = vpack.c.b16 %v4760, %v4752
    %v7169 = vpack.c.b16 %v4761, %v4753
    %v7170 = vpack.c.b16 %v4762, %v4754
    %v7171 = vpack.c.b16 %v4763, %v4755
    %v7172 = vpack.c.b16 %v4764, %v4756
    %v7173 = vpack.c.b16 %v4773, %v4765
    %v7174 = vpack.c.b16 %v4774, %v4766
    %v7175 = vpack.c.b16 %v4775, %v4767
    %v7176 = vpack.c.b16 %v4776, %v4768
    %v7177 = vpack.c.b16 %v4777, %v4769
    %v7178 = vpack.c.b16 %v4778, %v4770
    %v7179 = vpack.c.b16 %v4779, %v4771
    %v7180 = vpack.c.b16 %v4780, %v4772
    %v7181 = vpack.c.b16 %v4789, %v4781
    %v7182 = vpack.c.b16 %v4790, %v4782
    %v7183 = vpack.c.b16 %v4791, %v4783
    %v7184 = vpack.c.b16 %v4792, %v4784
    %v7185 = vpack.c.b16 %v4793, %v4785
    %v7186 = vpack.c.b16 %v4794, %v4786
    %v7187 = vpack.c.b16 %v4795, %v4787
    %v7188 = vpack.c.b16 %v4796, %v4788
    %v7189 = vpack.c.b16 %v4805, %v4797
    %v7190 = vpack.c.b16 %v4806, %v4798
    %v7191 = vpack.c.b16 %v4807, %v4799
    %v7192 = vpack.c.b16 %v4808, %v4800
    %v7193 = vpack.c.b16 %v4809, %v4801
    %v7194 = vpack.c.b16 %v4810, %v4802
    %v7195 = vpack.c.b16 %v4811, %v4803
    %v7196 = vpack.c.b16 %v4812, %v4804
    %v7197 = vpack.c.b16 %v4821, %v4813
    %v7198 = vpack.c.b16 %v4822, %v4814
    %v7199 = vpack.c.b16 %v4823, %v4815
    %v7200 = vpack.c.b16 %v4824, %v4816
    %v7201 = vpack.c.b16 %v4825, %v4817
    %v7202 = vpack.c.b16 %v4826, %v4818
    %v7203 = vpack.c.b16 %v4827, %v4819
    %v7204 = vpack.c.b16 %v4828, %v4820
    %v7205 = vpack.c.b16 %v4837, %v4829
    %v7206 = vpack.c.b16 %v4838, %v4830
    %v7207 = vpack.c.b16 %v4839, %v4831
    %v7208 = vpack.c.b16 %v4840, %v4832
    %v7209 = vpack.c.b16 %v4841, %v4833
    %v7210 = vpack.c.b16 %v4842, %v4834
    %v7211 = vpack.c.b16 %v4843, %v4835
    %v7212 = vpack.c.b16 %v4844, %v4836
    %v7213 = vpack.c.b16 %v4853, %v4845
    %v7214 = vpack.c.b16 %v4854, %v4846
    %v7215 = vpack.c.b16 %v4855, %v4847
    %v7216 = vpack.c.b16 %v4856, %v4848
    %v7217 = vpack.c.b16 %v4857, %v4849
    %v7218 = vpack.c.b16 %v4858, %v4850
    %v7219 = vpack.c.b16 %v4859, %v4851
    %v7220 = vpack.c.b16 %v4860, %v4852
    %v7221 = vpack.c.b16 %v4869, %v4861
    %v7222 = vpack.c.b16 %v4870, %v4862
    %v7223 = vpack.c.b16 %v4871, %v4863
    %v7224 = vpack.c.b16 %v4872, %v4864
    %v7225 = vpack.c.b16 %v4873, %v4865
    %v7226 = vpack.c.b16 %v4874, %v4866
    %v7227 = vpack.c.b16 %v4875, %v4867
    %v7228 = vpack.c.b16 %v4876, %v4868
    %v7229 = vpack.c.b16 %v4885, %v4877
    %v7230 = vpack.c.b16 %v4886, %v4878
    %v7231 = vpack.c.b16 %v4887, %v4879
    %v7232 = vpack.c.b16 %v4888, %v4880
    %v7233 = vpack.c.b16 %v4889, %v4881
    %v7234 = vpack.c.b16 %v4890, %v4882
    %v7235 = vpack.c.b16 %v4891, %v4883
    %v7236 = vpack.c.b16 %v4892, %v4884
    %v7237 = vpack.c.b16 %v4901, %v4893
    %v7238 = vpack.c.b16 %v4902, %v4894
    %v7239 = vpack.c.b16 %v4903, %v4895
    %v7240 = vpack.c.b16 %v4904, %v4896
    %v7241 = vpack.c.b16 %v4905, %v4897
    %v7242 = vpack.c.b16 %v4906, %v4898
    %v7243 = vpack.c.b16 %v4907, %v4899
    %v7244 = vpack.c.b16 %v4908, %v4900
    %v7245 = vpack.c.b16 %v4917, %v4909
    %v7246 = vpack.c.b16 %v4918, %v4910
    %v7247 = vpack.c.b16 %v4919, %v4911
    %v7248 = vpack.c.b16 %v4920, %v4912
    %v7249 = vpack.c.b16 %v4921, %v4913
    %v7250 = vpack.c.b16 %v4922, %v4914
    %v7251 = vpack.c.b16 %v4923, %v4915
    %v7252 = vpack.c.b16 %v4924, %v4916
    %v7253 = vpack.c.b16 %v4933, %v4925
    %v7254 = vpack.c.b16 %v4934, %v4926
    %v7255 = vpack.c.b16 %v4935, %v4927
    %v7256 = vpack.c.b16 %v4936, %v4928
    %v7257 = vpack.c.b16 %v4937, %v4929
    %v7258 = vpack.c.b16 %v4938, %v4930
    %v7259 = vpack.c.b16 %v4939, %v4931
    %v7260 = vpack.c.b16 %v4940, %v4932
    %v7261 = vpack.c.b16 %v4949, %v4941
    %v7262 = vpack.c.b16 %v4950, %v4942
    %v7263 = vpack.c.b16 %v4951, %v4943
    %v7264 = vpack.c.b16 %v4952, %v4944
    %v7265 = vpack.c.b16 %v4953, %v4945
    %v7266 = vpack.c.b16 %v4954, %v4946
    %v7267 = vpack.c.b16 %v4955, %v4947
    %v7268 = vpack.c.b16 %v4956, %v4948
    %v7269 = vpack.c.b16 %v4965, %v4957
    %v7270 = vpack.c.b16 %v4966, %v4958
    %v7271 = vpack.c.b16 %v4967, %v4959
    %v7272 = vpack.c.b16 %v4968, %v4960
    %v7273 = vpack.c.b16 %v4969, %v4961
    %v7274 = vpack.c.b16 %v4970, %v4962
    %v7275 = vpack.c.b16 %v4971, %v4963
    %v7276 = vpack.c.b16 %v4972, %v4964
    %v7277 = vpack.c.b16 %v4981, %v4973
    %v7278 = vpack.c.b16 %v4982, %v4974
    %v7279 = vpack.c.b16 %v4983, %v4975
    %v7280 = vpack.c.b16 %v4984, %v4976
    %v7281 = vpack.c.b16 %v4985, %v4977
    %v7282 = vpack.c.b16 %v4986, %v4978
    %v7283 = vpack.c.b16 %v4987, %v4979
    %v7284 = vpack.c.b16 %v4988, %v4980
    %v7285 = vpack.c.b16 %v4997, %v4989
    %v7286 = vpack.c.b16 %v4998, %v4990
    %v7287 = vpack.c.b16 %v4999, %v4991
    %v7288 = vpack.c.b16 %v5000, %v4992
    %v7289 = vpack.c.b16 %v5001, %v4993
    %v7290 = vpack.c.b16 %v5002, %v4994
    %v7291 = vpack.c.b16 %v5003, %v4995
    %v7292 = vpack.c.b16 %v5004, %v4996
    %v7293 = vpack.c.b16 %v5013, %v5005
    %v7294 = vpack.c.b16 %v5014, %v5006
    %v7295 = vpack.c.b16 %v5015, %v5007
    %v7296 = vpack.c.b16 %v5016, %v5008
    %v7297 = vpack.c.b16 %v5017, %v5009
    %v7298 = vpack.c.b16 %v5018, %v5010
    %v7299 = vpack.c.b16 %v5019, %v5011
    %v7300 = vpack.c.b16 %v5020, %v5012
    %v7301 = vpack.c.b16 %v5029, %v5021
    %v7302 = vpack.c.b16 %v5030, %v5022
    %v7303 = vpack.c.b16 %v5031, %v5023
    %v7304 = vpack.c.b16 %v5032, %v5024
    %v7305 = vpack.c.b16 %v5033, %v5025
    %v7306 = vpack.c.b16 %v5034, %v5026
    %v7307 = vpack.c.b16 %v5035, %v5027
    %v7308 = vpack.c.b16 %v5036, %v5028
    %v7309 = vpack.c.b16 %v5045, %v5037
    %v7310 = vpack.c.b16 %v5046, %v5038
    %v7311 = vpack.c.b16 %v5047, %v5039
    %v7312 = vpack.c.b16 %v5048, %v5040
    %v7313 = vpack.c.b16 %v5049, %v5041
    %v7314 = vpack.c.b16 %v5050, %v5042
    %v7315 = vpack.c.b16 %v5051, %v5043
    %v7316 = vpack.c.b16 %v5052, %v5044
    %v7317 = vpack.c.b16 %v5061, %v5053
    %v7318 = vpack.c.b16 %v5062, %v5054
    %v7319 = vpack.c.b16 %v5063, %v5055
    %v7320 = vpack.c.b16 %v5064, %v5056
    %v7321 = vpack.c.b16 %v5065, %v5057
    %v7322 = vpack.c.b16 %v5066, %v5058
    %v7323 = vpack.c.b16 %v5067, %v5059
    %v7324 = vpack.c.b16 %v5068, %v5060
    %v7325 = vpack.c.b16 %v5077, %v5069
    %v7326 = vpack.c.b16 %v5078, %v5070
    %v7327 = vpack.c.b16 %v5079, %v5071
    %v7328 = vpack.c.b16 %v5080, %v5072
    %v7329 = vpack.c.b16 %v5081, %v5073
    %v7330 = vpack.c.b16 %v5082, %v5074
    %v7331 = vpack.c.b16 %v5083, %v5075
    %v7332 = vpack.c.b16 %v5084, %v5076
    %v7333 = vpack.c.b16 %v5093, %v5085
    %v7334 = vpack.c.b16 %v5094, %v5086
    %v7335 = vpack.c.b16 %v5095, %v5087
    %v7336 = vpack.c.b16 %v5096, %v5088
    %v7337 = vpack.c.b16 %v5097, %v5089
    %v7338 = vpack.c.b16 %v5098, %v5090
    %v7339 = vpack.c.b16 %v5099, %v5091
    %v7340 = vpack.c.b16 %v5100, %v5092
    %v7341 = vpack.c.b16 %v5109, %v5101
    %v7342 = vpack.c.b16 %v5110, %v5102
    %v7343 = vpack.c.b16 %v5111, %v5103
    %v7344 = vpack.c.b16 %v5112, %v5104
    %v7345 = vpack.c.b16 %v5113, %v5105
    %v7346 = vpack.c.b16 %v5114, %v5106
    %v7347 = vpack.c.b16 %v5115, %v5107
    %v7348 = vpack.c.b16 %v5116, %v5108
    %v7349 = vpack.c.b16 %v5125, %v5117
    %v7350 = vpack.c.b16 %v5126, %v5118
    %v7351 = vpack.c.b16 %v5127, %v5119
    %v7352 = vpack.c.b16 %v5128, %v5120
    %v7353 = vpack.c.b16 %v5129, %v5121
    %v7354 = vpack.c.b16 %v5130, %v5122
    %v7355 = vpack.c.b16 %v5131, %v5123
    %v7356 = vpack.c.b16 %v5132, %v5124
    %v7357 = vpack.c.b16 %v5141, %v5133
    %v7358 = vpack.c.b16 %v5142, %v5134
    %v7359 = vpack.c.b16 %v5143, %v5135
    %v7360 = vpack.c.b16 %v5144, %v5136
    %v7361 = vpack.c.b16 %v5145, %v5137
    %v7362 = vpack.c.b16 %v5146, %v5138
    %v7363 = vpack.c.b16 %v5147, %v5139
    %v7364 = vpack.c.b16 %v5148, %v5140
    %v7365 = vpack.c.b16 %v5157, %v5149
    %v7366 = vpack.c.b16 %v5158, %v5150
    %v7367 = vpack.c.b16 %v5159, %v5151
    %v7368 = vpack.c.b16 %v5160, %v5152
    %v7369 = vpack.c.b16 %v5161, %v5153
    %v7370 = vpack.c.b16 %v5162, %v5154
    %v7371 = vpack.c.b16 %v5163, %v5155
    %v7372 = vpack.c.b16 %v5164, %v5156
    %v7373 = vpack.c.b16 %v5173, %v5165
    %v7374 = vpack.c.b16 %v5174, %v5166
    %v7375 = vpack.c.b16 %v5175, %v5167
    %v7376 = vpack.c.b16 %v5176, %v5168
    %v7377 = vpack.c.b16 %v5177, %v5169
    %v7378 = vpack.c.b16 %v5178, %v5170
    %v7379 = vpack.c.b16 %v5179, %v5171
    %v7380 = vpack.c.b16 %v5180, %v5172
    %v7381 = vpack.c.b16 %v5189, %v5181
    %v7382 = vpack.c.b16 %v5190, %v5182
    %v7383 = vpack.c.b16 %v5191, %v5183
    %v7384 = vpack.c.b16 %v5192, %v5184
    %v7385 = vpack.c.b16 %v5193, %v5185
    %v7386 = vpack.c.b16 %v5194, %v5186
    %v7387 = vpack.c.b16 %v5195, %v5187
    %v7388 = vpack.c.b16 %v5196, %v5188
    %v7389 = vpack.c.b16 %v5205, %v5197
    %v7390 = vpack.c.b16 %v5206, %v5198
    %v7391 = vpack.c.b16 %v5207, %v5199
    %v7392 = vpack.c.b16 %v5208, %v5200
    %v7393 = vpack.c.b16 %v5209, %v5201
    %v7394 = vpack.c.b16 %v5210, %v5202
    %v7395 = vpack.c.b16 %v5211, %v5203
    %v7396 = vpack.c.b16 %v5212, %v5204
    %v7397 = vpack.c.b16 %v5221, %v5213
    %v7398 = vpack.c.b16 %v5222, %v5214
    %v7399 = vpack.c.b16 %v5223, %v5215
    %v7400 = vpack.c.b16 %v5224, %v5216
    %v7401 = vpack.c.b16 %v5225, %v5217
    %v7402 = vpack.c.b16 %v5226, %v5218
    %v7403 = vpack.c.b16 %v5227, %v5219
    %v7404 = vpack.c.b16 %v5228, %v5220
    %v7405 = vpack.c.b16 %v5237, %v5229
    %v7406 = vpack.c.b16 %v5238, %v5230
    %v7407 = vpack.c.b16 %v5239, %v5231
    %v7408 = vpack.c.b16 %v5240, %v5232
    %v7409 = vpack.c.b16 %v5241, %v5233
    %v7410 = vpack.c.b16 %v5242, %v5234
    %v7411 = vpack.c.b16 %v5243, %v5235
    %v7412 = vpack.c.b16 %v5244, %v5236
    %v7413 = vpack.c.b16 %v5253, %v5245
    %v7414 = vpack.c.b16 %v5254, %v5246
    %v7415 = vpack.c.b16 %v5255, %v5247
    %v7416 = vpack.c.b16 %v5256, %v5248
    %v7417 = vpack.c.b16 %v5257, %v5249
    %v7418 = vpack.c.b16 %v5258, %v5250
    %v7419 = vpack.c.b16 %v5259, %v5251
    %v7420 = vpack.c.b16 %v5260, %v5252
    %v7421 = vpack.c.b16 %v5269, %v5261
    %v7422 = vpack.c.b16 %v5270, %v5262
    %v7423 = vpack.c.b16 %v5271, %v5263
    %v7424 = vpack.c.b16 %v5272, %v5264
    %v7425 = vpack.c.b16 %v5273, %v5265
    %v7426 = vpack.c.b16 %v5274, %v5266
    %v7427 = vpack.c.b16 %v5275, %v5267
    %v7428 = vpack.c.b16 %v5276, %v5268
    %v7429 = vpack.c.b16 %v5285, %v5277
    %v7430 = vpack.c.b16 %v5286, %v5278
    %v7431 = vpack.c.b16 %v5287, %v5279
    %v7432 = vpack.c.b16 %v5288, %v5280
    %v7433 = vpack.c.b16 %v5289, %v5281
    %v7434 = vpack.c.b16 %v5290, %v5282
    %v7435 = vpack.c.b16 %v5291, %v5283
    %v7436 = vpack.c.b16 %v5292, %v5284
    %v7437 = vpack.c.b16 %v5301, %v5293
    %v7438 = vpack.c.b16 %v5302, %v5294
    %v7439 = vpack.c.b16 %v5303, %v5295
    %v7440 = vpack.c.b16 %v5304, %v5296
    %v7441 = vpack.c.b16 %v5305, %v5297
    %v7442 = vpack.c.b16 %v5306, %v5298
    %v7443 = vpack.c.b16 %v5307, %v5299
    %v7444 = vpack.c.b16 %v5308, %v5300
    %v7445 = vpack.c.b16 %v5317, %v5309
    %v7446 = vpack.c.b16 %v5318, %v5310
    %v7447 = vpack.c.b16 %v5319, %v5311
    %v7448 = vpack.c.b16 %v5320, %v5312
    %v7449 = vpack.c.b16 %v5321, %v5313
    %v7450 = vpack.c.b16 %v5322, %v5314
    %v7451 = vpack.c.b16 %v5323, %v5315
    %v7452 = vpack.c.b16 %v5324, %v5316
    %v7453 = vpack.c.b16 %v5333, %v5325
    %v7454 = vpack.c.b16 %v5334, %v5326
    %v7455 = vpack.c.b16 %v5335, %v5327
    %v7456 = vpack.c.b16 %v5336, %v5328
    %v7457 = vpack.c.b16 %v5337, %v5329
    %v7458 = vpack.c.b16 %v5338, %v5330
    %v7459 = vpack.c.b16 %v5339, %v5331
    %v7460 = vpack.c.b16 %v5340, %v5332
    %v7461 = vpack.c.b16 %v5349, %v5341
    %v7462 = vpack.c.b16 %v5350, %v5342
    %v7463 = vpack.c.b16 %v5351, %v5343
    %v7464 = vpack.c.b16 %v5352, %v5344
    %v7465 = vpack.c.b16 %v5353, %v5345
    %v7466 = vpack.c.b16 %v5354, %v5346
    %v7467 = vpack.c.b16 %v5355, %v5347
    %v7468 = vpack.c.b16 %v5356, %v5348
    %v7469 = vpack.c.b16 %v5365, %v5357
    %v7470 = vpack.c.b16 %v5366, %v5358
    %v7471 = vpack.c.b16 %v5367, %v5359
    %v7472 = vpack.c.b16 %v5368, %v5360
    %v7473 = vpack.c.b16 %v5369, %v5361
    %v7474 = vpack.c.b16 %v5370, %v5362
    %v7475 = vpack.c.b16 %v5371, %v5363
    %v7476 = vpack.c.b16 %v5372, %v5364
    %v7477 = vpack.c.b16 %v5381, %v5373
    %v7478 = vpack.c.b16 %v5382, %v5374
    %v7479 = vpack.c.b16 %v5383, %v5375
    %v7480 = vpack.c.b16 %v5384, %v5376
    %v7481 = vpack.c.b16 %v5385, %v5377
    %v7482 = vpack.c.b16 %v5386, %v5378
    %v7483 = vpack.c.b16 %v5387, %v5379
    %v7484 = vpack.c.b16 %v5388, %v5380
    %v7485 = vpack.c.b16 %v5397, %v5389
    %v7486 = vpack.c.b16 %v5398, %v5390
    %v7487 = vpack.c.b16 %v5399, %v5391
    %v7488 = vpack.c.b16 %v5400, %v5392
    %v7489 = vpack.c.b16 %v5401, %v5393
    %v7490 = vpack.c.b16 %v5402, %v5394
    %v7491 = vpack.c.b16 %v5403, %v5395
    %v7492 = vpack.c.b16 %v5404, %v5396
    %v7493 = vpack.c.b16 %v5413, %v5405
    %v7494 = vpack.c.b16 %v5414, %v5406
    %v7495 = vpack.c.b16 %v5415, %v5407
    %v7496 = vpack.c.b16 %v5416, %v5408
    %v7497 = vpack.c.b16 %v5417, %v5409
    %v7498 = vpack.c.b16 %v5418, %v5410
    %v7499 = vpack.c.b16 %v5419, %v5411
    %v7500 = vpack.c.b16 %v5420, %v5412
    %v7501 = vpack.c.b16 %v5429, %v5421
    %v7502 = vpack.c.b16 %v5430, %v5422
    %v7503 = vpack.c.b16 %v5431, %v5423
    %v7504 = vpack.c.b16 %v5432, %v5424
    %v7505 = vpack.c.b16 %v5433, %v5425
    %v7506 = vpack.c.b16 %v5434, %v5426
    %v7507 = vpack.c.b16 %v5435, %v5427
    %v7508 = vpack.c.b16 %v5436, %v5428
    %v7509 = vpack.c.b16 %v5445, %v5437
    %v7510 = vpack.c.b16 %v5446, %v5438
    %v7511 = vpack.c.b16 %v5447, %v5439
    %v7512 = vpack.c.b16 %v5448, %v5440
    %v7513 = vpack.c.b16 %v5449, %v5441
    %v7514 = vpack.c.b16 %v5450, %v5442
    %v7515 = vpack.c.b16 %v5451, %v5443
    %v7516 = vpack.c.b16 %v5452, %v5444
    %v7517 = vpack.c.b16 %v5461, %v5453
    %v7518 = vpack.c.b16 %v5462, %v5454
    %v7519 = vpack.c.b16 %v5463, %v5455
    %v7520 = vpack.c.b16 %v5464, %v5456
    %v7521 = vpack.c.b16 %v5465, %v5457
    %v7522 = vpack.c.b16 %v5466, %v5458
    %v7523 = vpack.c.b16 %v5467, %v5459
    %v7524 = vpack.c.b16 %v5468, %v5460
    %v7525 = vpack.c.b16 %v5477, %v5469
    %v7526 = vpack.c.b16 %v5478, %v5470
    %v7527 = vpack.c.b16 %v5479, %v5471
    %v7528 = vpack.c.b16 %v5480, %v5472
    %v7529 = vpack.c.b16 %v5481, %v5473
    %v7530 = vpack.c.b16 %v5482, %v5474
    %v7531 = vpack.c.b16 %v5483, %v5475
    %v7532 = vpack.c.b16 %v5484, %v5476
    %v7533 = vpack.c.b16 %v5493, %v5485
    %v7534 = vpack.c.b16 %v5494, %v5486
    %v7535 = vpack.c.b16 %v5495, %v5487
    %v7536 = vpack.c.b16 %v5496, %v5488
    %v7537 = vpack.c.b16 %v5497, %v5489
    %v7538 = vpack.c.b16 %v5498, %v5490
    %v7539 = vpack.c.b16 %v5499, %v5491
    %v7540 = vpack.c.b16 %v5500, %v5492
    %v7541 = vpack.c.b16 %v5509, %v5501
    %v7542 = vpack.c.b16 %v5510, %v5502
    %v7543 = vpack.c.b16 %v5511, %v5503
    %v7544 = vpack.c.b16 %v5512, %v5504
    %v7545 = vpack.c.b16 %v5513, %v5505
    %v7546 = vpack.c.b16 %v5514, %v5506
    %v7547 = vpack.c.b16 %v5515, %v5507
    %v7548 = vpack.c.b16 %v5516, %v5508
    %v7549 = vpack.c.b16 %v5525, %v5517
    %v7550 = vpack.c.b16 %v5526, %v5518
    %v7551 = vpack.c.b16 %v5527, %v5519
    %v7552 = vpack.c.b16 %v5528, %v5520
    %v7553 = vpack.c.b16 %v5529, %v5521
    %v7554 = vpack.c.b16 %v5530, %v5522
    %v7555 = vpack.c.b16 %v5531, %v5523
    %v7556 = vpack.c.b16 %v5532, %v5524
    %v7557 = vpack.c.b16 %v5541, %v5533
    %v7558 = vpack.c.b16 %v5542, %v5534
    %v7559 = vpack.c.b16 %v5543, %v5535
    %v7560 = vpack.c.b16 %v5544, %v5536
    %v7561 = vpack.c.b16 %v5545, %v5537
    %v7562 = vpack.c.b16 %v5546, %v5538
    %v7563 = vpack.c.b16 %v5547, %v5539
    %v7564 = vpack.c.b16 %v5548, %v5540
    %v7565 = vpack.c.b16 %v5557, %v5549
    %v7566 = vpack.c.b16 %v5558, %v5550
    %v7567 = vpack.c.b16 %v5559, %v5551
    %v7568 = vpack.c.b16 %v5560, %v5552
    %v7569 = vpack.c.b16 %v5561, %v5553
    %v7570 = vpack.c.b16 %v5562, %v5554
    %v7571 = vpack.c.b16 %v5563, %v5555
    %v7572 = vpack.c.b16 %v5564, %v5556
    %v7573 = vpack.c.b16 %v5573, %v5565
    %v7574 = vpack.c.b16 %v5574, %v5566
    %v7575 = vpack.c.b16 %v5575, %v5567
    %v7576 = vpack.c.b16 %v5576, %v5568
    %v7577 = vpack.c.b16 %v5577, %v5569
    %v7578 = vpack.c.b16 %v5578, %v5570
    %v7579 = vpack.c.b16 %v5579, %v5571
    %v7580 = vpack.c.b16 %v5580, %v5572
    %v7581 = vpack.c.b16 %v5589, %v5581
    %v7582 = vpack.c.b16 %v5590, %v5582
    %v7583 = vpack.c.b16 %v5591, %v5583
    %v7584 = vpack.c.b16 %v5592, %v5584
    %v7585 = vpack.c.b16 %v5593, %v5585
    %v7586 = vpack.c.b16 %v5594, %v5586
    %v7587 = vpack.c.b16 %v5595, %v5587
    %v7588 = vpack.c.b16 %v5596, %v5588
    %v7589 = vpack.c.b16 %v5605, %v5597
    %v7590 = vpack.c.b16 %v5606, %v5598
    %v7591 = vpack.c.b16 %v5607, %v5599
    %v7592 = vpack.c.b16 %v5608, %v5600
    %v7593 = vpack.c.b16 %v5609, %v5601
    %v7594 = vpack.c.b16 %v5610, %v5602
    %v7595 = vpack.c.b16 %v5611, %v5603
    %v7596 = vpack.c.b16 %v5612, %v5604
    %v7597 = vpack.c.b16 %v5621, %v5613
    %v7598 = vpack.c.b16 %v5622, %v5614
    %v7599 = vpack.c.b16 %v5623, %v5615
    %v7600 = vpack.c.b16 %v5624, %v5616
    %v7601 = vpack.c.b16 %v5625, %v5617
    %v7602 = vpack.c.b16 %v5626, %v5618
    %v7603 = vpack.c.b16 %v5627, %v5619
    %v7604 = vpack.c.b16 %v5628, %v5620
    %v7605 = vpack.c.b16 %v5637, %v5629
    %v7606 = vpack.c.b16 %v5638, %v5630
    %v7607 = vpack.c.b16 %v5639, %v5631
    %v7608 = vpack.c.b16 %v5640, %v5632
    %v7609 = vpack.c.b16 %v5641, %v5633
    %v7610 = vpack.c.b16 %v5642, %v5634
    %v7611 = vpack.c.b16 %v5643, %v5635
    %v7612 = vpack.c.b16 %v5644, %v5636
    %v7613 = vpack.c.b16 %v5653, %v5645
    %v7614 = vpack.c.b16 %v5654, %v5646
    %v7615 = vpack.c.b16 %v5655, %v5647
    %v7616 = vpack.c.b16 %v5656, %v5648
    %v7617 = vpack.c.b16 %v5657, %v5649
    %v7618 = vpack.c.b16 %v5658, %v5650
    %v7619 = vpack.c.b16 %v5659, %v5651
    %v7620 = vpack.c.b16 %v5660, %v5652
    %v7621 = vpack.c.b16 %v5669, %v5661
    %v7622 = vpack.c.b16 %v5670, %v5662
    %v7623 = vpack.c.b16 %v5671, %v5663
    %v7624 = vpack.c.b16 %v5672, %v5664
    %v7625 = vpack.c.b16 %v5673, %v5665
    %v7626 = vpack.c.b16 %v5674, %v5666
    %v7627 = vpack.c.b16 %v5675, %v5667
    %v7628 = vpack.c.b16 %v5676, %v5668
    %v7629 = vpack.c.b16 %v5685, %v5677
    %v7630 = vpack.c.b16 %v5686, %v5678
    %v7631 = vpack.c.b16 %v5687, %v5679
    %v7632 = vpack.c.b16 %v5688, %v5680
    %v7633 = vpack.c.b16 %v5689, %v5681
    %v7634 = vpack.c.b16 %v5690, %v5682
    %v7635 = vpack.c.b16 %v5691, %v5683
    %v7636 = vpack.c.b16 %v5692, %v5684
    %v7637 = vpack.c.b16 %v5701, %v5693
    %v7638 = vpack.c.b16 %v5702, %v5694
    %v7639 = vpack.c.b16 %v5703, %v5695
    %v7640 = vpack.c.b16 %v5704, %v5696
    %v7641 = vpack.c.b16 %v5705, %v5697
    %v7642 = vpack.c.b16 %v5706, %v5698
    %v7643 = vpack.c.b16 %v5707, %v5699
    %v7644 = vpack.c.b16 %v5708, %v5700
    %v7645 = vpack.c.b16 %v5717, %v5709
    %v7646 = vpack.c.b16 %v5718, %v5710
    %v7647 = vpack.c.b16 %v5719, %v5711
    %v7648 = vpack.c.b16 %v5720, %v5712
    %v7649 = vpack.c.b16 %v5721, %v5713
    %v7650 = vpack.c.b16 %v5722, %v5714
    %v7651 = vpack.c.b16 %v5723, %v5715
    %v7652 = vpack.c.b16 %v5724, %v5716
    %v7653 = vpack.c.b16 %v5733, %v5725
    %v7654 = vpack.c.b16 %v5734, %v5726
    %v7655 = vpack.c.b16 %v5735, %v5727
    %v7656 = vpack.c.b16 %v5736, %v5728
    %v7657 = vpack.c.b16 %v5737, %v5729
    %v7658 = vpack.c.b16 %v5738, %v5730
    %v7659 = vpack.c.b16 %v5739, %v5731
    %v7660 = vpack.c.b16 %v5740, %v5732
    %v7661 = vpack.c.b16 %v5749, %v5741
    %v7662 = vpack.c.b16 %v5750, %v5742
    %v7663 = vpack.c.b16 %v5751, %v5743
    %v7664 = vpack.c.b16 %v5752, %v5744
    %v7665 = vpack.c.b16 %v5753, %v5745
    %v7666 = vpack.c.b16 %v5754, %v5746
    %v7667 = vpack.c.b16 %v5755, %v5747
    %v7668 = vpack.c.b16 %v5756, %v5748
    %v7669 = vpack.c.b16 %v5765, %v5757
    %v7670 = vpack.c.b16 %v5766, %v5758
    %v7671 = vpack.c.b16 %v5767, %v5759
    %v7672 = vpack.c.b16 %v5768, %v5760
    %v7673 = vpack.c.b16 %v5769, %v5761
    %v7674 = vpack.c.b16 %v5770, %v5762
    %v7675 = vpack.c.b16 %v5771, %v5763
    %v7676 = vpack.c.b16 %v5772, %v5764
    %v7677 = vpack.c.b16 %v5781, %v5773
    %v7678 = vpack.c.b16 %v5782, %v5774
    %v7679 = vpack.c.b16 %v5783, %v5775
    %v7680 = vpack.c.b16 %v5784, %v5776
    %v7681 = vpack.c.b16 %v5785, %v5777
    %v7682 = vpack.c.b16 %v5786, %v5778
    %v7683 = vpack.c.b16 %v5787, %v5779
    %v7684 = vpack.c.b16 %v5788, %v5780
    %v7685 = vpack.c.b16 %v5797, %v5789
    %v7686 = vpack.c.b16 %v5798, %v5790
    %v7687 = vpack.c.b16 %v5799, %v5791
    %v7688 = vpack.c.b16 %v5800, %v5792
    %v7689 = vpack.c.b16 %v5801, %v5793
    %v7690 = vpack.c.b16 %v5802, %v5794
    %v7691 = vpack.c.b16 %v5803, %v5795
    %v7692 = vpack.c.b16 %v5804, %v5796
    %v7693 = vpack.c.b16 %v5813, %v5805
    %v7694 = vpack.c.b16 %v5814, %v5806
    %v7695 = vpack.c.b16 %v5815, %v5807
    %v7696 = vpack.c.b16 %v5816, %v5808
    %v7697 = vpack.c.b16 %v5817, %v5809
    %v7698 = vpack.c.b16 %v5818, %v5810
    %v7699 = vpack.c.b16 %v5819, %v5811
    %v7700 = vpack.c.b16 %v5820, %v5812
    %v7701 = vpack.c.b16 %v5829, %v5821
    %v7702 = vpack.c.b16 %v5830, %v5822
    %v7703 = vpack.c.b16 %v5831, %v5823
    %v7704 = vpack.c.b16 %v5832, %v5824
    %v7705 = vpack.c.b16 %v5833, %v5825
    %v7706 = vpack.c.b16 %v5834, %v5826
    %v7707 = vpack.c.b16 %v5835, %v5827
    %v7708 = vpack.c.b16 %v5836, %v5828
    %v7709 = vpack.c.b16 %v5845, %v5837
    %v7710 = vpack.c.b16 %v5846, %v5838
    %v7711 = vpack.c.b16 %v5847, %v5839
    %v7712 = vpack.c.b16 %v5848, %v5840
    %v7713 = vpack.c.b16 %v5849, %v5841
    %v7714 = vpack.c.b16 %v5850, %v5842
    %v7715 = vpack.c.b16 %v5851, %v5843
    %v7716 = vpack.c.b16 %v5852, %v5844
    %v7717 = vpack.c.b16 %v5861, %v5853
    %v7718 = vpack.c.b16 %v5862, %v5854
    %v7719 = vpack.c.b16 %v5863, %v5855
    %v7720 = vpack.c.b16 %v5864, %v5856
    %v7721 = vpack.c.b16 %v5865, %v5857
    %v7722 = vpack.c.b16 %v5866, %v5858
    %v7723 = vpack.c.b16 %v5867, %v5859
    %v7724 = vpack.c.b16 %v5868, %v5860
    %v7725 = vpack.c.b16 %v5877, %v5869
    %v7726 = vpack.c.b16 %v5878, %v5870
    %v7727 = vpack.c.b16 %v5879, %v5871
    %v7728 = vpack.c.b16 %v5880, %v5872
    %v7729 = vpack.c.b16 %v5881, %v5873
    %v7730 = vpack.c.b16 %v5882, %v5874
    %v7731 = vpack.c.b16 %v5883, %v5875
    %v7732 = vpack.c.b16 %v5884, %v5876
    %v7733 = vpack.c.b16 %v5893, %v5885
    %v7734 = vpack.c.b16 %v5894, %v5886
    %v7735 = vpack.c.b16 %v5895, %v5887
    %v7736 = vpack.c.b16 %v5896, %v5888
    %v7737 = vpack.c.b16 %v5897, %v5889
    %v7738 = vpack.c.b16 %v5898, %v5890
    %v7739 = vpack.c.b16 %v5899, %v5891
    %v7740 = vpack.c.b16 %v5900, %v5892
    %v7741 = vpack.c.b16 %v5909, %v5901
    %v7742 = vpack.c.b16 %v5910, %v5902
    %v7743 = vpack.c.b16 %v5911, %v5903
    %v7744 = vpack.c.b16 %v5912, %v5904
    %v7745 = vpack.c.b16 %v5913, %v5905
    %v7746 = vpack.c.b16 %v5914, %v5906
    %v7747 = vpack.c.b16 %v5915, %v5907
    %v7748 = vpack.c.b16 %v5916, %v5908
    %v7749 = vpack.c.b16 %v5925, %v5917
    %v7750 = vpack.c.b16 %v5926, %v5918
    %v7751 = vpack.c.b16 %v5927, %v5919
    %v7752 = vpack.c.b16 %v5928, %v5920
    %v7753 = vpack.c.b16 %v5929, %v5921
    %v7754 = vpack.c.b16 %v5930, %v5922
    %v7755 = vpack.c.b16 %v5931, %v5923
    %v7756 = vpack.c.b16 %v5932, %v5924
    %v7757 = vpack.c.b16 %v5941, %v5933
    %v7758 = vpack.c.b16 %v5942, %v5934
    %v7759 = vpack.c.b16 %v5943, %v5935
    %v7760 = vpack.c.b16 %v5944, %v5936
    %v7761 = vpack.c.b16 %v5945, %v5937
    %v7762 = vpack.c.b16 %v5946, %v5938
    %v7763 = vpack.c.b16 %v5947, %v5939
    %v7764 = vpack.c.b16 %v5948, %v5940
    %v7765 = vpack.c.b16 %v5957, %v5949
    %v7766 = vpack.c.b16 %v5958, %v5950
    %v7767 = vpack.c.b16 %v5959, %v5951
    %v7768 = vpack.c.b16 %v5960, %v5952
    %v7769 = vpack.c.b16 %v5961, %v5953
    %v7770 = vpack.c.b16 %v5962, %v5954
    %v7771 = vpack.c.b16 %v5963, %v5955
    %v7772 = vpack.c.b16 %v5964, %v5956
    %v7773 = vpack.c.b16 %v5973, %v5965
    %v7774 = vpack.c.b16 %v5974, %v5966
    %v7775 = vpack.c.b16 %v5975, %v5967
    %v7776 = vpack.c.b16 %v5976, %v5968
    %v7777 = vpack.c.b16 %v5977, %v5969
    %v7778 = vpack.c.b16 %v5978, %v5970
    %v7779 = vpack.c.b16 %v5979, %v5971
    %v7780 = vpack.c.b16 %v5980, %v5972
    %v7781 = vpack.c.b16 %v5989, %v5981
    %v7782 = vpack.c.b16 %v5990, %v5982
    %v7783 = vpack.c.b16 %v5991, %v5983
    %v7784 = vpack.c.b16 %v5992, %v5984
    %v7785 = vpack.c.b16 %v5993, %v5985
    %v7786 = vpack.c.b16 %v5994, %v5986
    %v7787 = vpack.c.b16 %v5995, %v5987
    %v7788 = vpack.c.b16 %v5996, %v5988
    %v7789 = vpack.c.b16 %v6005, %v5997
    %v7790 = vpack.c.b16 %v6006, %v5998
    %v7791 = vpack.c.b16 %v6007, %v5999
    %v7792 = vpack.c.b16 %v6008, %v6000
    %v7793 = vpack.c.b16 %v6009, %v6001
    %v7794 = vpack.c.b16 %v6010, %v6002
    %v7795 = vpack.c.b16 %v6011, %v6003
    %v7796 = vpack.c.b16 %v6012, %v6004
    %v7797 = vpack.c.b16 %v6021, %v6013
    %v7798 = vpack.c.b16 %v6022, %v6014
    %v7799 = vpack.c.b16 %v6023, %v6015
    %v7800 = vpack.c.b16 %v6024, %v6016
    %v7801 = vpack.c.b16 %v6025, %v6017
    %v7802 = vpack.c.b16 %v6026, %v6018
    %v7803 = vpack.c.b16 %v6027, %v6019
    %v7804 = vpack.c.b16 %v6028, %v6020
    %v7805 = vpack.c.b16 %v6037, %v6029
    %v7806 = vpack.c.b16 %v6038, %v6030
    %v7807 = vpack.c.b16 %v6039, %v6031
    %v7808 = vpack.c.b16 %v6040, %v6032
    %v7809 = vpack.c.b16 %v6041, %v6033
    %v7810 = vpack.c.b16 %v6042, %v6034
    %v7811 = vpack.c.b16 %v6043, %v6035
    %v7812 = vpack.c.b16 %v6044, %v6036
    %v7813 = vpack.c.b16 %v6053, %v6045
    %v7814 = vpack.c.b16 %v6054, %v6046
    %v7815 = vpack.c.b16 %v6055, %v6047
    %v7816 = vpack.c.b16 %v6056, %v6048
    %v7817 = vpack.c.b16 %v6057, %v6049
    %v7818 = vpack.c.b16 %v6058, %v6050
    %v7819 = vpack.c.b16 %v6059, %v6051
    %v7820 = vpack.c.b16 %v6060, %v6052
    %v7821 = vpack.c.b16 %v6069, %v6061
    %v7822 = vpack.c.b16 %v6070, %v6062
    %v7823 = vpack.c.b16 %v6071, %v6063
    %v7824 = vpack.c.b16 %v6072, %v6064
    %v7825 = vpack.c.b16 %v6073, %v6065
    %v7826 = vpack.c.b16 %v6074, %v6066
    %v7827 = vpack.c.b16 %v6075, %v6067
    %v7828 = vpack.c.b16 %v6076, %v6068
    %v7829 = vpack.c.b16 %v6085, %v6077
    %v7830 = vpack.c.b16 %v6086, %v6078
    %v7831 = vpack.c.b16 %v6087, %v6079
    %v7832 = vpack.c.b16 %v6088, %v6080
    %v7833 = vpack.c.b16 %v6089, %v6081
    %v7834 = vpack.c.b16 %v6090, %v6082
    %v7835 = vpack.c.b16 %v6091, %v6083
    %v7836 = vpack.c.b16 %v6092, %v6084
    %v7837 = vpack.c.b16 %v6101, %v6093
    %v7838 = vpack.c.b16 %v6102, %v6094
    %v7839 = vpack.c.b16 %v6103, %v6095
    %v7840 = vpack.c.b16 %v6104, %v6096
    %v7841 = vpack.c.b16 %v6105, %v6097
    %v7842 = vpack.c.b16 %v6106, %v6098
    %v7843 = vpack.c.b16 %v6107, %v6099
    %v7844 = vpack.c.b16 %v6108, %v6100
    %v7845 = vpack.c.b16 %v6117, %v6109
    %v7846 = vpack.c.b16 %v6118, %v6110
    %v7847 = vpack.c.b16 %v6119, %v6111
    %v7848 = vpack.c.b16 %v6120, %v6112
    %v7849 = vpack.c.b16 %v6121, %v6113
    %v7850 = vpack.c.b16 %v6122, %v6114
    %v7851 = vpack.c.b16 %v6123, %v6115
    %v7852 = vpack.c.b16 %v6124, %v6116
    %v7853 = vpack.c.b16 %v6133, %v6125
    %v7854 = vpack.c.b16 %v6134, %v6126
    %v7855 = vpack.c.b16 %v6135, %v6127
    %v7856 = vpack.c.b16 %v6136, %v6128
    %v7857 = vpack.c.b16 %v6137, %v6129
    %v7858 = vpack.c.b16 %v6138, %v6130
    %v7859 = vpack.c.b16 %v6139, %v6131
    %v7860 = vpack.c.b16 %v6140, %v6132
    %v7861 = vpack.c.b16 %v6149, %v6141
    %v7862 = vpack.c.b16 %v6150, %v6142
    %v7863 = vpack.c.b16 %v6151, %v6143
    %v7864 = vpack.c.b16 %v6152, %v6144
    %v7865 = vpack.c.b16 %v6153, %v6145
    %v7866 = vpack.c.b16 %v6154, %v6146
    %v7867 = vpack.c.b16 %v6155, %v6147
    %v7868 = vpack.c.b16 %v6156, %v6148
    %v7869 = vpack.c.b16 %v6165, %v6157
    %v7870 = vpack.c.b16 %v6166, %v6158
    %v7871 = vpack.c.b16 %v6167, %v6159
    %v7872 = vpack.c.b16 %v6168, %v6160
    %v7873 = vpack.c.b16 %v6169, %v6161
    %v7874 = vpack.c.b16 %v6170, %v6162
    %v7875 = vpack.c.b16 %v6171, %v6163
    %v7876 = vpack.c.b16 %v6172, %v6164
    %v7877 = vpack.c.b16 %v6181, %v6173
    %v7878 = vpack.c.b16 %v6182, %v6174
    %v7879 = vpack.c.b16 %v6183, %v6175
    %v7880 = vpack.c.b16 %v6184, %v6176
    %v7881 = vpack.c.b16 %v6185, %v6177
    %v7882 = vpack.c.b16 %v6186, %v6178
    %v7883 = vpack.c.b16 %v6187, %v6179
    %v7884 = vpack.c.b16 %v6188, %v6180
    %v7885 = vpack.c.b16 %v6197, %v6189
    %v7886 = vpack.c.b16 %v6198, %v6190
    %v7887 = vpack.c.b16 %v6199, %v6191
    %v7888 = vpack.c.b16 %v6200, %v6192
    %v7889 = vpack.c.b16 %v6201, %v6193
    %v7890 = vpack.c.b16 %v6202, %v6194
    %v7891 = vpack.c.b16 %v6203, %v6195
    %v7892 = vpack.c.b16 %v6204, %v6196
    %v7893 = vpack.c.b16 %v6213, %v6205
    %v7894 = vpack.c.b16 %v6214, %v6206
    %v7895 = vpack.c.b16 %v6215, %v6207
    %v7896 = vpack.c.b16 %v6216, %v6208
    %v7897 = vpack.c.b16 %v6217, %v6209
    %v7898 = vpack.c.b16 %v6218, %v6210
    %v7899 = vpack.c.b16 %v6219, %v6211
    %v7900 = vpack.c.b16 %v6220, %v6212
    %v7901 = vpack.c.b16 %v6229, %v6221
    %v7902 = vpack.c.b16 %v6230, %v6222
    %v7903 = vpack.c.b16 %v6231, %v6223
    %v7904 = vpack.c.b16 %v6232, %v6224
    %v7905 = vpack.c.b16 %v6233, %v6225
    %v7906 = vpack.c.b16 %v6234, %v6226
    %v7907 = vpack.c.b16 %v6235, %v6227
    %v7908 = vpack.c.b16 %v6236, %v6228
    %v7909 = vpack.c.b16 %v6245, %v6237
    %v7910 = vpack.c.b16 %v6246, %v6238
    %v7911 = vpack.c.b16 %v6247, %v6239
    %v7912 = vpack.c.b16 %v6248, %v6240
    %v7913 = vpack.c.b16 %v6249, %v6241
    %v7914 = vpack.c.b16 %v6250, %v6242
    %v7915 = vpack.c.b16 %v6251, %v6243
    %v7916 = vpack.c.b16 %v6252, %v6244
    %v7917 = vpack.c.b16 %v6261, %v6253
    %v7918 = vpack.c.b16 %v6262, %v6254
    %v7919 = vpack.c.b16 %v6263, %v6255
    %v7920 = vpack.c.b16 %v6264, %v6256
    %v7921 = vpack.c.b16 %v6265, %v6257
    %v7922 = vpack.c.b16 %v6266, %v6258
    %v7923 = vpack.c.b16 %v6267, %v6259
    %v7924 = vpack.c.b16 %v6268, %v6260
    %v7925 = vpack.c.b16 %v6277, %v6269
    %v7926 = vpack.c.b16 %v6278, %v6270
    %v7927 = vpack.c.b16 %v6279, %v6271
    %v7928 = vpack.c.b16 %v6280, %v6272
    %v7929 = vpack.c.b16 %v6281, %v6273
    %v7930 = vpack.c.b16 %v6282, %v6274
    %v7931 = vpack.c.b16 %v6283, %v6275
    %v7932 = vpack.c.b16 %v6284, %v6276
    %v7933 = vpack.c.b16 %v6293, %v6285
    %v7934 = vpack.c.b16 %v6294, %v6286
    %v7935 = vpack.c.b16 %v6295, %v6287
    %v7936 = vpack.c.b16 %v6296, %v6288
    %v7937 = vpack.c.b16 %v6297, %v6289
    %v7938 = vpack.c.b16 %v6298, %v6290
    %v7939 = vpack.c.b16 %v6299, %v6291
    %v7940 = vpack.c.b16 %v6300, %v6292
    %v7941 = vpack.c.b16 %v6309, %v6301
    %v7942 = vpack.c.b16 %v6310, %v6302
    %v7943 = vpack.c.b16 %v6311, %v6303
    %v7944 = vpack.c.b16 %v6312, %v6304
    %v7945 = vpack.c.b16 %v6313, %v6305
    %v7946 = vpack.c.b16 %v6314, %v6306
    %v7947 = vpack.c.b16 %v6315, %v6307
    %v7948 = vpack.c.b16 %v6316, %v6308
    %v7949 = vpack.c.b16 %v6325, %v6317
    %v7950 = vpack.c.b16 %v6326, %v6318
    %v7951 = vpack.c.b16 %v6327, %v6319
    %v7952 = vpack.c.b16 %v6328, %v6320
    %v7953 = vpack.c.b16 %v6329, %v6321
    %v7954 = vpack.c.b16 %v6330, %v6322
    %v7955 = vpack.c.b16 %v6331, %v6323
    %v7956 = vpack.c.b16 %v6332, %v6324
    %v7957 = vpack.c.b16 %v6341, %v6333
    %v7958 = vpack.c.b16 %v6342, %v6334
    %v7959 = vpack.c.b16 %v6343, %v6335
    %v7960 = vpack.c.b16 %v6344, %v6336
    %v7961 = vpack.c.b16 %v6345, %v6337
    %v7962 = vpack.c.b16 %v6346, %v6338
    %v7963 = vpack.c.b16 %v6347, %v6339
    %v7964 = vpack.c.b16 %v6348, %v6340
    %v7965 = vpack.c.b16 %v6357, %v6349
    %v7966 = vpack.c.b16 %v6358, %v6350
    %v7967 = vpack.c.b16 %v6359, %v6351
    %v7968 = vpack.c.b16 %v6360, %v6352
    %v7969 = vpack.c.b16 %v6361, %v6353
    %v7970 = vpack.c.b16 %v6362, %v6354
    %v7971 = vpack.c.b16 %v6363, %v6355
    %v7972 = vpack.c.b16 %v6364, %v6356
    %v7973 = vpack.c.b16 %v6373, %v6365
    %v7974 = vpack.c.b16 %v6374, %v6366
    %v7975 = vpack.c.b16 %v6375, %v6367
    %v7976 = vpack.c.b16 %v6376, %v6368
    %v7977 = vpack.c.b16 %v6377, %v6369
    %v7978 = vpack.c.b16 %v6378, %v6370
    %v7979 = vpack.c.b16 %v6379, %v6371
    %v7980 = vpack.c.b16 %v6380, %v6372
    %v7981 = vpack.c.b16 %v6389, %v6381
    %v7982 = vpack.c.b16 %v6390, %v6382
    %v7983 = vpack.c.b16 %v6391, %v6383
    %v7984 = vpack.c.b16 %v6392, %v6384
    %v7985 = vpack.c.b16 %v6393, %v6385
    %v7986 = vpack.c.b16 %v6394, %v6386
    %v7987 = vpack.c.b16 %v6395, %v6387
    %v7988 = vpack.c.b16 %v6396, %v6388
    %v7989 = vpack.c.b16 %v6405, %v6397
    %v7990 = vpack.c.b16 %v6406, %v6398
    %v7991 = vpack.c.b16 %v6407, %v6399
    %v7992 = vpack.c.b16 %v6408, %v6400
    %v7993 = vpack.c.b16 %v6409, %v6401
    %v7994 = vpack.c.b16 %v6410, %v6402
    %v7995 = vpack.c.b16 %v6411, %v6403
    %v7996 = vpack.c.b16 %v6412, %v6404
    %v7997 = vpack.c.b16 %v6421, %v6413
    %v7998 = vpack.c.b16 %v6422, %v6414
    %v7999 = vpack.c.b16 %v6423, %v6415
    %v8000 = vpack.c.b16 %v6424, %v6416
    %v8001 = vpack.c.b16 %v6425, %v6417
    %v8002 = vpack.c.b16 %v6426, %v6418
    %v8003 = vpack.c.b16 %v6427, %v6419
    %v8004 = vpack.c.b16 %v6428, %v6420
    %v8005 = vpack.c.b16 %v6437, %v6429
    %v8006 = vpack.c.b16 %v6438, %v6430
    %v8007 = vpack.c.b16 %v6439, %v6431
    %v8008 = vpack.c.b16 %v6440, %v6432
    %v8009 = vpack.c.b16 %v6441, %v6433
    %v8010 = vpack.c.b16 %v6442, %v6434
    %v8011 = vpack.c.b16 %v6443, %v6435
    %v8012 = vpack.c.b16 %v6444, %v6436
    %v8013 = vpack.c.b16 %v6453, %v6445
    %v8014 = vpack.c.b16 %v6454, %v6446
    %v8015 = vpack.c.b16 %v6455, %v6447
    %v8016 = vpack.c.b16 %v6456, %v6448
    %v8017 = vpack.c.b16 %v6457, %v6449
    %v8018 = vpack.c.b16 %v6458, %v6450
    %v8019 = vpack.c.b16 %v6459, %v6451
    %v8020 = vpack.c.b16 %v6460, %v6452
    %v8021 = vpack.c.b16 %v6469, %v6461
    %v8022 = vpack.c.b16 %v6470, %v6462
    %v8023 = vpack.c.b16 %v6471, %v6463
    %v8024 = vpack.c.b16 %v6472, %v6464
    %v8025 = vpack.c.b16 %v6473, %v6465
    %v8026 = vpack.c.b16 %v6474, %v6466
    %v8027 = vpack.c.b16 %v6475, %v6467
    %v8028 = vpack.c.b16 %v6476, %v6468
    %v8029 = vpack.c.b16 %v6485, %v6477
    %v8030 = vpack.c.b16 %v6486, %v6478
    %v8031 = vpack.c.b16 %v6487, %v6479
    %v8032 = vpack.c.b16 %v6488, %v6480
    %v8033 = vpack.c.b16 %v6489, %v6481
    %v8034 = vpack.c.b16 %v6490, %v6482
    %v8035 = vpack.c.b16 %v6491, %v6483
    %v8036 = vpack.c.b16 %v6492, %v6484
    %v8037 = vpack.c.b16 %v6501, %v6493
    %v8038 = vpack.c.b16 %v6502, %v6494
    %v8039 = vpack.c.b16 %v6503, %v6495
    %v8040 = vpack.c.b16 %v6504, %v6496
    %v8041 = vpack.c.b16 %v6505, %v6497
    %v8042 = vpack.c.b16 %v6506, %v6498
    %v8043 = vpack.c.b16 %v6507, %v6499
    %v8044 = vpack.c.b16 %v6508, %v6500
    %9581 = vmatprep.subr.bf16.mxu0 %v6510
    %9582 = vmatpush1.bf16.msra.mxu0 %v6509
    %9583 = vmatprep.subr.bf16.mxu0 %v6518
    %9584 = vmatpush1.bf16.msra.mxu0 %v6517
    %9585 = vmatprep.subr.bf16.mxu0 %v6526
    %9586 = vmatpush1.bf16.msra.mxu0 %v6525
    %9587 = vmatprep.subr.bf16.mxu0 %v6534
    %9588 = vmatpush1.bf16.msra.mxu0 %v6533
    %9589 = vmatprep.subr.bf16.mxu0 %v6542
    %9590 = vmatpush1.bf16.msra.mxu0 %v6541
    %9591 = vmatprep.subr.bf16.mxu0 %v6550
    %9592 = vmatpush1.bf16.msra.mxu0 %v6549
    %9593 = vmatprep.subr.bf16.mxu0 %v6558
    %9594 = vmatpush1.bf16.msra.mxu0 %v6557
    %9595 = vmatprep.subr.bf16.mxu0 %v6566
    %9596 = vmatpush1.bf16.msra.mxu0 %v6565
    %9597 = vmatprep.subr.bf16.mxu0 %v6574
    %9598 = vmatpush1.bf16.msra.mxu0 %v6573
    %9599 = vmatprep.subr.bf16.mxu0 %v6582
    %9600 = vmatpush1.bf16.msra.mxu0 %v6581
    %9601 = vmatprep.subr.bf16.mxu0 %v6590
    %9602 = vmatpush1.bf16.msra.mxu0 %v6589
    %9603 = vmatprep.subr.bf16.mxu0 %v6598
    %9604 = vmatpush1.bf16.msra.mxu0 %v6597
    %9605 = vmatprep.subr.bf16.mxu0 %v6606
    %9606 = vmatpush1.bf16.msra.mxu0 %v6605
    %9607 = vmatprep.subr.bf16.mxu0 %v6614
    %9608 = vmatpush1.bf16.msra.mxu0 %v6613
    %9609 = vmatprep.subr.bf16.mxu0 %v6622
    %9610 = vmatpush1.bf16.msra.mxu0 %v6621
    %9611 = vmatprep.subr.bf16.mxu0 %v6630
    %9612 = vmatpush1.bf16.msra.mxu0 %v6629
    %9613 = vmatprep.mubr.bf16.mxu0 %v1854
    %9614 = vmatmul.mubr.bf16.gmra.mrb[0].mxu0 %v1853
    %v9615 = vpop.f32.mrb[0].mxu0
    %v9616 = vadd.f32 %v1744, %v9615
    %v9617 = vpop.f32.mrb[0].mxu0
    %v9618 = vadd.f32 %v1748, %v9617
    %v9619 = vpop.f32.mrb[0].mxu0
    %v9620 = vadd.f32 %v1744, %v9619
    %v9621 = vpop.f32.mrb[0].mxu0
    %v9622 = vadd.f32 %v1748, %v9621
    %9623 = vdwg.mxu0
    %9624 = vmatprep.subr.bf16.mxu0 %v6638
    %9625 = vmatpush1.bf16.msra.mxu0 %v6637
    %9626 = vmatprep.subr.bf16.mxu0 %v6646
    %9627 = vmatpush1.bf16.msra.mxu0 %v6645
    %9628 = vmatprep.subr.bf16.mxu0 %v6654
    %9629 = vmatpush1.bf16.msra.mxu0 %v6653
    %9630 = vmatprep.subr.bf16.mxu0 %v6662
    %9631 = vmatpush1.bf16.msra.mxu0 %v6661
    %9632 = vmatprep.subr.bf16.mxu0 %v6670
    %9633 = vmatpush1.bf16.msra.mxu0 %v6669
    %9634 = vmatprep.subr.bf16.mxu0 %v6678
    %9635 = vmatpush1.bf16.msra.mxu0 %v6677
    %9636 = vmatprep.subr.bf16.mxu0 %v6686
    %9637 = vmatpush1.bf16.msra.mxu0 %v6685
    %9638 = vmatprep.subr.bf16.mxu0 %v6694
    %9639 = vmatpush1.bf16.msra.mxu0 %v6693
    %9640 = vmatprep.subr.bf16.mxu0 %v6702
    %9641 = vmatpush1.bf16.msra.mxu0 %v6701
    %9642 = vmatprep.subr.bf16.mxu0 %v6710
    %9643 = vmatpush1.bf16.msra.mxu0 %v6709
    %9644 = vmatprep.subr.bf16.mxu0 %v6718
    %9645 = vmatpush1.bf16.msra.mxu0 %v6717
    %9646 = vmatprep.subr.bf16.mxu0 %v6726
    %9647 = vmatpush1.bf16.msra.mxu0 %v6725
    %9648 = vmatprep.subr.bf16.mxu0 %v6734
    %9649 = vmatpush1.bf16.msra.mxu0 %v6733
    %9650 = vmatprep.subr.bf16.mxu0 %v6742
    %9651 = vmatpush1.bf16.msra.mxu0 %v6741
    %9652 = vmatprep.subr.bf16.mxu0 %v6750
    %9653 = vmatpush1.bf16.msra.mxu0 %v6749
    %9654 = vmatprep.subr.bf16.mxu0 %v6758
    %9655 = vmatpush1.bf16.msra.mxu0 %v6757
    %9656 = vmatprep.mubr.bf16.mxu0 %v1856
    %9657 = vmatmul.mubr.bf16.gmra.mrb[0].mxu0 %v1855
    %v9658 = vpop.f32.mrb[0].mxu0
    %v9659 = vadd.f32 %v9616, %v9658
    %v9660 = vpop.f32.mrb[0].mxu0
    %v9661 = vadd.f32 %v9618, %v9660
    %v9662 = vpop.f32.mrb[0].mxu0
    %v9663 = vadd.f32 %v9620, %v9662
    %v9664 = vpop.f32.mrb[0].mxu0
    %v9665 = vadd.f32 %v9622, %v9664
    %9666 = vdwg.mxu0
    %9667 = vmatprep.subr.bf16.mxu0 %v6766
    %9668 = vmatpush1.bf16.msra.mxu0 %v6765
    %9669 = vmatprep.subr.bf16.mxu0 %v6774
    %9670 = vmatpush1.bf16.msra.mxu0 %v6773
    %9671 = vmatprep.subr.bf16.mxu0 %v6782
    %9672 = vmatpush1.bf16.msra.mxu0 %v6781
    %9673 = vmatprep.subr.bf16.mxu0 %v6790
    %9674 = vmatpush1.bf16.msra.mxu0 %v6789
    %9675 = vmatprep.subr.bf16.mxu0 %v6798
    %9676 = vmatpush1.bf16.msra.mxu0 %v6797
    %9677 = vmatprep.subr.bf16.mxu0 %v6806
    %9678 = vmatpush1.bf16.msra.mxu0 %v6805
    %9679 = vmatprep.subr.bf16.mxu0 %v6814
    %9680 = vmatpush1.bf16.msra.mxu0 %v6813
    %9681 = vmatprep.subr.bf16.mxu0 %v6822
    %9682 = vmatpush1.bf16.msra.mxu0 %v6821
    %9683 = vmatprep.subr.bf16.mxu0 %v6830
    %9684 = vmatpush1.bf16.msra.mxu0 %v6829
    %9685 = vmatprep.subr.bf16.mxu0 %v6838
    %9686 = vmatpush1.bf16.msra.mxu0 %v6837
    %9687 = vmatprep.subr.bf16.mxu0 %v6846
    %9688 = vmatpush1.bf16.msra.mxu0 %v6845
    %9689 = vmatprep.subr.bf16.mxu0 %v6854
    %9690 = vmatpush1.bf16.msra.mxu0 %v6853
    %9691 = vmatprep.subr.bf16.mxu0 %v6862
    %9692 = vmatpush1.bf16.msra.mxu0 %v6861
    %9693 = vmatprep.subr.bf16.mxu0 %v6870
    %9694 = vmatpush1.bf16.msra.mxu0 %v6869
    %9695 = vmatprep.subr.bf16.mxu0 %v6878
    %9696 = vmatpush1.bf16.msra.mxu0 %v6877
    %9697 = vmatprep.subr.bf16.mxu0 %v6886
    %9698 = vmatpush1.bf16.msra.mxu0 %v6885
    %9699 = vmatprep.mubr.bf16.mxu0 %v1858
    %9700 = vmatmul.mubr.bf16.gmra.mrb[0].mxu0 %v1857
    %v9701 = vpop.f32.mrb[0].mxu0
    %v9702 = vadd.f32 %v9659, %v9701
    %v9703 = vpop.f32.mrb[0].mxu0
    %v9704 = vadd.f32 %v9661, %v9703
    %v9705 = vpop.f32.mrb[0].mxu0
    %v9706 = vadd.f32 %v9663, %v9705
    %v9707 = vpop.f32.mrb[0].mxu0
    %v9708 = vadd.f32 %v9665, %v9707
    %9709 = vdwg.mxu0
    %9710 = vmatprep.subr.bf16.mxu0 %v6894
    %9711 = vmatpush1.bf16.msra.mxu0 %v6893
    %9712 = vmatprep.subr.bf16.mxu0 %v6902
    %9713 = vmatpush1.bf16.msra.mxu0 %v6901
    %9714 = vmatprep.subr.bf16.mxu0 %v6910
    %9715 = vmatpush1.bf16.msra.mxu0 %v6909
    %9716 = vmatprep.subr.bf16.mxu0 %v6918
    %9717 = vmatpush1.bf16.msra.mxu0 %v6917
    %9718 = vmatprep.subr.bf16.mxu0 %v6926
    %9719 = vmatpush1.bf16.msra.mxu0 %v6925
    %9720 = vmatprep.subr.bf16.mxu0 %v6934
    %9721 = vmatpush1.bf16.msra.mxu0 %v6933
    %9722 = vmatprep.subr.bf16.mxu0 %v6942
    %9723 = vmatpush1.bf16.msra.mxu0 %v6941
    %9724 = vmatprep.subr.bf16.mxu0 %v6950
    %9725 = vmatpush1.bf16.msra.mxu0 %v6949
    %9726 = vmatprep.subr.bf16.mxu0 %v6958
    %9727 = vmatpush1.bf16.msra.mxu0 %v6957
    %9728 = vmatprep.subr.bf16.mxu0 %v6966
    %9729 = vmatpush1.bf16.msra.mxu0 %v6965
    %9730 = vmatprep.subr.bf16.mxu0 %v6974
    %9731 = vmatpush1.bf16.msra.mxu0 %v6973
    %9732 = vmatprep.subr.bf16.mxu0 %v6982
    %9733 = vmatpush1.bf16.msra.mxu0 %v6981
    %9734 = vmatprep.subr.bf16.mxu0 %v6990
    %9735 = vmatpush1.bf16.msra.mxu0 %v6989
    %9736 = vmatprep.subr.bf16.mxu0 %v6998
    %9737 = vmatpush1.bf16.msra.mxu0 %v6997
    %9738 = vmatprep.subr.bf16.mxu0 %v7006
    %9739 = vmatpush1.bf16.msra.mxu0 %v7005
    %9740 = vmatprep.subr.bf16.mxu0 %v7014
    %9741 = vmatpush1.bf16.msra.mxu0 %v7013
    %9742 = vmatprep.mubr.bf16.mxu0 %v1860
    %9743 = vmatmul.mubr.bf16.gmra.mrb[0].mxu0 %v1859
    %v9744 = vpop.f32.mrb[0].mxu0
    %v9745 = vadd.f32 %v9702, %v9744
    %v9746 = vpop.f32.mrb[0].mxu0
    %v9747 = vadd.f32 %v9704, %v9746
    %v9748 = vpop.f32.mrb[0].mxu0
    %v9749 = vadd.f32 %v9706, %v9748
    %v9750 = vpop.f32.mrb[0].mxu0
    %v9751 = vadd.f32 %v9708, %v9750
    %9752 = vdwg.mxu0
    %9753 = vmatprep.subr.bf16.mxu0 %v7022
    %9754 = vmatpush1.bf16.msra.mxu0 %v7021
    %9755 = vmatprep.subr.bf16.mxu0 %v7030
    %9756 = vmatpush1.bf16.msra.mxu0 %v7029
    %9757 = vmatprep.subr.bf16.mxu0 %v7038
    %9758 = vmatpush1.bf16.msra.mxu0 %v7037
    %9759 = vmatprep.subr.bf16.mxu0 %v7046
    %9760 = vmatpush1.bf16.msra.mxu0 %v7045
    %9761 = vmatprep.subr.bf16.mxu0 %v7054
    %9762 = vmatpush1.bf16.msra.mxu0 %v7053
    %9763 = vmatprep.subr.bf16.mxu0 %v7062
    %9764 = vmatpush1.bf16.msra.mxu0 %v7061
    %9765 = vmatprep.subr.bf16.mxu0 %v7070
    %9766 = vmatpush1.bf16.msra.mxu0 %v7069
    %9767 = vmatprep.subr.bf16.mxu0 %v7078
    %9768 = vmatpush1.bf16.msra.mxu0 %v7077
    %9769 = vmatprep.subr.bf16.mxu0 %v7086
    %9770 = vmatpush1.bf16.msra.mxu0 %v7085
    %9771 = vmatprep.subr.bf16.mxu0 %v7094
    %9772 = vmatpush1.bf16.msra.mxu0 %v7093
    %9773 = vmatprep.subr.bf16.mxu0 %v7102
    %9774 = vmatpush1.bf16.msra.mxu0 %v7101
    %9775 = vmatprep.subr.bf16.mxu0 %v7110
    %9776 = vmatpush1.bf16.msra.mxu0 %v7109
    %9777 = vmatprep.subr.bf16.mxu0 %v7118
    %9778 = vmatpush1.bf16.msra.mxu0 %v7117
    %9779 = vmatprep.subr.bf16.mxu0 %v7126
    %9780 = vmatpush1.bf16.msra.mxu0 %v7125
    %9781 = vmatprep.subr.bf16.mxu0 %v7134
    %9782 = vmatpush1.bf16.msra.mxu0 %v7133
    %9783 = vmatprep.subr.bf16.mxu0 %v7142
    %9784 = vmatpush1.bf16.msra.mxu0 %v7141
    %9785 = vmatprep.mubr.bf16.mxu0 %v1862
    %9786 = vmatmul.mubr.bf16.gmra.mrb[0].mxu0 %v1861
    %v9787 = vpop.f32.mrb[0].mxu0
    %v9788 = vadd.f32 %v9745, %v9787
    %v9789 = vpop.f32.mrb[0].mxu0
    %v9790 = vadd.f32 %v9747, %v9789
    %v9791 = vpop.f32.mrb[0].mxu0
    %v9792 = vadd.f32 %v9749, %v9791
    %v9793 = vpop.f32.mrb[0].mxu0
    %v9794 = vadd.f32 %v9751, %v9793
    %9795 = vdwg.mxu0
    %9796 = vmatprep.subr.bf16.mxu0 %v7150
    %9797 = vmatpush1.bf16.msra.mxu0 %v7149
    %9798 = vmatprep.subr.bf16.mxu0 %v7158
    %9799 = vmatpush1.bf16.msra.mxu0 %v7157
    %9800 = vmatprep.subr.bf16.mxu0 %v7166
    %9801 = vmatpush1.bf16.msra.mxu0 %v7165
    %9802 = vmatprep.subr.bf16.mxu0 %v7174
    %9803 = vmatpush1.bf16.msra.mxu0 %v7173
    %9804 = vmatprep.subr.bf16.mxu0 %v7182
    %9805 = vmatpush1.bf16.msra.mxu0 %v7181
    %9806 = vmatprep.subr.bf16.mxu0 %v7190
    %9807 = vmatpush1.bf16.msra.mxu0 %v7189
    %9808 = vmatprep.subr.bf16.mxu0 %v7198
    %9809 = vmatpush1.bf16.msra.mxu0 %v7197
    %9810 = vmatprep.subr.bf16.mxu0 %v7206
    %9811 = vmatpush1.bf16.msra.mxu0 %v7205
    %9812 = vmatprep.subr.bf16.mxu0 %v7214
    %9813 = vmatpush1.bf16.msra.mxu0 %v7213
    %9814 = vmatprep.subr.bf16.mxu0 %v7222
    %9815 = vmatpush1.bf16.msra.mxu0 %v7221
    %9816 = vmatprep.subr.bf16.mxu0 %v7230
    %9817 = vmatpush1.bf16.msra.mxu0 %v7229
    %9818 = vmatprep.subr.bf16.mxu0 %v7238
    %9819 = vmatpush1.bf16.msra.mxu0 %v7237
    %9820 = vmatprep.subr.bf16.mxu0 %v7246
    %9821 = vmatpush1.bf16.msra.mxu0 %v7245
    %9822 = vmatprep.subr.bf16.mxu0 %v7254
    %9823 = vmatpush1.bf16.msra.mxu0 %v7253
    %9824 = vmatprep.subr.bf16.mxu0 %v7262
    %9825 = vmatpush1.bf16.msra.mxu0 %v7261
    %9826 = vmatprep.subr.bf16.mxu0 %v7270
    %9827 = vmatpush1.bf16.msra.mxu0 %v7269
    %9828 = vmatprep.mubr.bf16.mxu0 %v1864
    %9829 = vmatmul.mubr.bf16.gmra.mrb[0].mxu0 %v1863
    %v9830 = vpop.f32.mrb[0].mxu0
    %v9831 = vadd.f32 %v9788, %v9830
    %v9832 = vpop.f32.mrb[0].mxu0
    %v9833 = vadd.f32 %v9790, %v9832
    %v9834 = vpop.f32.mrb[0].mxu0
    %v9835 = vadd.f32 %v9792, %v9834
    %v9836 = vpop.f32.mrb[0].mxu0
    %v9837 = vadd.f32 %v9794, %v9836
    %9838 = vdwg.mxu0
    %9839 = vmatprep.subr.bf16.mxu0 %v7278
    %9840 = vmatpush1.bf16.msra.mxu0 %v7277
    %9841 = vmatprep.subr.bf16.mxu0 %v7286
    %9842 = vmatpush1.bf16.msra.mxu0 %v7285
    %9843 = vmatprep.subr.bf16.mxu0 %v7294
    %9844 = vmatpush1.bf16.msra.mxu0 %v7293
    %9845 = vmatprep.subr.bf16.mxu0 %v7302
    %9846 = vmatpush1.bf16.msra.mxu0 %v7301
    %9847 = vmatprep.subr.bf16.mxu0 %v7310
    %9848 = vmatpush1.bf16.msra.mxu0 %v7309
    %9849 = vmatprep.subr.bf16.mxu0 %v7318
    %9850 = vmatpush1.bf16.msra.mxu0 %v7317
    %9851 = vmatprep.subr.bf16.mxu0 %v7326
    %9852 = vmatpush1.bf16.msra.mxu0 %v7325
    %9853 = vmatprep.subr.bf16.mxu0 %v7334
    %9854 = vmatpush1.bf16.msra.mxu0 %v7333
    %9855 = vmatprep.subr.bf16.mxu0 %v7342
    %9856 = vmatpush1.bf16.msra.mxu0 %v7341
    %9857 = vmatprep.subr.bf16.mxu0 %v7350
    %9858 = vmatpush1.bf16.msra.mxu0 %v7349
    %9859 = vmatprep.subr.bf16.mxu0 %v7358
    %9860 = vmatpush1.bf16.msra.mxu0 %v7357
    %9861 = vmatprep.subr.bf16.mxu0 %v7366
    %9862 = vmatpush1.bf16.msra.mxu0 %v7365
    %9863 = vmatprep.subr.bf16.mxu0 %v7374
    %9864 = vmatpush1.bf16.msra.mxu0 %v7373
    %9865 = vmatprep.subr.bf16.mxu0 %v7382
    %9866 = vmatpush1.bf16.msra.mxu0 %v7381
    %9867 = vmatprep.subr.bf16.mxu0 %v7390
    %9868 = vmatpush1.bf16.msra.mxu0 %v7389
    %9869 = vmatprep.subr.bf16.mxu0 %v7398
    %9870 = vmatpush1.bf16.msra.mxu0 %v7397
    %9871 = vmatprep.mubr.bf16.mxu0 %v1866
    %9872 = vmatmul.mubr.bf16.gmra.mrb[0].mxu0 %v1865
    %v9873 = vpop.f32.mrb[0].mxu0
    %v9874 = vadd.f32 %v9831, %v9873
    %v9875 = vpop.f32.mrb[0].mxu0
    %v9876 = vadd.f32 %v9833, %v9875
    %v9877 = vpop.f32.mrb[0].mxu0
    %v9878 = vadd.f32 %v9835, %v9877
    %v9879 = vpop.f32.mrb[0].mxu0
    %v9880 = vadd.f32 %v9837, %v9879
    %9881 = vdwg.mxu0
    %9882 = vmatprep.subr.bf16.mxu0 %v7406
    %9883 = vmatpush1.bf16.msra.mxu0 %v7405
    %9884 = vmatprep.subr.bf16.mxu0 %v7414
    %9885 = vmatpush1.bf16.msra.mxu0 %v7413
    %9886 = vmatprep.subr.bf16.mxu0 %v7422
    %9887 = vmatpush1.bf16.msra.mxu0 %v7421
    %9888 = vmatprep.subr.bf16.mxu0 %v7430
    %9889 = vmatpush1.bf16.msra.mxu0 %v7429
    %9890 = vmatprep.subr.bf16.mxu0 %v7438
    %9891 = vmatpush1.bf16.msra.mxu0 %v7437
    %9892 = vmatprep.subr.bf16.mxu0 %v7446
    %9893 = vmatpush1.bf16.msra.mxu0 %v7445
    %9894 = vmatprep.subr.bf16.mxu0 %v7454
    %9895 = vmatpush1.bf16.msra.mxu0 %v7453
    %9896 = vmatprep.subr.bf16.mxu0 %v7462
    %9897 = vmatpush1.bf16.msra.mxu0 %v7461
    %9898 = vmatprep.subr.bf16.mxu0 %v7470
    %9899 = vmatpush1.bf16.msra.mxu0 %v7469
    %9900 = vmatprep.subr.bf16.mxu0 %v7478
    %9901 = vmatpush1.bf16.msra.mxu0 %v7477
    %9902 = vmatprep.subr.bf16.mxu0 %v7486
    %9903 = vmatpush1.bf16.msra.mxu0 %v7485
    %9904 = vmatprep.subr.bf16.mxu0 %v7494
    %9905 = vmatpush1.bf16.msra.mxu0 %v7493
    %9906 = vmatprep.subr.bf16.mxu0 %v7502
    %9907 = vmatpush1.bf16.msra.mxu0 %v7501
    %9908 = vmatprep.subr.bf16.mxu0 %v7510
    %9909 = vmatpush1.bf16.msra.mxu0 %v7509
    %9910 = vmatprep.subr.bf16.mxu0 %v7518
    %9911 = vmatpush1.bf16.msra.mxu0 %v7517
    %9912 = vmatprep.subr.bf16.mxu0 %v7526
    %9913 = vmatpush1.bf16.msra.mxu0 %v7525
    %9914 = vmatprep.mubr.bf16.mxu0 %v1868
    %9915 = vmatmul.mubr.bf16.gmra.mrb[0].mxu0 %v1867
    %v9916 = vpop.f32.mrb[0].mxu0
    %v9917 = vadd.f32 %v9874, %v9916
    %v9918 = vpop.f32.mrb[0].mxu0
    %v9919 = vadd.f32 %v9876, %v9918
    %v9920 = vpop.f32.mrb[0].mxu0
    %v9921 = vadd.f32 %v9878, %v9920
    %v9922 = vpop.f32.mrb[0].mxu0
    %v9923 = vadd.f32 %v9880, %v9922
    %9924 = vdwg.mxu0
    %9925 = vmatprep.subr.bf16.mxu0 %v7534
    %9926 = vmatpush1.bf16.msra.mxu0 %v7533
    %9927 = vmatprep.subr.bf16.mxu0 %v7542
    %9928 = vmatpush1.bf16.msra.mxu0 %v7541
    %9929 = vmatprep.subr.bf16.mxu0 %v7550
    %9930 = vmatpush1.bf16.msra.mxu0 %v7549
    %9931 = vmatprep.subr.bf16.mxu0 %v7558
    %9932 = vmatpush1.bf16.msra.mxu0 %v7557
    %9933 = vmatprep.subr.bf16.mxu0 %v7566
    %9934 = vmatpush1.bf16.msra.mxu0 %v7565
    %9935 = vmatprep.subr.bf16.mxu0 %v7574
    %9936 = vmatpush1.bf16.msra.mxu0 %v7573
    %9937 = vmatprep.subr.bf16.mxu0 %v7582
    %9938 = vmatpush1.bf16.msra.mxu0 %v7581
    %9939 = vmatprep.subr.bf16.mxu0 %v7590
    %9940 = vmatpush1.bf16.msra.mxu0 %v7589
    %9941 = vmatprep.subr.bf16.mxu0 %v7598
    %9942 = vmatpush1.bf16.msra.mxu0 %v7597
    %9943 = vmatprep.subr.bf16.mxu0 %v7606
    %9944 = vmatpush1.bf16.msra.mxu0 %v7605
    %9945 = vmatprep.subr.bf16.mxu0 %v7614
    %9946 = vmatpush1.bf16.msra.mxu0 %v7613
    %9947 = vmatprep.subr.bf16.mxu0 %v7622
    %9948 = vmatpush1.bf16.msra.mxu0 %v7621
    %9949 = vmatprep.subr.bf16.mxu0 %v7630
    %9950 = vmatpush1.bf16.msra.mxu0 %v7629
    %9951 = vmatprep.subr.bf16.mxu0 %v7638
    %9952 = vmatpush1.bf16.msra.mxu0 %v7637
    %9953 = vmatprep.subr.bf16.mxu0 %v7646
    %9954 = vmatpush1.bf16.msra.mxu0 %v7645
    %9955 = vmatprep.subr.bf16.mxu0 %v7654
    %9956 = vmatpush1.bf16.msra.mxu0 %v7653
    %9957 = vmatprep.mubr.bf16.mxu0 %v1870
    %9958 = vmatmul.mubr.bf16.gmra.mrb[0].mxu0 %v1869
    %v9959 = vpop.f32.mrb[0].mxu0
    %v9960 = vadd.f32 %v9917, %v9959
    %v9961 = vpop.f32.mrb[0].mxu0
    %v9962 = vadd.f32 %v9919, %v9961
    %v9963 = vpop.f32.mrb[0].mxu0
    %v9964 = vadd.f32 %v9921, %v9963
    %v9965 = vpop.f32.mrb[0].mxu0
    %v9966 = vadd.f32 %v9923, %v9965
    %9967 = vdwg.mxu0
    %9968 = vmatprep.subr.bf16.mxu0 %v7662
    %9969 = vmatpush1.bf16.msra.mxu0 %v7661
    %9970 = vmatprep.subr.bf16.mxu0 %v7670
    %9971 = vmatpush1.bf16.msra.mxu0 %v7669
    %9972 = vmatprep.subr.bf16.mxu0 %v7678
    %9973 = vmatpush1.bf16.msra.mxu0 %v7677
    %9974 = vmatprep.subr.bf16.mxu0 %v7686
    %9975 = vmatpush1.bf16.msra.mxu0 %v7685
    %9976 = vmatprep.subr.bf16.mxu0 %v7694
    %9977 = vmatpush1.bf16.msra.mxu0 %v7693
    %9978 = vmatprep.subr.bf16.mxu0 %v7702
    %9979 = vmatpush1.bf16.msra.mxu0 %v7701
    %9980 = vmatprep.subr.bf16.mxu0 %v7710
    %9981 = vmatpush1.bf16.msra.mxu0 %v7709
    %9982 = vmatprep.subr.bf16.mxu0 %v7718
    %9983 = vmatpush1.bf16.msra.mxu0 %v7717
    %9984 = vmatprep.subr.bf16.mxu0 %v7726
    %9985 = vmatpush1.bf16.msra.mxu0 %v7725
    %9986 = vmatprep.subr.bf16.mxu0 %v7734
    %9987 = vmatpush1.bf16.msra.mxu0 %v7733
    %9988 = vmatprep.subr.bf16.mxu0 %v7742
    %9989 = vmatpush1.bf16.msra.mxu0 %v7741
    %9990 = vmatprep.subr.bf16.mxu0 %v7750
    %9991 = vmatpush1.bf16.msra.mxu0 %v7749
    %9992 = vmatprep.subr.bf16.mxu0 %v7758
    %9993 = vmatpush1.bf16.msra.mxu0 %v7757
    %9994 = vmatprep.subr.bf16.mxu0 %v7766
    %9995 = vmatpush1.bf16.msra.mxu0 %v7765
    %9996 = vmatprep.subr.bf16.mxu0 %v7774
    %9997 = vmatpush1.bf16.msra.mxu0 %v7773
    %9998 = vmatprep.subr.bf16.mxu0 %v7782
    %9999 = vmatpush1.bf16.msra.mxu0 %v7781
    %10000 = vmatprep.mubr.bf16.mxu0 %v1872
    %10001 = vmatmul.mubr.bf16.gmra.mrb[0].mxu0 %v1871
    %v10002 = vpop.f32.mrb[0].mxu0
    %v10003 = vadd.f32 %v9960, %v10002
    %v10004 = vpop.f32.mrb[0].mxu0
    %v10005 = vadd.f32 %v9962, %v10004
    %v10006 = vpop.f32.mrb[0].mxu0
    %v10007 = vadd.f32 %v9964, %v10006
    %v10008 = vpop.f32.mrb[0].mxu0
    %v10009 = vadd.f32 %v9966, %v10008
    %10010 = vdwg.mxu0
    %10011 = vmatprep.subr.bf16.mxu0 %v7790
    %10012 = vmatpush1.bf16.msra.mxu0 %v7789
    %10013 = vmatprep.subr.bf16.mxu0 %v7798
    %10014 = vmatpush1.bf16.msra.mxu0 %v7797
    %10015 = vmatprep.subr.bf16.mxu0 %v7806
    %10016 = vmatpush1.bf16.msra.mxu0 %v7805
    %10017 = vmatprep.subr.bf16.mxu0 %v7814
    %10018 = vmatpush1.bf16.msra.mxu0 %v7813
    %10019 = vmatprep.subr.bf16.mxu0 %v7822
    %10020 = vmatpush1.bf16.msra.mxu0 %v7821
    %10021 = vmatprep.subr.bf16.mxu0 %v7830
    %10022 = vmatpush1.bf16.msra.mxu0 %v7829
    %10023 = vmatprep.subr.bf16.mxu0 %v7838
    %10024 = vmatpush1.bf16.msra.mxu0 %v7837
    %10025 = vmatprep.subr.bf16.mxu0 %v7846
    %10026 = vmatpush1.bf16.msra.mxu0 %v7845
    %10027 = vmatprep.subr.bf16.mxu0 %v7854
    %10028 = vmatpush1.bf16.msra.mxu0 %v7853
    %10029 = vmatprep.subr.bf16.mxu0 %v7862
    %10030 = vmatpush1.bf16.msra.mxu0 %v7861
    %10031 = vmatprep.subr.bf16.mxu0 %v7870
    %10032 = vmatpush1.bf16.msra.mxu0 %v7869
    %10033 = vmatprep.subr.bf16.mxu0 %v7878
    %10034 = vmatpush1.bf16.msra.mxu0 %v7877
    %10035 = vmatprep.subr.bf16.mxu0 %v7886
    %10036 = vmatpush1.bf16.msra.mxu0 %v7885
    %10037 = vmatprep.subr.bf16.mxu0 %v7894
    %10038 = vmatpush1.bf16.msra.mxu0 %v7893
    %10039 = vmatprep.subr.bf16.mxu0 %v7902
    %10040 = vmatpush1.bf16.msra.mxu0 %v7901
    %10041 = vmatprep.subr.bf16.mxu0 %v7910
    %10042 = vmatpush1.bf16.msra.mxu0 %v7909
    %10043 = vmatprep.mubr.bf16.mxu0 %v1874
    %10044 = vmatmul.mubr.bf16.gmra.mrb[0].mxu0 %v1873
    %v10045 = vpop.f32.mrb[0].mxu0
    %v10046 = vadd.f32 %v10003, %v10045
    %v10047 = vpop.f32.mrb[0].mxu0
    %v10048 = vadd.f32 %v10005, %v10047
    %v10049 = vpop.f32.mrb[0].mxu0
    %v10050 = vadd.f32 %v10007, %v10049
    %v10051 = vpop.f32.mrb[0].mxu0
    %v10052 = vadd.f32 %v10009, %v10051
    %10053 = vdwg.mxu0
    %10054 = vmatprep.subr.bf16.mxu0 %v7918
    %10055 = vmatpush1.bf16.msra.mxu0 %v7917
    %10056 = vmatprep.subr.bf16.mxu0 %v7926
    %10057 = vmatpush1.bf16.msra.mxu0 %v7925
    %10058 = vmatprep.subr.bf16.mxu0 %v7934
    %10059 = vmatpush1.bf16.msra.mxu0 %v7933
    %10060 = vmatprep.subr.bf16.mxu0 %v7942
    %10061 = vmatpush1.bf16.msra.mxu0 %v7941
    %10062 = vmatprep.subr.bf16.mxu0 %v7950
    %10063 = vmatpush1.bf16.msra.mxu0 %v7949
    %10064 = vmatprep.subr.bf16.mxu0 %v7958
    %10065 = vmatpush1.bf16.msra.mxu0 %v7957
    %10066 = vmatprep.subr.bf16.mxu0 %v7966
    %10067 = vmatpush1.bf16.msra.mxu0 %v7965
    %10068 = vmatprep.subr.bf16.mxu0 %v7974
    %10069 = vmatpush1.bf16.msra.mxu0 %v7973
    %10070 = vmatprep.subr.bf16.mxu0 %v7982
    %10071 = vmatpush1.bf16.msra.mxu0 %v7981
    %10072 = vmatprep.subr.bf16.mxu0 %v7990
    %10073 = vmatpush1.bf16.msra.mxu0 %v7989
    %10074 = vmatprep.subr.bf16.mxu0 %v7998
    %10075 = vmatpush1.bf16.msra.mxu0 %v7997
    %10076 = vmatprep.subr.bf16.mxu0 %v8006
    %10077 = vmatpush1.bf16.msra.mxu0 %v8005
    %10078 = vmatprep.subr.bf16.mxu0 %v8014
    %10079 = vmatpush1.bf16.msra.mxu0 %v8013
    %10080 = vmatprep.subr.bf16.mxu0 %v8022
    %10081 = vmatpush1.bf16.msra.mxu0 %v8021
    %10082 = vmatprep.subr.bf16.mxu0 %v8030
    %10083 = vmatpush1.bf16.msra.mxu0 %v8029
    %10084 = vmatprep.subr.bf16.mxu0 %v8038
    %10085 = vmatpush1.bf16.msra.mxu0 %v8037
    %10086 = vmatprep.mubr.bf16.mxu0 %v1876
    %10087 = vmatmul.mubr.bf16.gmra.mrb[0].mxu0 %v1875
    %v10088 = vpop.f32.mrb[0].mxu0
    %v10089 = vadd.f32 %v10046, %v10088
    %v10090 = vpop.f32.mrb[0].mxu0
    %v10091 = vadd.f32 %v10048, %v10090
    %v10092 = vpop.f32.mrb[0].mxu0
    %v10093 = vadd.f32 %v10050, %v10092
    %v10094 = vpop.f32.mrb[0].mxu0
    %v10095 = vadd.f32 %v10052, %v10094
    %10096 = vdwg.mxu0
    %10097 = vmatprep.subr.bf16.mxu0 %v6512
    %10098 = vmatpush1.bf16.msra.mxu0 %v6511
    %10099 = vmatprep.subr.bf16.mxu0 %v6520
    %10100 = vmatpush1.bf16.msra.mxu0 %v6519
    %10101 = vmatprep.subr.bf16.mxu0 %v6528
    %10102 = vmatpush1.bf16.msra.mxu0 %v6527
    %10103 = vmatprep.subr.bf16.mxu0 %v6536
    %10104 = vmatpush1.bf16.msra.mxu0 %v6535
    %10105 = vmatprep.subr.bf16.mxu0 %v6544
    %10106 = vmatpush1.bf16.msra.mxu0 %v6543
    %10107 = vmatprep.subr.bf16.mxu0 %v6552
    %10108 = vmatpush1.bf16.msra.mxu0 %v6551
    %10109 = vmatprep.subr.bf16.mxu0 %v6560
    %10110 = vmatpush1.bf16.msra.mxu0 %v6559
    %10111 = vmatprep.subr.bf16.mxu0 %v6568
    %10112 = vmatpush1.bf16.msra.mxu0 %v6567
    %10113 = vmatprep.subr.bf16.mxu0 %v6576
    %10114 = vmatpush1.bf16.msra.mxu0 %v6575
    %10115 = vmatprep.subr.bf16.mxu0 %v6584
    %10116 = vmatpush1.bf16.msra.mxu0 %v6583
    %10117 = vmatprep.subr.bf16.mxu0 %v6592
    %10118 = vmatpush1.bf16.msra.mxu0 %v6591
    %10119 = vmatprep.subr.bf16.mxu0 %v6600
    %10120 = vmatpush1.bf16.msra.mxu0 %v6599
    %10121 = vmatprep.subr.bf16.mxu0 %v6608
    %10122 = vmatpush1.bf16.msra.mxu0 %v6607
    %10123 = vmatprep.subr.bf16.mxu0 %v6616
    %10124 = vmatpush1.bf16.msra.mxu0 %v6615
    %10125 = vmatprep.subr.bf16.mxu0 %v6624
    %10126 = vmatpush1.bf16.msra.mxu0 %v6623
    %10127 = vmatprep.subr.bf16.mxu0 %v6632
    %10128 = vmatpush1.bf16.msra.mxu0 %v6631
    %10129 = vmatprep.mubr.bf16.mxu0 %v1854
    %10130 = vmatmul.mubr.bf16.gmra.mrb[0].mxu0 %v1853
    %v10131 = vpop.f32.mrb[0].mxu0
    %v10132 = vadd.f32 %v1752, %v10131
    %v10133 = vpop.f32.mrb[0].mxu0
    %v10134 = vadd.f32 %v1756, %v10133
    %v10135 = vpop.f32.mrb[0].mxu0
    %v10136 = vadd.f32 %v1752, %v10135
    %v10137 = vpop.f32.mrb[0].mxu0
    %v10138 = vadd.f32 %v1756, %v10137
    %10139 = vdwg.mxu0
    %10140 = vmatprep.subr.bf16.mxu0 %v6640
    %10141 = vmatpush1.bf16.msra.mxu0 %v6639
    %10142 = vmatprep.subr.bf16.mxu0 %v6648
    %10143 = vmatpush1.bf16.msra.mxu0 %v6647
    %10144 = vmatprep.subr.bf16.mxu0 %v6656
    %10145 = vmatpush1.bf16.msra.mxu0 %v6655
    %10146 = vmatprep.subr.bf16.mxu0 %v6664
    %10147 = vmatpush1.bf16.msra.mxu0 %v6663
    %10148 = vmatprep.subr.bf16.mxu0 %v6672
    %10149 = vmatpush1.bf16.msra.mxu0 %v6671
    %10150 = vmatprep.subr.bf16.mxu0 %v6680
    %10151 = vmatpush1.bf16.msra.mxu0 %v6679
    %10152 = vmatprep.subr.bf16.mxu0 %v6688
    %10153 = vmatpush1.bf16.msra.mxu0 %v6687
    %10154 = vmatprep.subr.bf16.mxu0 %v6696
    %10155 = vmatpush1.bf16.msra.mxu0 %v6695
    %10156 = vmatprep.subr.bf16.mxu0 %v6704
    %10157 = vmatpush1.bf16.msra.mxu0 %v6703
    %10158 = vmatprep.subr.bf16.mxu0 %v6712
    %10159 = vmatpush1.bf16.msra.mxu0 %v6711
    %10160 = vmatprep.subr.bf16.mxu0 %v6720
    %10161 = vmatpush1.bf16.msra.mxu0 %v6719
    %10162 = vmatprep.subr.bf16.mxu0 %v6728
    %10163 = vmatpush1.bf16.msra.mxu0 %v6727
    %10164 = vmatprep.subr.bf16.mxu0 %v6736
    %10165 = vmatpush1.bf16.msra.mxu0 %v6735
    %10166 = vmatprep.subr.bf16.mxu0 %v6744
    %10167 = vmatpush1.bf16.msra.mxu0 %v6743
    %10168 = vmatprep.subr.bf16.mxu0 %v6752
    %10169 = vmatpush1.bf16.msra.mxu0 %v6751
    %10170 = vmatprep.subr.bf16.mxu0 %v6760
    %10171 = vmatpush1.bf16.msra.mxu0 %v6759
    %10172 = vmatprep.mubr.bf16.mxu0 %v1856
    %10173 = vmatmul.mubr.bf16.gmra.mrb[0].mxu0 %v1855
    %v10174 = vpop.f32.mrb[0].mxu0
    %v10175 = vadd.f32 %v10132, %v10174
    %v10176 = vpop.f32.mrb[0].mxu0
    %v10177 = vadd.f32 %v10134, %v10176
    %v10178 = vpop.f32.mrb[0].mxu0
    %v10179 = vadd.f32 %v10136, %v10178
    %v10180 = vpop.f32.mrb[0].mxu0
    %v10181 = vadd.f32 %v10138, %v10180
    %10182 = vdwg.mxu0
    %10183 = vmatprep.subr.bf16.mxu0 %v6768
    %10184 = vmatpush1.bf16.msra.mxu0 %v6767
    %10185 = vmatprep.subr.bf16.mxu0 %v6776
    %10186 = vmatpush1.bf16.msra.mxu0 %v6775
    %10187 = vmatprep.subr.bf16.mxu0 %v6784
    %10188 = vmatpush1.bf16.msra.mxu0 %v6783
    %10189 = vmatprep.subr.bf16.mxu0 %v6792
    %10190 = vmatpush1.bf16.msra.mxu0 %v6791
    %10191 = vmatprep.subr.bf16.mxu0 %v6800
    %10192 = vmatpush1.bf16.msra.mxu0 %v6799
    %10193 = vmatprep.subr.bf16.mxu0 %v6808
    %10194 = vmatpush1.bf16.msra.mxu0 %v6807
    %10195 = vmatprep.subr.bf16.mxu0 %v6816
    %10196 = vmatpush1.bf16.msra.mxu0 %v6815
    %10197 = vmatprep.subr.bf16.mxu0 %v6824
    %10198 = vmatpush1.bf16.msra.mxu0 %v6823
    %10199 = vmatprep.subr.bf16.mxu0 %v6832
    %10200 = vmatpush1.bf16.msra.mxu0 %v6831
    %10201 = vmatprep.subr.bf16.mxu0 %v6840
    %10202 = vmatpush1.bf16.msra.mxu0 %v6839
    %10203 = vmatprep.subr.bf16.mxu0 %v6848
    %10204 = vmatpush1.bf16.msra.mxu0 %v6847
    %10205 = vmatprep.subr.bf16.mxu0 %v6856
    %10206 = vmatpush1.bf16.msra.mxu0 %v6855
    %10207 = vmatprep.subr.bf16.mxu0 %v6864
    %10208 = vmatpush1.bf16.msra.mxu0 %v6863
    %10209 = vmatprep.subr.bf16.mxu0 %v6872
    %10210 = vmatpush1.bf16.msra.mxu0 %v6871
    %10211 = vmatprep.subr.bf16.mxu0 %v6880
    %10212 = vmatpush1.bf16.msra.mxu0 %v6879
    %10213 = vmatprep.subr.bf16.mxu0 %v6888
    %10214 = vmatpush1.bf16.msra.mxu0 %v6887
    %10215 = vmatprep.mubr.bf16.mxu0 %v1858
    %10216 = vmatmul.mubr.bf16.gmra.mrb[0].mxu0 %v1857
    %v10217 = vpop.f32.mrb[0].mxu0
    %v10218 = vadd.f32 %v10175, %v10217
    %v10219 = vpop.f32.mrb[0].mxu0
    %v10220 = vadd.f32 %v10177, %v10219
    %v10221 = vpop.f32.mrb[0].mxu0
    %v10222 = vadd.f32 %v10179, %v10221
    %v10223 = vpop.f32.mrb[0].mxu0
    %v10224 = vadd.f32 %v10181, %v10223
    %10225 = vdwg.mxu0
    %10226 = vmatprep.subr.bf16.mxu0 %v6896
    %10227 = vmatpush1.bf16.msra.mxu0 %v6895
    %10228 = vmatprep.subr.bf16.mxu0 %v6904
    %10229 = vmatpush1.bf16.msra.mxu0 %v6903
    %10230 = vmatprep.subr.bf16.mxu0 %v6912
    %10231 = vmatpush1.bf16.msra.mxu0 %v6911
    %10232 = vmatprep.subr.bf16.mxu0 %v6920
    %10233 = vmatpush1.bf16.msra.mxu0 %v6919
    %10234 = vmatprep.subr.bf16.mxu0 %v6928
    %10235 = vmatpush1.bf16.msra.mxu0 %v6927
    %10236 = vmatprep.subr.bf16.mxu0 %v6936
    %10237 = vmatpush1.bf16.msra.mxu0 %v6935
    %10238 = vmatprep.subr.bf16.mxu0 %v6944
    %10239 = vmatpush1.bf16.msra.mxu0 %v6943
    %10240 = vmatprep.subr.bf16.mxu0 %v6952
    %10241 = vmatpush1.bf16.msra.mxu0 %v6951
    %10242 = vmatprep.subr.bf16.mxu0 %v6960
    %10243 = vmatpush1.bf16.msra.mxu0 %v6959
    %10244 = vmatprep.subr.bf16.mxu0 %v6968
    %10245 = vmatpush1.bf16.msra.mxu0 %v6967
    %10246 = vmatprep.subr.bf16.mxu0 %v6976
    %10247 = vmatpush1.bf16.msra.mxu0 %v6975
    %10248 = vmatprep.subr.bf16.mxu0 %v6984
    %10249 = vmatpush1.bf16.msra.mxu0 %v6983
    %10250 = vmatprep.subr.bf16.mxu0 %v6992
    %10251 = vmatpush1.bf16.msra.mxu0 %v6991
    %10252 = vmatprep.subr.bf16.mxu0 %v7000
    %10253 = vmatpush1.bf16.msra.mxu0 %v6999
    %10254 = vmatprep.subr.bf16.mxu0 %v7008
    %10255 = vmatpush1.bf16.msra.mxu0 %v7007
    %10256 = vmatprep.subr.bf16.mxu0 %v7016
    %10257 = vmatpush1.bf16.msra.mxu0 %v7015
    %10258 = vmatprep.mubr.bf16.mxu0 %v1860
    %10259 = vmatmul.mubr.bf16.gmra.mrb[0].mxu0 %v1859
    %v10260 = vpop.f32.mrb[0].mxu0
    %v10261 = vadd.f32 %v10218, %v10260
    %v10262 = vpop.f32.mrb[0].mxu0
    %v10263 = vadd.f32 %v10220, %v10262
    %v10264 = vpop.f32.mrb[0].mxu0
    %v10265 = vadd.f32 %v10222, %v10264
    %v10266 = vpop.f32.mrb[0].mxu0
    %v10267 = vadd.f32 %v10224, %v10266
    %10268 = vdwg.mxu0
    %10269 = vmatprep.subr.bf16.mxu0 %v7024
    %10270 = vmatpush1.bf16.msra.mxu0 %v7023
    %10271 = vmatprep.subr.bf16.mxu0 %v7032
    %10272 = vmatpush1.bf16.msra.mxu0 %v7031
    %10273 = vmatprep.subr.bf16.mxu0 %v7040
    %10274 = vmatpush1.bf16.msra.mxu0 %v7039
    %10275 = vmatprep.subr.bf16.mxu0 %v7048
    %10276 = vmatpush1.bf16.msra.mxu0 %v7047
    %10277 = vmatprep.subr.bf16.mxu0 %v7056
    %10278 = vmatpush1.bf16.msra.mxu0 %v7055
    %10279 = vmatprep.subr.bf16.mxu0 %v7064
    %10280 = vmatpush1.bf16.msra.mxu0 %v7063
    %10281 = vmatprep.subr.bf16.mxu0 %v7072
    %10282 = vmatpush1.bf16.msra.mxu0 %v7071
    %10283 = vmatprep.subr.bf16.mxu0 %v7080
    %10284 = vmatpush1.bf16.msra.mxu0 %v7079
    %10285 = vmatprep.subr.bf16.mxu0 %v7088
    %10286 = vmatpush1.bf16.msra.mxu0 %v7087
    %10287 = vmatprep.subr.bf16.mxu0 %v7096
    %10288 = vmatpush1.bf16.msra.mxu0 %v7095
    %10289 = vmatprep.subr.bf16.mxu0 %v7104
    %10290 = vmatpush1.bf16.msra.mxu0 %v7103
    %10291 = vmatprep.subr.bf16.mxu0 %v7112
    %10292 = vmatpush1.bf16.msra.mxu0 %v7111
    %10293 = vmatprep.subr.bf16.mxu0 %v7120
    %10294 = vmatpush1.bf16.msra.mxu0 %v7119
    %10295 = vmatprep.subr.bf16.mxu0 %v7128
    %10296 = vmatpush1.bf16.msra.mxu0 %v7127
    %10297 = vmatprep.subr.bf16.mxu0 %v7136
    %10298 = vmatpush1.bf16.msra.mxu0 %v7135
    %10299 = vmatprep.subr.bf16.mxu0 %v7144
    %10300 = vmatpush1.bf16.msra.mxu0 %v7143
    %10301 = vmatprep.mubr.bf16.mxu0 %v1862
    %10302 = vmatmul.mubr.bf16.gmra.mrb[0].mxu0 %v1861
    %v10303 = vpop.f32.mrb[0].mxu0
    %v10304 = vadd.f32 %v10261, %v10303
    %v10305 = vpop.f32.mrb[0].mxu0
    %v10306 = vadd.f32 %v10263, %v10305
    %v10307 = vpop.f32.mrb[0].mxu0
    %v10308 = vadd.f32 %v10265, %v10307
    %v10309 = vpop.f32.mrb[0].mxu0
    %v10310 = vadd.f32 %v10267, %v10309
    %10311 = vdwg.mxu0
    %10312 = vmatprep.subr.bf16.mxu0 %v7152
    %10313 = vmatpush1.bf16.msra.mxu0 %v7151
    %10314 = vmatprep.subr.bf16.mxu0 %v7160
    %10315 = vmatpush1.bf16.msra.mxu0 %v7159
    %10316 = vmatprep.subr.bf16.mxu0 %v7168
    %10317 = vmatpush1.bf16.msra.mxu0 %v7167
    %10318 = vmatprep.subr.bf16.mxu0 %v7176
    %10319 = vmatpush1.bf16.msra.mxu0 %v7175
    %10320 = vmatprep.subr.bf16.mxu0 %v7184
    %10321 = vmatpush1.bf16.msra.mxu0 %v7183
    %10322 = vmatprep.subr.bf16.mxu0 %v7192
    %10323 = vmatpush1.bf16.msra.mxu0 %v7191
    %10324 = vmatprep.subr.bf16.mxu0 %v7200
    %10325 = vmatpush1.bf16.msra.mxu0 %v7199
    %10326 = vmatprep.subr.bf16.mxu0 %v7208
    %10327 = vmatpush1.bf16.msra.mxu0 %v7207
    %10328 = vmatprep.subr.bf16.mxu0 %v7216
    %10329 = vmatpush1.bf16.msra.mxu0 %v7215
    %10330 = vmatprep.subr.bf16.mxu0 %v7224
    %10331 = vmatpush1.bf16.msra.mxu0 %v7223
    %10332 = vmatprep.subr.bf16.mxu0 %v7232
    %10333 = vmatpush1.bf16.msra.mxu0 %v7231
    %10334 = vmatprep.subr.bf16.mxu0 %v7240
    %10335 = vmatpush1.bf16.msra.mxu0 %v7239
    %10336 = vmatprep.subr.bf16.mxu0 %v7248
    %10337 = vmatpush1.bf16.msra.mxu0 %v7247
    %10338 = vmatprep.subr.bf16.mxu0 %v7256
    %10339 = vmatpush1.bf16.msra.mxu0 %v7255
    %10340 = vmatprep.subr.bf16.mxu0 %v7264
    %10341 = vmatpush1.bf16.msra.mxu0 %v7263
    %10342 = vmatprep.subr.bf16.mxu0 %v7272
    %10343 = vmatpush1.bf16.msra.mxu0 %v7271
    %10344 = vmatprep.mubr.bf16.mxu0 %v1864
    %10345 = vmatmul.mubr.bf16.gmra.mrb[0].mxu0 %v1863
    %v10346 = vpop.f32.mrb[0].mxu0
    %v10347 = vadd.f32 %v10304, %v10346
    %v10348 = vpop.f32.mrb[0].mxu0
    %v10349 = vadd.f32 %v10306, %v10348
    %v10350 = vpop.f32.mrb[0].mxu0
    %v10351 = vadd.f32 %v10308, %v10350
    %v10352 = vpop.f32.mrb[0].mxu0
    %v10353 = vadd.f32 %v10310, %v10352
    %10354 = vdwg.mxu0
    %10355 = vmatprep.subr.bf16.mxu0 %v7280
    %10356 = vmatpush1.bf16.msra.mxu0 %v7279
    %10357 = vmatprep.subr.bf16.mxu0 %v7288
    %10358 = vmatpush1.bf16.msra.mxu0 %v7287
    %10359 = vmatprep.subr.bf16.mxu0 %v7296
    %10360 = vmatpush1.bf16.msra.mxu0 %v7295
    %10361 = vmatprep.subr.bf16.mxu0 %v7304
    %10362 = vmatpush1.bf16.msra.mxu0 %v7303
    %10363 = vmatprep.subr.bf16.mxu0 %v7312
    %10364 = vmatpush1.bf16.msra.mxu0 %v7311
    %10365 = vmatprep.subr.bf16.mxu0 %v7320
    %10366 = vmatpush1.bf16.msra.mxu0 %v7319
    %10367 = vmatprep.subr.bf16.mxu0 %v7328
    %10368 = vmatpush1.bf16.msra.mxu0 %v7327
    %10369 = vmatprep.subr.bf16.mxu0 %v7336
    %10370 = vmatpush1.bf16.msra.mxu0 %v7335
    %10371 = vmatprep.subr.bf16.mxu0 %v7344
    %10372 = vmatpush1.bf16.msra.mxu0 %v7343
    %10373 = vmatprep.subr.bf16.mxu0 %v7352
    %10374 = vmatpush1.bf16.msra.mxu0 %v7351
    %10375 = vmatprep.subr.bf16.mxu0 %v7360
    %10376 = vmatpush1.bf16.msra.mxu0 %v7359
    %10377 = vmatprep.subr.bf16.mxu0 %v7368
    %10378 = vmatpush1.bf16.msra.mxu0 %v7367
    %10379 = vmatprep.subr.bf16.mxu0 %v7376
    %10380 = vmatpush1.bf16.msra.mxu0 %v7375
    %10381 = vmatprep.subr.bf16.mxu0 %v7384
    %10382 = vmatpush1.bf16.msra.mxu0 %v7383
    %10383 = vmatprep.subr.bf16.mxu0 %v7392
    %10384 = vmatpush1.bf16.msra.mxu0 %v7391
    %10385 = vmatprep.subr.bf16.mxu0 %v7400
    %10386 = vmatpush1.bf16.msra.mxu0 %v7399
    %10387 = vmatprep.mubr.bf16.mxu0 %v1866
    %10388 = vmatmul.mubr.bf16.gmra.mrb[0].mxu0 %v1865
    %v10389 = vpop.f32.mrb[0].mxu0
    %v10390 = vadd.f32 %v10347, %v10389
    %v10391 = vpop.f32.mrb[0].mxu0
    %v10392 = vadd.f32 %v10349, %v10391
    %v10393 = vpop.f32.mrb[0].mxu0
    %v10394 = vadd.f32 %v10351, %v10393
    %v10395 = vpop.f32.mrb[0].mxu0
    %v10396 = vadd.f32 %v10353, %v10395
    %10397 = vdwg.mxu0
    %10398 = vmatprep.subr.bf16.mxu0 %v7408
    %10399 = vmatpush1.bf16.msra.mxu0 %v7407
    %10400 = vmatprep.subr.bf16.mxu0 %v7416
    %10401 = vmatpush1.bf16.msra.mxu0 %v7415
    %10402 = vmatprep.subr.bf16.mxu0 %v7424
    %10403 = vmatpush1.bf16.msra.mxu0 %v7423
    %10404 = vmatprep.subr.bf16.mxu0 %v7432
    %10405 = vmatpush1.bf16.msra.mxu0 %v7431
    %10406 = vmatprep.subr.bf16.mxu0 %v7440
    %10407 = vmatpush1.bf16.msra.mxu0 %v7439
    %10408 = vmatprep.subr.bf16.mxu0 %v7448
    %10409 = vmatpush1.bf16.msra.mxu0 %v7447
    %10410 = vmatprep.subr.bf16.mxu0 %v7456
    %10411 = vmatpush1.bf16.msra.mxu0 %v7455
    %10412 = vmatprep.subr.bf16.mxu0 %v7464
    %10413 = vmatpush1.bf16.msra.mxu0 %v7463
    %10414 = vmatprep.subr.bf16.mxu0 %v7472
    %10415 = vmatpush1.bf16.msra.mxu0 %v7471
    %10416 = vmatprep.subr.bf16.mxu0 %v7480
    %10417 = vmatpush1.bf16.msra.mxu0 %v7479
    %10418 = vmatprep.subr.bf16.mxu0 %v7488
    %10419 = vmatpush1.bf16.msra.mxu0 %v7487
    %10420 = vmatprep.subr.bf16.mxu0 %v7496
    %10421 = vmatpush1.bf16.msra.mxu0 %v7495
    %10422 = vmatprep.subr.bf16.mxu0 %v7504
    %10423 = vmatpush1.bf16.msra.mxu0 %v7503
    %10424 = vmatprep.subr.bf16.mxu0 %v7512
    %10425 = vmatpush1.bf16.msra.mxu0 %v7511
    %10426 = vmatprep.subr.bf16.mxu0 %v7520
    %10427 = vmatpush1.bf16.msra.mxu0 %v7519
    %10428 = vmatprep.subr.bf16.mxu0 %v7528
    %10429 = vmatpush1.bf16.msra.mxu0 %v7527
    %10430 = vmatprep.mubr.bf16.mxu0 %v1868
    %10431 = vmatmul.mubr.bf16.gmra.mrb[0].mxu0 %v1867
    %v10432 = vpop.f32.mrb[0].mxu0
    %v10433 = vadd.f32 %v10390, %v10432
    %v10434 = vpop.f32.mrb[0].mxu0
    %v10435 = vadd.f32 %v10392, %v10434
    %v10436 = vpop.f32.mrb[0].mxu0
    %v10437 = vadd.f32 %v10394, %v10436
    %v10438 = vpop.f32.mrb[0].mxu0
    %v10439 = vadd.f32 %v10396, %v10438
    %10440 = vdwg.mxu0
    %10441 = vmatprep.subr.bf16.mxu0 %v7536
    %10442 = vmatpush1.bf16.msra.mxu0 %v7535
    %10443 = vmatprep.subr.bf16.mxu0 %v7544
    %10444 = vmatpush1.bf16.msra.mxu0 %v7543
    %10445 = vmatprep.subr.bf16.mxu0 %v7552
    %10446 = vmatpush1.bf16.msra.mxu0 %v7551
    %10447 = vmatprep.subr.bf16.mxu0 %v7560
    %10448 = vmatpush1.bf16.msra.mxu0 %v7559
    %10449 = vmatprep.subr.bf16.mxu0 %v7568
    %10450 = vmatpush1.bf16.msra.mxu0 %v7567
    %10451 = vmatprep.subr.bf16.mxu0 %v7576
    %10452 = vmatpush1.bf16.msra.mxu0 %v7575
    %10453 = vmatprep.subr.bf16.mxu0 %v7584
    %10454 = vmatpush1.bf16.msra.mxu0 %v7583
    %10455 = vmatprep.subr.bf16.mxu0 %v7592
    %10456 = vmatpush1.bf16.msra.mxu0 %v7591
    %10457 = vmatprep.subr.bf16.mxu0 %v7600
    %10458 = vmatpush1.bf16.msra.mxu0 %v7599
    %10459 = vmatprep.subr.bf16.mxu0 %v7608
    %10460 = vmatpush1.bf16.msra.mxu0 %v7607
    %10461 = vmatprep.subr.bf16.mxu0 %v7616
    %10462 = vmatpush1.bf16.msra.mxu0 %v7615
    %10463 = vmatprep.subr.bf16.mxu0 %v7624
    %10464 = vmatpush1.bf16.msra.mxu0 %v7623
    %10465 = vmatprep.subr.bf16.mxu0 %v7632
    %10466 = vmatpush1.bf16.msra.mxu0 %v7631
    %10467 = vmatprep.subr.bf16.mxu0 %v7640
    %10468 = vmatpush1.bf16.msra.mxu0 %v7639
    %10469 = vmatprep.subr.bf16.mxu0 %v7648
    %10470 = vmatpush1.bf16.msra.mxu0 %v7647
    %10471 = vmatprep.subr.bf16.mxu0 %v7656
    %10472 = vmatpush1.bf16.msra.mxu0 %v7655
    %10473 = vmatprep.mubr.bf16.mxu0 %v1870
    %10474 = vmatmul.mubr.bf16.gmra.mrb[0].mxu0 %v1869
    %v10475 = vpop.f32.mrb[0].mxu0
    %v10476 = vadd.f32 %v10433, %v10475
    %v10477 = vpop.f32.mrb[0].mxu0
    %v10478 = vadd.f32 %v10435, %v10477
    %v10479 = vpop.f32.mrb[0].mxu0
    %v10480 = vadd.f32 %v10437, %v10479
    %v10481 = vpop.f32.mrb[0].mxu0
    %v10482 = vadd.f32 %v10439, %v10481
    %10483 = vdwg.mxu0
    %10484 = vmatprep.subr.bf16.mxu0 %v7664
    %10485 = vmatpush1.bf16.msra.mxu0 %v7663
    %10486 = vmatprep.subr.bf16.mxu0 %v7672
    %10487 = vmatpush1.bf16.msra.mxu0 %v7671
    %10488 = vmatprep.subr.bf16.mxu0 %v7680
    %10489 = vmatpush1.bf16.msra.mxu0 %v7679
    %10490 = vmatprep.subr.bf16.mxu0 %v7688
    %10491 = vmatpush1.bf16.msra.mxu0 %v7687
    %10492 = vmatprep.subr.bf16.mxu0 %v7696
    %10493 = vmatpush1.bf16.msra.mxu0 %v7695
    %10494 = vmatprep.subr.bf16.mxu0 %v7704
    %10495 = vmatpush1.bf16.msra.mxu0 %v7703
    %10496 = vmatprep.subr.bf16.mxu0 %v7712
    %10497 = vmatpush1.bf16.msra.mxu0 %v7711
    %10498 = vmatprep.subr.bf16.mxu0 %v7720
    %10499 = vmatpush1.bf16.msra.mxu0 %v7719
    %10500 = vmatprep.subr.bf16.mxu0 %v7728
    %10501 = vmatpush1.bf16.msra.mxu0 %v7727
    %10502 = vmatprep.subr.bf16.mxu0 %v7736
    %10503 = vmatpush1.bf16.msra.mxu0 %v7735
    %10504 = vmatprep.subr.bf16.mxu0 %v7744
    %10505 = vmatpush1.bf16.msra.mxu0 %v7743
    %10506 = vmatprep.subr.bf16.mxu0 %v7752
    %10507 = vmatpush1.bf16.msra.mxu0 %v7751
    %10508 = vmatprep.subr.bf16.mxu0 %v7760
    %10509 = vmatpush1.bf16.msra.mxu0 %v7759
    %10510 = vmatprep.subr.bf16.mxu0 %v7768
    %10511 = vmatpush1.bf16.msra.mxu0 %v7767
    %10512 = vmatprep.subr.bf16.mxu0 %v7776
    %10513 = vmatpush1.bf16.msra.mxu0 %v7775
    %10514 = vmatprep.subr.bf16.mxu0 %v7784
    %10515 = vmatpush1.bf16.msra.mxu0 %v7783
    %10516 = vmatprep.mubr.bf16.mxu0 %v1872
    %10517 = vmatmul.mubr.bf16.gmra.mrb[0].mxu0 %v1871
    %v10518 = vpop.f32.mrb[0].mxu0
    %v10519 = vadd.f32 %v10476, %v10518
    %v10520 = vpop.f32.mrb[0].mxu0
    %v10521 = vadd.f32 %v10478, %v10520
    %v10522 = vpop.f32.mrb[0].mxu0
    %v10523 = vadd.f32 %v10480, %v10522
    %v10524 = vpop.f32.mrb[0].mxu0
    %v10525 = vadd.f32 %v10482, %v10524
    %10526 = vdwg.mxu0
    %10527 = vmatprep.subr.bf16.mxu0 %v7792
    %10528 = vmatpush1.bf16.msra.mxu0 %v7791
    %10529 = vmatprep.subr.bf16.mxu0 %v7800
    %10530 = vmatpush1.bf16.msra.mxu0 %v7799
    %10531 = vmatprep.subr.bf16.mxu0 %v7808
    %10532 = vmatpush1.bf16.msra.mxu0 %v7807
    %10533 = vmatprep.subr.bf16.mxu0 %v7816
    %10534 = vmatpush1.bf16.msra.mxu0 %v7815
    %10535 = vmatprep.subr.bf16.mxu0 %v7824
    %10536 = vmatpush1.bf16.msra.mxu0 %v7823
    %10537 = vmatprep.subr.bf16.mxu0 %v7832
    %10538 = vmatpush1.bf16.msra.mxu0 %v7831
    %10539 = vmatprep.subr.bf16.mxu0 %v7840
    %10540 = vmatpush1.bf16.msra.mxu0 %v7839
    %10541 = vmatprep.subr.bf16.mxu0 %v7848
    %10542 = vmatpush1.bf16.msra.mxu0 %v7847
    %10543 = vmatprep.subr.bf16.mxu0 %v7856
    %10544 = vmatpush1.bf16.msra.mxu0 %v7855
    %10545 = vmatprep.subr.bf16.mxu0 %v7864
    %10546 = vmatpush1.bf16.msra.mxu0 %v7863
    %10547 = vmatprep.subr.bf16.mxu0 %v7872
    %10548 = vmatpush1.bf16.msra.mxu0 %v7871
    %10549 = vmatprep.subr.bf16.mxu0 %v7880
    %10550 = vmatpush1.bf16.msra.mxu0 %v7879
    %10551 = vmatprep.subr.bf16.mxu0 %v7888
    %10552 = vmatpush1.bf16.msra.mxu0 %v7887
    %10553 = vmatprep.subr.bf16.mxu0 %v7896
    %10554 = vmatpush1.bf16.msra.mxu0 %v7895
    %10555 = vmatprep.subr.bf16.mxu0 %v7904
    %10556 = vmatpush1.bf16.msra.mxu0 %v7903
    %10557 = vmatprep.subr.bf16.mxu0 %v7912
    %10558 = vmatpush1.bf16.msra.mxu0 %v7911
    %10559 = vmatprep.mubr.bf16.mxu0 %v1874
    %10560 = vmatmul.mubr.bf16.gmra.mrb[0].mxu0 %v1873
    %v10561 = vpop.f32.mrb[0].mxu0
    %v10562 = vadd.f32 %v10519, %v10561
    %v10563 = vpop.f32.mrb[0].mxu0
    %v10564 = vadd.f32 %v10521, %v10563
    %v10565 = vpop.f32.mrb[0].mxu0
    %v10566 = vadd.f32 %v10523, %v10565
    %v10567 = vpop.f32.mrb[0].mxu0
    %v10568 = vadd.f32 %v10525, %v10567
    %10569 = vdwg.mxu0
    %10570 = vmatprep.subr.bf16.mxu0 %v7920
    %10571 = vmatpush1.bf16.msra.mxu0 %v7919
    %10572 = vmatprep.subr.bf16.mxu0 %v7928
    %10573 = vmatpush1.bf16.msra.mxu0 %v7927
    %10574 = vmatprep.subr.bf16.mxu0 %v7936
    %10575 = vmatpush1.bf16.msra.mxu0 %v7935
    %10576 = vmatprep.subr.bf16.mxu0 %v7944
    %10577 = vmatpush1.bf16.msra.mxu0 %v7943
    %10578 = vmatprep.subr.bf16.mxu0 %v7952
    %10579 = vmatpush1.bf16.msra.mxu0 %v7951
    %10580 = vmatprep.subr.bf16.mxu0 %v7960
    %10581 = vmatpush1.bf16.msra.mxu0 %v7959
    %10582 = vmatprep.subr.bf16.mxu0 %v7968
    %10583 = vmatpush1.bf16.msra.mxu0 %v7967
    %10584 = vmatprep.subr.bf16.mxu0 %v7976
    %10585 = vmatpush1.bf16.msra.mxu0 %v7975
    %10586 = vmatprep.subr.bf16.mxu0 %v7984
    %10587 = vmatpush1.bf16.msra.mxu0 %v7983
    %10588 = vmatprep.subr.bf16.mxu0 %v7992
    %10589 = vmatpush1.bf16.msra.mxu0 %v7991
    %10590 = vmatprep.subr.bf16.mxu0 %v8000
    %10591 = vmatpush1.bf16.msra.mxu0 %v7999
    %10592 = vmatprep.subr.bf16.mxu0 %v8008
    %10593 = vmatpush1.bf16.msra.mxu0 %v8007
    %10594 = vmatprep.subr.bf16.mxu0 %v8016
    %10595 = vmatpush1.bf16.msra.mxu0 %v8015
    %10596 = vmatprep.subr.bf16.mxu0 %v8024
    %10597 = vmatpush1.bf16.msra.mxu0 %v8023
    %10598 = vmatprep.subr.bf16.mxu0 %v8032
    %10599 = vmatpush1.bf16.msra.mxu0 %v8031
    %10600 = vmatprep.subr.bf16.mxu0 %v8040
    %10601 = vmatpush1.bf16.msra.mxu0 %v8039
    %10602 = vmatprep.mubr.bf16.mxu0 %v1876
    %10603 = vmatmul.mubr.bf16.gmra.mrb[0].mxu0 %v1875
    %v10604 = vpop.f32.mrb[0].mxu0
    %v10605 = vadd.f32 %v10562, %v10604
    %v10606 = vpop.f32.mrb[0].mxu0
    %v10607 = vadd.f32 %v10564, %v10606
    %v10608 = vpop.f32.mrb[0].mxu0
    %v10609 = vadd.f32 %v10566, %v10608
    %v10610 = vpop.f32.mrb[0].mxu0
    %v10611 = vadd.f32 %v10568, %v10610
    %10612 = vdwg.mxu0
    %10613 = vmatprep.subr.bf16.mxu0 %v6514
    %10614 = vmatpush1.bf16.msra.mxu0 %v6513
    %10615 = vmatprep.subr.bf16.mxu0 %v6522
    %10616 = vmatpush1.bf16.msra.mxu0 %v6521
    %10617 = vmatprep.subr.bf16.mxu0 %v6530
    %10618 = vmatpush1.bf16.msra.mxu0 %v6529
    %10619 = vmatprep.subr.bf16.mxu0 %v6538
    %10620 = vmatpush1.bf16.msra.mxu0 %v6537
    %10621 = vmatprep.subr.bf16.mxu0 %v6546
    %10622 = vmatpush1.bf16.msra.mxu0 %v6545
    %10623 = vmatprep.subr.bf16.mxu0 %v6554
    %10624 = vmatpush1.bf16.msra.mxu0 %v6553
    %10625 = vmatprep.subr.bf16.mxu0 %v6562
    %10626 = vmatpush1.bf16.msra.mxu0 %v6561
    %10627 = vmatprep.subr.bf16.mxu0 %v6570
    %10628 = vmatpush1.bf16.msra.mxu0 %v6569
    %10629 = vmatprep.subr.bf16.mxu0 %v6578
    %10630 = vmatpush1.bf16.msra.mxu0 %v6577
    %10631 = vmatprep.subr.bf16.mxu0 %v6586
    %10632 = vmatpush1.bf16.msra.mxu0 %v6585
    %10633 = vmatprep.subr.bf16.mxu0 %v6594
    %10634 = vmatpush1.bf16.msra.mxu0 %v6593
    %10635 = vmatprep.subr.bf16.mxu0 %v6602
    %10636 = vmatpush1.bf16.msra.mxu0 %v6601
    %10637 = vmatprep.subr.bf16.mxu0 %v6610
    %10638 = vmatpush1.bf16.msra.mxu0 %v6609
    %10639 = vmatprep.subr.bf16.mxu0 %v6618
    %10640 = vmatpush1.bf16.msra.mxu0 %v6617
    %10641 = vmatprep.subr.bf16.mxu0 %v6626
    %10642 = vmatpush1.bf16.msra.mxu0 %v6625
    %10643 = vmatprep.subr.bf16.mxu0 %v6634
    %10644 = vmatpush1.bf16.msra.mxu0 %v6633
    %10645 = vmatprep.mubr.bf16.mxu0 %v1854
    %10646 = vmatmul.mubr.bf16.gmra.mrb[0].mxu0 %v1853
    %v10647 = vpop.f32.mrb[0].mxu0
    %v10648 = vadd.f32 %v1760, %v10647
    %v10649 = vpop.f32.mrb[0].mxu0
    %v10650 = vadd.f32 %v1764, %v10649
    %v10651 = vpop.f32.mrb[0].mxu0
    %v10652 = vadd.f32 %v1760, %v10651
    %v10653 = vpop.f32.mrb[0].mxu0
    %v10654 = vadd.f32 %v1764, %v10653
    %10655 = vdwg.mxu0
    %10656 = vmatprep.subr.bf16.mxu0 %v6642
    %10657 = vmatpush1.bf16.msra.mxu0 %v6641
    %10658 = vmatprep.subr.bf16.mxu0 %v6650
    %10659 = vmatpush1.bf16.msra.mxu0 %v6649
    %10660 = vmatprep.subr.bf16.mxu0 %v6658
    %10661 = vmatpush1.bf16.msra.mxu0 %v6657
    %10662 = vmatprep.subr.bf16.mxu0 %v6666
    %10663 = vmatpush1.bf16.msra.mxu0 %v6665
    %10664 = vmatprep.subr.bf16.mxu0 %v6674
    %10665 = vmatpush1.bf16.msra.mxu0 %v6673
    %10666 = vmatprep.subr.bf16.mxu0 %v6682
    %10667 = vmatpush1.bf16.msra.mxu0 %v6681
    %10668 = vmatprep.subr.bf16.mxu0 %v6690
    %10669 = vmatpush1.bf16.msra.mxu0 %v6689
    %10670 = vmatprep.subr.bf16.mxu0 %v6698
    %10671 = vmatpush1.bf16.msra.mxu0 %v6697
    %10672 = vmatprep.subr.bf16.mxu0 %v6706
    %10673 = vmatpush1.bf16.msra.mxu0 %v6705
    %10674 = vmatprep.subr.bf16.mxu0 %v6714
    %10675 = vmatpush1.bf16.msra.mxu0 %v6713
    %10676 = vmatprep.subr.bf16.mxu0 %v6722
    %10677 = vmatpush1.bf16.msra.mxu0 %v6721
    %10678 = vmatprep.subr.bf16.mxu0 %v6730
    %10679 = vmatpush1.bf16.msra.mxu0 %v6729
    %10680 = vmatprep.subr.bf16.mxu0 %v6738
    %10681 = vmatpush1.bf16.msra.mxu0 %v6737
    %10682 = vmatprep.subr.bf16.mxu0 %v6746
    %10683 = vmatpush1.bf16.msra.mxu0 %v6745
    %10684 = vmatprep.subr.bf16.mxu0 %v6754
    %10685 = vmatpush1.bf16.msra.mxu0 %v6753
    %10686 = vmatprep.subr.bf16.mxu0 %v6762
    %10687 = vmatpush1.bf16.msra.mxu0 %v6761
    %10688 = vmatprep.mubr.bf16.mxu0 %v1856
    %10689 = vmatmul.mubr.bf16.gmra.mrb[0].mxu0 %v1855
    %v10690 = vpop.f32.mrb[0].mxu0
    %v10691 = vadd.f32 %v10648, %v10690
    %v10692 = vpop.f32.mrb[0].mxu0
    %v10693 = vadd.f32 %v10650, %v10692
    %v10694 = vpop.f32.mrb[0].mxu0
    %v10695 = vadd.f32 %v10652, %v10694
    %v10696 = vpop.f32.mrb[0].mxu0
    %v10697 = vadd.f32 %v10654, %v10696
    %10698 = vdwg.mxu0
    %10699 = vmatprep.subr.bf16.mxu0 %v6770
    %10700 = vmatpush1.bf16.msra.mxu0 %v6769
    %10701 = vmatprep.subr.bf16.mxu0 %v6778
    %10702 = vmatpush1.bf16.msra.mxu0 %v6777
    %10703 = vmatprep.subr.bf16.mxu0 %v6786
    %10704 = vmatpush1.bf16.msra.mxu0 %v6785
    %10705 = vmatprep.subr.bf16.mxu0 %v6794
    %10706 = vmatpush1.bf16.msra.mxu0 %v6793
    %10707 = vmatprep.subr.bf16.mxu0 %v6802
    %10708 = vmatpush1.bf16.msra.mxu0 %v6801
    %10709 = vmatprep.subr.bf16.mxu0 %v6810
    %10710 = vmatpush1.bf16.msra.mxu0 %v6809
    %10711 = vmatprep.subr.bf16.mxu0 %v6818
    %10712 = vmatpush1.bf16.msra.mxu0 %v6817
    %10713 = vmatprep.subr.bf16.mxu0 %v6826
    %10714 = vmatpush1.bf16.msra.mxu0 %v6825
    %10715 = vmatprep.subr.bf16.mxu0 %v6834
    %10716 = vmatpush1.bf16.msra.mxu0 %v6833
    %10717 = vmatprep.subr.bf16.mxu0 %v6842
    %10718 = vmatpush1.bf16.msra.mxu0 %v6841
    %10719 = vmatprep.subr.bf16.mxu0 %v6850
    %10720 = vmatpush1.bf16.msra.mxu0 %v6849
    %10721 = vmatprep.subr.bf16.mxu0 %v6858
    %10722 = vmatpush1.bf16.msra.mxu0 %v6857
    %10723 = vmatprep.subr.bf16.mxu0 %v6866
    %10724 = vmatpush1.bf16.msra.mxu0 %v6865
    %10725 = vmatprep.subr.bf16.mxu0 %v6874
    %10726 = vmatpush1.bf16.msra.mxu0 %v6873
    %10727 = vmatprep.subr.bf16.mxu0 %v6882
    %10728 = vmatpush1.bf16.msra.mxu0 %v6881
    %10729 = vmatprep.subr.bf16.mxu0 %v6890
    %10730 = vmatpush1.bf16.msra.mxu0 %v6889
    %10731 = vmatprep.mubr.bf16.mxu0 %v1858
    %10732 = vmatmul.mubr.bf16.gmra.mrb[0].mxu0 %v1857
    %v10733 = vpop.f32.mrb[0].mxu0
    %v10734 = vadd.f32 %v10691, %v10733
    %v10735 = vpop.f32.mrb[0].mxu0
    %v10736 = vadd.f32 %v10693, %v10735
    %v10737 = vpop.f32.mrb[0].mxu0
    %v10738 = vadd.f32 %v10695, %v10737
    %v10739 = vpop.f32.mrb[0].mxu0
    %v10740 = vadd.f32 %v10697, %v10739
    %10741 = vdwg.mxu0
    %10742 = vmatprep.subr.bf16.mxu0 %v6898
    %10743 = vmatpush1.bf16.msra.mxu0 %v6897
    %10744 = vmatprep.subr.bf16.mxu0 %v6906
    %10745 = vmatpush1.bf16.msra.mxu0 %v6905
    %10746 = vmatprep.subr.bf16.mxu0 %v6914
    %10747 = vmatpush1.bf16.msra.mxu0 %v6913
    %10748 = vmatprep.subr.bf16.mxu0 %v6922
    %10749 = vmatpush1.bf16.msra.mxu0 %v6921
    %10750 = vmatprep.subr.bf16.mxu0 %v6930
    %10751 = vmatpush1.bf16.msra.mxu0 %v6929
    %10752 = vmatprep.subr.bf16.mxu0 %v6938
    %10753 = vmatpush1.bf16.msra.mxu0 %v6937
    %10754 = vmatprep.subr.bf16.mxu0 %v6946
    %10755 = vmatpush1.bf16.msra.mxu0 %v6945
    %10756 = vmatprep.subr.bf16.mxu0 %v6954
    %10757 = vmatpush1.bf16.msra.mxu0 %v6953
    %10758 = vmatprep.subr.bf16.mxu0 %v6962
    %10759 = vmatpush1.bf16.msra.mxu0 %v6961
    %10760 = vmatprep.subr.bf16.mxu0 %v6970
    %10761 = vmatpush1.bf16.msra.mxu0 %v6969
    %10762 = vmatprep.subr.bf16.mxu0 %v6978
    %10763 = vmatpush1.bf16.msra.mxu0 %v6977
    %10764 = vmatprep.subr.bf16.mxu0 %v6986
    %10765 = vmatpush1.bf16.msra.mxu0 %v6985
    %10766 = vmatprep.subr.bf16.mxu0 %v6994
    %10767 = vmatpush1.bf16.msra.mxu0 %v6993
    %10768 = vmatprep.subr.bf16.mxu0 %v7002
    %10769 = vmatpush1.bf16.msra.mxu0 %v7001
    %10770 = vmatprep.subr.bf16.mxu0 %v7010
    %10771 = vmatpush1.bf16.msra.mxu0 %v7009
    %10772 = vmatprep.subr.bf16.mxu0 %v7018
    %10773 = vmatpush1.bf16.msra.mxu0 %v7017
    %10774 = vmatprep.mubr.bf16.mxu0 %v1860
    %10775 = vmatmul.mubr.bf16.gmra.mrb[0].mxu0 %v1859
    %v10776 = vpop.f32.mrb[0].mxu0
    %v10777 = vadd.f32 %v10734, %v10776
    %v10778 = vpop.f32.mrb[0].mxu0
    %v10779 = vadd.f32 %v10736, %v10778
    %v10780 = vpop.f32.mrb[0].mxu0
    %v10781 = vadd.f32 %v10738, %v10780
    %v10782 = vpop.f32.mrb[0].mxu0
    %v10783 = vadd.f32 %v10740, %v10782
    %10784 = vdwg.mxu0
    %10785 = vmatprep.subr.bf16.mxu0 %v7026
    %10786 = vmatpush1.bf16.msra.mxu0 %v7025
    %10787 = vmatprep.subr.bf16.mxu0 %v7034
    %10788 = vmatpush1.bf16.msra.mxu0 %v7033
    %10789 = vmatprep.subr.bf16.mxu0 %v7042
    %10790 = vmatpush1.bf16.msra.mxu0 %v7041
    %10791 = vmatprep.subr.bf16.mxu0 %v7050
    %10792 = vmatpush1.bf16.msra.mxu0 %v7049
    %10793 = vmatprep.subr.bf16.mxu0 %v7058
    %10794 = vmatpush1.bf16.msra.mxu0 %v7057
    %10795 = vmatprep.subr.bf16.mxu0 %v7066
    %10796 = vmatpush1.bf16.msra.mxu0 %v7065
    %10797 = vmatprep.subr.bf16.mxu0 %v7074
    %10798 = vmatpush1.bf16.msra.mxu0 %v7073
    %10799 = vmatprep.subr.bf16.mxu0 %v7082
    %10800 = vmatpush1.bf16.msra.mxu0 %v7081
    %10801 = vmatprep.subr.bf16.mxu0 %v7090
    %10802 = vmatpush1.bf16.msra.mxu0 %v7089
    %10803 = vmatprep.subr.bf16.mxu0 %v7098
    %10804 = vmatpush1.bf16.msra.mxu0 %v7097
    %10805 = vmatprep.subr.bf16.mxu0 %v7106
    %10806 = vmatpush1.bf16.msra.mxu0 %v7105
    %10807 = vmatprep.subr.bf16.mxu0 %v7114
    %10808 = vmatpush1.bf16.msra.mxu0 %v7113
    %10809 = vmatprep.subr.bf16.mxu0 %v7122
    %10810 = vmatpush1.bf16.msra.mxu0 %v7121
    %10811 = vmatprep.subr.bf16.mxu0 %v7130
    %10812 = vmatpush1.bf16.msra.mxu0 %v7129
    %10813 = vmatprep.subr.bf16.mxu0 %v7138
    %10814 = vmatpush1.bf16.msra.mxu0 %v7137
    %10815 = vmatprep.subr.bf16.mxu0 %v7146
    %10816 = vmatpush1.bf16.msra.mxu0 %v7145
    %10817 = vmatprep.mubr.bf16.mxu0 %v1862
    %10818 = vmatmul.mubr.bf16.gmra.mrb[0].mxu0 %v1861
    %v10819 = vpop.f32.mrb[0].mxu0
    %v10820 = vadd.f32 %v10777, %v10819
    %v10821 = vpop.f32.mrb[0].mxu0
    %v10822 = vadd.f32 %v10779, %v10821
    %v10823 = vpop.f32.mrb[0].mxu0
    %v10824 = vadd.f32 %v10781, %v10823
    %v10825 = vpop.f32.mrb[0].mxu0
    %v10826 = vadd.f32 %v10783, %v10825
    %10827 = vdwg.mxu0
    %10828 = vmatprep.subr.bf16.mxu0 %v7154
    %10829 = vmatpush1.bf16.msra.mxu0 %v7153
    %10830 = vmatprep.subr.bf16.mxu0 %v7162
    %10831 = vmatpush1.bf16.msra.mxu0 %v7161
    %10832 = vmatprep.subr.bf16.mxu0 %v7170
    %10833 = vmatpush1.bf16.msra.mxu0 %v7169
    %10834 = vmatprep.subr.bf16.mxu0 %v7178
    %10835 = vmatpush1.bf16.msra.mxu0 %v7177
    %10836 = vmatprep.subr.bf16.mxu0 %v7186
    %10837 = vmatpush1.bf16.msra.mxu0 %v7185
    %10838 = vmatprep.subr.bf16.mxu0 %v7194
    %10839 = vmatpush1.bf16.msra.mxu0 %v7193
    %10840 = vmatprep.subr.bf16.mxu0 %v7202
    %10841 = vmatpush1.bf16.msra.mxu0 %v7201
    %10842 = vmatprep.subr.bf16.mxu0 %v7210
    %10843 = vmatpush1.bf16.msra.mxu0 %v7209
    %10844 = vmatprep.subr.bf16.mxu0 %v7218
    %10845 = vmatpush1.bf16.msra.mxu0 %v7217
    %10846 = vmatprep.subr.bf16.mxu0 %v7226
    %10847 = vmatpush1.bf16.msra.mxu0 %v7225
    %10848 = vmatprep.subr.bf16.mxu0 %v7234
    %10849 = vmatpush1.bf16.msra.mxu0 %v7233
    %10850 = vmatprep.subr.bf16.mxu0 %v7242
    %10851 = vmatpush1.bf16.msra.mxu0 %v7241
    %10852 = vmatprep.subr.bf16.mxu0 %v7250
    %10853 = vmatpush1.bf16.msra.mxu0 %v7249
    %10854 = vmatprep.subr.bf16.mxu0 %v7258
    %10855 = vmatpush1.bf16.msra.mxu0 %v7257
    %10856 = vmatprep.subr.bf16.mxu0 %v7266
    %10857 = vmatpush1.bf16.msra.mxu0 %v7265
    %10858 = vmatprep.subr.bf16.mxu0 %v7274
    %10859 = vmatpush1.bf16.msra.mxu0 %v7273
    %10860 = vmatprep.mubr.bf16.mxu0 %v1864
    %10861 = vmatmul.mubr.bf16.gmra.mrb[0].mxu0 %v1863
    %v10862 = vpop.f32.mrb[0].mxu0
    %v10863 = vadd.f32 %v10820, %v10862
    %v10864 = vpop.f32.mrb[0].mxu0
    %v10865 = vadd.f32 %v10822, %v10864
    %v10866 = vpop.f32.mrb[0].mxu0
    %v10867 = vadd.f32 %v10824, %v10866
    %v10868 = vpop.f32.mrb[0].mxu0
    %v10869 = vadd.f32 %v10826, %v10868
    %10870 = vdwg.mxu0
    %10871 = vmatprep.subr.bf16.mxu0 %v7282
    %10872 = vmatpush1.bf16.msra.mxu0 %v7281
    %10873 = vmatprep.subr.bf16.mxu0 %v7290
    %10874 = vmatpush1.bf16.msra.mxu0 %v7289
    %10875 = vmatprep.subr.bf16.mxu0 %v7298
    %10876 = vmatpush1.bf16.msra.mxu0 %v7297
    %10877 = vmatprep.subr.bf16.mxu0 %v7306
    %10878 = vmatpush1.bf16.msra.mxu0 %v7305
    %10879 = vmatprep.subr.bf16.mxu0 %v7314
    %10880 = vmatpush1.bf16.msra.mxu0 %v7313
    %10881 = vmatprep.subr.bf16.mxu0 %v7322
    %10882 = vmatpush1.bf16.msra.mxu0 %v7321
    %10883 = vmatprep.subr.bf16.mxu0 %v7330
    %10884 = vmatpush1.bf16.msra.mxu0 %v7329
    %10885 = vmatprep.subr.bf16.mxu0 %v7338
    %10886 = vmatpush1.bf16.msra.mxu0 %v7337
    %10887 = vmatprep.subr.bf16.mxu0 %v7346
    %10888 = vmatpush1.bf16.msra.mxu0 %v7345
    %10889 = vmatprep.subr.bf16.mxu0 %v7354
    %10890 = vmatpush1.bf16.msra.mxu0 %v7353
    %10891 = vmatprep.subr.bf16.mxu0 %v7362
    %10892 = vmatpush1.bf16.msra.mxu0 %v7361
    %10893 = vmatprep.subr.bf16.mxu0 %v7370
    %10894 = vmatpush1.bf16.msra.mxu0 %v7369
    %10895 = vmatprep.subr.bf16.mxu0 %v7378
    %10896 = vmatpush1.bf16.msra.mxu0 %v7377
    %10897 = vmatprep.subr.bf16.mxu0 %v7386
    %10898 = vmatpush1.bf16.msra.mxu0 %v7385
    %10899 = vmatprep.subr.bf16.mxu0 %v7394
    %10900 = vmatpush1.bf16.msra.mxu0 %v7393
    %10901 = vmatprep.subr.bf16.mxu0 %v7402
    %10902 = vmatpush1.bf16.msra.mxu0 %v7401
    %10903 = vmatprep.mubr.bf16.mxu0 %v1866
    %10904 = vmatmul.mubr.bf16.gmra.mrb[0].mxu0 %v1865
    %v10905 = vpop.f32.mrb[0].mxu0
    %v10906 = vadd.f32 %v10863, %v10905
    %v10907 = vpop.f32.mrb[0].mxu0
    %v10908 = vadd.f32 %v10865, %v10907
    %v10909 = vpop.f32.mrb[0].mxu0
    %v10910 = vadd.f32 %v10867, %v10909
    %v10911 = vpop.f32.mrb[0].mxu0
    %v10912 = vadd.f32 %v10869, %v10911
    %10913 = vdwg.mxu0
    %10914 = vmatprep.subr.bf16.mxu0 %v7410
    %10915 = vmatpush1.bf16.msra.mxu0 %v7409
    %10916 = vmatprep.subr.bf16.mxu0 %v7418
    %10917 = vmatpush1.bf16.msra.mxu0 %v7417
    %10918 = vmatprep.subr.bf16.mxu0 %v7426
    %10919 = vmatpush1.bf16.msra.mxu0 %v7425
    %10920 = vmatprep.subr.bf16.mxu0 %v7434
    %10921 = vmatpush1.bf16.msra.mxu0 %v7433
    %10922 = vmatprep.subr.bf16.mxu0 %v7442
    %10923 = vmatpush1.bf16.msra.mxu0 %v7441
    %10924 = vmatprep.subr.bf16.mxu0 %v7450
    %10925 = vmatpush1.bf16.msra.mxu0 %v7449
    %10926 = vmatprep.subr.bf16.mxu0 %v7458
    %10927 = vmatpush1.bf16.msra.mxu0 %v7457
    %10928 = vmatprep.subr.bf16.mxu0 %v7466
    %10929 = vmatpush1.bf16.msra.mxu0 %v7465
    %10930 = vmatprep.subr.bf16.mxu0 %v7474
    %10931 = vmatpush1.bf16.msra.mxu0 %v7473
    %10932 = vmatprep.subr.bf16.mxu0 %v7482
    %10933 = vmatpush1.bf16.msra.mxu0 %v7481
    %10934 = vmatprep.subr.bf16.mxu0 %v7490
    %10935 = vmatpush1.bf16.msra.mxu0 %v7489
    %10936 = vmatprep.subr.bf16.mxu0 %v7498
    %10937 = vmatpush1.bf16.msra.mxu0 %v7497
    %10938 = vmatprep.subr.bf16.mxu0 %v7506
    %10939 = vmatpush1.bf16.msra.mxu0 %v7505
    %10940 = vmatprep.subr.bf16.mxu0 %v7514
    %10941 = vmatpush1.bf16.msra.mxu0 %v7513
    %10942 = vmatprep.subr.bf16.mxu0 %v7522
    %10943 = vmatpush1.bf16.msra.mxu0 %v7521
    %10944 = vmatprep.subr.bf16.mxu0 %v7530
    %10945 = vmatpush1.bf16.msra.mxu0 %v7529
    %10946 = vmatprep.mubr.bf16.mxu0 %v1868
    %10947 = vmatmul.mubr.bf16.gmra.mrb[0].mxu0 %v1867
    %v10948 = vpop.f32.mrb[0].mxu0
    %v10949 = vadd.f32 %v10906, %v10948
    %v10950 = vpop.f32.mrb[0].mxu0
    %v10951 = vadd.f32 %v10908, %v10950
    %v10952 = vpop.f32.mrb[0].mxu0
    %v10953 = vadd.f32 %v10910, %v10952
    %v10954 = vpop.f32.mrb[0].mxu0
    %v10955 = vadd.f32 %v10912, %v10954
    %10956 = vdwg.mxu0
    %10957 = vmatprep.subr.bf16.mxu0 %v7538
    %10958 = vmatpush1.bf16.msra.mxu0 %v7537
    %10959 = vmatprep.subr.bf16.mxu0 %v7546
    %10960 = vmatpush1.bf16.msra.mxu0 %v7545
    %10961 = vmatprep.subr.bf16.mxu0 %v7554
    %10962 = vmatpush1.bf16.msra.mxu0 %v7553
    %10963 = vmatprep.subr.bf16.mxu0 %v7562
    %10964 = vmatpush1.bf16.msra.mxu0 %v7561
    %10965 = vmatprep.subr.bf16.mxu0 %v7570
    %10966 = vmatpush1.bf16.msra.mxu0 %v7569
    %10967 = vmatprep.subr.bf16.mxu0 %v7578
    %10968 = vmatpush1.bf16.msra.mxu0 %v7577
    %10969 = vmatprep.subr.bf16.mxu0 %v7586
    %10970 = vmatpush1.bf16.msra.mxu0 %v7585
    %10971 = vmatprep.subr.bf16.mxu0 %v7594
    %10972 = vmatpush1.bf16.msra.mxu0 %v7593
    %10973 = vmatprep.subr.bf16.mxu0 %v7602
    %10974 = vmatpush1.bf16.msra.mxu0 %v7601
    %10975 = vmatprep.subr.bf16.mxu0 %v7610
    %10976 = vmatpush1.bf16.msra.mxu0 %v7609
    %10977 = vmatprep.subr.bf16.mxu0 %v7618
    %10978 = vmatpush1.bf16.msra.mxu0 %v7617
    %10979 = vmatprep.subr.bf16.mxu0 %v7626
    %10980 = vmatpush1.bf16.msra.mxu0 %v7625
    %10981 = vmatprep.subr.bf16.mxu0 %v7634
    %10982 = vmatpush1.bf16.msra.mxu0 %v7633
    %10983 = vmatprep.subr.bf16.mxu0 %v7642
    %10984 = vmatpush1.bf16.msra.mxu0 %v7641
    %10985 = vmatprep.subr.bf16.mxu0 %v7650
    %10986 = vmatpush1.bf16.msra.mxu0 %v7649
    %10987 = vmatprep.subr.bf16.mxu0 %v7658
    %10988 = vmatpush1.bf16.msra.mxu0 %v7657
    %10989 = vmatprep.mubr.bf16.mxu0 %v1870
    %10990 = vmatmul.mubr.bf16.gmra.mrb[0].mxu0 %v1869
    %v10991 = vpop.f32.mrb[0].mxu0
    %v10992 = vadd.f32 %v10949, %v10991
    %v10993 = vpop.f32.mrb[0].mxu0
    %v10994 = vadd.f32 %v10951, %v10993
    %v10995 = vpop.f32.mrb[0].mxu0
    %v10996 = vadd.f32 %v10953, %v10995
    %v10997 = vpop.f32.mrb[0].mxu0
    %v10998 = vadd.f32 %v10955, %v10997
    %10999 = vdwg.mxu0
    %11000 = vmatprep.subr.bf16.mxu0 %v7666
    %11001 = vmatpush1.bf16.msra.mxu0 %v7665
    %11002 = vmatprep.subr.bf16.mxu0 %v7674
    %11003 = vmatpush1.bf16.msra.mxu0 %v7673
    %11004 = vmatprep.subr.bf16.mxu0 %v7682
    %11005 = vmatpush1.bf16.msra.mxu0 %v7681
    %11006 = vmatprep.subr.bf16.mxu0 %v7690
    %11007 = vmatpush1.bf16.msra.mxu0 %v7689
    %11008 = vmatprep.subr.bf16.mxu0 %v7698
    %11009 = vmatpush1.bf16.msra.mxu0 %v7697
    %11010 = vmatprep.subr.bf16.mxu0 %v7706
    %11011 = vmatpush1.bf16.msra.mxu0 %v7705
    %11012 = vmatprep.subr.bf16.mxu0 %v7714
    %11013 = vmatpush1.bf16.msra.mxu0 %v7713
    %11014 = vmatprep.subr.bf16.mxu0 %v7722
    %11015 = vmatpush1.bf16.msra.mxu0 %v7721
    %11016 = vmatprep.subr.bf16.mxu0 %v7730
    %11017 = vmatpush1.bf16.msra.mxu0 %v7729
    %11018 = vmatprep.subr.bf16.mxu0 %v7738
    %11019 = vmatpush1.bf16.msra.mxu0 %v7737
    %11020 = vmatprep.subr.bf16.mxu0 %v7746
    %11021 = vmatpush1.bf16.msra.mxu0 %v7745
    %11022 = vmatprep.subr.bf16.mxu0 %v7754
    %11023 = vmatpush1.bf16.msra.mxu0 %v7753
    %11024 = vmatprep.subr.bf16.mxu0 %v7762
    %11025 = vmatpush1.bf16.msra.mxu0 %v7761
    %11026 = vmatprep.subr.bf16.mxu0 %v7770
    %11027 = vmatpush1.bf16.msra.mxu0 %v7769
    %11028 = vmatprep.subr.bf16.mxu0 %v7778
    %11029 = vmatpush1.bf16.msra.mxu0 %v7777
    %11030 = vmatprep.subr.bf16.mxu0 %v7786
    %11031 = vmatpush1.bf16.msra.mxu0 %v7785
    %11032 = vmatprep.mubr.bf16.mxu0 %v1872
    %11033 = vmatmul.mubr.bf16.gmra.mrb[0].mxu0 %v1871
    %v11034 = vpop.f32.mrb[0].mxu0
    %v11035 = vadd.f32 %v10992, %v11034
    %v11036 = vpop.f32.mrb[0].mxu0
    %v11037 = vadd.f32 %v10994, %v11036
    %v11038 = vpop.f32.mrb[0].mxu0
    %v11039 = vadd.f32 %v10996, %v11038
    %v11040 = vpop.f32.mrb[0].mxu0
    %v11041 = vadd.f32 %v10998, %v11040
    %11042 = vdwg.mxu0
    %11043 = vmatprep.subr.bf16.mxu0 %v7794
    %11044 = vmatpush1.bf16.msra.mxu0 %v7793
    %11045 = vmatprep.subr.bf16.mxu0 %v7802
    %11046 = vmatpush1.bf16.msra.mxu0 %v7801
    %11047 = vmatprep.subr.bf16.mxu0 %v7810
    %11048 = vmatpush1.bf16.msra.mxu0 %v7809
    %11049 = vmatprep.subr.bf16.mxu0 %v7818
    %11050 = vmatpush1.bf16.msra.mxu0 %v7817
    %11051 = vmatprep.subr.bf16.mxu0 %v7826
    %11052 = vmatpush1.bf16.msra.mxu0 %v7825
    %11053 = vmatprep.subr.bf16.mxu0 %v7834
    %11054 = vmatpush1.bf16.msra.mxu0 %v7833
    %11055 = vmatprep.subr.bf16.mxu0 %v7842
    %11056 = vmatpush1.bf16.msra.mxu0 %v7841
    %11057 = vmatprep.subr.bf16.mxu0 %v7850
    %11058 = vmatpush1.bf16.msra.mxu0 %v7849
    %11059 = vmatprep.subr.bf16.mxu0 %v7858
    %11060 = vmatpush1.bf16.msra.mxu0 %v7857
    %11061 = vmatprep.subr.bf16.mxu0 %v7866
    %11062 = vmatpush1.bf16.msra.mxu0 %v7865
    %11063 = vmatprep.subr.bf16.mxu0 %v7874
    %11064 = vmatpush1.bf16.msra.mxu0 %v7873
    %11065 = vmatprep.subr.bf16.mxu0 %v7882
    %11066 = vmatpush1.bf16.msra.mxu0 %v7881
    %11067 = vmatprep.subr.bf16.mxu0 %v7890
    %11068 = vmatpush1.bf16.msra.mxu0 %v7889
    %11069 = vmatprep.subr.bf16.mxu0 %v7898
    %11070 = vmatpush1.bf16.msra.mxu0 %v7897
    %11071 = vmatprep.subr.bf16.mxu0 %v7906
    %11072 = vmatpush1.bf16.msra.mxu0 %v7905
    %11073 = vmatprep.subr.bf16.mxu0 %v7914
    %11074 = vmatpush1.bf16.msra.mxu0 %v7913
    %11075 = vmatprep.mubr.bf16.mxu0 %v1874
    %11076 = vmatmul.mubr.bf16.gmra.mrb[0].mxu0 %v1873
    %v11077 = vpop.f32.mrb[0].mxu0
    %v11078 = vadd.f32 %v11035, %v11077
    %v11079 = vpop.f32.mrb[0].mxu0
    %v11080 = vadd.f32 %v11037, %v11079
    %v11081 = vpop.f32.mrb[0].mxu0
    %v11082 = vadd.f32 %v11039, %v11081
    %v11083 = vpop.f32.mrb[0].mxu0
    %v11084 = vadd.f32 %v11041, %v11083
    %11085 = vdwg.mxu0
    %11086 = vmatprep.subr.bf16.mxu0 %v7922
    %11087 = vmatpush1.bf16.msra.mxu0 %v7921
    %11088 = vmatprep.subr.bf16.mxu0 %v7930
    %11089 = vmatpush1.bf16.msra.mxu0 %v7929
    %11090 = vmatprep.subr.bf16.mxu0 %v7938
    %11091 = vmatpush1.bf16.msra.mxu0 %v7937
    %11092 = vmatprep.subr.bf16.mxu0 %v7946
    %11093 = vmatpush1.bf16.msra.mxu0 %v7945
    %11094 = vmatprep.subr.bf16.mxu0 %v7954
    %11095 = vmatpush1.bf16.msra.mxu0 %v7953
    %11096 = vmatprep.subr.bf16.mxu0 %v7962
    %11097 = vmatpush1.bf16.msra.mxu0 %v7961
    %11098 = vmatprep.subr.bf16.mxu0 %v7970
    %11099 = vmatpush1.bf16.msra.mxu0 %v7969
    %11100 = vmatprep.subr.bf16.mxu0 %v7978
    %11101 = vmatpush1.bf16.msra.mxu0 %v7977
    %11102 = vmatprep.subr.bf16.mxu0 %v7986
    %11103 = vmatpush1.bf16.msra.mxu0 %v7985
    %11104 = vmatprep.subr.bf16.mxu0 %v7994
    %11105 = vmatpush1.bf16.msra.mxu0 %v7993
    %11106 = vmatprep.subr.bf16.mxu0 %v8002
    %11107 = vmatpush1.bf16.msra.mxu0 %v8001
    %11108 = vmatprep.subr.bf16.mxu0 %v8010
    %11109 = vmatpush1.bf16.msra.mxu0 %v8009
    %11110 = vmatprep.subr.bf16.mxu0 %v8018
    %11111 = vmatpush1.bf16.msra.mxu0 %v8017
    %11112 = vmatprep.subr.bf16.mxu0 %v8026
    %11113 = vmatpush1.bf16.msra.mxu0 %v8025
    %11114 = vmatprep.subr.bf16.mxu0 %v8034
    %11115 = vmatpush1.bf16.msra.mxu0 %v8033
    %11116 = vmatprep.subr.bf16.mxu0 %v8042
    %11117 = vmatpush1.bf16.msra.mxu0 %v8041
    %11118 = vmatprep.mubr.bf16.mxu0 %v1876
    %11119 = vmatmul.mubr.bf16.gmra.mrb[0].mxu0 %v1875
    %v11120 = vpop.f32.mrb[0].mxu0
    %v11121 = vadd.f32 %v11078, %v11120
    %v11122 = vpop.f32.mrb[0].mxu0
    %v11123 = vadd.f32 %v11080, %v11122
    %v11124 = vpop.f32.mrb[0].mxu0
    %v11125 = vadd.f32 %v11082, %v11124
    %v11126 = vpop.f32.mrb[0].mxu0
    %v11127 = vadd.f32 %v11084, %v11126
    %11128 = vdwg.mxu0
    %11129 = vmatprep.subr.bf16.mxu0 %v6516
    %11130 = vmatpush1.bf16.msra.mxu0 %v6515
    %11131 = vmatprep.subr.bf16.mxu0 %v6524
    %11132 = vmatpush1.bf16.msra.mxu0 %v6523
    %11133 = vmatprep.subr.bf16.mxu0 %v6532
    %11134 = vmatpush1.bf16.msra.mxu0 %v6531
    %11135 = vmatprep.subr.bf16.mxu0 %v6540
    %11136 = vmatpush1.bf16.msra.mxu0 %v6539
    %11137 = vmatprep.subr.bf16.mxu0 %v6548
    %11138 = vmatpush1.bf16.msra.mxu0 %v6547
    %11139 = vmatprep.subr.bf16.mxu0 %v6556
    %11140 = vmatpush1.bf16.msra.mxu0 %v6555
    %11141 = vmatprep.subr.bf16.mxu0 %v6564
    %11142 = vmatpush1.bf16.msra.mxu0 %v6563
    %11143 = vmatprep.subr.bf16.mxu0 %v6572
    %11144 = vmatpush1.bf16.msra.mxu0 %v6571
    %11145 = vmatprep.subr.bf16.mxu0 %v6580
    %11146 = vmatpush1.bf16.msra.mxu0 %v6579
    %11147 = vmatprep.subr.bf16.mxu0 %v6588
    %11148 = vmatpush1.bf16.msra.mxu0 %v6587
    %11149 = vmatprep.subr.bf16.mxu0 %v6596
    %11150 = vmatpush1.bf16.msra.mxu0 %v6595
    %11151 = vmatprep.subr.bf16.mxu0 %v6604
    %11152 = vmatpush1.bf16.msra.mxu0 %v6603
    %11153 = vmatprep.subr.bf16.mxu0 %v6612
    %11154 = vmatpush1.bf16.msra.mxu0 %v6611
    %11155 = vmatprep.subr.bf16.mxu0 %v6620
    %11156 = vmatpush1.bf16.msra.mxu0 %v6619
    %11157 = vmatprep.subr.bf16.mxu0 %v6628
    %11158 = vmatpush1.bf16.msra.mxu0 %v6627
    %11159 = vmatprep.subr.bf16.mxu0 %v6636
    %11160 = vmatpush1.bf16.msra.mxu0 %v6635
    %11161 = vmatprep.mubr.bf16.mxu0 %v1854
    %11162 = vmatmul.mubr.bf16.gmra.mrb[0].mxu0 %v1853
    %v11163 = vpop.f32.mrb[0].mxu0
    %v11164 = vadd.f32 %v1768, %v11163
    %v11165 = vpop.f32.mrb[0].mxu0
    %v11166 = vadd.f32 %v1772, %v11165
    %v11167 = vpop.f32.mrb[0].mxu0
    %v11168 = vadd.f32 %v1768, %v11167
    %v11169 = vpop.f32.mrb[0].mxu0
    %v11170 = vadd.f32 %v1772, %v11169
    %11171 = vdwg.mxu0
    %11172 = vmatprep.subr.bf16.mxu0 %v6644
    %11173 = vmatpush1.bf16.msra.mxu0 %v6643
    %11174 = vmatprep.subr.bf16.mxu0 %v6652
    %11175 = vmatpush1.bf16.msra.mxu0 %v6651
    %11176 = vmatprep.subr.bf16.mxu0 %v6660
    %11177 = vmatpush1.bf16.msra.mxu0 %v6659
    %11178 = vmatprep.subr.bf16.mxu0 %v6668
    %11179 = vmatpush1.bf16.msra.mxu0 %v6667
    %11180 = vmatprep.subr.bf16.mxu0 %v6676
    %11181 = vmatpush1.bf16.msra.mxu0 %v6675
    %11182 = vmatprep.subr.bf16.mxu0 %v6684
    %11183 = vmatpush1.bf16.msra.mxu0 %v6683
    %11184 = vmatprep.subr.bf16.mxu0 %v6692
    %11185 = vmatpush1.bf16.msra.mxu0 %v6691
    %11186 = vmatprep.subr.bf16.mxu0 %v6700
    %11187 = vmatpush1.bf16.msra.mxu0 %v6699
    %11188 = vmatprep.subr.bf16.mxu0 %v6708
    %11189 = vmatpush1.bf16.msra.mxu0 %v6707
    %11190 = vmatprep.subr.bf16.mxu0 %v6716
    %11191 = vmatpush1.bf16.msra.mxu0 %v6715
    %11192 = vmatprep.subr.bf16.mxu0 %v6724
    %11193 = vmatpush1.bf16.msra.mxu0 %v6723
    %11194 = vmatprep.subr.bf16.mxu0 %v6732
    %11195 = vmatpush1.bf16.msra.mxu0 %v6731
    %11196 = vmatprep.subr.bf16.mxu0 %v6740
    %11197 = vmatpush1.bf16.msra.mxu0 %v6739
    %11198 = vmatprep.subr.bf16.mxu0 %v6748
    %11199 = vmatpush1.bf16.msra.mxu0 %v6747
    %11200 = vmatprep.subr.bf16.mxu0 %v6756
    %11201 = vmatpush1.bf16.msra.mxu0 %v6755
    %11202 = vmatprep.subr.bf16.mxu0 %v6764
    %11203 = vmatpush1.bf16.msra.mxu0 %v6763
    %11204 = vmatprep.mubr.bf16.mxu0 %v1856
    %11205 = vmatmul.mubr.bf16.gmra.mrb[0].mxu0 %v1855
    %v11206 = vpop.f32.mrb[0].mxu0
    %v11207 = vadd.f32 %v11164, %v11206
    %v11208 = vpop.f32.mrb[0].mxu0
    %v11209 = vadd.f32 %v11166, %v11208
    %v11210 = vpop.f32.mrb[0].mxu0
    %v11211 = vadd.f32 %v11168, %v11210
    %v11212 = vpop.f32.mrb[0].mxu0
    %v11213 = vadd.f32 %v11170, %v11212
    %11214 = vdwg.mxu0
    %11215 = vmatprep.subr.bf16.mxu0 %v6772
    %11216 = vmatpush1.bf16.msra.mxu0 %v6771
    %11217 = vmatprep.subr.bf16.mxu0 %v6780
    %11218 = vmatpush1.bf16.msra.mxu0 %v6779
    %11219 = vmatprep.subr.bf16.mxu0 %v6788
    %11220 = vmatpush1.bf16.msra.mxu0 %v6787
    %11221 = vmatprep.subr.bf16.mxu0 %v6796
    %11222 = vmatpush1.bf16.msra.mxu0 %v6795
    %11223 = vmatprep.subr.bf16.mxu0 %v6804
    %11224 = vmatpush1.bf16.msra.mxu0 %v6803
    %11225 = vmatprep.subr.bf16.mxu0 %v6812
    %11226 = vmatpush1.bf16.msra.mxu0 %v6811
    %11227 = vmatprep.subr.bf16.mxu0 %v6820
    %11228 = vmatpush1.bf16.msra.mxu0 %v6819
    %11229 = vmatprep.subr.bf16.mxu0 %v6828
    %11230 = vmatpush1.bf16.msra.mxu0 %v6827
    %11231 = vmatprep.subr.bf16.mxu0 %v6836
    %11232 = vmatpush1.bf16.msra.mxu0 %v6835
    %11233 = vmatprep.subr.bf16.mxu0 %v6844
    %11234 = vmatpush1.bf16.msra.mxu0 %v6843
    %11235 = vmatprep.subr.bf16.mxu0 %v6852
    %11236 = vmatpush1.bf16.msra.mxu0 %v6851
    %11237 = vmatprep.subr.bf16.mxu0 %v6860
    %11238 = vmatpush1.bf16.msra.mxu0 %v6859
    %11239 = vmatprep.subr.bf16.mxu0 %v6868
    %11240 = vmatpush1.bf16.msra.mxu0 %v6867
    %11241 = vmatprep.subr.bf16.mxu0 %v6876
    %11242 = vmatpush1.bf16.msra.mxu0 %v6875
    %11243 = vmatprep.subr.bf16.mxu0 %v6884
    %11244 = vmatpush1.bf16.msra.mxu0 %v6883
    %11245 = vmatprep.subr.bf16.mxu0 %v6892
    %11246 = vmatpush1.bf16.msra.mxu0 %v6891
    %11247 = vmatprep.mubr.bf16.mxu0 %v1858
    %11248 = vmatmul.mubr.bf16.gmra.mrb[0].mxu0 %v1857
    %v11249 = vpop.f32.mrb[0].mxu0
    %v11250 = vadd.f32 %v11207, %v11249
    %v11251 = vpop.f32.mrb[0].mxu0
    %v11252 = vadd.f32 %v11209, %v11251
    %v11253 = vpop.f32.mrb[0].mxu0
    %v11254 = vadd.f32 %v11211, %v11253
    %v11255 = vpop.f32.mrb[0].mxu0
    %v11256 = vadd.f32 %v11213, %v11255
    %11257 = vdwg.mxu0
    %11258 = vmatprep.subr.bf16.mxu0 %v6900
    %11259 = vmatpush1.bf16.msra.mxu0 %v6899
    %11260 = vmatprep.subr.bf16.mxu0 %v6908
    %11261 = vmatpush1.bf16.msra.mxu0 %v6907
    %11262 = vmatprep.subr.bf16.mxu0 %v6916
    %11263 = vmatpush1.bf16.msra.mxu0 %v6915
    %11264 = vmatprep.subr.bf16.mxu0 %v6924
    %11265 = vmatpush1.bf16.msra.mxu0 %v6923
    %11266 = vmatprep.subr.bf16.mxu0 %v6932
    %11267 = vmatpush1.bf16.msra.mxu0 %v6931
    %11268 = vmatprep.subr.bf16.mxu0 %v6940
    %11269 = vmatpush1.bf16.msra.mxu0 %v6939
    %11270 = vmatprep.subr.bf16.mxu0 %v6948
    %11271 = vmatpush1.bf16.msra.mxu0 %v6947
    %11272 = vmatprep.subr.bf16.mxu0 %v6956
    %11273 = vmatpush1.bf16.msra.mxu0 %v6955
    %11274 = vmatprep.subr.bf16.mxu0 %v6964
    %11275 = vmatpush1.bf16.msra.mxu0 %v6963
    %11276 = vmatprep.subr.bf16.mxu0 %v6972
    %11277 = vmatpush1.bf16.msra.mxu0 %v6971
    %11278 = vmatprep.subr.bf16.mxu0 %v6980
    %11279 = vmatpush1.bf16.msra.mxu0 %v6979
    %11280 = vmatprep.subr.bf16.mxu0 %v6988
    %11281 = vmatpush1.bf16.msra.mxu0 %v6987
    %11282 = vmatprep.subr.bf16.mxu0 %v6996
    %11283 = vmatpush1.bf16.msra.mxu0 %v6995
    %11284 = vmatprep.subr.bf16.mxu0 %v7004
    %11285 = vmatpush1.bf16.msra.mxu0 %v7003
    %11286 = vmatprep.subr.bf16.mxu0 %v7012
    %11287 = vmatpush1.bf16.msra.mxu0 %v7011
    %11288 = vmatprep.subr.bf16.mxu0 %v7020
    %11289 = vmatpush1.bf16.msra.mxu0 %v7019
    %11290 = vmatprep.mubr.bf16.mxu0 %v1860
    %11291 = vmatmul.mubr.bf16.gmra.mrb[0].mxu0 %v1859
    %v11292 = vpop.f32.mrb[0].mxu0
    %v11293 = vadd.f32 %v11250, %v11292
    %v11294 = vpop.f32.mrb[0].mxu0
    %v11295 = vadd.f32 %v11252, %v11294
    %v11296 = vpop.f32.mrb[0].mxu0
    %v11297 = vadd.f32 %v11254, %v11296
    %v11298 = vpop.f32.mrb[0].mxu0
    %v11299 = vadd.f32 %v11256, %v11298
    %11300 = vdwg.mxu0
    %11301 = vmatprep.subr.bf16.mxu0 %v7028
    %11302 = vmatpush1.bf16.msra.mxu0 %v7027
    %11303 = vmatprep.subr.bf16.mxu0 %v7036
    %11304 = vmatpush1.bf16.msra.mxu0 %v7035
    %11305 = vmatprep.subr.bf16.mxu0 %v7044
    %11306 = vmatpush1.bf16.msra.mxu0 %v7043
    %11307 = vmatprep.subr.bf16.mxu0 %v7052
    %11308 = vmatpush1.bf16.msra.mxu0 %v7051
    %11309 = vmatprep.subr.bf16.mxu0 %v7060
    %11310 = vmatpush1.bf16.msra.mxu0 %v7059
    %11311 = vmatprep.subr.bf16.mxu0 %v7068
    %11312 = vmatpush1.bf16.msra.mxu0 %v7067
    %11313 = vmatprep.subr.bf16.mxu0 %v7076
    %11314 = vmatpush1.bf16.msra.mxu0 %v7075
    %11315 = vmatprep.subr.bf16.mxu0 %v7084
    %11316 = vmatpush1.bf16.msra.mxu0 %v7083
    %11317 = vmatprep.subr.bf16.mxu0 %v7092
    %11318 = vmatpush1.bf16.msra.mxu0 %v7091
    %11319 = vmatprep.subr.bf16.mxu0 %v7100
    %11320 = vmatpush1.bf16.msra.mxu0 %v7099
    %11321 = vmatprep.subr.bf16.mxu0 %v7108
    %11322 = vmatpush1.bf16.msra.mxu0 %v7107
    %11323 = vmatprep.subr.bf16.mxu0 %v7116
    %11324 = vmatpush1.bf16.msra.mxu0 %v7115
    %11325 = vmatprep.subr.bf16.mxu0 %v7124
    %11326 = vmatpush1.bf16.msra.mxu0 %v7123
    %11327 = vmatprep.subr.bf16.mxu0 %v7132
    %11328 = vmatpush1.bf16.msra.mxu0 %v7131
    %11329 = vmatprep.subr.bf16.mxu0 %v7140
    %11330 = vmatpush1.bf16.msra.mxu0 %v7139
    %11331 = vmatprep.subr.bf16.mxu0 %v7148
    %11332 = vmatpush1.bf16.msra.mxu0 %v7147
    %11333 = vmatprep.mubr.bf16.mxu0 %v1862
    %11334 = vmatmul.mubr.bf16.gmra.mrb[0].mxu0 %v1861
    %v11335 = vpop.f32.mrb[0].mxu0
    %v11336 = vadd.f32 %v11293, %v11335
    %v11337 = vpop.f32.mrb[0].mxu0
    %v11338 = vadd.f32 %v11295, %v11337
    %v11339 = vpop.f32.mrb[0].mxu0
    %v11340 = vadd.f32 %v11297, %v11339
    %v11341 = vpop.f32.mrb[0].mxu0
    %v11342 = vadd.f32 %v11299, %v11341
    %11343 = vdwg.mxu0
    %11344 = vmatprep.subr.bf16.mxu0 %v7156
    %11345 = vmatpush1.bf16.msra.mxu0 %v7155
    %11346 = vmatprep.subr.bf16.mxu0 %v7164
    %11347 = vmatpush1.bf16.msra.mxu0 %v7163
    %11348 = vmatprep.subr.bf16.mxu0 %v7172
    %11349 = vmatpush1.bf16.msra.mxu0 %v7171
    %11350 = vmatprep.subr.bf16.mxu0 %v7180
    %11351 = vmatpush1.bf16.msra.mxu0 %v7179
    %11352 = vmatprep.subr.bf16.mxu0 %v7188
    %11353 = vmatpush1.bf16.msra.mxu0 %v7187
    %11354 = vmatprep.subr.bf16.mxu0 %v7196
    %11355 = vmatpush1.bf16.msra.mxu0 %v7195
    %11356 = vmatprep.subr.bf16.mxu0 %v7204
    %11357 = vmatpush1.bf16.msra.mxu0 %v7203
    %11358 = vmatprep.subr.bf16.mxu0 %v7212
    %11359 = vmatpush1.bf16.msra.mxu0 %v7211
    %11360 = vmatprep.subr.bf16.mxu0 %v7220
    %11361 = vmatpush1.bf16.msra.mxu0 %v7219
    %11362 = vmatprep.subr.bf16.mxu0 %v7228
    %11363 = vmatpush1.bf16.msra.mxu0 %v7227
    %11364 = vmatprep.subr.bf16.mxu0 %v7236
    %11365 = vmatpush1.bf16.msra.mxu0 %v7235
    %11366 = vmatprep.subr.bf16.mxu0 %v7244
    %11367 = vmatpush1.bf16.msra.mxu0 %v7243
    %11368 = vmatprep.subr.bf16.mxu0 %v7252
    %11369 = vmatpush1.bf16.msra.mxu0 %v7251
    %11370 = vmatprep.subr.bf16.mxu0 %v7260
    %11371 = vmatpush1.bf16.msra.mxu0 %v7259
    %11372 = vmatprep.subr.bf16.mxu0 %v7268
    %11373 = vmatpush1.bf16.msra.mxu0 %v7267
    %11374 = vmatprep.subr.bf16.mxu0 %v7276
    %11375 = vmatpush1.bf16.msra.mxu0 %v7275
    %11376 = vmatprep.mubr.bf16.mxu0 %v1864
    %11377 = vmatmul.mubr.bf16.gmra.mrb[0].mxu0 %v1863
    %v11378 = vpop.f32.mrb[0].mxu0
    %v11379 = vadd.f32 %v11336, %v11378
    %v11380 = vpop.f32.mrb[0].mxu0
    %v11381 = vadd.f32 %v11338, %v11380
    %v11382 = vpop.f32.mrb[0].mxu0
    %v11383 = vadd.f32 %v11340, %v11382
    %v11384 = vpop.f32.mrb[0].mxu0
    %v11385 = vadd.f32 %v11342, %v11384
    %11386 = vdwg.mxu0
    %11387 = vmatprep.subr.bf16.mxu0 %v7284
    %11388 = vmatpush1.bf16.msra.mxu0 %v7283
    %11389 = vmatprep.subr.bf16.mxu0 %v7292
    %11390 = vmatpush1.bf16.msra.mxu0 %v7291
    %11391 = vmatprep.subr.bf16.mxu0 %v7300
    %11392 = vmatpush1.bf16.msra.mxu0 %v7299
    %11393 = vmatprep.subr.bf16.mxu0 %v7308
    %11394 = vmatpush1.bf16.msra.mxu0 %v7307
    %11395 = vmatprep.subr.bf16.mxu0 %v7316
    %11396 = vmatpush1.bf16.msra.mxu0 %v7315
    %11397 = vmatprep.subr.bf16.mxu0 %v7324
    %11398 = vmatpush1.bf16.msra.mxu0 %v7323
    %11399 = vmatprep.subr.bf16.mxu0 %v7332
    %11400 = vmatpush1.bf16.msra.mxu0 %v7331
    %11401 = vmatprep.subr.bf16.mxu0 %v7340
    %11402 = vmatpush1.bf16.msra.mxu0 %v7339
    %11403 = vmatprep.subr.bf16.mxu0 %v7348
    %11404 = vmatpush1.bf16.msra.mxu0 %v7347
    %11405 = vmatprep.subr.bf16.mxu0 %v7356
    %11406 = vmatpush1.bf16.msra.mxu0 %v7355
    %11407 = vmatprep.subr.bf16.mxu0 %v7364
    %11408 = vmatpush1.bf16.msra.mxu0 %v7363
    %11409 = vmatprep.subr.bf16.mxu0 %v7372
    %11410 = vmatpush1.bf16.msra.mxu0 %v7371
    %11411 = vmatprep.subr.bf16.mxu0 %v7380
    %11412 = vmatpush1.bf16.msra.mxu0 %v7379
    %11413 = vmatprep.subr.bf16.mxu0 %v7388
    %11414 = vmatpush1.bf16.msra.mxu0 %v7387
    %11415 = vmatprep.subr.bf16.mxu0 %v7396
    %11416 = vmatpush1.bf16.msra.mxu0 %v7395
    %11417 = vmatprep.subr.bf16.mxu0 %v7404
    %11418 = vmatpush1.bf16.msra.mxu0 %v7403
    %11419 = vmatprep.mubr.bf16.mxu0 %v1866
    %11420 = vmatmul.mubr.bf16.gmra.mrb[0].mxu0 %v1865
    %v11421 = vpop.f32.mrb[0].mxu0
    %v11422 = vadd.f32 %v11379, %v11421
    %v11423 = vpop.f32.mrb[0].mxu0
    %v11424 = vadd.f32 %v11381, %v11423
    %v11425 = vpop.f32.mrb[0].mxu0
    %v11426 = vadd.f32 %v11383, %v11425
    %v11427 = vpop.f32.mrb[0].mxu0
    %v11428 = vadd.f32 %v11385, %v11427
    %11429 = vdwg.mxu0
    %11430 = vmatprep.subr.bf16.mxu0 %v7412
    %11431 = vmatpush1.bf16.msra.mxu0 %v7411
    %11432 = vmatprep.subr.bf16.mxu0 %v7420
    %11433 = vmatpush1.bf16.msra.mxu0 %v7419
    %11434 = vmatprep.subr.bf16.mxu0 %v7428
    %11435 = vmatpush1.bf16.msra.mxu0 %v7427
    %11436 = vmatprep.subr.bf16.mxu0 %v7436
    %11437 = vmatpush1.bf16.msra.mxu0 %v7435
    %11438 = vmatprep.subr.bf16.mxu0 %v7444
    %11439 = vmatpush1.bf16.msra.mxu0 %v7443
    %11440 = vmatprep.subr.bf16.mxu0 %v7452
    %11441 = vmatpush1.bf16.msra.mxu0 %v7451
    %11442 = vmatprep.subr.bf16.mxu0 %v7460
    %11443 = vmatpush1.bf16.msra.mxu0 %v7459
    %11444 = vmatprep.subr.bf16.mxu0 %v7468
    %11445 = vmatpush1.bf16.msra.mxu0 %v7467
    %11446 = vmatprep.subr.bf16.mxu0 %v7476
    %11447 = vmatpush1.bf16.msra.mxu0 %v7475
    %11448 = vmatprep.subr.bf16.mxu0 %v7484
    %11449 = vmatpush1.bf16.msra.mxu0 %v7483
    %11450 = vmatprep.subr.bf16.mxu0 %v7492
    %11451 = vmatpush1.bf16.msra.mxu0 %v7491
    %11452 = vmatprep.subr.bf16.mxu0 %v7500
    %11453 = vmatpush1.bf16.msra.mxu0 %v7499
    %11454 = vmatprep.subr.bf16.mxu0 %v7508
    %11455 = vmatpush1.bf16.msra.mxu0 %v7507
    %11456 = vmatprep.subr.bf16.mxu0 %v7516
    %11457 = vmatpush1.bf16.msra.mxu0 %v7515
    %11458 = vmatprep.subr.bf16.mxu0 %v7524
    %11459 = vmatpush1.bf16.msra.mxu0 %v7523
    %11460 = vmatprep.subr.bf16.mxu0 %v7532
    %11461 = vmatpush1.bf16.msra.mxu0 %v7531
    %11462 = vmatprep.mubr.bf16.mxu0 %v1868
    %11463 = vmatmul.mubr.bf16.gmra.mrb[0].mxu0 %v1867
    %v11464 = vpop.f32.mrb[0].mxu0
    %v11465 = vadd.f32 %v11422, %v11464
    %v11466 = vpop.f32.mrb[0].mxu0
    %v11467 = vadd.f32 %v11424, %v11466
    %v11468 = vpop.f32.mrb[0].mxu0
    %v11469 = vadd.f32 %v11426, %v11468
    %v11470 = vpop.f32.mrb[0].mxu0
    %v11471 = vadd.f32 %v11428, %v11470
    %11472 = vdwg.mxu0
    %11473 = vmatprep.subr.bf16.mxu0 %v7540
    %11474 = vmatpush1.bf16.msra.mxu0 %v7539
    %11475 = vmatprep.subr.bf16.mxu0 %v7548
    %11476 = vmatpush1.bf16.msra.mxu0 %v7547
    %11477 = vmatprep.subr.bf16.mxu0 %v7556
    %11478 = vmatpush1.bf16.msra.mxu0 %v7555
    %11479 = vmatprep.subr.bf16.mxu0 %v7564
    %11480 = vmatpush1.bf16.msra.mxu0 %v7563
    %11481 = vmatprep.subr.bf16.mxu0 %v7572
    %11482 = vmatpush1.bf16.msra.mxu0 %v7571
    %11483 = vmatprep.subr.bf16.mxu0 %v7580
    %11484 = vmatpush1.bf16.msra.mxu0 %v7579
    %11485 = vmatprep.subr.bf16.mxu0 %v7588
    %11486 = vmatpush1.bf16.msra.mxu0 %v7587
    %11487 = vmatprep.subr.bf16.mxu0 %v7596
    %11488 = vmatpush1.bf16.msra.mxu0 %v7595
    %11489 = vmatprep.subr.bf16.mxu0 %v7604
    %11490 = vmatpush1.bf16.msra.mxu0 %v7603
    %11491 = vmatprep.subr.bf16.mxu0 %v7612
    %11492 = vmatpush1.bf16.msra.mxu0 %v7611
    %11493 = vmatprep.subr.bf16.mxu0 %v7620
    %11494 = vmatpush1.bf16.msra.mxu0 %v7619
    %11495 = vmatprep.subr.bf16.mxu0 %v7628
    %11496 = vmatpush1.bf16.msra.mxu0 %v7627
    %11497 = vmatprep.subr.bf16.mxu0 %v7636
    %11498 = vmatpush1.bf16.msra.mxu0 %v7635
    %11499 = vmatprep.subr.bf16.mxu0 %v7644
    %11500 = vmatpush1.bf16.msra.mxu0 %v7643
    %11501 = vmatprep.subr.bf16.mxu0 %v7652
    %11502 = vmatpush1.bf16.msra.mxu0 %v7651
    %11503 = vmatprep.subr.bf16.mxu0 %v7660
    %11504 = vmatpush1.bf16.msra.mxu0 %v7659
    %11505 = vmatprep.mubr.bf16.mxu0 %v1870
    %11506 = vmatmul.mubr.bf16.gmra.mrb[0].mxu0 %v1869
    %v11507 = vpop.f32.mrb[0].mxu0
    %v11508 = vadd.f32 %v11465, %v11507
    %v11509 = vpop.f32.mrb[0].mxu0
    %v11510 = vadd.f32 %v11467, %v11509
    %v11511 = vpop.f32.mrb[0].mxu0
    %v11512 = vadd.f32 %v11469, %v11511
    %v11513 = vpop.f32.mrb[0].mxu0
    %v11514 = vadd.f32 %v11471, %v11513
    %11515 = vdwg.mxu0
    %11516 = vmatprep.subr.bf16.mxu0 %v7668
    %11517 = vmatpush1.bf16.msra.mxu0 %v7667
    %11518 = vmatprep.subr.bf16.mxu0 %v7676
    %11519 = vmatpush1.bf16.msra.mxu0 %v7675
    %11520 = vmatprep.subr.bf16.mxu0 %v7684
    %11521 = vmatpush1.bf16.msra.mxu0 %v7683
    %11522 = vmatprep.subr.bf16.mxu0 %v7692
    %11523 = vmatpush1.bf16.msra.mxu0 %v7691
    %11524 = vmatprep.subr.bf16.mxu0 %v7700
    %11525 = vmatpush1.bf16.msra.mxu0 %v7699
    %11526 = vmatprep.subr.bf16.mxu0 %v7708
    %11527 = vmatpush1.bf16.msra.mxu0 %v7707
    %11528 = vmatprep.subr.bf16.mxu0 %v7716
    %11529 = vmatpush1.bf16.msra.mxu0 %v7715
    %11530 = vmatprep.subr.bf16.mxu0 %v7724
    %11531 = vmatpush1.bf16.msra.mxu0 %v7723
    %11532 = vmatprep.subr.bf16.mxu0 %v7732
    %11533 = vmatpush1.bf16.msra.mxu0 %v7731
    %11534 = vmatprep.subr.bf16.mxu0 %v7740
    %11535 = vmatpush1.bf16.msra.mxu0 %v7739
    %11536 = vmatprep.subr.bf16.mxu0 %v7748
    %11537 = vmatpush1.bf16.msra.mxu0 %v7747
    %11538 = vmatprep.subr.bf16.mxu0 %v7756
    %11539 = vmatpush1.bf16.msra.mxu0 %v7755
    %11540 = vmatprep.subr.bf16.mxu0 %v7764
    %11541 = vmatpush1.bf16.msra.mxu0 %v7763
    %11542 = vmatprep.subr.bf16.mxu0 %v7772
    %11543 = vmatpush1.bf16.msra.mxu0 %v7771
    %11544 = vmatprep.subr.bf16.mxu0 %v7780
    %11545 = vmatpush1.bf16.msra.mxu0 %v7779
    %11546 = vmatprep.subr.bf16.mxu0 %v7788
    %11547 = vmatpush1.bf16.msra.mxu0 %v7787
    %11548 = vmatprep.mubr.bf16.mxu0 %v1872
    %11549 = vmatmul.mubr.bf16.gmra.mrb[0].mxu0 %v1871
    %v11550 = vpop.f32.mrb[0].mxu0
    %v11551 = vadd.f32 %v11508, %v11550
    %v11552 = vpop.f32.mrb[0].mxu0
    %v11553 = vadd.f32 %v11510, %v11552
    %v11554 = vpop.f32.mrb[0].mxu0
    %v11555 = vadd.f32 %v11512, %v11554
    %v11556 = vpop.f32.mrb[0].mxu0
    %v11557 = vadd.f32 %v11514, %v11556
    %11558 = vdwg.mxu0
    %11559 = vmatprep.subr.bf16.mxu0 %v7796
    %11560 = vmatpush1.bf16.msra.mxu0 %v7795
    %11561 = vmatprep.subr.bf16.mxu0 %v7804
    %11562 = vmatpush1.bf16.msra.mxu0 %v7803
    %11563 = vmatprep.subr.bf16.mxu0 %v7812
    %11564 = vmatpush1.bf16.msra.mxu0 %v7811
    %11565 = vmatprep.subr.bf16.mxu0 %v7820
    %11566 = vmatpush1.bf16.msra.mxu0 %v7819
    %11567 = vmatprep.subr.bf16.mxu0 %v7828
    %11568 = vmatpush1.bf16.msra.mxu0 %v7827
    %11569 = vmatprep.subr.bf16.mxu0 %v7836
    %11570 = vmatpush1.bf16.msra.mxu0 %v7835
    %11571 = vmatprep.subr.bf16.mxu0 %v7844
    %11572 = vmatpush1.bf16.msra.mxu0 %v7843
    %11573 = vmatprep.subr.bf16.mxu0 %v7852
    %11574 = vmatpush1.bf16.msra.mxu0 %v7851
    %11575 = vmatprep.subr.bf16.mxu0 %v7860
    %11576 = vmatpush1.bf16.msra.mxu0 %v7859
    %11577 = vmatprep.subr.bf16.mxu0 %v7868
    %11578 = vmatpush1.bf16.msra.mxu0 %v7867
    %11579 = vmatprep.subr.bf16.mxu0 %v7876
    %11580 = vmatpush1.bf16.msra.mxu0 %v7875
    %11581 = vmatprep.subr.bf16.mxu0 %v7884
    %11582 = vmatpush1.bf16.msra.mxu0 %v7883
    %11583 = vmatprep.subr.bf16.mxu0 %v7892
    %11584 = vmatpush1.bf16.msra.mxu0 %v7891
    %11585 = vmatprep.subr.bf16.mxu0 %v7900
    %11586 = vmatpush1.bf16.msra.mxu0 %v7899
    %11587 = vmatprep.subr.bf16.mxu0 %v7908
    %11588 = vmatpush1.bf16.msra.mxu0 %v7907
    %11589 = vmatprep.subr.bf16.mxu0 %v7916
    %11590 = vmatpush1.bf16.msra.mxu0 %v7915
    %11591 = vmatprep.mubr.bf16.mxu0 %v1874
    %11592 = vmatmul.mubr.bf16.gmra.mrb[0].mxu0 %v1873
    %v11593 = vpop.f32.mrb[0].mxu0
    %v11594 = vadd.f32 %v11551, %v11593
    %v11595 = vpop.f32.mrb[0].mxu0
    %v11596 = vadd.f32 %v11553, %v11595
    %v11597 = vpop.f32.mrb[0].mxu0
    %v11598 = vadd.f32 %v11555, %v11597
    %v11599 = vpop.f32.mrb[0].mxu0
    %v11600 = vadd.f32 %v11557, %v11599
    %11601 = vdwg.mxu0
    %11602 = vmatprep.subr.bf16.mxu0 %v7924
    %11603 = vmatpush1.bf16.msra.mxu0 %v7923
    %11604 = vmatprep.subr.bf16.mxu0 %v7932
    %11605 = vmatpush1.bf16.msra.mxu0 %v7931
    %11606 = vmatprep.subr.bf16.mxu0 %v7940
    %11607 = vmatpush1.bf16.msra.mxu0 %v7939
    %11608 = vmatprep.subr.bf16.mxu0 %v7948
    %11609 = vmatpush1.bf16.msra.mxu0 %v7947
    %11610 = vmatprep.subr.bf16.mxu0 %v7956
    %11611 = vmatpush1.bf16.msra.mxu0 %v7955
    %11612 = vmatprep.subr.bf16.mxu0 %v7964
    %11613 = vmatpush1.bf16.msra.mxu0 %v7963
    %11614 = vmatprep.subr.bf16.mxu0 %v7972
    %11615 = vmatpush1.bf16.msra.mxu0 %v7971
    %11616 = vmatprep.subr.bf16.mxu0 %v7980
    %11617 = vmatpush1.bf16.msra.mxu0 %v7979
    %11618 = vmatprep.subr.bf16.mxu0 %v7988
    %11619 = vmatpush1.bf16.msra.mxu0 %v7987
    %11620 = vmatprep.subr.bf16.mxu0 %v7996
    %11621 = vmatpush1.bf16.msra.mxu0 %v7995
    %11622 = vmatprep.subr.bf16.mxu0 %v8004
    %11623 = vmatpush1.bf16.msra.mxu0 %v8003
    %11624 = vmatprep.subr.bf16.mxu0 %v8012
    %11625 = vmatpush1.bf16.msra.mxu0 %v8011
    %11626 = vmatprep.subr.bf16.mxu0 %v8020
    %11627 = vmatpush1.bf16.msra.mxu0 %v8019
    %11628 = vmatprep.subr.bf16.mxu0 %v8028
    %11629 = vmatpush1.bf16.msra.mxu0 %v8027
    %11630 = vmatprep.subr.bf16.mxu0 %v8036
    %11631 = vmatpush1.bf16.msra.mxu0 %v8035
    %11632 = vmatprep.subr.bf16.mxu0 %v8044
    %11633 = vmatpush1.bf16.msra.mxu0 %v8043
    %11634 = vmatprep.mubr.bf16.mxu0 %v1876
    %11635 = vmatmul.mubr.bf16.gmra.mrb[0].mxu0 %v1875
    %v11636 = vpop.f32.mrb[0].mxu0
    %v11637 = vadd.f32 %v11594, %v11636
    %v11638 = vpop.f32.mrb[0].mxu0
    %v11639 = vadd.f32 %v11596, %v11638
    %v11640 = vpop.f32.mrb[0].mxu0
    %v11641 = vadd.f32 %v11598, %v11640
    %v11642 = vpop.f32.mrb[0].mxu0
    %v11643 = vadd.f32 %v11600, %v11642
    %11644 = vdwg.mxu0
    %v11645 = vmax.f32 %v10089, 0.0
    %v11646 = vmax.f32 %v10091, 0.0
    %v11647 = vmax.f32 %v10605, 0.0
    %v11648 = vmax.f32 %v10607, 0.0
    %v11649 = vmax.f32 %v11121, 0.0
    %v11650 = vmax.f32 %v11123, 0.0
    %v11651 = vmax.f32 %v11637, 0.0
    %v11652 = vmax.f32 %v11639, 0.0
    %v11653 = vmax.f32 %v10093, 0.0
    %v11654 = vmax.f32 %v10095, 0.0
    %v11655 = vmax.f32 %v10609, 0.0
    %v11656 = vmax.f32 %v10611, 0.0
    %v11657 = vmax.f32 %v11125, 0.0
    %v11658 = vmax.f32 %v11127, 0.0
    %v11659 = vmax.f32 %v11641, 0.0
    %v11660 = vmax.f32 %v11643, 0.0
    %v11661 = vpack.c.bf16 %v11653, %v11645
    %v11662 = vpack.c.bf16 %v11654, %v11646
    %v11663 = vpack.c.bf16 %v11655, %v11647
    %v11664 = vpack.c.bf16 %v11656, %v11648
    %v11665 = vpack.c.bf16 %v11657, %v11649
    %v11666 = vpack.c.bf16 %v11658, %v11650
    %v11667 = vpack.c.bf16 %v11659, %v11651
    %v11668 = vpack.c.bf16 %v11660, %v11652
    %v11669 = vld [vmem:[#allocation8] sm:$0xff]
    %v11670 = vld [vmem:[#allocation8 + $0x8] sm:$0xff]
    %v11671 = vld [vmem:[#allocation8 + $0x10] sm:$0xff]
    %v11672 = vld [vmem:[#allocation8 + $0x18] sm:$0xff]
    %v11673 = vld [vmem:[#allocation8 + $0x20] sm:$0xff]
    %v11674 = vld [vmem:[#allocation8 + $0x28] sm:$0xff]
    %v11675 = vld [vmem:[#allocation8 + $0x30] sm:$0xff]
    %v11676 = vld [vmem:[#allocation8 + $0x38] sm:$0xff]
    %v11677 = vld [vmem:[#allocation8 + $0x40] sm:$0xff]
    %v11678 = vld [vmem:[#allocation8 + $0x48] sm:$0xff]
    %v11679 = vld [vmem:[#allocation8 + $0x50] sm:$0xff]
    %v11680 = vld [vmem:[#allocation8 + $0x58] sm:$0xff]
    %v11681 = vld [vmem:[#allocation8 + $0x60] sm:$0xff]
    %v11682 = vld [vmem:[#allocation8 + $0x68] sm:$0xff]
    %v11683 = vld [vmem:[#allocation8 + $0x70] sm:$0xff]
    %v11684 = vld [vmem:[#allocation8 + $0x78] sm:$0xff]
    %v11685 = vld [vmem:[#allocation8 + $0x80] sm:$0xff]
    %v11686 = vld [vmem:[#allocation8 + $0x88] sm:$0xff]
    %v11687 = vld [vmem:[#allocation8 + $0x90] sm:$0xff]
    %v11688 = vld [vmem:[#allocation8 + $0x98] sm:$0xff]
    %v11689 = vld [vmem:[#allocation8 + $0xa0] sm:$0xff]
    %v11690 = vld [vmem:[#allocation8 + $0xa8] sm:$0xff]
    %v11691 = vld [vmem:[#allocation8 + $0xb0] sm:$0xff]
    %v11692 = vld [vmem:[#allocation8 + $0xb8] sm:$0xff]
    %v11693 = vld [vmem:[#allocation8 + $0xc0] sm:$0xff]
    %v11694 = vld [vmem:[#allocation8 + $0xc8] sm:$0xff]
    %v11695 = vld [vmem:[#allocation8 + $0xd0] sm:$0xff]
    %v11696 = vld [vmem:[#allocation8 + $0xd8] sm:$0xff]
    %v11697 = vld [vmem:[#allocation8 + $0xe0] sm:$0xff]
    %v11698 = vld [vmem:[#allocation8 + $0xe8] sm:$0xff]
    %v11699 = vld [vmem:[#allocation8 + $0xf0] sm:$0xff]
    %v11700 = vld [vmem:[#allocation8 + $0xf8] sm:$0xff]
    %v11701 = vld [vmem:[#allocation8 + $0x100] sm:$0xff]
    %v11702 = vld [vmem:[#allocation8 + $0x108] sm:$0xff]
    %v11703 = vld [vmem:[#allocation8 + $0x110] sm:$0xff]
    %v11704 = vld [vmem:[#allocation8 + $0x118] sm:$0xff]
    %v11705 = vld [vmem:[#allocation8 + $0x120] sm:$0xff]
    %v11706 = vld [vmem:[#allocation8 + $0x128] sm:$0xff]
    %v11707 = vld [vmem:[#allocation8 + $0x130] sm:$0xff]
    %v11708 = vld [vmem:[#allocation8 + $0x138] sm:$0xff]
    %v11709 = vld [vmem:[#allocation8 + $0x140] sm:$0xff]
    %v11710 = vld [vmem:[#allocation8 + $0x148] sm:$0xff]
    %v11711 = vld [vmem:[#allocation8 + $0x150] sm:$0xff]
    %v11712 = vld [vmem:[#allocation8 + $0x158] sm:$0xff]
    %v11713 = vld [vmem:[#allocation8 + $0x160] sm:$0xff]
    %v11714 = vld [vmem:[#allocation8 + $0x168] sm:$0xff]
    %v11715 = vld [vmem:[#allocation8 + $0x170] sm:$0xff]
    %v11716 = vld [vmem:[#allocation8 + $0x178] sm:$0xff]
    %v11717 = vld [vmem:[#allocation8 + $0x180] sm:$0xff]
    %v11718 = vld [vmem:[#allocation8 + $0x188] sm:$0xff]
    %v11719 = vld [vmem:[#allocation8 + $0x190] sm:$0xff]
    %v11720 = vld [vmem:[#allocation8 + $0x198] sm:$0xff]
    %v11721 = vld [vmem:[#allocation8 + $0x1a0] sm:$0xff]
    %v11722 = vld [vmem:[#allocation8 + $0x1a8] sm:$0xff]
    %v11723 = vld [vmem:[#allocation8 + $0x1b0] sm:$0xff]
    %v11724 = vld [vmem:[#allocation8 + $0x1b8] sm:$0xff]
    %v11725 = vld [vmem:[#allocation8 + $0x1c0] sm:$0xff]
    %v11726 = vld [vmem:[#allocation8 + $0x1c8] sm:$0xff]
    %v11727 = vld [vmem:[#allocation8 + $0x1d0] sm:$0xff]
    %v11728 = vld [vmem:[#allocation8 + $0x1d8] sm:$0xff]
    %v11729 = vld [vmem:[#allocation8 + $0x1e0] sm:$0xff]
    %v11730 = vld [vmem:[#allocation8 + $0x1e8] sm:$0xff]
    %v11731 = vld [vmem:[#allocation8 + $0x1f0] sm:$0xff]
    %v11732 = vld [vmem:[#allocation8 + $0x1f8] sm:$0xff]
    %v11733 = vld [vmem:[#allocation8 + $0x200] sm:$0xff]
    %v11734 = vld [vmem:[#allocation8 + $0x208] sm:$0xff]
    %v11735 = vld [vmem:[#allocation8 + $0x210] sm:$0xff]
    %v11736 = vld [vmem:[#allocation8 + $0x218] sm:$0xff]
    %v11737 = vld [vmem:[#allocation8 + $0x220] sm:$0xff]
    %v11738 = vld [vmem:[#allocation8 + $0x228] sm:$0xff]
    %v11739 = vld [vmem:[#allocation8 + $0x230] sm:$0xff]
    %v11740 = vld [vmem:[#allocation8 + $0x238] sm:$0xff]
    %v11741 = vld [vmem:[#allocation8 + $0x240] sm:$0xff]
    %v11742 = vld [vmem:[#allocation8 + $0x248] sm:$0xff]
    %v11743 = vld [vmem:[#allocation8 + $0x250] sm:$0xff]
    %v11744 = vld [vmem:[#allocation8 + $0x258] sm:$0xff]
    %v11745 = vld [vmem:[#allocation8 + $0x260] sm:$0xff]
    %v11746 = vld [vmem:[#allocation8 + $0x268] sm:$0xff]
    %v11747 = vld [vmem:[#allocation8 + $0x270] sm:$0xff]
    %v11748 = vld [vmem:[#allocation8 + $0x278] sm:$0xff]
    %v11749 = vld [vmem:[#allocation8 + $0x280] sm:$0xff]
    %v11750 = vld [vmem:[#allocation8 + $0x288] sm:$0xff]
    %v11751 = vld [vmem:[#allocation8 + $0x290] sm:$0xff]
    %v11752 = vld [vmem:[#allocation8 + $0x298] sm:$0xff]
    %v11753 = vld [vmem:[#allocation8 + $0x2a0] sm:$0xff]
    %v11754 = vld [vmem:[#allocation8 + $0x2a8] sm:$0xff]
    %v11755 = vld [vmem:[#allocation8 + $0x2b0] sm:$0xff]
    %v11756 = vld [vmem:[#allocation8 + $0x2b8] sm:$0xff]
    %v11757 = vld [vmem:[#allocation8 + $0x2c0] sm:$0xff]
    %v11758 = vld [vmem:[#allocation8 + $0x2c8] sm:$0xff]
    %v11759 = vld [vmem:[#allocation8 + $0x2d0] sm:$0xff]
    %v11760 = vld [vmem:[#allocation8 + $0x2d8] sm:$0xff]
    %v11761 = vld [vmem:[#allocation8 + $0x2e0] sm:$0xff]
    %v11762 = vld [vmem:[#allocation8 + $0x2e8] sm:$0xff]
    %v11763 = vld [vmem:[#allocation8 + $0x2f0] sm:$0xff]
    %v11764 = vld [vmem:[#allocation8 + $0x2f8] sm:$0xff]
    %v11765 = vld [vmem:[#allocation8 + $0x300] sm:$0xff]
    %v11766 = vld [vmem:[#allocation8 + $0x308] sm:$0xff]
    %v11767 = vld [vmem:[#allocation8 + $0x310] sm:$0xff]
    %v11768 = vld [vmem:[#allocation8 + $0x318] sm:$0xff]
    %v11769 = vld [vmem:[#allocation8 + $0x320] sm:$0xff]
    %v11770 = vld [vmem:[#allocation8 + $0x328] sm:$0xff]
    %v11771 = vld [vmem:[#allocation8 + $0x330] sm:$0xff]
    %v11772 = vld [vmem:[#allocation8 + $0x338] sm:$0xff]
    %v11773 = vld [vmem:[#allocation8 + $0x340] sm:$0xff]
    %v11774 = vld [vmem:[#allocation8 + $0x348] sm:$0xff]
    %v11775 = vld [vmem:[#allocation8 + $0x350] sm:$0xff]
    %v11776 = vld [vmem:[#allocation8 + $0x358] sm:$0xff]
    %v11777 = vld [vmem:[#allocation8 + $0x360] sm:$0xff]
    %v11778 = vld [vmem:[#allocation8 + $0x368] sm:$0xff]
    %v11779 = vld [vmem:[#allocation8 + $0x370] sm:$0xff]
    %v11780 = vld [vmem:[#allocation8 + $0x378] sm:$0xff]
    %v11781 = vld [vmem:[#allocation8 + $0x380] sm:$0xff]
    %v11782 = vld [vmem:[#allocation8 + $0x388] sm:$0xff]
    %v11783 = vld [vmem:[#allocation8 + $0x390] sm:$0xff]
    %v11784 = vld [vmem:[#allocation8 + $0x398] sm:$0xff]
    %v11785 = vld [vmem:[#allocation8 + $0x3a0] sm:$0xff]
    %v11786 = vld [vmem:[#allocation8 + $0x3a8] sm:$0xff]
    %v11787 = vld [vmem:[#allocation8 + $0x3b0] sm:$0xff]
    %v11788 = vld [vmem:[#allocation8 + $0x3b8] sm:$0xff]
    %v11789 = vld [vmem:[#allocation8 + $0x3c0] sm:$0xff]
    %v11790 = vld [vmem:[#allocation8 + $0x3c8] sm:$0xff]
    %v11791 = vld [vmem:[#allocation8 + $0x3d0] sm:$0xff]
    %v11792 = vld [vmem:[#allocation8 + $0x3d8] sm:$0xff]
    %v11793 = vld [vmem:[#allocation8 + $0x3e0] sm:$0xff]
    %v11794 = vld [vmem:[#allocation8 + $0x3e8] sm:$0xff]
    %v11795 = vld [vmem:[#allocation8 + $0x3f0] sm:$0xff]
    %v11796 = vld [vmem:[#allocation8 + $0x3f8] sm:$0xff]
    %v11797 = vld [vmem:[#allocation8 + $0x400] sm:$0xff]
    %v11798 = vld [vmem:[#allocation8 + $0x408] sm:$0xff]
    %v11799 = vld [vmem:[#allocation8 + $0x410] sm:$0xff]
    %v11800 = vld [vmem:[#allocation8 + $0x418] sm:$0xff]
    %v11801 = vld [vmem:[#allocation8 + $0x420] sm:$0xff]
    %v11802 = vld [vmem:[#allocation8 + $0x428] sm:$0xff]
    %v11803 = vld [vmem:[#allocation8 + $0x430] sm:$0xff]
    %v11804 = vld [vmem:[#allocation8 + $0x438] sm:$0xff]
    %v11805 = vld [vmem:[#allocation8 + $0x440] sm:$0xff]
    %v11806 = vld [vmem:[#allocation8 + $0x448] sm:$0xff]
    %v11807 = vld [vmem:[#allocation8 + $0x450] sm:$0xff]
    %v11808 = vld [vmem:[#allocation8 + $0x458] sm:$0xff]
    %v11809 = vld [vmem:[#allocation8 + $0x460] sm:$0xff]
    %v11810 = vld [vmem:[#allocation8 + $0x468] sm:$0xff]
    %v11811 = vld [vmem:[#allocation8 + $0x470] sm:$0xff]
    %v11812 = vld [vmem:[#allocation8 + $0x478] sm:$0xff]
    %v11813 = vld [vmem:[#allocation8 + $0x480] sm:$0xff]
    %v11814 = vld [vmem:[#allocation8 + $0x488] sm:$0xff]
    %v11815 = vld [vmem:[#allocation8 + $0x490] sm:$0xff]
    %v11816 = vld [vmem:[#allocation8 + $0x498] sm:$0xff]
    %v11817 = vld [vmem:[#allocation8 + $0x4a0] sm:$0xff]
    %v11818 = vld [vmem:[#allocation8 + $0x4a8] sm:$0xff]
    %v11819 = vld [vmem:[#allocation8 + $0x4b0] sm:$0xff]
    %v11820 = vld [vmem:[#allocation8 + $0x4b8] sm:$0xff]
    %v11821 = vld [vmem:[#allocation8 + $0x4c0] sm:$0xff]
    %v11822 = vld [vmem:[#allocation8 + $0x4c8] sm:$0xff]
    %v11823 = vld [vmem:[#allocation8 + $0x4d0] sm:$0xff]
    %v11824 = vld [vmem:[#allocation8 + $0x4d8] sm:$0xff]
    %v11825 = vld [vmem:[#allocation8 + $0x4e0] sm:$0xff]
    %v11826 = vld [vmem:[#allocation8 + $0x4e8] sm:$0xff]
    %v11827 = vld [vmem:[#allocation8 + $0x4f0] sm:$0xff]
    %v11828 = vld [vmem:[#allocation8 + $0x4f8] sm:$0xff]
    %v11829 = vld [vmem:[#allocation8 + $0x500] sm:$0xff]
    %v11830 = vld [vmem:[#allocation8 + $0x508] sm:$0xff]
    %v11831 = vld [vmem:[#allocation8 + $0x510] sm:$0xff]
    %v11832 = vld [vmem:[#allocation8 + $0x518] sm:$0xff]
    %v11833 = vld [vmem:[#allocation8 + $0x520] sm:$0xff]
    %v11834 = vld [vmem:[#allocation8 + $0x528] sm:$0xff]
    %v11835 = vld [vmem:[#allocation8 + $0x530] sm:$0xff]
    %v11836 = vld [vmem:[#allocation8 + $0x538] sm:$0xff]
    %v11837 = vld [vmem:[#allocation8 + $0x540] sm:$0xff]
    %v11838 = vld [vmem:[#allocation8 + $0x548] sm:$0xff]
    %v11839 = vld [vmem:[#allocation8 + $0x550] sm:$0xff]
    %v11840 = vld [vmem:[#allocation8 + $0x558] sm:$0xff]
    %v11841 = vld [vmem:[#allocation8 + $0x560] sm:$0xff]
    %v11842 = vld [vmem:[#allocation8 + $0x568] sm:$0xff]
    %v11843 = vld [vmem:[#allocation8 + $0x570] sm:$0xff]
    %v11844 = vld [vmem:[#allocation8 + $0x578] sm:$0xff]
    %v11845 = vld [vmem:[#allocation8 + $0x580] sm:$0xff]
    %v11846 = vld [vmem:[#allocation8 + $0x588] sm:$0xff]
    %v11847 = vld [vmem:[#allocation8 + $0x590] sm:$0xff]
    %v11848 = vld [vmem:[#allocation8 + $0x598] sm:$0xff]
    %v11849 = vld [vmem:[#allocation8 + $0x5a0] sm:$0xff]
    %v11850 = vld [vmem:[#allocation8 + $0x5a8] sm:$0xff]
    %v11851 = vld [vmem:[#allocation8 + $0x5b0] sm:$0xff]
    %v11852 = vld [vmem:[#allocation8 + $0x5b8] sm:$0xff]
    %v11853 = vld [vmem:[#allocation8 + $0x5c0] sm:$0xff]
    %v11854 = vld [vmem:[#allocation8 + $0x5c8] sm:$0xff]
    %v11855 = vld [vmem:[#allocation8 + $0x5d0] sm:$0xff]
    %v11856 = vld [vmem:[#allocation8 + $0x5d8] sm:$0xff]
    %v11857 = vld [vmem:[#allocation8 + $0x5e0] sm:$0xff]
    %v11858 = vld [vmem:[#allocation8 + $0x5e8] sm:$0xff]
    %v11859 = vld [vmem:[#allocation8 + $0x5f0] sm:$0xff]
    %v11860 = vld [vmem:[#allocation8 + $0x5f8] sm:$0xff]
    %v11861 = vld [vmem:[#allocation8 + $0x600] sm:$0xff]
    %v11862 = vld [vmem:[#allocation8 + $0x608] sm:$0xff]
    %v11863 = vld [vmem:[#allocation8 + $0x610] sm:$0xff]
    %v11864 = vld [vmem:[#allocation8 + $0x618] sm:$0xff]
    %v11865 = vld [vmem:[#allocation8 + $0x620] sm:$0xff]
    %v11866 = vld [vmem:[#allocation8 + $0x628] sm:$0xff]
    %v11867 = vld [vmem:[#allocation8 + $0x630] sm:$0xff]
    %v11868 = vld [vmem:[#allocation8 + $0x638] sm:$0xff]
    %v11869 = vld [vmem:[#allocation8 + $0x640] sm:$0xff]
    %v11870 = vld [vmem:[#allocation8 + $0x648] sm:$0xff]
    %v11871 = vld [vmem:[#allocation8 + $0x650] sm:$0xff]
    %v11872 = vld [vmem:[#allocation8 + $0x658] sm:$0xff]
    %v11873 = vld [vmem:[#allocation8 + $0x660] sm:$0xff]
    %v11874 = vld [vmem:[#allocation8 + $0x668] sm:$0xff]
    %v11875 = vld [vmem:[#allocation8 + $0x670] sm:$0xff]
    %v11876 = vld [vmem:[#allocation8 + $0x678] sm:$0xff]
    %v11877 = vld [vmem:[#allocation8 + $0x680] sm:$0xff]
    %v11878 = vld [vmem:[#allocation8 + $0x688] sm:$0xff]
    %v11879 = vld [vmem:[#allocation8 + $0x690] sm:$0xff]
    %v11880 = vld [vmem:[#allocation8 + $0x698] sm:$0xff]
    %v11881 = vld [vmem:[#allocation8 + $0x6a0] sm:$0xff]
    %v11882 = vld [vmem:[#allocation8 + $0x6a8] sm:$0xff]
    %v11883 = vld [vmem:[#allocation8 + $0x6b0] sm:$0xff]
    %v11884 = vld [vmem:[#allocation8 + $0x6b8] sm:$0xff]
    %v11885 = vld [vmem:[#allocation8 + $0x6c0] sm:$0xff]
    %v11886 = vld [vmem:[#allocation8 + $0x6c8] sm:$0xff]
    %v11887 = vld [vmem:[#allocation8 + $0x6d0] sm:$0xff]
    %v11888 = vld [vmem:[#allocation8 + $0x6d8] sm:$0xff]
    %v11889 = vld [vmem:[#allocation8 + $0x6e0] sm:$0xff]
    %v11890 = vld [vmem:[#allocation8 + $0x6e8] sm:$0xff]
    %v11891 = vld [vmem:[#allocation8 + $0x6f0] sm:$0xff]
    %v11892 = vld [vmem:[#allocation8 + $0x6f8] sm:$0xff]
    %v11893 = vld [vmem:[#allocation8 + $0x700] sm:$0xff]
    %v11894 = vld [vmem:[#allocation8 + $0x708] sm:$0xff]
    %v11895 = vld [vmem:[#allocation8 + $0x710] sm:$0xff]
    %v11896 = vld [vmem:[#allocation8 + $0x718] sm:$0xff]
    %v11897 = vld [vmem:[#allocation8 + $0x720] sm:$0xff]
    %v11898 = vld [vmem:[#allocation8 + $0x728] sm:$0xff]
    %v11899 = vld [vmem:[#allocation8 + $0x730] sm:$0xff]
    %v11900 = vld [vmem:[#allocation8 + $0x738] sm:$0xff]
    %v11901 = vld [vmem:[#allocation8 + $0x740] sm:$0xff]
    %v11902 = vld [vmem:[#allocation8 + $0x748] sm:$0xff]
    %v11903 = vld [vmem:[#allocation8 + $0x750] sm:$0xff]
    %v11904 = vld [vmem:[#allocation8 + $0x758] sm:$0xff]
    %v11905 = vld [vmem:[#allocation8 + $0x760] sm:$0xff]
    %v11906 = vld [vmem:[#allocation8 + $0x768] sm:$0xff]
    %v11907 = vld [vmem:[#allocation8 + $0x770] sm:$0xff]
    %v11908 = vld [vmem:[#allocation8 + $0x778] sm:$0xff]
    %v11909 = vld [vmem:[#allocation8 + $0x780] sm:$0xff]
    %v11910 = vld [vmem:[#allocation8 + $0x788] sm:$0xff]
    %v11911 = vld [vmem:[#allocation8 + $0x790] sm:$0xff]
    %v11912 = vld [vmem:[#allocation8 + $0x798] sm:$0xff]
    %v11913 = vld [vmem:[#allocation8 + $0x7a0] sm:$0xff]
    %v11914 = vld [vmem:[#allocation8 + $0x7a8] sm:$0xff]
    %v11915 = vld [vmem:[#allocation8 + $0x7b0] sm:$0xff]
    %v11916 = vld [vmem:[#allocation8 + $0x7b8] sm:$0xff]
    %v11917 = vld [vmem:[#allocation8 + $0x7c0] sm:$0xff]
    %v11918 = vld [vmem:[#allocation8 + $0x7c8] sm:$0xff]
    %v11919 = vld [vmem:[#allocation8 + $0x7d0] sm:$0xff]
    %v11920 = vld [vmem:[#allocation8 + $0x7d8] sm:$0xff]
    %v11921 = vld [vmem:[#allocation8 + $0x7e0] sm:$0xff]
    %v11922 = vld [vmem:[#allocation8 + $0x7e8] sm:$0xff]
    %v11923 = vld [vmem:[#allocation8 + $0x7f0] sm:$0xff]
    %v11924 = vld [vmem:[#allocation8 + $0x7f8] sm:$0xff]
    %v11925 = vld [vmem:[#allocation10] sm:$0xf]
    %v11927 = vlaneseq
    %v11928 = vshrl.u32 %v11927, 7
    %v11929 = vsub.s32 0, %v11928
    %v11930 = vrot.slane %v11925, %v11929
    %v11931 = vlaneseq
    %v11932 = vshrl.u32 %v11931, 7
    %v11933 = vsub.s32 1, %v11932
    %v11934 = vrot.slane %v11925, %v11933
    %v11935 = vlaneseq
    %v11936 = vshrl.u32 %v11935, 7
    %v11937 = vsub.s32 2, %v11936
    %v11938 = vrot.slane %v11925, %v11937
    %v11939 = vlaneseq
    %v11940 = vshrl.u32 %v11939, 7
    %v11941 = vsub.s32 3, %v11940
    %v11942 = vrot.slane %v11925, %v11941
    %v12203 = vunpack.c.l.b16 %v11669
    %v12204 = vunpack.c.h.b16 %v11669
    %v12205 = vunpack.c.l.b16 %v11670
    %v12206 = vunpack.c.h.b16 %v11670
    %v12207 = vunpack.c.l.b16 %v11671
    %v12208 = vunpack.c.h.b16 %v11671
    %v12209 = vunpack.c.l.b16 %v11672
    %v12210 = vunpack.c.h.b16 %v11672
    %v12211 = vunpack.c.l.b16 %v11673
    %v12212 = vunpack.c.h.b16 %v11673
    %v12213 = vunpack.c.l.b16 %v11674
    %v12214 = vunpack.c.h.b16 %v11674
    %v12215 = vunpack.c.l.b16 %v11675
    %v12216 = vunpack.c.h.b16 %v11675
    %v12217 = vunpack.c.l.b16 %v11676
    %v12218 = vunpack.c.h.b16 %v11676
    %v12219 = vunpack.c.l.b16 %v11677
    %v12220 = vunpack.c.h.b16 %v11677
    %v12221 = vunpack.c.l.b16 %v11678
    %v12222 = vunpack.c.h.b16 %v11678
    %v12223 = vunpack.c.l.b16 %v11679
    %v12224 = vunpack.c.h.b16 %v11679
    %v12225 = vunpack.c.l.b16 %v11680
    %v12226 = vunpack.c.h.b16 %v11680
    %v12227 = vunpack.c.l.b16 %v11681
    %v12228 = vunpack.c.h.b16 %v11681
    %v12229 = vunpack.c.l.b16 %v11682
    %v12230 = vunpack.c.h.b16 %v11682
    %v12231 = vunpack.c.l.b16 %v11683
    %v12232 = vunpack.c.h.b16 %v11683
    %v12233 = vunpack.c.l.b16 %v11684
    %v12234 = vunpack.c.h.b16 %v11684
    %v12235 = vunpack.c.l.b16 %v11685
    %v12236 = vunpack.c.h.b16 %v11685
    %v12237 = vunpack.c.l.b16 %v11686
    %v12238 = vunpack.c.h.b16 %v11686
    %v12239 = vunpack.c.l.b16 %v11687
    %v12240 = vunpack.c.h.b16 %v11687
    %v12241 = vunpack.c.l.b16 %v11688
    %v12242 = vunpack.c.h.b16 %v11688
    %v12243 = vunpack.c.l.b16 %v11689
    %v12244 = vunpack.c.h.b16 %v11689
    %v12245 = vunpack.c.l.b16 %v11690
    %v12246 = vunpack.c.h.b16 %v11690
    %v12247 = vunpack.c.l.b16 %v11691
    %v12248 = vunpack.c.h.b16 %v11691
    %v12249 = vunpack.c.l.b16 %v11692
    %v12250 = vunpack.c.h.b16 %v11692
    %v12251 = vunpack.c.l.b16 %v11693
    %v12252 = vunpack.c.h.b16 %v11693
    %v12253 = vunpack.c.l.b16 %v11694
    %v12254 = vunpack.c.h.b16 %v11694
    %v12255 = vunpack.c.l.b16 %v11695
    %v12256 = vunpack.c.h.b16 %v11695
    %v12257 = vunpack.c.l.b16 %v11696
    %v12258 = vunpack.c.h.b16 %v11696
    %v12259 = vunpack.c.l.b16 %v11697
    %v12260 = vunpack.c.h.b16 %v11697
    %v12261 = vunpack.c.l.b16 %v11698
    %v12262 = vunpack.c.h.b16 %v11698
    %v12263 = vunpack.c.l.b16 %v11699
    %v12264 = vunpack.c.h.b16 %v11699
    %v12265 = vunpack.c.l.b16 %v11700
    %v12266 = vunpack.c.h.b16 %v11700
    %v12267 = vunpack.c.l.b16 %v11701
    %v12268 = vunpack.c.h.b16 %v11701
    %v12269 = vunpack.c.l.b16 %v11702
    %v12270 = vunpack.c.h.b16 %v11702
    %v12271 = vunpack.c.l.b16 %v11703
    %v12272 = vunpack.c.h.b16 %v11703
    %v12273 = vunpack.c.l.b16 %v11704
    %v12274 = vunpack.c.h.b16 %v11704
    %v12275 = vunpack.c.l.b16 %v11705
    %v12276 = vunpack.c.h.b16 %v11705
    %v12277 = vunpack.c.l.b16 %v11706
    %v12278 = vunpack.c.h.b16 %v11706
    %v12279 = vunpack.c.l.b16 %v11707
    %v12280 = vunpack.c.h.b16 %v11707
    %v12281 = vunpack.c.l.b16 %v11708
    %v12282 = vunpack.c.h.b16 %v11708
    %v12283 = vunpack.c.l.b16 %v11709
    %v12284 = vunpack.c.h.b16 %v11709
    %v12285 = vunpack.c.l.b16 %v11710
    %v12286 = vunpack.c.h.b16 %v11710
    %v12287 = vunpack.c.l.b16 %v11711
    %v12288 = vunpack.c.h.b16 %v11711
    %v12289 = vunpack.c.l.b16 %v11712
    %v12290 = vunpack.c.h.b16 %v11712
    %v12291 = vunpack.c.l.b16 %v11713
    %v12292 = vunpack.c.h.b16 %v11713
    %v12293 = vunpack.c.l.b16 %v11714
    %v12294 = vunpack.c.h.b16 %v11714
    %v12295 = vunpack.c.l.b16 %v11715
    %v12296 = vunpack.c.h.b16 %v11715
    %v12297 = vunpack.c.l.b16 %v11716
    %v12298 = vunpack.c.h.b16 %v11716
    %v12299 = vunpack.c.l.b16 %v11717
    %v12300 = vunpack.c.h.b16 %v11717
    %v12301 = vunpack.c.l.b16 %v11718
    %v12302 = vunpack.c.h.b16 %v11718
    %v12303 = vunpack.c.l.b16 %v11719
    %v12304 = vunpack.c.h.b16 %v11719
    %v12305 = vunpack.c.l.b16 %v11720
    %v12306 = vunpack.c.h.b16 %v11720
    %v12307 = vunpack.c.l.b16 %v11721
    %v12308 = vunpack.c.h.b16 %v11721
    %v12309 = vunpack.c.l.b16 %v11722
    %v12310 = vunpack.c.h.b16 %v11722
    %v12311 = vunpack.c.l.b16 %v11723
    %v12312 = vunpack.c.h.b16 %v11723
    %v12313 = vunpack.c.l.b16 %v11724
    %v12314 = vunpack.c.h.b16 %v11724
    %v12315 = vunpack.c.l.b16 %v11725
    %v12316 = vunpack.c.h.b16 %v11725
    %v12317 = vunpack.c.l.b16 %v11726
    %v12318 = vunpack.c.h.b16 %v11726
    %v12319 = vunpack.c.l.b16 %v11727
    %v12320 = vunpack.c.h.b16 %v11727
    %v12321 = vunpack.c.l.b16 %v11728
    %v12322 = vunpack.c.h.b16 %v11728
    %v12323 = vunpack.c.l.b16 %v11729
    %v12324 = vunpack.c.h.b16 %v11729
    %v12325 = vunpack.c.l.b16 %v11730
    %v12326 = vunpack.c.h.b16 %v11730
    %v12327 = vunpack.c.l.b16 %v11731
    %v12328 = vunpack.c.h.b16 %v11731
    %v12329 = vunpack.c.l.b16 %v11732
    %v12330 = vunpack.c.h.b16 %v11732
    %v12331 = vunpack.c.l.b16 %v11733
    %v12332 = vunpack.c.h.b16 %v11733
    %v12333 = vunpack.c.l.b16 %v11734
    %v12334 = vunpack.c.h.b16 %v11734
    %v12335 = vunpack.c.l.b16 %v11735
    %v12336 = vunpack.c.h.b16 %v11735
    %v12337 = vunpack.c.l.b16 %v11736
    %v12338 = vunpack.c.h.b16 %v11736
    %v12339 = vunpack.c.l.b16 %v11737
    %v12340 = vunpack.c.h.b16 %v11737
    %v12341 = vunpack.c.l.b16 %v11738
    %v12342 = vunpack.c.h.b16 %v11738
    %v12343 = vunpack.c.l.b16 %v11739
    %v12344 = vunpack.c.h.b16 %v11739
    %v12345 = vunpack.c.l.b16 %v11740
    %v12346 = vunpack.c.h.b16 %v11740
    %v12347 = vunpack.c.l.b16 %v11741
    %v12348 = vunpack.c.h.b16 %v11741
    %v12349 = vunpack.c.l.b16 %v11742
    %v12350 = vunpack.c.h.b16 %v11742
    %v12351 = vunpack.c.l.b16 %v11743
    %v12352 = vunpack.c.h.b16 %v11743
    %v12353 = vunpack.c.l.b16 %v11744
    %v12354 = vunpack.c.h.b16 %v11744
    %v12355 = vunpack.c.l.b16 %v11745
    %v12356 = vunpack.c.h.b16 %v11745
    %v12357 = vunpack.c.l.b16 %v11746
    %v12358 = vunpack.c.h.b16 %v11746
    %v12359 = vunpack.c.l.b16 %v11747
    %v12360 = vunpack.c.h.b16 %v11747
    %v12361 = vunpack.c.l.b16 %v11748
    %v12362 = vunpack.c.h.b16 %v11748
    %v12363 = vunpack.c.l.b16 %v11749
    %v12364 = vunpack.c.h.b16 %v11749
    %v12365 = vunpack.c.l.b16 %v11750
    %v12366 = vunpack.c.h.b16 %v11750
    %v12367 = vunpack.c.l.b16 %v11751
    %v12368 = vunpack.c.h.b16 %v11751
    %v12369 = vunpack.c.l.b16 %v11752
    %v12370 = vunpack.c.h.b16 %v11752
    %v12371 = vunpack.c.l.b16 %v11753
    %v12372 = vunpack.c.h.b16 %v11753
    %v12373 = vunpack.c.l.b16 %v11754
    %v12374 = vunpack.c.h.b16 %v11754
    %v12375 = vunpack.c.l.b16 %v11755
    %v12376 = vunpack.c.h.b16 %v11755
    %v12377 = vunpack.c.l.b16 %v11756
    %v12378 = vunpack.c.h.b16 %v11756
    %v12379 = vunpack.c.l.b16 %v11757
    %v12380 = vunpack.c.h.b16 %v11757
    %v12381 = vunpack.c.l.b16 %v11758
    %v12382 = vunpack.c.h.b16 %v11758
    %v12383 = vunpack.c.l.b16 %v11759
    %v12384 = vunpack.c.h.b16 %v11759
    %v12385 = vunpack.c.l.b16 %v11760
    %v12386 = vunpack.c.h.b16 %v11760
    %v12387 = vunpack.c.l.b16 %v11761
    %v12388 = vunpack.c.h.b16 %v11761
    %v12389 = vunpack.c.l.b16 %v11762
    %v12390 = vunpack.c.h.b16 %v11762
    %v12391 = vunpack.c.l.b16 %v11763
    %v12392 = vunpack.c.h.b16 %v11763
    %v12393 = vunpack.c.l.b16 %v11764
    %v12394 = vunpack.c.h.b16 %v11764
    %v12395 = vunpack.c.l.b16 %v11765
    %v12396 = vunpack.c.h.b16 %v11765
    %v12397 = vunpack.c.l.b16 %v11766
    %v12398 = vunpack.c.h.b16 %v11766
    %v12399 = vunpack.c.l.b16 %v11767
    %v12400 = vunpack.c.h.b16 %v11767
    %v12401 = vunpack.c.l.b16 %v11768
    %v12402 = vunpack.c.h.b16 %v11768
    %v12403 = vunpack.c.l.b16 %v11769
    %v12404 = vunpack.c.h.b16 %v11769
    %v12405 = vunpack.c.l.b16 %v11770
    %v12406 = vunpack.c.h.b16 %v11770
    %v12407 = vunpack.c.l.b16 %v11771
    %v12408 = vunpack.c.h.b16 %v11771
    %v12409 = vunpack.c.l.b16 %v11772
    %v12410 = vunpack.c.h.b16 %v11772
    %v12411 = vunpack.c.l.b16 %v11773
    %v12412 = vunpack.c.h.b16 %v11773
    %v12413 = vunpack.c.l.b16 %v11774
    %v12414 = vunpack.c.h.b16 %v11774
    %v12415 = vunpack.c.l.b16 %v11775
    %v12416 = vunpack.c.h.b16 %v11775
    %v12417 = vunpack.c.l.b16 %v11776
    %v12418 = vunpack.c.h.b16 %v11776
    %v12419 = vunpack.c.l.b16 %v11777
    %v12420 = vunpack.c.h.b16 %v11777
    %v12421 = vunpack.c.l.b16 %v11778
    %v12422 = vunpack.c.h.b16 %v11778
    %v12423 = vunpack.c.l.b16 %v11779
    %v12424 = vunpack.c.h.b16 %v11779
    %v12425 = vunpack.c.l.b16 %v11780
    %v12426 = vunpack.c.h.b16 %v11780
    %v12427 = vunpack.c.l.b16 %v11781
    %v12428 = vunpack.c.h.b16 %v11781
    %v12429 = vunpack.c.l.b16 %v11782
    %v12430 = vunpack.c.h.b16 %v11782
    %v12431 = vunpack.c.l.b16 %v11783
    %v12432 = vunpack.c.h.b16 %v11783
    %v12433 = vunpack.c.l.b16 %v11784
    %v12434 = vunpack.c.h.b16 %v11784
    %v12435 = vunpack.c.l.b16 %v11785
    %v12436 = vunpack.c.h.b16 %v11785
    %v12437 = vunpack.c.l.b16 %v11786
    %v12438 = vunpack.c.h.b16 %v11786
    %v12439 = vunpack.c.l.b16 %v11787
    %v12440 = vunpack.c.h.b16 %v11787
    %v12441 = vunpack.c.l.b16 %v11788
    %v12442 = vunpack.c.h.b16 %v11788
    %v12443 = vunpack.c.l.b16 %v11789
    %v12444 = vunpack.c.h.b16 %v11789
    %v12445 = vunpack.c.l.b16 %v11790
    %v12446 = vunpack.c.h.b16 %v11790
    %v12447 = vunpack.c.l.b16 %v11791
    %v12448 = vunpack.c.h.b16 %v11791
    %v12449 = vunpack.c.l.b16 %v11792
    %v12450 = vunpack.c.h.b16 %v11792
    %v12451 = vunpack.c.l.b16 %v11793
    %v12452 = vunpack.c.h.b16 %v11793
    %v12453 = vunpack.c.l.b16 %v11794
    %v12454 = vunpack.c.h.b16 %v11794
    %v12455 = vunpack.c.l.b16 %v11795
    %v12456 = vunpack.c.h.b16 %v11795
    %v12457 = vunpack.c.l.b16 %v11796
    %v12458 = vunpack.c.h.b16 %v11796
    %v12459 = vunpack.c.l.b16 %v11797
    %v12460 = vunpack.c.h.b16 %v11797
    %v12461 = vunpack.c.l.b16 %v11798
    %v12462 = vunpack.c.h.b16 %v11798
    %v12463 = vunpack.c.l.b16 %v11799
    %v12464 = vunpack.c.h.b16 %v11799
    %v12465 = vunpack.c.l.b16 %v11800
    %v12466 = vunpack.c.h.b16 %v11800
    %v12467 = vunpack.c.l.b16 %v11801
    %v12468 = vunpack.c.h.b16 %v11801
    %v12469 = vunpack.c.l.b16 %v11802
    %v12470 = vunpack.c.h.b16 %v11802
    %v12471 = vunpack.c.l.b16 %v11803
    %v12472 = vunpack.c.h.b16 %v11803
    %v12473 = vunpack.c.l.b16 %v11804
    %v12474 = vunpack.c.h.b16 %v11804
    %v12475 = vunpack.c.l.b16 %v11805
    %v12476 = vunpack.c.h.b16 %v11805
    %v12477 = vunpack.c.l.b16 %v11806
    %v12478 = vunpack.c.h.b16 %v11806
    %v12479 = vunpack.c.l.b16 %v11807
    %v12480 = vunpack.c.h.b16 %v11807
    %v12481 = vunpack.c.l.b16 %v11808
    %v12482 = vunpack.c.h.b16 %v11808
    %v12483 = vunpack.c.l.b16 %v11809
    %v12484 = vunpack.c.h.b16 %v11809
    %v12485 = vunpack.c.l.b16 %v11810
    %v12486 = vunpack.c.h.b16 %v11810
    %v12487 = vunpack.c.l.b16 %v11811
    %v12488 = vunpack.c.h.b16 %v11811
    %v12489 = vunpack.c.l.b16 %v11812
    %v12490 = vunpack.c.h.b16 %v11812
    %v12491 = vunpack.c.l.b16 %v11813
    %v12492 = vunpack.c.h.b16 %v11813
    %v12493 = vunpack.c.l.b16 %v11814
    %v12494 = vunpack.c.h.b16 %v11814
    %v12495 = vunpack.c.l.b16 %v11815
    %v12496 = vunpack.c.h.b16 %v11815
    %v12497 = vunpack.c.l.b16 %v11816
    %v12498 = vunpack.c.h.b16 %v11816
    %v12499 = vunpack.c.l.b16 %v11817
    %v12500 = vunpack.c.h.b16 %v11817
    %v12501 = vunpack.c.l.b16 %v11818
    %v12502 = vunpack.c.h.b16 %v11818
    %v12503 = vunpack.c.l.b16 %v11819
    %v12504 = vunpack.c.h.b16 %v11819
    %v12505 = vunpack.c.l.b16 %v11820
    %v12506 = vunpack.c.h.b16 %v11820
    %v12507 = vunpack.c.l.b16 %v11821
    %v12508 = vunpack.c.h.b16 %v11821
    %v12509 = vunpack.c.l.b16 %v11822
    %v12510 = vunpack.c.h.b16 %v11822
    %v12511 = vunpack.c.l.b16 %v11823
    %v12512 = vunpack.c.h.b16 %v11823
    %v12513 = vunpack.c.l.b16 %v11824
    %v12514 = vunpack.c.h.b16 %v11824
    %v12515 = vunpack.c.l.b16 %v11825
    %v12516 = vunpack.c.h.b16 %v11825
    %v12517 = vunpack.c.l.b16 %v11826
    %v12518 = vunpack.c.h.b16 %v11826
    %v12519 = vunpack.c.l.b16 %v11827
    %v12520 = vunpack.c.h.b16 %v11827
    %v12521 = vunpack.c.l.b16 %v11828
    %v12522 = vunpack.c.h.b16 %v11828
    %v12523 = vunpack.c.l.b16 %v11829
    %v12524 = vunpack.c.h.b16 %v11829
    %v12525 = vunpack.c.l.b16 %v11830
    %v12526 = vunpack.c.h.b16 %v11830
    %v12527 = vunpack.c.l.b16 %v11831
    %v12528 = vunpack.c.h.b16 %v11831
    %v12529 = vunpack.c.l.b16 %v11832
    %v12530 = vunpack.c.h.b16 %v11832
    %v12531 = vunpack.c.l.b16 %v11833
    %v12532 = vunpack.c.h.b16 %v11833
    %v12533 = vunpack.c.l.b16 %v11834
    %v12534 = vunpack.c.h.b16 %v11834
    %v12535 = vunpack.c.l.b16 %v11835
    %v12536 = vunpack.c.h.b16 %v11835
    %v12537 = vunpack.c.l.b16 %v11836
    %v12538 = vunpack.c.h.b16 %v11836
    %v12539 = vunpack.c.l.b16 %v11837
    %v12540 = vunpack.c.h.b16 %v11837
    %v12541 = vunpack.c.l.b16 %v11838
    %v12542 = vunpack.c.h.b16 %v11838
    %v12543 = vunpack.c.l.b16 %v11839
    %v12544 = vunpack.c.h.b16 %v11839
    %v12545 = vunpack.c.l.b16 %v11840
    %v12546 = vunpack.c.h.b16 %v11840
    %v12547 = vunpack.c.l.b16 %v11841
    %v12548 = vunpack.c.h.b16 %v11841
    %v12549 = vunpack.c.l.b16 %v11842
    %v12550 = vunpack.c.h.b16 %v11842
    %v12551 = vunpack.c.l.b16 %v11843
    %v12552 = vunpack.c.h.b16 %v11843
    %v12553 = vunpack.c.l.b16 %v11844
    %v12554 = vunpack.c.h.b16 %v11844
    %v12555 = vunpack.c.l.b16 %v11845
    %v12556 = vunpack.c.h.b16 %v11845
    %v12557 = vunpack.c.l.b16 %v11846
    %v12558 = vunpack.c.h.b16 %v11846
    %v12559 = vunpack.c.l.b16 %v11847
    %v12560 = vunpack.c.h.b16 %v11847
    %v12561 = vunpack.c.l.b16 %v11848
    %v12562 = vunpack.c.h.b16 %v11848
    %v12563 = vunpack.c.l.b16 %v11849
    %v12564 = vunpack.c.h.b16 %v11849
    %v12565 = vunpack.c.l.b16 %v11850
    %v12566 = vunpack.c.h.b16 %v11850
    %v12567 = vunpack.c.l.b16 %v11851
    %v12568 = vunpack.c.h.b16 %v11851
    %v12569 = vunpack.c.l.b16 %v11852
    %v12570 = vunpack.c.h.b16 %v11852
    %v12571 = vunpack.c.l.b16 %v11853
    %v12572 = vunpack.c.h.b16 %v11853
    %v12573 = vunpack.c.l.b16 %v11854
    %v12574 = vunpack.c.h.b16 %v11854
    %v12575 = vunpack.c.l.b16 %v11855
    %v12576 = vunpack.c.h.b16 %v11855
    %v12577 = vunpack.c.l.b16 %v11856
    %v12578 = vunpack.c.h.b16 %v11856
    %v12579 = vunpack.c.l.b16 %v11857
    %v12580 = vunpack.c.h.b16 %v11857
    %v12581 = vunpack.c.l.b16 %v11858
    %v12582 = vunpack.c.h.b16 %v11858
    %v12583 = vunpack.c.l.b16 %v11859
    %v12584 = vunpack.c.h.b16 %v11859
    %v12585 = vunpack.c.l.b16 %v11860
    %v12586 = vunpack.c.h.b16 %v11860
    %v12587 = vunpack.c.l.b16 %v11861
    %v12588 = vunpack.c.h.b16 %v11861
    %v12589 = vunpack.c.l.b16 %v11862
    %v12590 = vunpack.c.h.b16 %v11862
    %v12591 = vunpack.c.l.b16 %v11863
    %v12592 = vunpack.c.h.b16 %v11863
    %v12593 = vunpack.c.l.b16 %v11864
    %v12594 = vunpack.c.h.b16 %v11864
    %v12595 = vunpack.c.l.b16 %v11865
    %v12596 = vunpack.c.h.b16 %v11865
    %v12597 = vunpack.c.l.b16 %v11866
    %v12598 = vunpack.c.h.b16 %v11866
    %v12599 = vunpack.c.l.b16 %v11867
    %v12600 = vunpack.c.h.b16 %v11867
    %v12601 = vunpack.c.l.b16 %v11868
    %v12602 = vunpack.c.h.b16 %v11868
    %v12603 = vunpack.c.l.b16 %v11869
    %v12604 = vunpack.c.h.b16 %v11869
    %v12605 = vunpack.c.l.b16 %v11870
    %v12606 = vunpack.c.h.b16 %v11870
    %v12607 = vunpack.c.l.b16 %v11871
    %v12608 = vunpack.c.h.b16 %v11871
    %v12609 = vunpack.c.l.b16 %v11872
    %v12610 = vunpack.c.h.b16 %v11872
    %v12611 = vunpack.c.l.b16 %v11873
    %v12612 = vunpack.c.h.b16 %v11873
    %v12613 = vunpack.c.l.b16 %v11874
    %v12614 = vunpack.c.h.b16 %v11874
    %v12615 = vunpack.c.l.b16 %v11875
    %v12616 = vunpack.c.h.b16 %v11875
    %v12617 = vunpack.c.l.b16 %v11876
    %v12618 = vunpack.c.h.b16 %v11876
    %v12619 = vunpack.c.l.b16 %v11877
    %v12620 = vunpack.c.h.b16 %v11877
    %v12621 = vunpack.c.l.b16 %v11878
    %v12622 = vunpack.c.h.b16 %v11878
    %v12623 = vunpack.c.l.b16 %v11879
    %v12624 = vunpack.c.h.b16 %v11879
    %v12625 = vunpack.c.l.b16 %v11880
    %v12626 = vunpack.c.h.b16 %v11880
    %v12627 = vunpack.c.l.b16 %v11881
    %v12628 = vunpack.c.h.b16 %v11881
    %v12629 = vunpack.c.l.b16 %v11882
    %v12630 = vunpack.c.h.b16 %v11882
    %v12631 = vunpack.c.l.b16 %v11883
    %v12632 = vunpack.c.h.b16 %v11883
    %v12633 = vunpack.c.l.b16 %v11884
    %v12634 = vunpack.c.h.b16 %v11884
    %v12635 = vunpack.c.l.b16 %v11885
    %v12636 = vunpack.c.h.b16 %v11885
    %v12637 = vunpack.c.l.b16 %v11886
    %v12638 = vunpack.c.h.b16 %v11886
    %v12639 = vunpack.c.l.b16 %v11887
    %v12640 = vunpack.c.h.b16 %v11887
    %v12641 = vunpack.c.l.b16 %v11888
    %v12642 = vunpack.c.h.b16 %v11888
    %v12643 = vunpack.c.l.b16 %v11889
    %v12644 = vunpack.c.h.b16 %v11889
    %v12645 = vunpack.c.l.b16 %v11890
    %v12646 = vunpack.c.h.b16 %v11890
    %v12647 = vunpack.c.l.b16 %v11891
    %v12648 = vunpack.c.h.b16 %v11891
    %v12649 = vunpack.c.l.b16 %v11892
    %v12650 = vunpack.c.h.b16 %v11892
    %v12651 = vunpack.c.l.b16 %v11893
    %v12652 = vunpack.c.h.b16 %v11893
    %v12653 = vunpack.c.l.b16 %v11894
    %v12654 = vunpack.c.h.b16 %v11894
    %v12655 = vunpack.c.l.b16 %v11895
    %v12656 = vunpack.c.h.b16 %v11895
    %v12657 = vunpack.c.l.b16 %v11896
    %v12658 = vunpack.c.h.b16 %v11896
    %v12659 = vunpack.c.l.b16 %v11897
    %v12660 = vunpack.c.h.b16 %v11897
    %v12661 = vunpack.c.l.b16 %v11898
    %v12662 = vunpack.c.h.b16 %v11898
    %v12663 = vunpack.c.l.b16 %v11899
    %v12664 = vunpack.c.h.b16 %v11899
    %v12665 = vunpack.c.l.b16 %v11900
    %v12666 = vunpack.c.h.b16 %v11900
    %v12667 = vunpack.c.l.b16 %v11901
    %v12668 = vunpack.c.h.b16 %v11901
    %v12669 = vunpack.c.l.b16 %v11902
    %v12670 = vunpack.c.h.b16 %v11902
    %v12671 = vunpack.c.l.b16 %v11903
    %v12672 = vunpack.c.h.b16 %v11903
    %v12673 = vunpack.c.l.b16 %v11904
    %v12674 = vunpack.c.h.b16 %v11904
    %v12675 = vunpack.c.l.b16 %v11905
    %v12676 = vunpack.c.h.b16 %v11905
    %v12677 = vunpack.c.l.b16 %v11906
    %v12678 = vunpack.c.h.b16 %v11906
    %v12679 = vunpack.c.l.b16 %v11907
    %v12680 = vunpack.c.h.b16 %v11907
    %v12681 = vunpack.c.l.b16 %v11908
    %v12682 = vunpack.c.h.b16 %v11908
    %v12683 = vunpack.c.l.b16 %v11909
    %v12684 = vunpack.c.h.b16 %v11909
    %v12685 = vunpack.c.l.b16 %v11910
    %v12686 = vunpack.c.h.b16 %v11910
    %v12687 = vunpack.c.l.b16 %v11911
    %v12688 = vunpack.c.h.b16 %v11911
    %v12689 = vunpack.c.l.b16 %v11912
    %v12690 = vunpack.c.h.b16 %v11912
    %v12691 = vunpack.c.l.b16 %v11913
    %v12692 = vunpack.c.h.b16 %v11913
    %v12693 = vunpack.c.l.b16 %v11914
    %v12694 = vunpack.c.h.b16 %v11914
    %v12695 = vunpack.c.l.b16 %v11915
    %v12696 = vunpack.c.h.b16 %v11915
    %v12697 = vunpack.c.l.b16 %v11916
    %v12698 = vunpack.c.h.b16 %v11916
    %v12699 = vunpack.c.l.b16 %v11917
    %v12700 = vunpack.c.h.b16 %v11917
    %v12701 = vunpack.c.l.b16 %v11918
    %v12702 = vunpack.c.h.b16 %v11918
    %v12703 = vunpack.c.l.b16 %v11919
    %v12704 = vunpack.c.h.b16 %v11919
    %v12705 = vunpack.c.l.b16 %v11920
    %v12706 = vunpack.c.h.b16 %v11920
    %v12707 = vunpack.c.l.b16 %v11921
    %v12708 = vunpack.c.h.b16 %v11921
    %v12709 = vunpack.c.l.b16 %v11922
    %v12710 = vunpack.c.h.b16 %v11922
    %v12711 = vunpack.c.l.b16 %v11923
    %v12712 = vunpack.c.h.b16 %v11923
    %v12713 = vunpack.c.l.b16 %v11924
    %v12714 = vunpack.c.h.b16 %v11924
    %v12715 = vpack.c.b16 %v12207, %v12203
    %v12716 = vpack.c.b16 %v12208, %v12204
    %v12717 = vpack.c.b16 %v12209, %v12205
    %v12718 = vpack.c.b16 %v12210, %v12206
    %v12719 = vpack.c.b16 %v12215, %v12211
    %v12720 = vpack.c.b16 %v12216, %v12212
    %v12721 = vpack.c.b16 %v12217, %v12213
    %v12722 = vpack.c.b16 %v12218, %v12214
    %v12723 = vpack.c.b16 %v12223, %v12219
    %v12724 = vpack.c.b16 %v12224, %v12220
    %v12725 = vpack.c.b16 %v12225, %v12221
    %v12726 = vpack.c.b16 %v12226, %v12222
    %v12727 = vpack.c.b16 %v12231, %v12227
    %v12728 = vpack.c.b16 %v12232, %v12228
    %v12729 = vpack.c.b16 %v12233, %v12229
    %v12730 = vpack.c.b16 %v12234, %v12230
    %v12731 = vpack.c.b16 %v12239, %v12235
    %v12732 = vpack.c.b16 %v12240, %v12236
    %v12733 = vpack.c.b16 %v12241, %v12237
    %v12734 = vpack.c.b16 %v12242, %v12238
    %v12735 = vpack.c.b16 %v12247, %v12243
    %v12736 = vpack.c.b16 %v12248, %v12244
    %v12737 = vpack.c.b16 %v12249, %v12245
    %v12738 = vpack.c.b16 %v12250, %v12246
    %v12739 = vpack.c.b16 %v12255, %v12251
    %v12740 = vpack.c.b16 %v12256, %v12252
    %v12741 = vpack.c.b16 %v12257, %v12253
    %v12742 = vpack.c.b16 %v12258, %v12254
    %v12743 = vpack.c.b16 %v12263, %v12259
    %v12744 = vpack.c.b16 %v12264, %v12260
    %v12745 = vpack.c.b16 %v12265, %v12261
    %v12746 = vpack.c.b16 %v12266, %v12262
    %v12747 = vpack.c.b16 %v12271, %v12267
    %v12748 = vpack.c.b16 %v12272, %v12268
    %v12749 = vpack.c.b16 %v12273, %v12269
    %v12750 = vpack.c.b16 %v12274, %v12270
    %v12751 = vpack.c.b16 %v12279, %v12275
    %v12752 = vpack.c.b16 %v12280, %v12276
    %v12753 = vpack.c.b16 %v12281, %v12277
    %v12754 = vpack.c.b16 %v12282, %v12278
    %v12755 = vpack.c.b16 %v12287, %v12283
    %v12756 = vpack.c.b16 %v12288, %v12284
    %v12757 = vpack.c.b16 %v12289, %v12285
    %v12758 = vpack.c.b16 %v12290, %v12286
    %v12759 = vpack.c.b16 %v12295, %v12291
    %v12760 = vpack.c.b16 %v12296, %v12292
    %v12761 = vpack.c.b16 %v12297, %v12293
    %v12762 = vpack.c.b16 %v12298, %v12294
    %v12763 = vpack.c.b16 %v12303, %v12299
    %v12764 = vpack.c.b16 %v12304, %v12300
    %v12765 = vpack.c.b16 %v12305, %v12301
    %v12766 = vpack.c.b16 %v12306, %v12302
    %v12767 = vpack.c.b16 %v12311, %v12307
    %v12768 = vpack.c.b16 %v12312, %v12308
    %v12769 = vpack.c.b16 %v12313, %v12309
    %v12770 = vpack.c.b16 %v12314, %v12310
    %v12771 = vpack.c.b16 %v12319, %v12315
    %v12772 = vpack.c.b16 %v12320, %v12316
    %v12773 = vpack.c.b16 %v12321, %v12317
    %v12774 = vpack.c.b16 %v12322, %v12318
    %v12775 = vpack.c.b16 %v12327, %v12323
    %v12776 = vpack.c.b16 %v12328, %v12324
    %v12777 = vpack.c.b16 %v12329, %v12325
    %v12778 = vpack.c.b16 %v12330, %v12326
    %v12779 = vpack.c.b16 %v12335, %v12331
    %v12780 = vpack.c.b16 %v12336, %v12332
    %v12781 = vpack.c.b16 %v12337, %v12333
    %v12782 = vpack.c.b16 %v12338, %v12334
    %v12783 = vpack.c.b16 %v12343, %v12339
    %v12784 = vpack.c.b16 %v12344, %v12340
    %v12785 = vpack.c.b16 %v12345, %v12341
    %v12786 = vpack.c.b16 %v12346, %v12342
    %v12787 = vpack.c.b16 %v12351, %v12347
    %v12788 = vpack.c.b16 %v12352, %v12348
    %v12789 = vpack.c.b16 %v12353, %v12349
    %v12790 = vpack.c.b16 %v12354, %v12350
    %v12791 = vpack.c.b16 %v12359, %v12355
    %v12792 = vpack.c.b16 %v12360, %v12356
    %v12793 = vpack.c.b16 %v12361, %v12357
    %v12794 = vpack.c.b16 %v12362, %v12358
    %v12795 = vpack.c.b16 %v12367, %v12363
    %v12796 = vpack.c.b16 %v12368, %v12364
    %v12797 = vpack.c.b16 %v12369, %v12365
    %v12798 = vpack.c.b16 %v12370, %v12366
    %v12799 = vpack.c.b16 %v12375, %v12371
    %v12800 = vpack.c.b16 %v12376, %v12372
    %v12801 = vpack.c.b16 %v12377, %v12373
    %v12802 = vpack.c.b16 %v12378, %v12374
    %v12803 = vpack.c.b16 %v12383, %v12379
    %v12804 = vpack.c.b16 %v12384, %v12380
    %v12805 = vpack.c.b16 %v12385, %v12381
    %v12806 = vpack.c.b16 %v12386, %v12382
    %v12807 = vpack.c.b16 %v12391, %v12387
    %v12808 = vpack.c.b16 %v12392, %v12388
    %v12809 = vpack.c.b16 %v12393, %v12389
    %v12810 = vpack.c.b16 %v12394, %v12390
    %v12811 = vpack.c.b16 %v12399, %v12395
    %v12812 = vpack.c.b16 %v12400, %v12396
    %v12813 = vpack.c.b16 %v12401, %v12397
    %v12814 = vpack.c.b16 %v12402, %v12398
    %v12815 = vpack.c.b16 %v12407, %v12403
    %v12816 = vpack.c.b16 %v12408, %v12404
    %v12817 = vpack.c.b16 %v12409, %v12405
    %v12818 = vpack.c.b16 %v12410, %v12406
    %v12819 = vpack.c.b16 %v12415, %v12411
    %v12820 = vpack.c.b16 %v12416, %v12412
    %v12821 = vpack.c.b16 %v12417, %v12413
    %v12822 = vpack.c.b16 %v12418, %v12414
    %v12823 = vpack.c.b16 %v12423, %v12419
    %v12824 = vpack.c.b16 %v12424, %v12420
    %v12825 = vpack.c.b16 %v12425, %v12421
    %v12826 = vpack.c.b16 %v12426, %v12422
    %v12827 = vpack.c.b16 %v12431, %v12427
    %v12828 = vpack.c.b16 %v12432, %v12428
    %v12829 = vpack.c.b16 %v12433, %v12429
    %v12830 = vpack.c.b16 %v12434, %v12430
    %v12831 = vpack.c.b16 %v12439, %v12435
    %v12832 = vpack.c.b16 %v12440, %v12436
    %v12833 = vpack.c.b16 %v12441, %v12437
    %v12834 = vpack.c.b16 %v12442, %v12438
    %v12835 = vpack.c.b16 %v12447, %v12443
    %v12836 = vpack.c.b16 %v12448, %v12444
    %v12837 = vpack.c.b16 %v12449, %v12445
    %v12838 = vpack.c.b16 %v12450, %v12446
    %v12839 = vpack.c.b16 %v12455, %v12451
    %v12840 = vpack.c.b16 %v12456, %v12452
    %v12841 = vpack.c.b16 %v12457, %v12453
    %v12842 = vpack.c.b16 %v12458, %v12454
    %v12843 = vpack.c.b16 %v12463, %v12459
    %v12844 = vpack.c.b16 %v12464, %v12460
    %v12845 = vpack.c.b16 %v12465, %v12461
    %v12846 = vpack.c.b16 %v12466, %v12462
    %v12847 = vpack.c.b16 %v12471, %v12467
    %v12848 = vpack.c.b16 %v12472, %v12468
    %v12849 = vpack.c.b16 %v12473, %v12469
    %v12850 = vpack.c.b16 %v12474, %v12470
    %v12851 = vpack.c.b16 %v12479, %v12475
    %v12852 = vpack.c.b16 %v12480, %v12476
    %v12853 = vpack.c.b16 %v12481, %v12477
    %v12854 = vpack.c.b16 %v12482, %v12478
    %v12855 = vpack.c.b16 %v12487, %v12483
    %v12856 = vpack.c.b16 %v12488, %v12484
    %v12857 = vpack.c.b16 %v12489, %v12485
    %v12858 = vpack.c.b16 %v12490, %v12486
    %v12859 = vpack.c.b16 %v12495, %v12491
    %v12860 = vpack.c.b16 %v12496, %v12492
    %v12861 = vpack.c.b16 %v12497, %v12493
    %v12862 = vpack.c.b16 %v12498, %v12494
    %v12863 = vpack.c.b16 %v12503, %v12499
    %v12864 = vpack.c.b16 %v12504, %v12500
    %v12865 = vpack.c.b16 %v12505, %v12501
    %v12866 = vpack.c.b16 %v12506, %v12502
    %v12867 = vpack.c.b16 %v12511, %v12507
    %v12868 = vpack.c.b16 %v12512, %v12508
    %v12869 = vpack.c.b16 %v12513, %v12509
    %v12870 = vpack.c.b16 %v12514, %v12510
    %v12871 = vpack.c.b16 %v12519, %v12515
    %v12872 = vpack.c.b16 %v12520, %v12516
    %v12873 = vpack.c.b16 %v12521, %v12517
    %v12874 = vpack.c.b16 %v12522, %v12518
    %v12875 = vpack.c.b16 %v12527, %v12523
    %v12876 = vpack.c.b16 %v12528, %v12524
    %v12877 = vpack.c.b16 %v12529, %v12525
    %v12878 = vpack.c.b16 %v12530, %v12526
    %v12879 = vpack.c.b16 %v12535, %v12531
    %v12880 = vpack.c.b16 %v12536, %v12532
    %v12881 = vpack.c.b16 %v12537, %v12533
    %v12882 = vpack.c.b16 %v12538, %v12534
    %v12883 = vpack.c.b16 %v12543, %v12539
    %v12884 = vpack.c.b16 %v12544, %v12540
    %v12885 = vpack.c.b16 %v12545, %v12541
    %v12886 = vpack.c.b16 %v12546, %v12542
    %v12887 = vpack.c.b16 %v12551, %v12547
    %v12888 = vpack.c.b16 %v12552, %v12548
    %v12889 = vpack.c.b16 %v12553, %v12549
    %v12890 = vpack.c.b16 %v12554, %v12550
    %v12891 = vpack.c.b16 %v12559, %v12555
    %v12892 = vpack.c.b16 %v12560, %v12556
    %v12893 = vpack.c.b16 %v12561, %v12557
    %v12894 = vpack.c.b16 %v12562, %v12558
    %v12895 = vpack.c.b16 %v12567, %v12563
    %v12896 = vpack.c.b16 %v12568, %v12564
    %v12897 = vpack.c.b16 %v12569, %v12565
    %v12898 = vpack.c.b16 %v12570, %v12566
    %v12899 = vpack.c.b16 %v12575, %v12571
    %v12900 = vpack.c.b16 %v12576, %v12572
    %v12901 = vpack.c.b16 %v12577, %v12573
    %v12902 = vpack.c.b16 %v12578, %v12574
    %v12903 = vpack.c.b16 %v12583, %v12579
    %v12904 = vpack.c.b16 %v12584, %v12580
    %v12905 = vpack.c.b16 %v12585, %v12581
    %v12906 = vpack.c.b16 %v12586, %v12582
    %v12907 = vpack.c.b16 %v12591, %v12587
    %v12908 = vpack.c.b16 %v12592, %v12588
    %v12909 = vpack.c.b16 %v12593, %v12589
    %v12910 = vpack.c.b16 %v12594, %v12590
    %v12911 = vpack.c.b16 %v12599, %v12595
    %v12912 = vpack.c.b16 %v12600, %v12596
    %v12913 = vpack.c.b16 %v12601, %v12597
    %v12914 = vpack.c.b16 %v12602, %v12598
    %v12915 = vpack.c.b16 %v12607, %v12603
    %v12916 = vpack.c.b16 %v12608, %v12604
    %v12917 = vpack.c.b16 %v12609, %v12605
    %v12918 = vpack.c.b16 %v12610, %v12606
    %v12919 = vpack.c.b16 %v12615, %v12611
    %v12920 = vpack.c.b16 %v12616, %v12612
    %v12921 = vpack.c.b16 %v12617, %v12613
    %v12922 = vpack.c.b16 %v12618, %v12614
    %v12923 = vpack.c.b16 %v12623, %v12619
    %v12924 = vpack.c.b16 %v12624, %v12620
    %v12925 = vpack.c.b16 %v12625, %v12621
    %v12926 = vpack.c.b16 %v12626, %v12622
    %v12927 = vpack.c.b16 %v12631, %v12627
    %v12928 = vpack.c.b16 %v12632, %v12628
    %v12929 = vpack.c.b16 %v12633, %v12629
    %v12930 = vpack.c.b16 %v12634, %v12630
    %v12931 = vpack.c.b16 %v12639, %v12635
    %v12932 = vpack.c.b16 %v12640, %v12636
    %v12933 = vpack.c.b16 %v12641, %v12637
    %v12934 = vpack.c.b16 %v12642, %v12638
    %v12935 = vpack.c.b16 %v12647, %v12643
    %v12936 = vpack.c.b16 %v12648, %v12644
    %v12937 = vpack.c.b16 %v12649, %v12645
    %v12938 = vpack.c.b16 %v12650, %v12646
    %v12939 = vpack.c.b16 %v12655, %v12651
    %v12940 = vpack.c.b16 %v12656, %v12652
    %v12941 = vpack.c.b16 %v12657, %v12653
    %v12942 = vpack.c.b16 %v12658, %v12654
    %v12943 = vpack.c.b16 %v12663, %v12659
    %v12944 = vpack.c.b16 %v12664, %v12660
    %v12945 = vpack.c.b16 %v12665, %v12661
    %v12946 = vpack.c.b16 %v12666, %v12662
    %v12947 = vpack.c.b16 %v12671, %v12667
    %v12948 = vpack.c.b16 %v12672, %v12668
    %v12949 = vpack.c.b16 %v12673, %v12669
    %v12950 = vpack.c.b16 %v12674, %v12670
    %v12951 = vpack.c.b16 %v12679, %v12675
    %v12952 = vpack.c.b16 %v12680, %v12676
    %v12953 = vpack.c.b16 %v12681, %v12677
    %v12954 = vpack.c.b16 %v12682, %v12678
    %v12955 = vpack.c.b16 %v12687, %v12683
    %v12956 = vpack.c.b16 %v12688, %v12684
    %v12957 = vpack.c.b16 %v12689, %v12685
    %v12958 = vpack.c.b16 %v12690, %v12686
    %v12959 = vpack.c.b16 %v12695, %v12691
    %v12960 = vpack.c.b16 %v12696, %v12692
    %v12961 = vpack.c.b16 %v12697, %v12693
    %v12962 = vpack.c.b16 %v12698, %v12694
    %v12963 = vpack.c.b16 %v12703, %v12699
    %v12964 = vpack.c.b16 %v12704, %v12700
    %v12965 = vpack.c.b16 %v12705, %v12701
    %v12966 = vpack.c.b16 %v12706, %v12702
    %v12967 = vpack.c.b16 %v12711, %v12707
    %v12968 = vpack.c.b16 %v12712, %v12708
    %v12969 = vpack.c.b16 %v12713, %v12709
    %v12970 = vpack.c.b16 %v12714, %v12710
    %13227 = vmatprep.subr.bf16.mxu0 %v12716
    %13228 = vmatpush1.bf16.msra.mxu0 %v12715
    %13229 = vmatprep.subr.bf16.mxu0 %v12720
    %13230 = vmatpush1.bf16.msra.mxu0 %v12719
    %13231 = vmatprep.subr.bf16.mxu0 %v12724
    %13232 = vmatpush1.bf16.msra.mxu0 %v12723
    %13233 = vmatprep.subr.bf16.mxu0 %v12728
    %13234 = vmatpush1.bf16.msra.mxu0 %v12727
    %13235 = vmatprep.subr.bf16.mxu0 %v12732
    %13236 = vmatpush1.bf16.msra.mxu0 %v12731
    %13237 = vmatprep.subr.bf16.mxu0 %v12736
    %13238 = vmatpush1.bf16.msra.mxu0 %v12735
    %13239 = vmatprep.subr.bf16.mxu0 %v12740
    %13240 = vmatpush1.bf16.msra.mxu0 %v12739
    %13241 = vmatprep.subr.bf16.mxu0 %v12744
    %13242 = vmatpush1.bf16.msra.mxu0 %v12743
    %13243 = vmatprep.subr.bf16.mxu0 %v12748
    %13244 = vmatpush1.bf16.msra.mxu0 %v12747
    %13245 = vmatprep.subr.bf16.mxu0 %v12752
    %13246 = vmatpush1.bf16.msra.mxu0 %v12751
    %13247 = vmatprep.subr.bf16.mxu0 %v12756
    %13248 = vmatpush1.bf16.msra.mxu0 %v12755
    %13249 = vmatprep.subr.bf16.mxu0 %v12760
    %13250 = vmatpush1.bf16.msra.mxu0 %v12759
    %13251 = vmatprep.subr.bf16.mxu0 %v12764
    %13252 = vmatpush1.bf16.msra.mxu0 %v12763
    %13253 = vmatprep.subr.bf16.mxu0 %v12768
    %13254 = vmatpush1.bf16.msra.mxu0 %v12767
    %13255 = vmatprep.subr.bf16.mxu0 %v12772
    %13256 = vmatpush1.bf16.msra.mxu0 %v12771
    %13257 = vmatprep.subr.bf16.mxu0 %v12776
    %13258 = vmatpush1.bf16.msra.mxu0 %v12775
    %13259 = vmatprep.mubr.bf16.mxu0 %v11662
    %13260 = vmatmul.mubr.bf16.gmra.mrb[0].mxu0 %v11661
    %v13261 = vpop.f32.mrb[0].mxu0
    %v13262 = vadd.f32 %v11930, %v13261
    %v13263 = vpop.f32.mrb[0].mxu0
    %v13264 = vadd.f32 %v11934, %v13263
    %v13265 = vpop.f32.mrb[0].mxu0
    %v13266 = vadd.f32 %v11930, %v13265
    %v13267 = vpop.f32.mrb[0].mxu0
    %v13268 = vadd.f32 %v11934, %v13267
    %13269 = vdwg.mxu0
    %13270 = vmatprep.subr.bf16.mxu0 %v12780
    %13271 = vmatpush1.bf16.msra.mxu0 %v12779
    %13272 = vmatprep.subr.bf16.mxu0 %v12784
    %13273 = vmatpush1.bf16.msra.mxu0 %v12783
    %13274 = vmatprep.subr.bf16.mxu0 %v12788
    %13275 = vmatpush1.bf16.msra.mxu0 %v12787
    %13276 = vmatprep.subr.bf16.mxu0 %v12792
    %13277 = vmatpush1.bf16.msra.mxu0 %v12791
    %13278 = vmatprep.subr.bf16.mxu0 %v12796
    %13279 = vmatpush1.bf16.msra.mxu0 %v12795
    %13280 = vmatprep.subr.bf16.mxu0 %v12800
    %13281 = vmatpush1.bf16.msra.mxu0 %v12799
    %13282 = vmatprep.subr.bf16.mxu0 %v12804
    %13283 = vmatpush1.bf16.msra.mxu0 %v12803
    %13284 = vmatprep.subr.bf16.mxu0 %v12808
    %13285 = vmatpush1.bf16.msra.mxu0 %v12807
    %13286 = vmatprep.subr.bf16.mxu0 %v12812
    %13287 = vmatpush1.bf16.msra.mxu0 %v12811
    %13288 = vmatprep.subr.bf16.mxu0 %v12816
    %13289 = vmatpush1.bf16.msra.mxu0 %v12815
    %13290 = vmatprep.subr.bf16.mxu0 %v12820
    %13291 = vmatpush1.bf16.msra.mxu0 %v12819
    %13292 = vmatprep.subr.bf16.mxu0 %v12824
    %13293 = vmatpush1.bf16.msra.mxu0 %v12823
    %13294 = vmatprep.subr.bf16.mxu0 %v12828
    %13295 = vmatpush1.bf16.msra.mxu0 %v12827
    %13296 = vmatprep.subr.bf16.mxu0 %v12832
    %13297 = vmatpush1.bf16.msra.mxu0 %v12831
    %13298 = vmatprep.subr.bf16.mxu0 %v12836
    %13299 = vmatpush1.bf16.msra.mxu0 %v12835
    %13300 = vmatprep.subr.bf16.mxu0 %v12840
    %13301 = vmatpush1.bf16.msra.mxu0 %v12839
    %13302 = vmatprep.mubr.bf16.mxu0 %v11664
    %13303 = vmatmul.mubr.bf16.gmra.mrb[0].mxu0 %v11663
    %v13304 = vpop.f32.mrb[0].mxu0
    %v13305 = vadd.f32 %v13262, %v13304
    %v13306 = vpop.f32.mrb[0].mxu0
    %v13307 = vadd.f32 %v13264, %v13306
    %v13308 = vpop.f32.mrb[0].mxu0
    %v13309 = vadd.f32 %v13266, %v13308
    %v13310 = vpop.f32.mrb[0].mxu0
    %v13311 = vadd.f32 %v13268, %v13310
    %13312 = vdwg.mxu0
    %13313 = vmatprep.subr.bf16.mxu0 %v12844
    %13314 = vmatpush1.bf16.msra.mxu0 %v12843
    %13315 = vmatprep.subr.bf16.mxu0 %v12848
    %13316 = vmatpush1.bf16.msra.mxu0 %v12847
    %13317 = vmatprep.subr.bf16.mxu0 %v12852
    %13318 = vmatpush1.bf16.msra.mxu0 %v12851
    %13319 = vmatprep.subr.bf16.mxu0 %v12856
    %13320 = vmatpush1.bf16.msra.mxu0 %v12855
    %13321 = vmatprep.subr.bf16.mxu0 %v12860
    %13322 = vmatpush1.bf16.msra.mxu0 %v12859
    %13323 = vmatprep.subr.bf16.mxu0 %v12864
    %13324 = vmatpush1.bf16.msra.mxu0 %v12863
    %13325 = vmatprep.subr.bf16.mxu0 %v12868
    %13326 = vmatpush1.bf16.msra.mxu0 %v12867
    %13327 = vmatprep.subr.bf16.mxu0 %v12872
    %13328 = vmatpush1.bf16.msra.mxu0 %v12871
    %13329 = vmatprep.subr.bf16.mxu0 %v12876
    %13330 = vmatpush1.bf16.msra.mxu0 %v12875
    %13331 = vmatprep.subr.bf16.mxu0 %v12880
    %13332 = vmatpush1.bf16.msra.mxu0 %v12879
    %13333 = vmatprep.subr.bf16.mxu0 %v12884
    %13334 = vmatpush1.bf16.msra.mxu0 %v12883
    %13335 = vmatprep.subr.bf16.mxu0 %v12888
    %13336 = vmatpush1.bf16.msra.mxu0 %v12887
    %13337 = vmatprep.subr.bf16.mxu0 %v12892
    %13338 = vmatpush1.bf16.msra.mxu0 %v12891
    %13339 = vmatprep.subr.bf16.mxu0 %v12896
    %13340 = vmatpush1.bf16.msra.mxu0 %v12895
    %13341 = vmatprep.subr.bf16.mxu0 %v12900
    %13342 = vmatpush1.bf16.msra.mxu0 %v12899
    %13343 = vmatprep.subr.bf16.mxu0 %v12904
    %13344 = vmatpush1.bf16.msra.mxu0 %v12903
    %13345 = vmatprep.mubr.bf16.mxu0 %v11666
    %13346 = vmatmul.mubr.bf16.gmra.mrb[0].mxu0 %v11665
    %v13347 = vpop.f32.mrb[0].mxu0
    %v13348 = vadd.f32 %v13305, %v13347
    %v13349 = vpop.f32.mrb[0].mxu0
    %v13350 = vadd.f32 %v13307, %v13349
    %v13351 = vpop.f32.mrb[0].mxu0
    %v13352 = vadd.f32 %v13309, %v13351
    %v13353 = vpop.f32.mrb[0].mxu0
    %v13354 = vadd.f32 %v13311, %v13353
    %13355 = vdwg.mxu0
    %13356 = vmatprep.subr.bf16.mxu0 %v12908
    %13357 = vmatpush1.bf16.msra.mxu0 %v12907
    %13358 = vmatprep.subr.bf16.mxu0 %v12912
    %13359 = vmatpush1.bf16.msra.mxu0 %v12911
    %13360 = vmatprep.subr.bf16.mxu0 %v12916
    %13361 = vmatpush1.bf16.msra.mxu0 %v12915
    %13362 = vmatprep.subr.bf16.mxu0 %v12920
    %13363 = vmatpush1.bf16.msra.mxu0 %v12919
    %13364 = vmatprep.subr.bf16.mxu0 %v12924
    %13365 = vmatpush1.bf16.msra.mxu0 %v12923
    %13366 = vmatprep.subr.bf16.mxu0 %v12928
    %13367 = vmatpush1.bf16.msra.mxu0 %v12927
    %13368 = vmatprep.subr.bf16.mxu0 %v12932
    %13369 = vmatpush1.bf16.msra.mxu0 %v12931
    %13370 = vmatprep.subr.bf16.mxu0 %v12936
    %13371 = vmatpush1.bf16.msra.mxu0 %v12935
    %13372 = vmatprep.subr.bf16.mxu0 %v12940
    %13373 = vmatpush1.bf16.msra.mxu0 %v12939
    %13374 = vmatprep.subr.bf16.mxu0 %v12944
    %13375 = vmatpush1.bf16.msra.mxu0 %v12943
    %13376 = vmatprep.subr.bf16.mxu0 %v12948
    %13377 = vmatpush1.bf16.msra.mxu0 %v12947
    %13378 = vmatprep.subr.bf16.mxu0 %v12952
    %13379 = vmatpush1.bf16.msra.mxu0 %v12951
    %13380 = vmatprep.subr.bf16.mxu0 %v12956
    %13381 = vmatpush1.bf16.msra.mxu0 %v12955
    %13382 = vmatprep.subr.bf16.mxu0 %v12960
    %13383 = vmatpush1.bf16.msra.mxu0 %v12959
    %13384 = vmatprep.subr.bf16.mxu0 %v12964
    %13385 = vmatpush1.bf16.msra.mxu0 %v12963
    %13386 = vmatprep.subr.bf16.mxu0 %v12968
    %13387 = vmatpush1.bf16.msra.mxu0 %v12967
    %13388 = vmatprep.mubr.bf16.mxu0 %v11668
    %13389 = vmatmul.mubr.bf16.gmra.mrb[0].mxu0 %v11667
    %v13390 = vpop.f32.mrb[0].mxu0
    %v13391 = vadd.f32 %v13348, %v13390
    %v13392 = vpop.f32.mrb[0].mxu0
    %v13393 = vadd.f32 %v13350, %v13392
    %v13394 = vpop.f32.mrb[0].mxu0
    %v13395 = vadd.f32 %v13352, %v13394
    %v13396 = vpop.f32.mrb[0].mxu0
    %v13397 = vadd.f32 %v13354, %v13396
    %13398 = vdwg.mxu0
    %13399 = vmatprep.subr.bf16.mxu0 %v12718
    %13400 = vmatpush1.bf16.msra.mxu0 %v12717
    %13401 = vmatprep.subr.bf16.mxu0 %v12722
    %13402 = vmatpush1.bf16.msra.mxu0 %v12721
    %13403 = vmatprep.subr.bf16.mxu0 %v12726
    %13404 = vmatpush1.bf16.msra.mxu0 %v12725
    %13405 = vmatprep.subr.bf16.mxu0 %v12730
    %13406 = vmatpush1.bf16.msra.mxu0 %v12729
    %13407 = vmatprep.subr.bf16.mxu0 %v12734
    %13408 = vmatpush1.bf16.msra.mxu0 %v12733
    %13409 = vmatprep.subr.bf16.mxu0 %v12738
    %13410 = vmatpush1.bf16.msra.mxu0 %v12737
    %13411 = vmatprep.subr.bf16.mxu0 %v12742
    %13412 = vmatpush1.bf16.msra.mxu0 %v12741
    %13413 = vmatprep.subr.bf16.mxu0 %v12746
    %13414 = vmatpush1.bf16.msra.mxu0 %v12745
    %13415 = vmatprep.subr.bf16.mxu0 %v12750
    %13416 = vmatpush1.bf16.msra.mxu0 %v12749
    %13417 = vmatprep.subr.bf16.mxu0 %v12754
    %13418 = vmatpush1.bf16.msra.mxu0 %v12753
    %13419 = vmatprep.subr.bf16.mxu0 %v12758
    %13420 = vmatpush1.bf16.msra.mxu0 %v12757
    %13421 = vmatprep.subr.bf16.mxu0 %v12762
    %13422 = vmatpush1.bf16.msra.mxu0 %v12761
    %13423 = vmatprep.subr.bf16.mxu0 %v12766
    %13424 = vmatpush1.bf16.msra.mxu0 %v12765
    %13425 = vmatprep.subr.bf16.mxu0 %v12770
    %13426 = vmatpush1.bf16.msra.mxu0 %v12769
    %13427 = vmatprep.subr.bf16.mxu0 %v12774
    %13428 = vmatpush1.bf16.msra.mxu0 %v12773
    %13429 = vmatprep.subr.bf16.mxu0 %v12778
    %13430 = vmatpush1.bf16.msra.mxu0 %v12777
    %13431 = vmatprep.mubr.bf16.mxu0 %v11662
    %13432 = vmatmul.mubr.bf16.gmra.mrb[0].mxu0 %v11661
    %v13433 = vpop.f32.mrb[0].mxu0
    %v13434 = vadd.f32 %v11938, %v13433
    %v13435 = vpop.f32.mrb[0].mxu0
    %v13436 = vadd.f32 %v11942, %v13435
    %v13437 = vpop.f32.mrb[0].mxu0
    %v13438 = vadd.f32 %v11938, %v13437
    %v13439 = vpop.f32.mrb[0].mxu0
    %v13440 = vadd.f32 %v11942, %v13439
    %13441 = vdwg.mxu0
    %13442 = vmatprep.subr.bf16.mxu0 %v12782
    %13443 = vmatpush1.bf16.msra.mxu0 %v12781
    %13444 = vmatprep.subr.bf16.mxu0 %v12786
    %13445 = vmatpush1.bf16.msra.mxu0 %v12785
    %13446 = vmatprep.subr.bf16.mxu0 %v12790
    %13447 = vmatpush1.bf16.msra.mxu0 %v12789
    %13448 = vmatprep.subr.bf16.mxu0 %v12794
    %13449 = vmatpush1.bf16.msra.mxu0 %v12793
    %13450 = vmatprep.subr.bf16.mxu0 %v12798
    %13451 = vmatpush1.bf16.msra.mxu0 %v12797
    %13452 = vmatprep.subr.bf16.mxu0 %v12802
    %13453 = vmatpush1.bf16.msra.mxu0 %v12801
    %13454 = vmatprep.subr.bf16.mxu0 %v12806
    %13455 = vmatpush1.bf16.msra.mxu0 %v12805
    %13456 = vmatprep.subr.bf16.mxu0 %v12810
    %13457 = vmatpush1.bf16.msra.mxu0 %v12809
    %13458 = vmatprep.subr.bf16.mxu0 %v12814
    %13459 = vmatpush1.bf16.msra.mxu0 %v12813
    %13460 = vmatprep.subr.bf16.mxu0 %v12818
    %13461 = vmatpush1.bf16.msra.mxu0 %v12817
    %13462 = vmatprep.subr.bf16.mxu0 %v12822
    %13463 = vmatpush1.bf16.msra.mxu0 %v12821
    %13464 = vmatprep.subr.bf16.mxu0 %v12826
    %13465 = vmatpush1.bf16.msra.mxu0 %v12825
    %13466 = vmatprep.subr.bf16.mxu0 %v12830
    %13467 = vmatpush1.bf16.msra.mxu0 %v12829
    %13468 = vmatprep.subr.bf16.mxu0 %v12834
    %13469 = vmatpush1.bf16.msra.mxu0 %v12833
    %13470 = vmatprep.subr.bf16.mxu0 %v12838
    %13471 = vmatpush1.bf16.msra.mxu0 %v12837
    %13472 = vmatprep.subr.bf16.mxu0 %v12842
    %13473 = vmatpush1.bf16.msra.mxu0 %v12841
    %13474 = vmatprep.mubr.bf16.mxu0 %v11664
    %13475 = vmatmul.mubr.bf16.gmra.mrb[0].mxu0 %v11663
    %v13476 = vpop.f32.mrb[0].mxu0
    %v13477 = vadd.f32 %v13434, %v13476
    %v13478 = vpop.f32.mrb[0].mxu0
    %v13479 = vadd.f32 %v13436, %v13478
    %v13480 = vpop.f32.mrb[0].mxu0
    %v13481 = vadd.f32 %v13438, %v13480
    %v13482 = vpop.f32.mrb[0].mxu0
    %v13483 = vadd.f32 %v13440, %v13482
    %13484 = vdwg.mxu0
    %13485 = vmatprep.subr.bf16.mxu0 %v12846
    %13486 = vmatpush1.bf16.msra.mxu0 %v12845
    %13487 = vmatprep.subr.bf16.mxu0 %v12850
    %13488 = vmatpush1.bf16.msra.mxu0 %v12849
    %13489 = vmatprep.subr.bf16.mxu0 %v12854
    %13490 = vmatpush1.bf16.msra.mxu0 %v12853
    %13491 = vmatprep.subr.bf16.mxu0 %v12858
    %13492 = vmatpush1.bf16.msra.mxu0 %v12857
    %13493 = vmatprep.subr.bf16.mxu0 %v12862
    %13494 = vmatpush1.bf16.msra.mxu0 %v12861
    %13495 = vmatprep.subr.bf16.mxu0 %v12866
    %13496 = vmatpush1.bf16.msra.mxu0 %v12865
    %13497 = vmatprep.subr.bf16.mxu0 %v12870
    %13498 = vmatpush1.bf16.msra.mxu0 %v12869
    %13499 = vmatprep.subr.bf16.mxu0 %v12874
    %13500 = vmatpush1.bf16.msra.mxu0 %v12873
    %13501 = vmatprep.subr.bf16.mxu0 %v12878
    %13502 = vmatpush1.bf16.msra.mxu0 %v12877
    %13503 = vmatprep.subr.bf16.mxu0 %v12882
    %13504 = vmatpush1.bf16.msra.mxu0 %v12881
    %13505 = vmatprep.subr.bf16.mxu0 %v12886
    %13506 = vmatpush1.bf16.msra.mxu0 %v12885
    %13507 = vmatprep.subr.bf16.mxu0 %v12890
    %13508 = vmatpush1.bf16.msra.mxu0 %v12889
    %13509 = vmatprep.subr.bf16.mxu0 %v12894
    %13510 = vmatpush1.bf16.msra.mxu0 %v12893
    %13511 = vmatprep.subr.bf16.mxu0 %v12898
    %13512 = vmatpush1.bf16.msra.mxu0 %v12897
    %13513 = vmatprep.subr.bf16.mxu0 %v12902
    %13514 = vmatpush1.bf16.msra.mxu0 %v12901
    %13515 = vmatprep.subr.bf16.mxu0 %v12906
    %13516 = vmatpush1.bf16.msra.mxu0 %v12905
    %13517 = vmatprep.mubr.bf16.mxu0 %v11666
    %13518 = vmatmul.mubr.bf16.gmra.mrb[0].mxu0 %v11665
    %v13519 = vpop.f32.mrb[0].mxu0
    %v13520 = vadd.f32 %v13477, %v13519
    %v13521 = vpop.f32.mrb[0].mxu0
    %v13522 = vadd.f32 %v13479, %v13521
    %v13523 = vpop.f32.mrb[0].mxu0
    %v13524 = vadd.f32 %v13481, %v13523
    %v13525 = vpop.f32.mrb[0].mxu0
    %v13526 = vadd.f32 %v13483, %v13525
    %13527 = vdwg.mxu0
    %13528 = vmatprep.subr.bf16.mxu0 %v12910
    %13529 = vmatpush1.bf16.msra.mxu0 %v12909
    %13530 = vmatprep.subr.bf16.mxu0 %v12914
    %13531 = vmatpush1.bf16.msra.mxu0 %v12913
    %13532 = vmatprep.subr.bf16.mxu0 %v12918
    %13533 = vmatpush1.bf16.msra.mxu0 %v12917
    %13534 = vmatprep.subr.bf16.mxu0 %v12922
    %13535 = vmatpush1.bf16.msra.mxu0 %v12921
    %13536 = vmatprep.subr.bf16.mxu0 %v12926
    %13537 = vmatpush1.bf16.msra.mxu0 %v12925
    %13538 = vmatprep.subr.bf16.mxu0 %v12930
    %13539 = vmatpush1.bf16.msra.mxu0 %v12929
    %13540 = vmatprep.subr.bf16.mxu0 %v12934
    %13541 = vmatpush1.bf16.msra.mxu0 %v12933
    %13542 = vmatprep.subr.bf16.mxu0 %v12938
    %13543 = vmatpush1.bf16.msra.mxu0 %v12937
    %13544 = vmatprep.subr.bf16.mxu0 %v12942
    %13545 = vmatpush1.bf16.msra.mxu0 %v12941
    %13546 = vmatprep.subr.bf16.mxu0 %v12946
    %13547 = vmatpush1.bf16.msra.mxu0 %v12945
    %13548 = vmatprep.subr.bf16.mxu0 %v12950
    %13549 = vmatpush1.bf16.msra.mxu0 %v12949
    %13550 = vmatprep.subr.bf16.mxu0 %v12954
    %13551 = vmatpush1.bf16.msra.mxu0 %v12953
    %13552 = vmatprep.subr.bf16.mxu0 %v12958
    %13553 = vmatpush1.bf16.msra.mxu0 %v12957
    %13554 = vmatprep.subr.bf16.mxu0 %v12962
    %13555 = vmatpush1.bf16.msra.mxu0 %v12961
    %13556 = vmatprep.subr.bf16.mxu0 %v12966
    %13557 = vmatpush1.bf16.msra.mxu0 %v12965
    %13558 = vmatprep.subr.bf16.mxu0 %v12970
    %13559 = vmatpush1.bf16.msra.mxu0 %v12969
    %13560 = vmatprep.mubr.bf16.mxu0 %v11668
    %13561 = vmatmul.mubr.bf16.gmra.mrb[0].mxu0 %v11667
    %v13562 = vpop.f32.mrb[0].mxu0
    %v13563 = vadd.f32 %v13520, %v13562
    %v13564 = vpop.f32.mrb[0].mxu0
    %v13565 = vadd.f32 %v13522, %v13564
    %v13566 = vpop.f32.mrb[0].mxu0
    %v13567 = vadd.f32 %v13524, %v13566
    %v13568 = vpop.f32.mrb[0].mxu0
    %v13569 = vadd.f32 %v13526, %v13568
    %13570 = vdwg.mxu0
    %v13571 = vmax.f32 %v13391, 0.0
    %v13572 = vmax.f32 %v13393, 0.0
    %v13573 = vmax.f32 %v13563, 0.0
    %v13574 = vmax.f32 %v13565, 0.0
    %v13575 = vmax.f32 %v13395, 0.0
    %v13576 = vmax.f32 %v13397, 0.0
    %v13577 = vmax.f32 %v13567, 0.0
    %v13578 = vmax.f32 %v13569, 0.0
    %v13579 = vpack.c.bf16 %v13575, %v13571
    %v13580 = vpack.c.bf16 %v13576, %v13572
    %v13581 = vpack.c.bf16 %v13577, %v13573
    %v13582 = vpack.c.bf16 %v13578, %v13574
    %v13583 = vld [vmem:[#allocation11] sm:$0xff]
    %v13584 = vld [vmem:[#allocation11 + $0x8] sm:$0xff]
    %v13585 = vld [vmem:[#allocation11 + $0x10] sm:$0xff]
    %v13586 = vld [vmem:[#allocation11 + $0x18] sm:$0xff]
    %v13587 = vld [vmem:[#allocation11 + $0x20] sm:$0xff]
    %v13588 = vld [vmem:[#allocation11 + $0x28] sm:$0xff]
    %v13589 = vld [vmem:[#allocation11 + $0x30] sm:$0xff]
    %v13590 = vld [vmem:[#allocation11 + $0x38] sm:$0xff]
    %v13591 = vld [vmem:[#allocation11 + $0x40] sm:$0xff]
    %v13592 = vld [vmem:[#allocation11 + $0x48] sm:$0xff]
    %v13593 = vld [vmem:[#allocation11 + $0x50] sm:$0xff]
    %v13594 = vld [vmem:[#allocation11 + $0x58] sm:$0xff]
    %v13595 = vld [vmem:[#allocation11 + $0x60] sm:$0xff]
    %v13596 = vld [vmem:[#allocation11 + $0x68] sm:$0xff]
    %v13597 = vld [vmem:[#allocation11 + $0x70] sm:$0xff]
    %v13598 = vld [vmem:[#allocation11 + $0x78] sm:$0xff]
    %v13599 = vld [vmem:[#allocation11 + $0x80] sm:$0xff]
    %v13600 = vld [vmem:[#allocation11 + $0x88] sm:$0xff]
    %v13601 = vld [vmem:[#allocation11 + $0x90] sm:$0xff]
    %v13602 = vld [vmem:[#allocation11 + $0x98] sm:$0xff]
    %v13603 = vld [vmem:[#allocation11 + $0xa0] sm:$0xff]
    %v13604 = vld [vmem:[#allocation11 + $0xa8] sm:$0xff]
    %v13605 = vld [vmem:[#allocation11 + $0xb0] sm:$0xff]
    %v13606 = vld [vmem:[#allocation11 + $0xb8] sm:$0xff]
    %v13607 = vld [vmem:[#allocation11 + $0xc0] sm:$0xff]
    %v13608 = vld [vmem:[#allocation11 + $0xc8] sm:$0xff]
    %v13609 = vld [vmem:[#allocation11 + $0xd0] sm:$0xff]
    %v13610 = vld [vmem:[#allocation11 + $0xd8] sm:$0xff]
    %v13611 = vld [vmem:[#allocation11 + $0xe0] sm:$0xff]
    %v13612 = vld [vmem:[#allocation11 + $0xe8] sm:$0xff]
    %v13613 = vld [vmem:[#allocation11 + $0xf0] sm:$0xff]
    %v13614 = vld [vmem:[#allocation11 + $0xf8] sm:$0xff]
    %v13615 = vld [vmem:[#allocation11 + $0x100] sm:$0xff]
    %v13616 = vld [vmem:[#allocation11 + $0x108] sm:$0xff]
    %v13617 = vld [vmem:[#allocation11 + $0x110] sm:$0xff]
    %v13618 = vld [vmem:[#allocation11 + $0x118] sm:$0xff]
    %v13619 = vld [vmem:[#allocation11 + $0x120] sm:$0xff]
    %v13620 = vld [vmem:[#allocation11 + $0x128] sm:$0xff]
    %v13621 = vld [vmem:[#allocation11 + $0x130] sm:$0xff]
    %v13622 = vld [vmem:[#allocation11 + $0x138] sm:$0xff]
    %v13623 = vld [vmem:[#allocation11 + $0x140] sm:$0xff]
    %v13624 = vld [vmem:[#allocation11 + $0x148] sm:$0xff]
    %v13625 = vld [vmem:[#allocation11 + $0x150] sm:$0xff]
    %v13626 = vld [vmem:[#allocation11 + $0x158] sm:$0xff]
    %v13627 = vld [vmem:[#allocation11 + $0x160] sm:$0xff]
    %v13628 = vld [vmem:[#allocation11 + $0x168] sm:$0xff]
    %v13629 = vld [vmem:[#allocation11 + $0x170] sm:$0xff]
    %v13630 = vld [vmem:[#allocation11 + $0x178] sm:$0xff]
    %v13631 = vld [vmem:[#allocation11 + $0x180] sm:$0xff]
    %v13632 = vld [vmem:[#allocation11 + $0x188] sm:$0xff]
    %v13633 = vld [vmem:[#allocation11 + $0x190] sm:$0xff]
    %v13634 = vld [vmem:[#allocation11 + $0x198] sm:$0xff]
    %v13635 = vld [vmem:[#allocation11 + $0x1a0] sm:$0xff]
    %v13636 = vld [vmem:[#allocation11 + $0x1a8] sm:$0xff]
    %v13637 = vld [vmem:[#allocation11 + $0x1b0] sm:$0xff]
    %v13638 = vld [vmem:[#allocation11 + $0x1b8] sm:$0xff]
    %v13639 = vld [vmem:[#allocation11 + $0x1c0] sm:$0xff]
    %v13640 = vld [vmem:[#allocation11 + $0x1c8] sm:$0xff]
    %v13641 = vld [vmem:[#allocation11 + $0x1d0] sm:$0xff]
    %v13642 = vld [vmem:[#allocation11 + $0x1d8] sm:$0xff]
    %v13643 = vld [vmem:[#allocation11 + $0x1e0] sm:$0xff]
    %v13644 = vld [vmem:[#allocation11 + $0x1e8] sm:$0xff]
    %v13645 = vld [vmem:[#allocation11 + $0x1f0] sm:$0xff]
    %v13646 = vld [vmem:[#allocation11 + $0x1f8] sm:$0xff]
    %v13647 = vld [vmem:[#allocation13] sm:$0x3]
    %v13649 = vlaneseq
    %v13650 = vshrl.u32 %v13649, 7
    %v13651 = vsub.s32 0, %v13650
    %v13652 = vrot.slane %v13647, %v13651
    %v13653 = vlaneseq
    %v13654 = vshrl.u32 %v13653, 7
    %v13655 = vsub.s32 1, %v13654
    %v13656 = vrot.slane %v13647, %v13655
    %v13723 = vunpack.c.l.b16 %v13583
    %v13724 = vunpack.c.h.b16 %v13583
    %v13725 = vunpack.c.l.b16 %v13584
    %v13726 = vunpack.c.h.b16 %v13584
    %v13727 = vunpack.c.l.b16 %v13585
    %v13728 = vunpack.c.h.b16 %v13585
    %v13729 = vunpack.c.l.b16 %v13586
    %v13730 = vunpack.c.h.b16 %v13586
    %v13731 = vunpack.c.l.b16 %v13587
    %v13732 = vunpack.c.h.b16 %v13587
    %v13733 = vunpack.c.l.b16 %v13588
    %v13734 = vunpack.c.h.b16 %v13588
    %v13735 = vunpack.c.l.b16 %v13589
    %v13736 = vunpack.c.h.b16 %v13589
    %v13737 = vunpack.c.l.b16 %v13590
    %v13738 = vunpack.c.h.b16 %v13590
    %v13739 = vunpack.c.l.b16 %v13591
    %v13740 = vunpack.c.h.b16 %v13591
    %v13741 = vunpack.c.l.b16 %v13592
    %v13742 = vunpack.c.h.b16 %v13592
    %v13743 = vunpack.c.l.b16 %v13593
    %v13744 = vunpack.c.h.b16 %v13593
    %v13745 = vunpack.c.l.b16 %v13594
    %v13746 = vunpack.c.h.b16 %v13594
    %v13747 = vunpack.c.l.b16 %v13595
    %v13748 = vunpack.c.h.b16 %v13595
    %v13749 = vunpack.c.l.b16 %v13596
    %v13750 = vunpack.c.h.b16 %v13596
    %v13751 = vunpack.c.l.b16 %v13597
    %v13752 = vunpack.c.h.b16 %v13597
    %v13753 = vunpack.c.l.b16 %v13598
    %v13754 = vunpack.c.h.b16 %v13598
    %v13755 = vunpack.c.l.b16 %v13599
    %v13756 = vunpack.c.h.b16 %v13599
    %v13757 = vunpack.c.l.b16 %v13600
    %v13758 = vunpack.c.h.b16 %v13600
    %v13759 = vunpack.c.l.b16 %v13601
    %v13760 = vunpack.c.h.b16 %v13601
    %v13761 = vunpack.c.l.b16 %v13602
    %v13762 = vunpack.c.h.b16 %v13602
    %v13763 = vunpack.c.l.b16 %v13603
    %v13764 = vunpack.c.h.b16 %v13603
    %v13765 = vunpack.c.l.b16 %v13604
    %v13766 = vunpack.c.h.b16 %v13604
    %v13767 = vunpack.c.l.b16 %v13605
    %v13768 = vunpack.c.h.b16 %v13605
    %v13769 = vunpack.c.l.b16 %v13606
    %v13770 = vunpack.c.h.b16 %v13606
    %v13771 = vunpack.c.l.b16 %v13607
    %v13772 = vunpack.c.h.b16 %v13607
    %v13773 = vunpack.c.l.b16 %v13608
    %v13774 = vunpack.c.h.b16 %v13608
    %v13775 = vunpack.c.l.b16 %v13609
    %v13776 = vunpack.c.h.b16 %v13609
    %v13777 = vunpack.c.l.b16 %v13610
    %v13778 = vunpack.c.h.b16 %v13610
    %v13779 = vunpack.c.l.b16 %v13611
    %v13780 = vunpack.c.h.b16 %v13611
    %v13781 = vunpack.c.l.b16 %v13612
    %v13782 = vunpack.c.h.b16 %v13612
    %v13783 = vunpack.c.l.b16 %v13613
    %v13784 = vunpack.c.h.b16 %v13613
    %v13785 = vunpack.c.l.b16 %v13614
    %v13786 = vunpack.c.h.b16 %v13614
    %v13787 = vunpack.c.l.b16 %v13615
    %v13788 = vunpack.c.h.b16 %v13615
    %v13789 = vunpack.c.l.b16 %v13616
    %v13790 = vunpack.c.h.b16 %v13616
    %v13791 = vunpack.c.l.b16 %v13617
    %v13792 = vunpack.c.h.b16 %v13617
    %v13793 = vunpack.c.l.b16 %v13618
    %v13794 = vunpack.c.h.b16 %v13618
    %v13795 = vunpack.c.l.b16 %v13619
    %v13796 = vunpack.c.h.b16 %v13619
    %v13797 = vunpack.c.l.b16 %v13620
    %v13798 = vunpack.c.h.b16 %v13620
    %v13799 = vunpack.c.l.b16 %v13621
    %v13800 = vunpack.c.h.b16 %v13621
    %v13801 = vunpack.c.l.b16 %v13622
    %v13802 = vunpack.c.h.b16 %v13622
    %v13803 = vunpack.c.l.b16 %v13623
    %v13804 = vunpack.c.h.b16 %v13623
    %v13805 = vunpack.c.l.b16 %v13624
    %v13806 = vunpack.c.h.b16 %v13624
    %v13807 = vunpack.c.l.b16 %v13625
    %v13808 = vunpack.c.h.b16 %v13625
    %v13809 = vunpack.c.l.b16 %v13626
    %v13810 = vunpack.c.h.b16 %v13626
    %v13811 = vunpack.c.l.b16 %v13627
    %v13812 = vunpack.c.h.b16 %v13627
    %v13813 = vunpack.c.l.b16 %v13628
    %v13814 = vunpack.c.h.b16 %v13628
    %v13815 = vunpack.c.l.b16 %v13629
    %v13816 = vunpack.c.h.b16 %v13629
    %v13817 = vunpack.c.l.b16 %v13630
    %v13818 = vunpack.c.h.b16 %v13630
    %v13819 = vunpack.c.l.b16 %v13631
    %v13820 = vunpack.c.h.b16 %v13631
    %v13821 = vunpack.c.l.b16 %v13632
    %v13822 = vunpack.c.h.b16 %v13632
    %v13823 = vunpack.c.l.b16 %v13633
    %v13824 = vunpack.c.h.b16 %v13633
    %v13825 = vunpack.c.l.b16 %v13634
    %v13826 = vunpack.c.h.b16 %v13634
    %v13827 = vunpack.c.l.b16 %v13635
    %v13828 = vunpack.c.h.b16 %v13635
    %v13829 = vunpack.c.l.b16 %v13636
    %v13830 = vunpack.c.h.b16 %v13636
    %v13831 = vunpack.c.l.b16 %v13637
    %v13832 = vunpack.c.h.b16 %v13637
    %v13833 = vunpack.c.l.b16 %v13638
    %v13834 = vunpack.c.h.b16 %v13638
    %v13835 = vunpack.c.l.b16 %v13639
    %v13836 = vunpack.c.h.b16 %v13639
    %v13837 = vunpack.c.l.b16 %v13640
    %v13838 = vunpack.c.h.b16 %v13640
    %v13839 = vunpack.c.l.b16 %v13641
    %v13840 = vunpack.c.h.b16 %v13641
    %v13841 = vunpack.c.l.b16 %v13642
    %v13842 = vunpack.c.h.b16 %v13642
    %v13843 = vunpack.c.l.b16 %v13643
    %v13844 = vunpack.c.h.b16 %v13643
    %v13845 = vunpack.c.l.b16 %v13644
    %v13846 = vunpack.c.h.b16 %v13644
    %v13847 = vunpack.c.l.b16 %v13645
    %v13848 = vunpack.c.h.b16 %v13645
    %v13849 = vunpack.c.l.b16 %v13646
    %v13850 = vunpack.c.h.b16 %v13646
    %v13851 = vpack.c.b16 %v13725, %v13723
    %v13852 = vpack.c.b16 %v13726, %v13724
    %v13853 = vpack.c.b16 %v13729, %v13727
    %v13854 = vpack.c.b16 %v13730, %v13728
    %v13855 = vpack.c.b16 %v13733, %v13731
    %v13856 = vpack.c.b16 %v13734, %v13732
    %v13857 = vpack.c.b16 %v13737, %v13735
    %v13858 = vpack.c.b16 %v13738, %v13736
    %v13859 = vpack.c.b16 %v13741, %v13739
    %v13860 = vpack.c.b16 %v13742, %v13740
    %v13861 = vpack.c.b16 %v13745, %v13743
    %v13862 = vpack.c.b16 %v13746, %v13744
    %v13863 = vpack.c.b16 %v13749, %v13747
    %v13864 = vpack.c.b16 %v13750, %v13748
    %v13865 = vpack.c.b16 %v13753, %v13751
    %v13866 = vpack.c.b16 %v13754, %v13752
    %v13867 = vpack.c.b16 %v13757, %v13755
    %v13868 = vpack.c.b16 %v13758, %v13756
    %v13869 = vpack.c.b16 %v13761, %v13759
    %v13870 = vpack.c.b16 %v13762, %v13760
    %v13871 = vpack.c.b16 %v13765, %v13763
    %v13872 = vpack.c.b16 %v13766, %v13764
    %v13873 = vpack.c.b16 %v13769, %v13767
    %v13874 = vpack.c.b16 %v13770, %v13768
    %v13875 = vpack.c.b16 %v13773, %v13771
    %v13876 = vpack.c.b16 %v13774, %v13772
    %v13877 = vpack.c.b16 %v13777, %v13775
    %v13878 = vpack.c.b16 %v13778, %v13776
    %v13879 = vpack.c.b16 %v13781, %v13779
    %v13880 = vpack.c.b16 %v13782, %v13780
    %v13881 = vpack.c.b16 %v13785, %v13783
    %v13882 = vpack.c.b16 %v13786, %v13784
    %v13883 = vpack.c.b16 %v13789, %v13787
    %v13884 = vpack.c.b16 %v13790, %v13788
    %v13885 = vpack.c.b16 %v13793, %v13791
    %v13886 = vpack.c.b16 %v13794, %v13792
    %v13887 = vpack.c.b16 %v13797, %v13795
    %v13888 = vpack.c.b16 %v13798, %v13796
    %v13889 = vpack.c.b16 %v13801, %v13799
    %v13890 = vpack.c.b16 %v13802, %v13800
    %v13891 = vpack.c.b16 %v13805, %v13803
    %v13892 = vpack.c.b16 %v13806, %v13804
    %v13893 = vpack.c.b16 %v13809, %v13807
    %v13894 = vpack.c.b16 %v13810, %v13808
    %v13895 = vpack.c.b16 %v13813, %v13811
    %v13896 = vpack.c.b16 %v13814, %v13812
    %v13897 = vpack.c.b16 %v13817, %v13815
    %v13898 = vpack.c.b16 %v13818, %v13816
    %v13899 = vpack.c.b16 %v13821, %v13819
    %v13900 = vpack.c.b16 %v13822, %v13820
    %v13901 = vpack.c.b16 %v13825, %v13823
    %v13902 = vpack.c.b16 %v13826, %v13824
    %v13903 = vpack.c.b16 %v13829, %v13827
    %v13904 = vpack.c.b16 %v13830, %v13828
    %v13905 = vpack.c.b16 %v13833, %v13831
    %v13906 = vpack.c.b16 %v13834, %v13832
    %v13907 = vpack.c.b16 %v13837, %v13835
    %v13908 = vpack.c.b16 %v13838, %v13836
    %v13909 = vpack.c.b16 %v13841, %v13839
    %v13910 = vpack.c.b16 %v13842, %v13840
    %v13911 = vpack.c.b16 %v13845, %v13843
    %v13912 = vpack.c.b16 %v13846, %v13844
    %v13913 = vpack.c.b16 %v13849, %v13847
    %v13914 = vpack.c.b16 %v13850, %v13848
    %13979 = vmatprep.subr.bf16.mxu0 %v13852
    %13980 = vmatpush1.bf16.msra.mxu0 %v13851
    %13981 = vmatprep.subr.bf16.mxu0 %v13854
    %13982 = vmatpush1.bf16.msra.mxu0 %v13853
    %13983 = vmatprep.subr.bf16.mxu0 %v13856
    %13984 = vmatpush1.bf16.msra.mxu0 %v13855
    %13985 = vmatprep.subr.bf16.mxu0 %v13858
    %13986 = vmatpush1.bf16.msra.mxu0 %v13857
    %13987 = vmatprep.subr.bf16.mxu0 %v13860
    %13988 = vmatpush1.bf16.msra.mxu0 %v13859
    %13989 = vmatprep.subr.bf16.mxu0 %v13862
    %13990 = vmatpush1.bf16.msra.mxu0 %v13861
    %13991 = vmatprep.subr.bf16.mxu0 %v13864
    %13992 = vmatpush1.bf16.msra.mxu0 %v13863
    %13993 = vmatprep.subr.bf16.mxu0 %v13866
    %13994 = vmatpush1.bf16.msra.mxu0 %v13865
    %13995 = vmatprep.subr.bf16.mxu0 %v13868
    %13996 = vmatpush1.bf16.msra.mxu0 %v13867
    %13997 = vmatprep.subr.bf16.mxu0 %v13870
    %13998 = vmatpush1.bf16.msra.mxu0 %v13869
    %13999 = vmatprep.subr.bf16.mxu0 %v13872
    %14000 = vmatpush1.bf16.msra.mxu0 %v13871
    %14001 = vmatprep.subr.bf16.mxu0 %v13874
    %14002 = vmatpush1.bf16.msra.mxu0 %v13873
    %14003 = vmatprep.subr.bf16.mxu0 %v13876
    %14004 = vmatpush1.bf16.msra.mxu0 %v13875
    %14005 = vmatprep.subr.bf16.mxu0 %v13878
    %14006 = vmatpush1.bf16.msra.mxu0 %v13877
    %14007 = vmatprep.subr.bf16.mxu0 %v13880
    %14008 = vmatpush1.bf16.msra.mxu0 %v13879
    %14009 = vmatprep.subr.bf16.mxu0 %v13882
    %14010 = vmatpush1.bf16.msra.mxu0 %v13881
    %14011 = vmatprep.mubr.bf16.mxu0 %v13580
    %14012 = vmatmul.mubr.bf16.gmra.mrb[0].mxu0 %v13579
    %v14013 = vpop.f32.mrb[0].mxu0
    %v14014 = vadd.f32 %v13652, %v14013
    %v14015 = vpop.f32.mrb[0].mxu0
    %v14016 = vadd.f32 %v13656, %v14015
    %v14017 = vpop.f32.mrb[0].mxu0
    %v14018 = vadd.f32 %v13652, %v14017
    %v14019 = vpop.f32.mrb[0].mxu0
    %v14020 = vadd.f32 %v13656, %v14019
    %14021 = vdwg.mxu0
    %14022 = vmatprep.subr.bf16.mxu0 %v13884
    %14023 = vmatpush1.bf16.msra.mxu0 %v13883
    %14024 = vmatprep.subr.bf16.mxu0 %v13886
    %14025 = vmatpush1.bf16.msra.mxu0 %v13885
    %14026 = vmatprep.subr.bf16.mxu0 %v13888
    %14027 = vmatpush1.bf16.msra.mxu0 %v13887
    %14028 = vmatprep.subr.bf16.mxu0 %v13890
    %14029 = vmatpush1.bf16.msra.mxu0 %v13889
    %14030 = vmatprep.subr.bf16.mxu0 %v13892
    %14031 = vmatpush1.bf16.msra.mxu0 %v13891
    %14032 = vmatprep.subr.bf16.mxu0 %v13894
    %14033 = vmatpush1.bf16.msra.mxu0 %v13893
    %14034 = vmatprep.subr.bf16.mxu0 %v13896
    %14035 = vmatpush1.bf16.msra.mxu0 %v13895
    %14036 = vmatprep.subr.bf16.mxu0 %v13898
    %14037 = vmatpush1.bf16.msra.mxu0 %v13897
    %14038 = vmatprep.subr.bf16.mxu0 %v13900
    %14039 = vmatpush1.bf16.msra.mxu0 %v13899
    %14040 = vmatprep.subr.bf16.mxu0 %v13902
    %14041 = vmatpush1.bf16.msra.mxu0 %v13901
    %14042 = vmatprep.subr.bf16.mxu0 %v13904
    %14043 = vmatpush1.bf16.msra.mxu0 %v13903
    %14044 = vmatprep.subr.bf16.mxu0 %v13906
    %14045 = vmatpush1.bf16.msra.mxu0 %v13905
    %14046 = vmatprep.subr.bf16.mxu0 %v13908
    %14047 = vmatpush1.bf16.msra.mxu0 %v13907
    %14048 = vmatprep.subr.bf16.mxu0 %v13910
    %14049 = vmatpush1.bf16.msra.mxu0 %v13909
    %14050 = vmatprep.subr.bf16.mxu0 %v13912
    %14051 = vmatpush1.bf16.msra.mxu0 %v13911
    %14052 = vmatprep.subr.bf16.mxu0 %v13914
    %14053 = vmatpush1.bf16.msra.mxu0 %v13913
    %14054 = vmatprep.mubr.bf16.mxu0 %v13582
    %14055 = vmatmul.mubr.bf16.gmra.mrb[0].mxu0 %v13581
    %v14056 = vpop.f32.mrb[0].mxu0
    %v14057 = vadd.f32 %v14014, %v14056
    %v14058 = vpop.f32.mrb[0].mxu0
    %v14059 = vadd.f32 %v14016, %v14058
    %v14060 = vpop.f32.mrb[0].mxu0
    %v14061 = vadd.f32 %v14018, %v14060
    %v14062 = vpop.f32.mrb[0].mxu0
    %v14063 = vadd.f32 %v14020, %v14062
    %14064 = vdwg.mxu0
    %v14065 = vmax.f32 %v14057, 0.0
    %v14066 = vmax.f32 %v14059, 0.0
    %v14067 = vmax.f32 %v14061, 0.0
    %v14068 = vmax.f32 %v14063, 0.0
    %v14069 = vpack.c.bf16 %v14067, %v14065
    %v14070 = vpack.c.bf16 %v14068, %v14066
    %v14071 = vld [vmem:[#allocation14] sm:$0xf]
    %v14072 = vld [vmem:[#allocation14 + $0x4] sm:$0xf]
    %v14073 = vld [vmem:[#allocation14 + $0x8] sm:$0xf]
    %v14074 = vld [vmem:[#allocation14 + $0xc] sm:$0xf]
    %v14075 = vld [vmem:[#allocation14 + $0x10] sm:$0xf]
    %v14076 = vld [vmem:[#allocation14 + $0x14] sm:$0xf]
    %v14077 = vld [vmem:[#allocation14 + $0x18] sm:$0xf]
    %v14078 = vld [vmem:[#allocation14 + $0x1c] sm:$0xf]
    %v14079 = vld [vmem:[#allocation14 + $0x20] sm:$0xf]
    %v14080 = vld [vmem:[#allocation14 + $0x24] sm:$0xf]
    %v14081 = vld [vmem:[#allocation14 + $0x28] sm:$0xf]
    %v14082 = vld [vmem:[#allocation14 + $0x2c] sm:$0xf]
    %v14083 = vld [vmem:[#allocation14 + $0x30] sm:$0xf]
    %v14084 = vld [vmem:[#allocation14 + $0x34] sm:$0xf]
    %v14085 = vld [vmem:[#allocation14 + $0x38] sm:$0xf]
    %v14086 = vld [vmem:[#allocation14 + $0x3c] sm:$0xf]
    %v14087 = vld [vmem:[#allocation14 + $0x40] sm:$0xf]
    %v14088 = vld [vmem:[#allocation14 + $0x44] sm:$0xf]
    %v14089 = vld [vmem:[#allocation14 + $0x48] sm:$0xf]
    %v14090 = vld [vmem:[#allocation14 + $0x4c] sm:$0xf]
    %v14091 = vld [vmem:[#allocation14 + $0x50] sm:$0xf]
    %v14092 = vld [vmem:[#allocation14 + $0x54] sm:$0xf]
    %v14093 = vld [vmem:[#allocation14 + $0x58] sm:$0xf]
    %v14094 = vld [vmem:[#allocation14 + $0x5c] sm:$0xf]
    %v14095 = vld [vmem:[#allocation14 + $0x60] sm:$0xf]
    %v14096 = vld [vmem:[#allocation14 + $0x64] sm:$0xf]
    %v14097 = vld [vmem:[#allocation14 + $0x68] sm:$0xf]
    %v14098 = vld [vmem:[#allocation14 + $0x6c] sm:$0xf]
    %v14099 = vld [vmem:[#allocation14 + $0x70] sm:$0xf]
    %v14100 = vld [vmem:[#allocation14 + $0x74] sm:$0xf]
    %v14101 = vld [vmem:[#allocation14 + $0x78] sm:$0xf]
    %v14102 = vld [vmem:[#allocation14 + $0x7c] sm:$0xf]
    %v14103 = vld [vmem:[#allocation16] sm:$0x1]
    %v14105 = vlaneseq
    %v14106 = vshrl.u32 %v14105, 7
    %v14107 = vsub.s32 0, %v14106
    %v14108 = vrot.slane %v14103, %v14107
    %v14142 = vunpack.c.l.b16 %v14071
    %v14143 = vunpack.c.l.b16 %v14072
    %v14144 = vunpack.c.l.b16 %v14073
    %v14145 = vunpack.c.l.b16 %v14074
    %v14146 = vunpack.c.l.b16 %v14075
    %v14147 = vunpack.c.l.b16 %v14076
    %v14148 = vunpack.c.l.b16 %v14077
    %v14149 = vunpack.c.l.b16 %v14078
    %v14150 = vunpack.c.l.b16 %v14079
    %v14151 = vunpack.c.l.b16 %v14080
    %v14152 = vunpack.c.l.b16 %v14081
    %v14153 = vunpack.c.l.b16 %v14082
    %v14154 = vunpack.c.l.b16 %v14083
    %v14155 = vunpack.c.l.b16 %v14084
    %v14156 = vunpack.c.l.b16 %v14085
    %v14157 = vunpack.c.l.b16 %v14086
    %v14158 = vunpack.c.l.b16 %v14087
    %v14159 = vunpack.c.l.b16 %v14088
    %v14160 = vunpack.c.l.b16 %v14089
    %v14161 = vunpack.c.l.b16 %v14090
    %v14162 = vunpack.c.l.b16 %v14091
    %v14163 = vunpack.c.l.b16 %v14092
    %v14164 = vunpack.c.l.b16 %v14093
    %v14165 = vunpack.c.l.b16 %v14094
    %v14166 = vunpack.c.l.b16 %v14095
    %v14167 = vunpack.c.l.b16 %v14096
    %v14168 = vunpack.c.l.b16 %v14097
    %v14169 = vunpack.c.l.b16 %v14098
    %v14170 = vunpack.c.l.b16 %v14099
    %v14171 = vunpack.c.l.b16 %v14100
    %v14172 = vunpack.c.l.b16 %v14101
    %v14173 = vunpack.c.l.b16 %v14102
    %v14174 = vpack.c.b16 %v14143, %v14142
    %v14175 = vpack.c.b16 %v14145, %v14144
    %v14176 = vpack.c.b16 %v14147, %v14146
    %v14177 = vpack.c.b16 %v14149, %v14148
    %v14178 = vpack.c.b16 %v14151, %v14150
    %v14179 = vpack.c.b16 %v14153, %v14152
    %v14180 = vpack.c.b16 %v14155, %v14154
    %v14181 = vpack.c.b16 %v14157, %v14156
    %v14182 = vpack.c.b16 %v14159, %v14158
    %v14183 = vpack.c.b16 %v14161, %v14160
    %v14184 = vpack.c.b16 %v14163, %v14162
    %v14185 = vpack.c.b16 %v14165, %v14164
    %v14186 = vpack.c.b16 %v14167, %v14166
    %v14187 = vpack.c.b16 %v14169, %v14168
    %v14188 = vpack.c.b16 %v14171, %v14170
    %v14189 = vpack.c.b16 %v14173, %v14172
    %14206 = vmatprep.subr.bf16.mxu0 0
    %14207 = vmatpush1.bf16.msra.mxu0 %v14174
    %14208 = vmatprep.subr.bf16.mxu0 0
    %14209 = vmatpush1.bf16.msra.mxu0 %v14175
    %14210 = vmatprep.subr.bf16.mxu0 0
    %14211 = vmatpush1.bf16.msra.mxu0 %v14176
    %14212 = vmatprep.subr.bf16.mxu0 0
    %14213 = vmatpush1.bf16.msra.mxu0 %v14177
    %14214 = vmatprep.subr.bf16.mxu0 0
    %14215 = vmatpush1.bf16.msra.mxu0 %v14178
    %14216 = vmatprep.subr.bf16.mxu0 0
    %14217 = vmatpush1.bf16.msra.mxu0 %v14179
    %14218 = vmatprep.subr.bf16.mxu0 0
    %14219 = vmatpush1.bf16.msra.mxu0 %v14180
    %14220 = vmatprep.subr.bf16.mxu0 0
    %14221 = vmatpush1.bf16.msra.mxu0 %v14181
    %14222 = vmatprep.subr.bf16.mxu0 0
    %14223 = vmatpush1.bf16.msra.mxu0 %v14182
    %14224 = vmatprep.subr.bf16.mxu0 0
    %14225 = vmatpush1.bf16.msra.mxu0 %v14183
    %14226 = vmatprep.subr.bf16.mxu0 0
    %14227 = vmatpush1.bf16.msra.mxu0 %v14184
    %14228 = vmatprep.subr.bf16.mxu0 0
    %14229 = vmatpush1.bf16.msra.mxu0 %v14185
    %14230 = vmatprep.subr.bf16.mxu0 0
    %14231 = vmatpush1.bf16.msra.mxu0 %v14186
    %14232 = vmatprep.subr.bf16.mxu0 0
    %14233 = vmatpush1.bf16.msra.mxu0 %v14187
    %14234 = vmatprep.subr.bf16.mxu0 0
    %14235 = vmatpush1.bf16.msra.mxu0 %v14188
    %14236 = vmatprep.subr.bf16.mxu0 0
    %14237 = vmatpush1.bf16.msra.mxu0 %v14189
    %14238 = vmatprep.mubr.bf16.mxu0 %v14070
    %14239 = vmatmul.mubr.bf16.gmra.mrb[0].mxu0 %v14069
    %v14240 = vpop.f32.mrb[0].mxu0
    %v14241 = vadd.f32 %v14108, %v14240
    %v14242 = vpop.f32.mrb[0].mxu0
    %v14243 = vpop.f32.mrb[0].mxu0
    %v14244 = vadd.f32 %v14108, %v14243
    %v14245 = vpop.f32.mrb[0].mxu0
    %14246 = vdwg.mxu0
    %v14247 = vmax.f32 %v14241, 0.0
    %v14248 = vmax.f32 %v14244, 0.0
    %v14249 = vpack.c.bf16 %v14248, %v14247
    %v14250 = vld [vmem:[#allocation17] sm:$0xf]
    %v14251 = vld [vmem:[#allocation17 + $0x4] sm:$0xf]
    %v14252 = vld [vmem:[#allocation17 + $0x8] sm:$0xf]
    %v14253 = vld [vmem:[#allocation17 + $0xc] sm:$0xf]
    %v14254 = vld [vmem:[#allocation17 + $0x10] sm:$0xf]
    %v14255 = vld [vmem:[#allocation17 + $0x14] sm:$0xf]
    %v14256 = vld [vmem:[#allocation17 + $0x18] sm:$0xf]
    %v14257 = vld [vmem:[#allocation17 + $0x1c] sm:$0xf]
    %v14258 = vld [vmem:[#allocation17 + $0x20] sm:$0xf]
    %v14259 = vld [vmem:[#allocation17 + $0x24] sm:$0xf]
    %v14260 = vld [vmem:[#allocation17 + $0x28] sm:$0xf]
    %v14261 = vld [vmem:[#allocation17 + $0x2c] sm:$0xf]
    %v14262 = vld [vmem:[#allocation17 + $0x30] sm:$0xf]
    %v14263 = vld [vmem:[#allocation17 + $0x34] sm:$0xf]
    %v14264 = vld [vmem:[#allocation17 + $0x38] sm:$0xf]
    %v14265 = vld [vmem:[#allocation17 + $0x3c] sm:$0xf]
    %v14266 = vld [vmem:[#allocation19] sm:$0x1]
    %v14268 = vlaneseq
    %v14269 = vshrl.u32 %v14268, 7
    %v14270 = vsub.s32 0, %v14269
    %v14271 = vrot.slane %v14266, %v14270
    %v14289 = vunpack.c.l.b16 %v14250
    %v14290 = vunpack.c.l.b16 %v14251
    %v14291 = vunpack.c.l.b16 %v14252
    %v14292 = vunpack.c.l.b16 %v14253
    %v14293 = vunpack.c.l.b16 %v14254
    %v14294 = vunpack.c.l.b16 %v14255
    %v14295 = vunpack.c.l.b16 %v14256
    %v14296 = vunpack.c.l.b16 %v14257
    %v14297 = vunpack.c.l.b16 %v14258
    %v14298 = vunpack.c.l.b16 %v14259
    %v14299 = vunpack.c.l.b16 %v14260
    %v14300 = vunpack.c.l.b16 %v14261
    %v14301 = vunpack.c.l.b16 %v14262
    %v14302 = vunpack.c.l.b16 %v14263
    %v14303 = vunpack.c.l.b16 %v14264
    %v14304 = vunpack.c.l.b16 %v14265
    %v14305 = vpack.c.b16 %v14290, %v14289
    %v14306 = vpack.c.b16 %v14292, %v14291
    %v14307 = vpack.c.b16 %v14294, %v14293
    %v14308 = vpack.c.b16 %v14296, %v14295
    %v14309 = vpack.c.b16 %v14298, %v14297
    %v14310 = vpack.c.b16 %v14300, %v14299
    %v14311 = vpack.c.b16 %v14302, %v14301
    %v14312 = vpack.c.b16 %v14304, %v14303
    %14321 = vmatprep.subr.bf16.mxu0 0
    %14322 = vmatpush1.bf16.msra.mxu0 %v14305
    %14323 = vmatprep.subr.bf16.mxu0 0
    %14324 = vmatpush1.bf16.msra.mxu0 %v14306
    %14325 = vmatprep.subr.bf16.mxu0 0
    %14326 = vmatpush1.bf16.msra.mxu0 %v14307
    %14327 = vmatprep.subr.bf16.mxu0 0
    %14328 = vmatpush1.bf16.msra.mxu0 %v14308
    %14329 = vmatprep.subr.bf16.mxu0 0
    %14330 = vmatpush1.bf16.msra.mxu0 %v14309
    %14331 = vmatprep.subr.bf16.mxu0 0
    %14332 = vmatpush1.bf16.msra.mxu0 %v14310
    %14333 = vmatprep.subr.bf16.mxu0 0
    %14334 = vmatpush1.bf16.msra.mxu0 %v14311
    %14335 = vmatprep.subr.bf16.mxu0 0
    %14336 = vmatpush1.bf16.msra.mxu0 %v14312
    %14337 = vmatprep.subr.bf16.mxu0 0
    %14338 = vmatpush1.bf16.msra.mxu0 0
    %14339 = vmatprep.subr.bf16.mxu0 0
    %14340 = vmatpush1.bf16.msra.mxu0 0
    %14341 = vmatprep.subr.bf16.mxu0 0
    %14342 = vmatpush1.bf16.msra.mxu0 0
    %14343 = vmatprep.subr.bf16.mxu0 0
    %14344 = vmatpush1.bf16.msra.mxu0 0
    %14345 = vmatprep.subr.bf16.mxu0 0
    %14346 = vmatpush1.bf16.msra.mxu0 0
    %14347 = vmatprep.subr.bf16.mxu0 0
    %14348 = vmatpush1.bf16.msra.mxu0 0
    %14349 = vmatprep.subr.bf16.mxu0 0
    %14350 = vmatpush1.bf16.msra.mxu0 0
    %14351 = vmatprep.subr.bf16.mxu0 0
    %14352 = vmatpush1.bf16.msra.mxu0 0
    %14353 = vmatprep.mubr.bf16.mxu0 0
    %14354 = vmatmul.mubr.bf16.gmra.mrb[0].mxu0 %v14249
    %v14355 = vpop.f32.mrb[0].mxu0
    %v14356 = vadd.f32 %v14271, %v14355
    %v14357 = vpop.f32.mrb[0].mxu0
    %v14358 = vpop.f32.mrb[0].mxu0
    %v14359 = vadd.f32 %v14271, %v14358
    %v14360 = vpop.f32.mrb[0].mxu0
    %14361 = vdwg.mxu0
    %14362 = vst [vmem:[#allocation20] sm:$0xff] %v14356
    %14363 = vst [vmem:[#allocation20 + $0x8] sm:$0xff] %v14359
    // Predicated region
    $region90: #{tpu_custom_call.1} parent=1 // pred_check
      _
    $region91: #{tpu_custom_call.1} parent=1 // pred_check_branch
      %14365 = sbr.rel (0) target = $region93
    $region92: #{tpu_custom_call.1} parent=1 // pred_region
      %s14367 = ssub.s32 256, 256
      %14368 = vsyncadd [#allocation4], %s14367
      %s14369 = sshll.u32 [#allocation20], 4
      %s14370 = int_to_ptr.vmem [resolvable:$true] %s14369
      %14375 = dma.vmem_to_hbm [thread:$0]  %s14370, 256, %s11, [#allocation4], 128, 128, 8
    $region93: #{tpu_custom_call.1} parent=1 // pred_fallthru
      _
    // Predicated region
    $region94: #{tpu_custom_call.1} parent=1 // pred_check
      _
    $region95: #{tpu_custom_call.1} parent=1 // pred_check_branch
      %14377 = sbr.rel (0) target = $region97
    $region96: #{tpu_custom_call.1} parent=1 // pred_region
      %14378 = dma.done [#allocation4], 256
    $region97: #{tpu_custom_call.1} parent=1 // pred_fallthru
      _
    %14379 = vsyncpa [#allocation3], 1
    %14380 = vsyncpa [#allocation6], 1
    %14381 = vsyncpa [#allocation9], 1
    %14382 = vsyncpa [#allocation12], 1
    %14383 = vsyncpa [#allocation15], 1
    %14384 = vsyncpa [#allocation18], 1
    %14385 = vsyncpa [#allocation4], 1

</llo_original>
